<compile_context>
chip_gen: v7x
topology: tpu7x:2x2x1
jax: 0.10.0
libtpu: 0.0.40
codegen_flags: <defaults>
</compile_context>

<pallas_src>
import jax
import jax.numpy as jnp
import numpy as np
from jax.experimental import pallas as pl
from jax.experimental.pallas import tpu as pltpu


# ----------------------------------------------------------------------------
# Fused forward kernel (built per static config)
# ----------------------------------------------------------------------------
def _build_fused_kernel(conv_kernel_sizes, n_fc, levels):
    """Builds a kernel computing the whole ConvColumnNet1D forward pass.

    Ref order:
      conv_in [L, B, 2]   (channel 0 = temp profile, channel 1 = qin profile)
      scalars [B, S]
      per conv layer:  w [K, 2*Cin, 2*Cout] (block-diag temp/qin), b [1, 2*Cout]
      w1p [L, 2*Cf, F1]   first-FC weight with the NCW-flatten perm pre-folded
      w1s [S, F1]         first-FC weight rows for the scalar features
      b1  [1, F1]
      per remaining FC layer:  w [In, Out], b [1, Out]
      out [B, F_last]
    """
    n_conv = len(conv_kernel_sizes)
    L = levels

    def kernel(*refs):
        pos = 0
        conv_in_ref = refs[pos]; pos += 1
        scal_ref = refs[pos]; pos += 1
        conv_wb = []
        for _ in range(n_conv):
            conv_wb.append((refs[pos], refs[pos + 1]))
            pos += 2
        w1p_ref, w1s_ref, b1_ref = refs[pos], refs[pos + 1], refs[pos + 2]
        pos += 3
        fc_wb = []
        for _ in range(n_fc - 1):
            fc_wb.append((refs[pos], refs[pos + 1]))
            pos += 2
        o_ref = refs[pos]

        h = conv_in_ref[...]                                   # [L, B, 2]
        bsz = h.shape[1]

        # ---- both conv stacks at once (block-diagonal weights), all in VMEM ----
        for ksize, (w_ref, b_ref) in zip(conv_kernel_sizes, conv_wb):
            pad = ksize // 2
            cin = h.shape[2]
            cout = w_ref.shape[2]
            zpad = jnp.zeros((pad, bsz, cin), jnp.float32)
            h_pad = jnp.concatenate([zpad, h, zpad], axis=0)   # [L+2p, B, cin]
            w = w_ref[...]                                     # [K, cin, cout]
            # accumulator starts as the broadcast bias (saves a full add pass)
            acc = jnp.broadcast_to(b_ref[...], (L, bsz, cout)).astype(jnp.float32)
            for k in range(ksize):                             # unrolled, K small
                acc = acc + jnp.dot(h_pad[k:k + L], w[k],
                                    preferred_element_type=jnp.float32)
            h = jnp.maximum(acc, 0.0)                          # [L, B, cout]

        # ---- FC1: flatten-free contraction (flatten perm folded into w1p) ----
        part = jnp.einsum('lbc,lcf->lbf', h, w1p_ref[...],
                          preferred_element_type=jnp.float32)  # [L, B, F1]
        y = jnp.sum(part, axis=0)                              # [B, F1]
        y = y + jnp.dot(scal_ref[...], w1s_ref[...],
                        preferred_element_type=jnp.float32)
        y = y + b1_ref[...]
        if n_fc > 1:
            y = jnp.maximum(y, 0.0)

        # ---- remaining FC layers ----
        for i, (w_ref, b_ref) in enumerate(fc_wb):
            y = jnp.dot(y, w_ref[...], preferred_element_type=jnp.float32)
            y = y + b_ref[...]
            if i < n_fc - 2:
                y = jnp.maximum(y, 0.0)

        o_ref[...] = y

    return kernel


def _replicated_spec(a):
    """Full-array block that is re-used (not re-indexed) for every grid step."""
    nd = a.ndim
    return pl.BlockSpec(a.shape, lambda i: (0,) * nd)


# ----------------------------------------------------------------------------
# Parameters: synthetic init (PyTorch-equivalent shapes) + one-time repack
# ----------------------------------------------------------------------------
def init_params(key, conv_configs, fc_layer_sizes, levels):
    """Conv weights stored as [K, Cin, Cout] (== torch w.transpose(2,1,0)),
    FC weights as [In, Out] (== torch w.T)."""
    params = {'temp_conv': [], 'qin_conv': [], 'fc': []}
    for stack in ('temp_conv', 'qin_conv'):
        cin = 1
        for cfg in conv_configs:
            key, k1, k2 = jax.random.split(key, 3)
            K, cout = cfg['kernel'], cfg['filters']
            bound = 1.0 / float(np.sqrt(cin * K))
            w = jax.random.uniform(k1, (K, cin, cout), jnp.float32, -bound, bound)
            b = jax.random.uniform(k2, (cout,), jnp.float32, -bound, bound)
            params[stack].append((w, b))
            cin = cout
    fc_dims = [conv_configs[-1]['filters'] * levels * 2 + 2] + list(fc_layer_sizes)
    for i in range(len(fc_dims) - 1):
        key, k1, k2 = jax.random.split(key, 3)
        bound = 1.0 / float(np.sqrt(fc_dims[i]))
        w = jax.random.uniform(k1, (fc_dims[i], fc_dims[i + 1]), jnp.float32,
                               -bound, bound)
        b = jax.random.uniform(k2, (fc_dims[i + 1],), jnp.float32, -bound, bound)
        params['fc'].append((w, b))
    return params


def prepare_params(params, levels):
    """One-time repack of module params into the fused-kernel layout."""
    L = levels
    conv_layers = []
    for (wt, bt), (wq, bq) in zip(params['temp_conv'], params['qin_conv']):
        K, cin, cout = wt.shape
        assert K % 2 == 1, (
            "even conv kernel sizes change the 'same'-padded output length and "
            "break the module's fc_input_dim computation")
        wc = jnp.zeros((K, 2 * cin, 2 * cout), jnp.float32)
        wc = wc.at[:, :cin, :cout].set(wt)          # temp block
        wc = wc.at[:, cin:, cout:].set(wq)          # qin block
        bc = jnp.concatenate([bt, bq]).reshape(1, 2 * cout)
        conv_layers.append((K, wc, bc))

    cf = params['temp_conv'][-1][0].shape[2]        # final filters per stack
    w1, b1 = params['fc'][0]
    f1 = w1.shape[1]
    # Torch flattens [B, C, L] row-major (index c*L + l); our conv output is
    # [L, B, 2*cf] with channels [temp(cf) | qin(cf)].  Fold the permutation
    # into the first FC weight so the kernel needs no transpose/reshape.
    l_idx = np.arange(L)[:, None]                   # [L, 1]
    c_idx = np.arange(2 * cf)[None, :]              # [1, 2*cf]
    torch_row = np.where(c_idx < cf,
                         c_idx * L + l_idx,
                         cf * L + (c_idx - cf) * L + l_idx)     # [L, 2*cf]
    w1p = w1[torch_row.reshape(-1)].reshape(L, 2 * cf, f1)
    w1s = w1[2 * cf * L:, :]                        # scalar-feature rows
    fc_rest = [(w, b.reshape(1, -1)) for (w, b) in params['fc'][1:]]
    return {'conv': conv_layers, 'w1p': w1p, 'w1s': w1s,
            'b1': b1.reshape(1, f1), 'fc_rest': fc_rest}


# ----------------------------------------------------------------------------
# Forward: one fused pallas_call (plus trivial input-slicing glue)
# ----------------------------------------------------------------------------
def forward(x, prepared, levels, *, batch_block=None):
    """x: [B, 2*levels + 2] -> [B, fc_layer_sizes[-1]].  In production wrap in jit."""
    B = x.shape[0]
    L = levels
    conv_layers = prepared['conv']
    fc_rest = prepared['fc_rest']
    n_fc = 1 + len(fc_rest)
    F1 = prepared['w1p'].shape[2]
    F_out = fc_rest[-1][0].shape[1] if fc_rest else F1

    # Tiny one-time input prep (lane->sublane relayout left to XLA; everything
    # downstream runs inside the single fused kernel).
    prof = x[:, :2 * L].reshape(B, 2, L)
    conv_in = jnp.transpose(prof, (2, 0, 1)).astype(jnp.float32)   # [L, B, 2]
    scalars = x[:, 2 * L:].astype(jnp.float32)                     # [B, S]
    S = scalars.shape[1]

    bb = B if batch_block is None else batch_block
    assert B % bb == 0 and (bb == B or bb % 8 == 0), "bad batch_block"
    grid = (B // bb,)

    inputs = [conv_in, scalars]
    in_specs = [
        pl.BlockSpec((L, bb, conv_in.shape[2]), lambda i: (0, i, 0)),
        pl.BlockSpec((bb, S), lambda i: (i, 0)),
    ]
    conv_ks = []
    for ksize, w, b in conv_layers:
        conv_ks.append(ksize)
        inputs += [w, b]
        in_specs += [_replicated_spec(w), _replicated_spec(b)]
    for a in (prepared['w1p'], prepared['w1s'], prepared['b1']):
        inputs.append(a)
        in_specs.append(_replicated_spec(a))
    for w, b in fc_rest:
        inputs += [w, b]
        in_specs += [_replicated_spec(w), _replicated_spec(b)]

    kernel = _build_fused_kernel(tuple(conv_ks), n_fc, L)

    return pl.pallas_call(
        kernel,
        out_shape=jax.ShapeDtypeStruct((B, F_out), jnp.float32),
        grid=grid,
        in_specs=in_specs,
        out_specs=pl.BlockSpec((bb, F_out), lambda i: (i, 0)),
        compiler_params=pltpu.CompilerParams(
            dimension_semantics=("parallel",)),
    )(*inputs)


# ----------------------------------------------------------------------------
# Pure-JAX reference (numerical verification only)
# ----------------------------------------------------------------------------
def reference_forward(x, params, levels):
    def conv_ref(h_ncl, w_kic, b):
        K = w_kic.shape[0]
        pad = K // 2
        w_oik = jnp.transpose(w_kic, (2, 1, 0))        # [Cout, Cin, K]
        y = jax.lax.conv_general_dilated(
            h_ncl, w_oik, window_strides=(1,), padding=[(pad, pad)],
            dimension_numbers=('NCH', 'OIH', 'NCH'))
        return jnp.maximum(y + b[None, :, None], 0.0)

    B = x.shape[0]
    temp = x[:, :levels][:, None, :]
    qin = x[:, levels:2 * levels][:, None, :]
    scalars = x[:, 2 * levels:]
    tf = temp
    for w, b in params['temp_conv']:
        tf = conv_ref(tf, w, b)
    qf = qin
    for w, b in params['qin_conv']:
        qf = conv_ref(qf, w, b)
    h = jnp.concatenate([tf.reshape(B, -1), qf.reshape(B, -1), scalars], axis=1)
    n_fc = len(params['fc'])
    for i, (w, b) in enumerate(params['fc']):
        h = h @ w + b
        if i < n_fc - 1:
            h = jnp.maximum(h, 0.0)
    return h


if __name__ == "__main__":
    levels = 49
    conv_layer_configs = [{'filters': 8, 'kernel': 3}, {'filters': 4, 'kernel': 5}]
    fc_layer_sizes = [32, 49]
    batch = 4

    key = jax.random.PRNGKey(0)
    kx, kp = jax.random.split(key)
    x = jax.random.normal(kx, (batch, 2 * levels + 2), jnp.float32)
    params = init_params(kp, conv_layer_configs, fc_layer_sizes, levels)
    prepared = prepare_params(params, levels)

    out = forward(x, prepared, levels)
    out = jax.block_until_ready(out)

    assert out.shape == (batch, fc_layer_sizes[-1]), out.shape
    ref = reference_forward(x, params, levels)
    np.testing.assert_allclose(np.asarray(out), np.asarray(ref), rtol=1e-4, atol=1e-4)

    print("KERNEL_OK")
</pallas_src>

<mosaic_0001>
module attributes {stable_mosaic.version = 11 : i64} {
  func.func @kernel(%arg0: i32, %arg1: memref<49x4x2xf32, #tpu.memory_space<vmem>>, %arg2: memref<4x2xf32, #tpu.memory_space<vmem>>, %arg3: memref<3x2x16xf32, #tpu.memory_space<vmem>>, %arg4: memref<1x16xf32, #tpu.memory_space<vmem>>, %arg5: memref<5x16x8xf32, #tpu.memory_space<vmem>>, %arg6: memref<1x8xf32, #tpu.memory_space<vmem>>, %arg7: memref<49x8x32xf32, #tpu.memory_space<vmem>>, %arg8: memref<2x32xf32, #tpu.memory_space<vmem>>, %arg9: memref<1x32xf32, #tpu.memory_space<vmem>>, %arg10: memref<32x49xf32, #tpu.memory_space<vmem>>, %arg11: memref<1x49xf32, #tpu.memory_space<vmem>>, %arg12: memref<4x49xf32, #tpu.memory_space<vmem>>) attributes {dimension_semantics = [#tpu.dimension_semantics<parallel>], iteration_bounds = array<i64: 1>, scalar_prefetch = 0 : i64, scratch_operands = 0 : i64, tpu.core_type = #tpu.core_type<tc>, window_params = [{transform_indices = @transform_0, window_bounds = array<i64: 49, 4, 2>}, {transform_indices = @transform_1, window_bounds = array<i64: 4, 2>}, {pipeline_mode = #tpu.pipeline_mode<synchronous>, transform_indices = @transform_2, window_bounds = array<i64: 3, 2, 16>}, {pipeline_mode = #tpu.pipeline_mode<synchronous>, transform_indices = @transform_3, window_bounds = array<i64: 1, 16>}, {pipeline_mode = #tpu.pipeline_mode<synchronous>, transform_indices = @transform_4, window_bounds = array<i64: 5, 16, 8>}, {pipeline_mode = #tpu.pipeline_mode<synchronous>, transform_indices = @transform_5, window_bounds = array<i64: 1, 8>}, {pipeline_mode = #tpu.pipeline_mode<synchronous>, transform_indices = @transform_6, window_bounds = array<i64: 49, 8, 32>}, {pipeline_mode = #tpu.pipeline_mode<synchronous>, transform_indices = @transform_7, window_bounds = array<i64: 2, 32>}, {pipeline_mode = #tpu.pipeline_mode<synchronous>, transform_indices = @transform_8, window_bounds = array<i64: 1, 32>}, {pipeline_mode = #tpu.pipeline_mode<synchronous>, transform_indices = @transform_9, window_bounds = array<i64: 32, 49>}, {pipeline_mode = #tpu.pipeline_mode<synchronous>, transform_indices = @transform_10, window_bounds = array<i64: 1, 49>}, {transform_indices = @transform_11, window_bounds = array<i64: 4, 49>}]} {
    %c0 = arith.constant 0 : index
    %c0_0 = arith.constant 0 : index
    %c0_1 = arith.constant 0 : index
    %0 = vector.load %arg1[%c0, %c0_0, %c0_1] : memref<49x4x2xf32, #tpu.memory_space<vmem>>, vector<49x4x2xf32>
    %cst = arith.constant 0.000000e+00 : f32
    %1 = vector.broadcast %cst : f32 to vector<1x4x2xf32>
    %2 = tpu.concatenate %1, %0, %1 in 0 : vector<1x4x2xf32>, vector<49x4x2xf32>, vector<1x4x2xf32> -> vector<51x4x2xf32>
    %c0_2 = arith.constant 0 : index
    %c0_3 = arith.constant 0 : index
    %c0_4 = arith.constant 0 : index
    %3 = vector.load %arg3[%c0_2, %c0_3, %c0_4] : memref<3x2x16xf32, #tpu.memory_space<vmem>>, vector<3x2x16xf32>
    %c0_5 = arith.constant 0 : index
    %c0_6 = arith.constant 0 : index
    %4 = vector.load %arg4[%c0_5, %c0_6] : memref<1x16xf32, #tpu.memory_space<vmem>>, vector<1x16xf32>
    %5 = vector.shape_cast %4 : vector<1x16xf32> to vector<1x1x16xf32>
    %6 = vector.broadcast %5 : vector<1x1x16xf32> to vector<49x4x16xf32>
    %7 = vector.extract_strided_slice %2 {offsets = [0, 0, 0], sizes = [49, 4, 2], strides = [1, 1, 1]} : vector<51x4x2xf32> to vector<49x4x2xf32>
    %8 = vector.extract_strided_slice %3 {offsets = [0, 0, 0], sizes = [1, 2, 16], strides = [1, 1, 1]} : vector<3x2x16xf32> to vector<1x2x16xf32>
    %9 = vector.shape_cast %8 : vector<1x2x16xf32> to vector<2x16xf32>
    %cst_7 = arith.constant dense<0.000000e+00> : vector<49x4x16xf32>
    %10 = tpu.matmul %7, %9, %cst_7 {dimension_numbers = #tpu.dot_dimension_numbers<[2], [0], [0, 1], [1], [0, 0, 0, 1, 1, 1], [], []>} : vector<49x4x2xf32>, vector<2x16xf32>, vector<49x4x16xf32> -> vector<49x4x16xf32>
    %11 = arith.addf %6, %10 : vector<49x4x16xf32>
    %12 = vector.extract_strided_slice %2 {offsets = [1, 0, 0], sizes = [49, 4, 2], strides = [1, 1, 1]} : vector<51x4x2xf32> to vector<49x4x2xf32>
    %13 = vector.extract_strided_slice %3 {offsets = [1, 0, 0], sizes = [1, 2, 16], strides = [1, 1, 1]} : vector<3x2x16xf32> to vector<1x2x16xf32>
    %14 = vector.shape_cast %13 : vector<1x2x16xf32> to vector<2x16xf32>
    %cst_8 = arith.constant dense<0.000000e+00> : vector<49x4x16xf32>
    %15 = tpu.matmul %12, %14, %cst_8 {dimension_numbers = #tpu.dot_dimension_numbers<[2], [0], [0, 1], [1], [0, 0, 0, 1, 1, 1], [], []>} : vector<49x4x2xf32>, vector<2x16xf32>, vector<49x4x16xf32> -> vector<49x4x16xf32>
    %16 = arith.addf %11, %15 : vector<49x4x16xf32>
    %17 = vector.extract_strided_slice %2 {offsets = [2, 0, 0], sizes = [49, 4, 2], strides = [1, 1, 1]} : vector<51x4x2xf32> to vector<49x4x2xf32>
    %18 = vector.extract_strided_slice %3 {offsets = [2, 0, 0], sizes = [1, 2, 16], strides = [1, 1, 1]} : vector<3x2x16xf32> to vector<1x2x16xf32>
    %19 = vector.shape_cast %18 : vector<1x2x16xf32> to vector<2x16xf32>
    %cst_9 = arith.constant dense<0.000000e+00> : vector<49x4x16xf32>
    %20 = tpu.matmul %17, %19, %cst_9 {dimension_numbers = #tpu.dot_dimension_numbers<[2], [0], [0, 1], [1], [0, 0, 0, 1, 1, 1], [], []>} : vector<49x4x2xf32>, vector<2x16xf32>, vector<49x4x16xf32> -> vector<49x4x16xf32>
    %21 = arith.addf %16, %20 : vector<49x4x16xf32>
    %cst_10 = arith.constant 0.000000e+00 : f32
    %22 = vector.broadcast %cst_10 : f32 to vector<49x4x16xf32>
    %23 = arith.maximumf %21, %22 : vector<49x4x16xf32>
    %cst_11 = arith.constant 0.000000e+00 : f32
    %24 = vector.broadcast %cst_11 : f32 to vector<2x4x16xf32>
    %25 = tpu.concatenate %24, %23, %24 in 0 : vector<2x4x16xf32>, vector<49x4x16xf32>, vector<2x4x16xf32> -> vector<53x4x16xf32>
    %c0_12 = arith.constant 0 : index
    %c0_13 = arith.constant 0 : index
    %c0_14 = arith.constant 0 : index
    %26 = vector.load %arg5[%c0_12, %c0_13, %c0_14] : memref<5x16x8xf32, #tpu.memory_space<vmem>>, vector<5x16x8xf32>
    %c0_15 = arith.constant 0 : index
    %c0_16 = arith.constant 0 : index
    %27 = vector.load %arg6[%c0_15, %c0_16] : memref<1x8xf32, #tpu.memory_space<vmem>>, vector<1x8xf32>
    %28 = vector.shape_cast %27 : vector<1x8xf32> to vector<1x1x8xf32>
    %29 = vector.broadcast %28 : vector<1x1x8xf32> to vector<49x4x8xf32>
    %30 = vector.extract_strided_slice %25 {offsets = [0, 0, 0], sizes = [49, 4, 16], strides = [1, 1, 1]} : vector<53x4x16xf32> to vector<49x4x16xf32>
    %31 = vector.extract_strided_slice %26 {offsets = [0, 0, 0], sizes = [1, 16, 8], strides = [1, 1, 1]} : vector<5x16x8xf32> to vector<1x16x8xf32>
    %32 = vector.shape_cast %31 : vector<1x16x8xf32> to vector<16x8xf32>
    %cst_17 = arith.constant dense<0.000000e+00> : vector<49x4x8xf32>
    %33 = tpu.matmul %30, %32, %cst_17 {dimension_numbers = #tpu.dot_dimension_numbers<[2], [0], [0, 1], [1], [0, 0, 0, 1, 1, 1], [], []>} : vector<49x4x16xf32>, vector<16x8xf32>, vector<49x4x8xf32> -> vector<49x4x8xf32>
    %34 = arith.addf %29, %33 : vector<49x4x8xf32>
    %35 = vector.extract_strided_slice %25 {offsets = [1, 0, 0], sizes = [49, 4, 16], strides = [1, 1, 1]} : vector<53x4x16xf32> to vector<49x4x16xf32>
    %36 = vector.extract_strided_slice %26 {offsets = [1, 0, 0], sizes = [1, 16, 8], strides = [1, 1, 1]} : vector<5x16x8xf32> to vector<1x16x8xf32>
    %37 = vector.shape_cast %36 : vector<1x16x8xf32> to vector<16x8xf32>
    %cst_18 = arith.constant dense<0.000000e+00> : vector<49x4x8xf32>
    %38 = tpu.matmul %35, %37, %cst_18 {dimension_numbers = #tpu.dot_dimension_numbers<[2], [0], [0, 1], [1], [0, 0, 0, 1, 1, 1], [], []>} : vector<49x4x16xf32>, vector<16x8xf32>, vector<49x4x8xf32> -> vector<49x4x8xf32>
    %39 = arith.addf %34, %38 : vector<49x4x8xf32>
    %40 = vector.extract_strided_slice %25 {offsets = [2, 0, 0], sizes = [49, 4, 16], strides = [1, 1, 1]} : vector<53x4x16xf32> to vector<49x4x16xf32>
    %41 = vector.extract_strided_slice %26 {offsets = [2, 0, 0], sizes = [1, 16, 8], strides = [1, 1, 1]} : vector<5x16x8xf32> to vector<1x16x8xf32>
    %42 = vector.shape_cast %41 : vector<1x16x8xf32> to vector<16x8xf32>
    %cst_19 = arith.constant dense<0.000000e+00> : vector<49x4x8xf32>
    %43 = tpu.matmul %40, %42, %cst_19 {dimension_numbers = #tpu.dot_dimension_numbers<[2], [0], [0, 1], [1], [0, 0, 0, 1, 1, 1], [], []>} : vector<49x4x16xf32>, vector<16x8xf32>, vector<49x4x8xf32> -> vector<49x4x8xf32>
    %44 = arith.addf %39, %43 : vector<49x4x8xf32>
    %45 = vector.extract_strided_slice %25 {offsets = [3, 0, 0], sizes = [49, 4, 16], strides = [1, 1, 1]} : vector<53x4x16xf32> to vector<49x4x16xf32>
    %46 = vector.extract_strided_slice %26 {offsets = [3, 0, 0], sizes = [1, 16, 8], strides = [1, 1, 1]} : vector<5x16x8xf32> to vector<1x16x8xf32>
    %47 = vector.shape_cast %46 : vector<1x16x8xf32> to vector<16x8xf32>
    %cst_20 = arith.constant dense<0.000000e+00> : vector<49x4x8xf32>
    %48 = tpu.matmul %45, %47, %cst_20 {dimension_numbers = #tpu.dot_dimension_numbers<[2], [0], [0, 1], [1], [0, 0, 0, 1, 1, 1], [], []>} : vector<49x4x16xf32>, vector<16x8xf32>, vector<49x4x8xf32> -> vector<49x4x8xf32>
    %49 = arith.addf %44, %48 : vector<49x4x8xf32>
    %50 = vector.extract_strided_slice %25 {offsets = [4, 0, 0], sizes = [49, 4, 16], strides = [1, 1, 1]} : vector<53x4x16xf32> to vector<49x4x16xf32>
    %51 = vector.extract_strided_slice %26 {offsets = [4, 0, 0], sizes = [1, 16, 8], strides = [1, 1, 1]} : vector<5x16x8xf32> to vector<1x16x8xf32>
    %52 = vector.shape_cast %51 : vector<1x16x8xf32> to vector<16x8xf32>
    %cst_21 = arith.constant dense<0.000000e+00> : vector<49x4x8xf32>
    %53 = tpu.matmul %50, %52, %cst_21 {dimension_numbers = #tpu.dot_dimension_numbers<[2], [0], [0, 1], [1], [0, 0, 0, 1, 1, 1], [], []>} : vector<49x4x16xf32>, vector<16x8xf32>, vector<49x4x8xf32> -> vector<49x4x8xf32>
    %54 = arith.addf %49, %53 : vector<49x4x8xf32>
    %cst_22 = arith.constant 0.000000e+00 : f32
    %55 = vector.broadcast %cst_22 : f32 to vector<49x4x8xf32>
    %56 = arith.maximumf %54, %55 : vector<49x4x8xf32>
    %c0_23 = arith.constant 0 : index
    %c0_24 = arith.constant 0 : index
    %c0_25 = arith.constant 0 : index
    %57 = vector.load %arg7[%c0_23, %c0_24, %c0_25] : memref<49x8x32xf32, #tpu.memory_space<vmem>>, vector<49x8x32xf32>
    "tpu.trace_start"() <{level = 10 : i32, message = "lbc,lcf->lbf"}> : () -> ()
    %cst_26 = arith.constant dense<0.000000e+00> : vector<49x4x32xf32>
    %58 = tpu.matmul %56, %57, %cst_26 {dimension_numbers = #tpu.dot_dimension_numbers<[2], [1], [1], [2], [0, 0, 0, 1, 1, 2], [0], [0]>} : vector<49x4x8xf32>, vector<49x8x32xf32>, vector<49x4x32xf32> -> vector<49x4x32xf32>
    "tpu.trace_stop"() : () -> ()
    %cst_27 = arith.constant dense<0.000000e+00> : vector<4x32xf32>
    %59 = vector.multi_reduction <add>, %58, %cst_27 [0] : vector<49x4x32xf32> to vector<4x32xf32>
    %c0_28 = arith.constant 0 : index
    %c0_29 = arith.constant 0 : index
    %60 = vector.load %arg2[%c0_28, %c0_29] : memref<4x2xf32, #tpu.memory_space<vmem>>, vector<4x2xf32>
    %c0_30 = arith.constant 0 : index
    %c0_31 = arith.constant 0 : index
    %61 = vector.load %arg8[%c0_30, %c0_31] : memref<2x32xf32, #tpu.memory_space<vmem>>, vector<2x32xf32>
    %cst_32 = arith.constant dense<0.000000e+00> : vector<4x32xf32>
    %62 = tpu.matmul %60, %61, %cst_32 {dimension_numbers = #tpu.dot_dimension_numbers<[1], [0], [0], [1], [0, 0, 1, 1], [], []>} : vector<4x2xf32>, vector<2x32xf32>, vector<4x32xf32> -> vector<4x32xf32>
    %63 = arith.addf %59, %62 : vector<4x32xf32>
    %c0_33 = arith.constant 0 : index
    %c0_34 = arith.constant 0 : index
    %64 = vector.load %arg9[%c0_33, %c0_34] : memref<1x32xf32, #tpu.memory_space<vmem>>, vector<1x32xf32>
    %65 = vector.broadcast %64 : vector<1x32xf32> to vector<4x32xf32>
    %66 = arith.addf %63, %65 : vector<4x32xf32>
    %cst_35 = arith.constant 0.000000e+00 : f32
    %67 = vector.broadcast %cst_35 : f32 to vector<4x32xf32>
    %68 = arith.maximumf %66, %67 : vector<4x32xf32>
    %c0_36 = arith.constant 0 : index
    %c0_37 = arith.constant 0 : index
    %69 = vector.load %arg10[%c0_36, %c0_37] : memref<32x49xf32, #tpu.memory_space<vmem>>, vector<32x49xf32>
    %cst_38 = arith.constant dense<0.000000e+00> : vector<4x49xf32>
    %70 = tpu.matmul %68, %69, %cst_38 {dimension_numbers = #tpu.dot_dimension_numbers<[1], [0], [0], [1], [0, 0, 1, 1], [], []>} : vector<4x32xf32>, vector<32x49xf32>, vector<4x49xf32> -> vector<4x49xf32>
    %c0_39 = arith.constant 0 : index
    %c0_40 = arith.constant 0 : index
    %71 = vector.load %arg11[%c0_39, %c0_40] : memref<1x49xf32, #tpu.memory_space<vmem>>, vector<1x49xf32>
    %72 = vector.broadcast %71 : vector<1x49xf32> to vector<4x49xf32>
    %73 = arith.addf %70, %72 : vector<4x49xf32>
    %c0_41 = arith.constant 0 : index
    %c0_42 = arith.constant 0 : index
    %74 = vector.load %arg12[%c0_41, %c0_42] : memref<4x49xf32, #tpu.memory_space<vmem>>, vector<4x49xf32>
    tpu.vector_store %arg12[%c0_41, %c0_42], %73 {strides = array<i32>} : memref<4x49xf32, #tpu.memory_space<vmem>>, vector<4x49xf32>,
    return
  }
  func.func @transform_0(%arg0: i32) -> (i32, i32, i32) {
    %c0_i32 = arith.constant 0 : i32
    %c0_i32_0 = arith.constant 0 : i32
    %c0_i32_1 = arith.constant 0 : i32
    return %c0_i32, %arg0, %c0_i32_0 : i32, i32, i32
  }
  func.func @transform_1(%arg0: i32) -> (i32, i32) {
    %c0_i32 = arith.constant 0 : i32
    %c0_i32_0 = arith.constant 0 : i32
    return %arg0, %c0_i32 : i32, i32
  }
  func.func @transform_2(%arg0: i32) -> (i32, i32, i32) {
    %c0_i32 = arith.constant 0 : i32
    %c0_i32_0 = arith.constant 0 : i32
    %c0_i32_1 = arith.constant 0 : i32
    %c0_i32_2 = arith.constant 0 : i32
    return %c0_i32, %c0_i32_0, %c0_i32_1 : i32, i32, i32
  }
  func.func @transform_3(%arg0: i32) -> (i32, i32) {
    %c0_i32 = arith.constant 0 : i32
    %c0_i32_0 = arith.constant 0 : i32
    %c0_i32_1 = arith.constant 0 : i32
    return %c0_i32, %c0_i32_0 : i32, i32
  }
  func.func @transform_4(%arg0: i32) -> (i32, i32, i32) {
    %c0_i32 = arith.constant 0 : i32
    %c0_i32_0 = arith.constant 0 : i32
    %c0_i32_1 = arith.constant 0 : i32
    %c0_i32_2 = arith.constant 0 : i32
    return %c0_i32, %c0_i32_0, %c0_i32_1 : i32, i32, i32
  }
  func.func @transform_5(%arg0: i32) -> (i32, i32) {
    %c0_i32 = arith.constant 0 : i32
    %c0_i32_0 = arith.constant 0 : i32
    %c0_i32_1 = arith.constant 0 : i32
    return %c0_i32, %c0_i32_0 : i32, i32
  }
  func.func @transform_6(%arg0: i32) -> (i32, i32, i32) {
    %c0_i32 = arith.constant 0 : i32
    %c0_i32_0 = arith.constant 0 : i32
    %c0_i32_1 = arith.constant 0 : i32
    %c0_i32_2 = arith.constant 0 : i32
    return %c0_i32, %c0_i32_0, %c0_i32_1 : i32, i32, i32
  }
  func.func @transform_7(%arg0: i32) -> (i32, i32) {
    %c0_i32 = arith.constant 0 : i32
    %c0_i32_0 = arith.constant 0 : i32
    %c0_i32_1 = arith.constant 0 : i32
    return %c0_i32, %c0_i32_0 : i32, i32
  }
  func.func @transform_8(%arg0: i32) -> (i32, i32) {
    %c0_i32 = arith.constant 0 : i32
    %c0_i32_0 = arith.constant 0 : i32
    %c0_i32_1 = arith.constant 0 : i32
    return %c0_i32, %c0_i32_0 : i32, i32
  }
  func.func @transform_9(%arg0: i32) -> (i32, i32) {
    %c0_i32 = arith.constant 0 : i32
    %c0_i32_0 = arith.constant 0 : i32
    %c0_i32_1 = arith.constant 0 : i32
    return %c0_i32, %c0_i32_0 : i32, i32
  }
  func.func @transform_10(%arg0: i32) -> (i32, i32) {
    %c0_i32 = arith.constant 0 : i32
    %c0_i32_0 = arith.constant 0 : i32
    %c0_i32_1 = arith.constant 0 : i32
    return %c0_i32, %c0_i32_0 : i32, i32
  }
  func.func @transform_11(%arg0: i32) -> (i32, i32) {
    %c0_i32 = arith.constant 0 : i32
    %c0_i32_0 = arith.constant 0 : i32
    return %arg0, %c0_i32 : i32, i32
  }
}

</mosaic_0001>

<llo_original>
// kernel: tpu_custom_call.1
$region0: #{tpu_custom_call.1}
  #allocation0 [shape = 'u32[]', space=smem, size = 0x4, offset = 0x4, fixed_abs, tag = 'smem constant byte address 0x4 - core index']
  #allocation1 [shape = 'u32[144,128]{1,0:T(1,128)}', space=vmem, size = 0x12000, scoped, tag = 'internal scratch']
  %s0 = inlined_call_operand.vmem [shape: f32[49,4,2], index: 0, kind: input, shape index: {}]
  %s1 = inlined_call_operand.vmem [shape: f32[4,2], index: 1, kind: input, shape index: {}]
  %s2 = inlined_call_operand.vmem [shape: f32[3,2,16], index: 2, kind: input, shape index: {}]
  %s3 = inlined_call_operand.vmem [shape: f32[1,16], index: 3, kind: input, shape index: {}]
  %s4 = inlined_call_operand.vmem [shape: f32[5,16,8], index: 4, kind: input, shape index: {}]
  %s5 = inlined_call_operand.vmem [shape: f32[1,8], index: 5, kind: input, shape index: {}]
  %s6 = inlined_call_operand.vmem [shape: f32[49,8,32], index: 6, kind: input, shape index: {}]
  %s7 = inlined_call_operand.vmem [shape: f32[2,32], index: 7, kind: input, shape index: {}]
  %s8 = inlined_call_operand.vmem [shape: f32[1,32], index: 8, kind: input, shape index: {}]
  %s9 = inlined_call_operand.vmem [shape: f32[32,49], index: 9, kind: input, shape index: {}]
  %s10 = inlined_call_operand.vmem [shape: f32[1,49], index: 10, kind: input, shape index: {}]
  %s11 = inlined_call_operand.hbm [shape: f32[4,49], index: 11, kind: output, shape index: {}]
  %s12 = sld [smem:[#allocation0]]
  $region54: #{tpu_custom_call.1} parent=0
    _
  %s14 = ssub.s32 1, %s12
  %s15 = scalar_select 0, %s14, %s12
  $region1: #{tpu_custom_call.1} parent=0
    #allocation2 [shape = 'u8[2048]{0}', space=vmem, size = 0x800, scoped, tag = 'output window, operand 0, single buffered']
    #allocation3 [shape = 's32[1]{0}', space=sflag, size = 0x4, scoped, tag = 'scoped memory for tpu_custom_call.1']
    %16 = vsyncpa [#allocation3], 0
    // Predicated region
    $region2: #{tpu_custom_call.1} parent=1 // pred_check
      _
    $region3: #{tpu_custom_call.1} parent=1 // pred_check_branch
      %18 = sbr.rel (0) target = $region5
    $region4: #{tpu_custom_call.1} parent=1 // pred_region
      _
    $region5: #{tpu_custom_call.1} parent=1 // pred_fallthru
      _
    // Predicated region
    $region6: #{tpu_custom_call.1} parent=1 // pred_check
      _
    $region7: #{tpu_custom_call.1} parent=1 // pred_check_branch
      %20 = sbr.rel (0) target = $region9
    $region8: #{tpu_custom_call.1} parent=1 // pred_region
      _
    $region9: #{tpu_custom_call.1} parent=1 // pred_fallthru
      _
    // Predicated region
    $region10: #{tpu_custom_call.1} parent=1 // pred_check
      _
    $region11: #{tpu_custom_call.1} parent=1 // pred_check_branch
      %22 = sbr.rel (0) target = $region13
    $region12: #{tpu_custom_call.1} parent=1 // pred_region
      _
    $region13: #{tpu_custom_call.1} parent=1 // pred_fallthru
      _
    // Predicated region
    $region14: #{tpu_custom_call.1} parent=1 // pred_check
      _
    $region15: #{tpu_custom_call.1} parent=1 // pred_check_branch
      %24 = sbr.rel (0) target = $region17
    $region16: #{tpu_custom_call.1} parent=1 // pred_region
      _
    $region17: #{tpu_custom_call.1} parent=1 // pred_fallthru
      _
    // Predicated region
    $region18: #{tpu_custom_call.1} parent=1 // pred_check
      _
    $region19: #{tpu_custom_call.1} parent=1 // pred_check_branch
      %26 = sbr.rel (0) target = $region21
    $region20: #{tpu_custom_call.1} parent=1 // pred_region
      _
    $region21: #{tpu_custom_call.1} parent=1 // pred_fallthru
      _
    // Predicated region
    $region22: #{tpu_custom_call.1} parent=1 // pred_check
      _
    $region23: #{tpu_custom_call.1} parent=1 // pred_check_branch
      %28 = sbr.rel (0) target = $region25
    $region24: #{tpu_custom_call.1} parent=1 // pred_region
      _
    $region25: #{tpu_custom_call.1} parent=1 // pred_fallthru
      _
    // Predicated region
    $region26: #{tpu_custom_call.1} parent=1 // pred_check
      _
    $region27: #{tpu_custom_call.1} parent=1 // pred_check_branch
      %30 = sbr.rel (0) target = $region29
    $region28: #{tpu_custom_call.1} parent=1 // pred_region
      _
    $region29: #{tpu_custom_call.1} parent=1 // pred_fallthru
      _
    // Predicated region
    $region30: #{tpu_custom_call.1} parent=1 // pred_check
      _
    $region31: #{tpu_custom_call.1} parent=1 // pred_check_branch
      %32 = sbr.rel (0) target = $region33
    $region32: #{tpu_custom_call.1} parent=1 // pred_region
      _
    $region33: #{tpu_custom_call.1} parent=1 // pred_fallthru
      _
    // Predicated region
    $region34: #{tpu_custom_call.1} parent=1 // pred_check
      _
    $region35: #{tpu_custom_call.1} parent=1 // pred_check_branch
      %34 = sbr.rel (0) target = $region37
    $region36: #{tpu_custom_call.1} parent=1 // pred_region
      _
    $region37: #{tpu_custom_call.1} parent=1 // pred_fallthru
      _
    // Predicated region
    $region38: #{tpu_custom_call.1} parent=1 // pred_check
      _
    $region39: #{tpu_custom_call.1} parent=1 // pred_check_branch
      %36 = sbr.rel (0) target = $region41
    $region40: #{tpu_custom_call.1} parent=1 // pred_region
      _
    $region41: #{tpu_custom_call.1} parent=1 // pred_fallthru
      _
    // Predicated region
    $region42: #{tpu_custom_call.1} parent=1 // pred_check
      _
    $region43: #{tpu_custom_call.1} parent=1 // pred_check_branch
      %38 = sbr.rel (0) target = $region45
    $region44: #{tpu_custom_call.1} parent=1 // pred_region
      _
    $region45: #{tpu_custom_call.1} parent=1 // pred_fallthru
      _
    %v39 = vld [vmem:[%s0] sm:$0xf]
    %v40 = vld [vmem:[%s0 + $0x4] sm:$0xf]
    %v41 = vld [vmem:[%s0 + $0x8] sm:$0xf]
    %v42 = vld [vmem:[%s0 + $0xc] sm:$0xf]
    %v43 = vld [vmem:[%s0 + $0x10] sm:$0xf]
    %v44 = vld [vmem:[%s0 + $0x14] sm:$0xf]
    %v45 = vld [vmem:[%s0 + $0x18] sm:$0xf]
    %v46 = vld [vmem:[%s0 + $0x1c] sm:$0xf]
    %v47 = vld [vmem:[%s0 + $0x20] sm:$0xf]
    %v48 = vld [vmem:[%s0 + $0x24] sm:$0xf]
    %v49 = vld [vmem:[%s0 + $0x28] sm:$0xf]
    %v50 = vld [vmem:[%s0 + $0x2c] sm:$0xf]
    %v51 = vld [vmem:[%s0 + $0x30] sm:$0xf]
    %v52 = vld [vmem:[%s0 + $0x34] sm:$0xf]
    %v53 = vld [vmem:[%s0 + $0x38] sm:$0xf]
    %v54 = vld [vmem:[%s0 + $0x3c] sm:$0xf]
    %v55 = vld [vmem:[%s0 + $0x40] sm:$0xf]
    %v56 = vld [vmem:[%s0 + $0x44] sm:$0xf]
    %v57 = vld [vmem:[%s0 + $0x48] sm:$0xf]
    %v58 = vld [vmem:[%s0 + $0x4c] sm:$0xf]
    %v59 = vld [vmem:[%s0 + $0x50] sm:$0xf]
    %v60 = vld [vmem:[%s0 + $0x54] sm:$0xf]
    %v61 = vld [vmem:[%s0 + $0x58] sm:$0xf]
    %v62 = vld [vmem:[%s0 + $0x5c] sm:$0xf]
    %v63 = vld [vmem:[%s0 + $0x60] sm:$0xf]
    %v64 = vld [vmem:[%s0 + $0x64] sm:$0xf]
    %v65 = vld [vmem:[%s0 + $0x68] sm:$0xf]
    %v66 = vld [vmem:[%s0 + $0x6c] sm:$0xf]
    %v67 = vld [vmem:[%s0 + $0x70] sm:$0xf]
    %v68 = vld [vmem:[%s0 + $0x74] sm:$0xf]
    %v69 = vld [vmem:[%s0 + $0x78] sm:$0xf]
    %v70 = vld [vmem:[%s0 + $0x7c] sm:$0xf]
    %v71 = vld [vmem:[%s0 + $0x80] sm:$0xf]
    %v72 = vld [vmem:[%s0 + $0x84] sm:$0xf]
    %v73 = vld [vmem:[%s0 + $0x88] sm:$0xf]
    %v74 = vld [vmem:[%s0 + $0x8c] sm:$0xf]
    %v75 = vld [vmem:[%s0 + $0x90] sm:$0xf]
    %v76 = vld [vmem:[%s0 + $0x94] sm:$0xf]
    %v77 = vld [vmem:[%s0 + $0x98] sm:$0xf]
    %v78 = vld [vmem:[%s0 + $0x9c] sm:$0xf]
    %v79 = vld [vmem:[%s0 + $0xa0] sm:$0xf]
    %v80 = vld [vmem:[%s0 + $0xa4] sm:$0xf]
    %v81 = vld [vmem:[%s0 + $0xa8] sm:$0xf]
    %v82 = vld [vmem:[%s0 + $0xac] sm:$0xf]
    %v83 = vld [vmem:[%s0 + $0xb0] sm:$0xf]
    %v84 = vld [vmem:[%s0 + $0xb4] sm:$0xf]
    %v85 = vld [vmem:[%s0 + $0xb8] sm:$0xf]
    %v86 = vld [vmem:[%s0 + $0xbc] sm:$0xf]
    %v87 = vld [vmem:[%s0 + $0xc0] sm:$0xf]
    %v88 = vld [vmem:[%s2] sm:$0x3]
    %v89 = vld [vmem:[%s2 + $0x2] sm:$0x3]
    %v90 = vld [vmem:[%s2 + $0x4] sm:$0x3]
    %v91 = vld [vmem:[%s3] sm:$0x1]
    %v93 = vlaneseq
    %v94 = vshrl.u32 %v93, 7
    %v95 = vsub.s32 0, %v94
    %v96 = vrot.slane %v91, %v95
    %v147 = vcombine.low 0.0, %v39
    %v148 = vcombine.low %v40, %v41
    %v149 = vcombine.low %v42, %v43
    %v150 = vcombine.low %v44, %v45
    %v151 = vcombine.low %v46, %v47
    %v152 = vcombine.low %v48, %v49
    %v153 = vcombine.low %v50, %v51
    %v154 = vcombine.low %v52, %v53
    %v155 = vcombine.low %v54, %v55
    %v156 = vcombine.low %v56, %v57
    %v157 = vcombine.low %v58, %v59
    %v158 = vcombine.low %v60, %v61
    %v159 = vcombine.low %v62, %v63
    %v160 = vcombine.low %v64, %v65
    %v161 = vcombine.low %v66, %v67
    %v162 = vcombine.low %v68, %v69
    %v163 = vcombine.low %v70, %v71
    %v164 = vcombine.low %v72, %v73
    %v165 = vcombine.low %v74, %v75
    %v166 = vcombine.low %v76, %v77
    %v167 = vcombine.low %v78, %v79
    %v168 = vcombine.low %v80, %v81
    %v169 = vcombine.low %v82, %v83
    %v170 = vcombine.low %v84, %v85
    %vm171 = vcmask 15360
    %v172 = vsel %vm171, %v147, 0
    %v174 = vsel %vm171, %v148, 0
    %v176 = vsel %vm171, %v149, 0
    %v178 = vsel %vm171, %v150, 0
    %v180 = vsel %vm171, %v151, 0
    %v182 = vsel %vm171, %v152, 0
    %v184 = vsel %vm171, %v153, 0
    %v186 = vsel %vm171, %v154, 0
    %v188 = vsel %vm171, %v155, 0
    %v190 = vsel %vm171, %v156, 0
    %v192 = vsel %vm171, %v157, 0
    %v194 = vsel %vm171, %v158, 0
    %v196 = vsel %vm171, %v159, 0
    %v198 = vsel %vm171, %v160, 0
    %v200 = vsel %vm171, %v161, 0
    %v202 = vsel %vm171, %v162, 0
    %v204 = vsel %vm171, %v163, 0
    %v206 = vsel %vm171, %v164, 0
    %v208 = vsel %vm171, %v165, 0
    %v210 = vsel %vm171, %v166, 0
    %v212 = vsel %vm171, %v167, 0
    %v214 = vsel %vm171, %v168, 0
    %v216 = vsel %vm171, %v169, 0
    %v218 = vsel %vm171, %v170, 0
    %v220 = vsel %vm171, %v86, 0
    %vm222 = vcmask 1041408
    %v224 = vsel %vm222, %v88, 0
    %226 = vmatprep.subr.mxu0 0.0
    %227 = vmatpush1.msra.mxu0 %v224
    %228 = vmatprep.subr.mxu0 0.0
    %229 = vmatpush1.msra.mxu0 0.0
    %230 = vmatprep.subr.mxu0 0.0
    %231 = vmatpush1.msra.mxu0 0.0
    %232 = vmatprep.subr.mxu0 0.0
    %233 = vmatpush1.msra.mxu0 0.0
    %234 = vmatprep.subr.mxu0 0.0
    %235 = vmatpush1.msra.mxu0 0.0
    %236 = vmatprep.subr.mxu0 0.0
    %237 = vmatpush1.msra.mxu0 0.0
    %238 = vmatprep.subr.mxu0 0.0
    %239 = vmatpush1.msra.mxu0 0.0
    %240 = vmatprep.subr.mxu0 0.0
    %241 = vmatpush1.msra.mxu0 0.0
    %242 = vmatprep.subr.mxu0 0.0
    %243 = vmatpush1.msra.mxu0 0.0
    %244 = vmatprep.subr.mxu0 0.0
    %245 = vmatpush1.msra.mxu0 0.0
    %246 = vmatprep.subr.mxu0 0.0
    %247 = vmatpush1.msra.mxu0 0.0
    %248 = vmatprep.subr.mxu0 0.0
    %249 = vmatpush1.msra.mxu0 0.0
    %250 = vmatprep.subr.mxu0 0.0
    %251 = vmatpush1.msra.mxu0 0.0
    %252 = vmatprep.subr.mxu0 0.0
    %253 = vmatpush1.msra.mxu0 0.0
    %254 = vmatprep.subr.mxu0 0.0
    %255 = vmatpush1.msra.mxu0 0.0
    %256 = vmatprep.subr.mxu0 0.0
    %257 = vmatpush1.msra.mxu0 0.0
    %258 = vmatprep.subr.mxu0 0.0
    %259 = vmatpush1.msra.mxu0 0.0
    %260 = vmatprep.subr.mxu0 0.0
    %261 = vmatpush1.msra.mxu0 0.0
    %262 = vmatprep.subr.mxu0 0.0
    %263 = vmatpush1.msra.mxu0 0.0
    %264 = vmatprep.subr.mxu0 0.0
    %265 = vmatpush1.msra.mxu0 0.0
    %266 = vmatprep.subr.mxu0 0.0
    %267 = vmatpush1.msra.mxu0 0.0
    %268 = vmatprep.subr.mxu0 0.0
    %269 = vmatpush1.msra.mxu0 0.0
    %270 = vmatprep.subr.mxu0 0.0
    %271 = vmatpush1.msra.mxu0 0.0
    %272 = vmatprep.subr.mxu0 0.0
    %273 = vmatpush1.msra.mxu0 0.0
    %274 = vmatprep.subr.mxu0 0.0
    %275 = vmatpush1.msra.mxu0 0.0
    %276 = vmatprep.subr.mxu0 0.0
    %277 = vmatpush1.msra.mxu0 0.0
    %278 = vmatprep.subr.mxu0 0.0
    %279 = vmatpush1.msra.mxu0 0.0
    %280 = vmatprep.subr.mxu0 0.0
    %281 = vmatpush1.msra.mxu0 0.0
    %282 = vmatprep.subr.mxu0 0.0
    %283 = vmatpush1.msra.mxu0 0.0
    %284 = vmatprep.subr.mxu0 0.0
    %285 = vmatpush1.msra.mxu0 0.0
    %286 = vmatprep.subr.mxu0 0.0
    %287 = vmatpush1.msra.mxu0 0.0
    %288 = vmatprep.subr.mxu0 0.0
    %289 = vmatpush1.msra.mxu0 0.0
    %290 = vmatprep.mubr.f32.mxu0 0.0
    %291 = vmatmul.mubr.f32.gmra.mrb[0].mxu0 %v172
    %v292 = vpop.f32.mrb[0].mxu0
    %v293 = vadd.f32 0.0, %v292
    %v294 = vpop.f32.mrb[0].mxu0
    %295 = vmatprep.mubr.f32.mxu0 0.0
    %296 = vmatmul.mubr.f32.gmra.mrb[0].mxu0 %v174
    %v297 = vpop.f32.mrb[0].mxu0
    %v298 = vadd.f32 0.0, %v297
    %v299 = vpop.f32.mrb[0].mxu0
    %300 = vmatprep.mubr.f32.mxu0 0.0
    %301 = vmatmul.mubr.f32.gmra.mrb[0].mxu0 %v176
    %v302 = vpop.f32.mrb[0].mxu0
    %v303 = vadd.f32 0.0, %v302
    %v304 = vpop.f32.mrb[0].mxu0
    %305 = vmatprep.mubr.f32.mxu0 0.0
    %306 = vmatmul.mubr.f32.gmra.mrb[0].mxu0 %v178
    %v307 = vpop.f32.mrb[0].mxu0
    %v308 = vadd.f32 0.0, %v307
    %v309 = vpop.f32.mrb[0].mxu0
    %310 = vmatprep.mubr.f32.mxu0 0.0
    %311 = vmatmul.mubr.f32.gmra.mrb[0].mxu0 %v180
    %v312 = vpop.f32.mrb[0].mxu0
    %v313 = vadd.f32 0.0, %v312
    %v314 = vpop.f32.mrb[0].mxu0
    %315 = vmatprep.mubr.f32.mxu0 0.0
    %316 = vmatmul.mubr.f32.gmra.mrb[0].mxu0 %v182
    %v317 = vpop.f32.mrb[0].mxu0
    %v318 = vadd.f32 0.0, %v317
    %v319 = vpop.f32.mrb[0].mxu0
    %320 = vmatprep.mubr.f32.mxu0 0.0
    %321 = vmatmul.mubr.f32.gmra.mrb[0].mxu0 %v184
    %v322 = vpop.f32.mrb[0].mxu0
    %v323 = vadd.f32 0.0, %v322
    %v324 = vpop.f32.mrb[0].mxu0
    %325 = vmatprep.mubr.f32.mxu0 0.0
    %326 = vmatmul.mubr.f32.gmra.mrb[0].mxu0 %v186
    %v327 = vpop.f32.mrb[0].mxu0
    %v328 = vadd.f32 0.0, %v327
    %v329 = vpop.f32.mrb[0].mxu0
    %330 = vmatprep.mubr.f32.mxu0 0.0
    %331 = vmatmul.mubr.f32.gmra.mrb[0].mxu0 %v188
    %v332 = vpop.f32.mrb[0].mxu0
    %v333 = vadd.f32 0.0, %v332
    %v334 = vpop.f32.mrb[0].mxu0
    %335 = vmatprep.mubr.f32.mxu0 0.0
    %336 = vmatmul.mubr.f32.gmra.mrb[0].mxu0 %v190
    %v337 = vpop.f32.mrb[0].mxu0
    %v338 = vadd.f32 0.0, %v337
    %v339 = vpop.f32.mrb[0].mxu0
    %340 = vmatprep.mubr.f32.mxu0 0.0
    %341 = vmatmul.mubr.f32.gmra.mrb[0].mxu0 %v192
    %v342 = vpop.f32.mrb[0].mxu0
    %v343 = vadd.f32 0.0, %v342
    %v344 = vpop.f32.mrb[0].mxu0
    %345 = vmatprep.mubr.f32.mxu0 0.0
    %346 = vmatmul.mubr.f32.gmra.mrb[0].mxu0 %v194
    %v347 = vpop.f32.mrb[0].mxu0
    %v348 = vadd.f32 0.0, %v347
    %v349 = vpop.f32.mrb[0].mxu0
    %350 = vmatprep.mubr.f32.mxu0 0.0
    %351 = vmatmul.mubr.f32.gmra.mrb[0].mxu0 %v196
    %v352 = vpop.f32.mrb[0].mxu0
    %v353 = vadd.f32 0.0, %v352
    %v354 = vpop.f32.mrb[0].mxu0
    %355 = vmatprep.mubr.f32.mxu0 0.0
    %356 = vmatmul.mubr.f32.gmra.mrb[0].mxu0 %v198
    %v357 = vpop.f32.mrb[0].mxu0
    %v358 = vadd.f32 0.0, %v357
    %v359 = vpop.f32.mrb[0].mxu0
    %360 = vmatprep.mubr.f32.mxu0 0.0
    %361 = vmatmul.mubr.f32.gmra.mrb[0].mxu0 %v200
    %v362 = vpop.f32.mrb[0].mxu0
    %v363 = vadd.f32 0.0, %v362
    %v364 = vpop.f32.mrb[0].mxu0
    %365 = vmatprep.mubr.f32.mxu0 0.0
    %366 = vmatmul.mubr.f32.gmra.mrb[0].mxu0 %v202
    %v367 = vpop.f32.mrb[0].mxu0
    %v368 = vadd.f32 0.0, %v367
    %v369 = vpop.f32.mrb[0].mxu0
    %370 = vmatprep.mubr.f32.mxu0 0.0
    %371 = vmatmul.mubr.f32.gmra.mrb[0].mxu0 %v204
    %v372 = vpop.f32.mrb[0].mxu0
    %v373 = vadd.f32 0.0, %v372
    %v374 = vpop.f32.mrb[0].mxu0
    %375 = vmatprep.mubr.f32.mxu0 0.0
    %376 = vmatmul.mubr.f32.gmra.mrb[0].mxu0 %v206
    %v377 = vpop.f32.mrb[0].mxu0
    %v378 = vadd.f32 0.0, %v377
    %v379 = vpop.f32.mrb[0].mxu0
    %380 = vmatprep.mubr.f32.mxu0 0.0
    %381 = vmatmul.mubr.f32.gmra.mrb[0].mxu0 %v208
    %v382 = vpop.f32.mrb[0].mxu0
    %v383 = vadd.f32 0.0, %v382
    %v384 = vpop.f32.mrb[0].mxu0
    %385 = vmatprep.mubr.f32.mxu0 0.0
    %386 = vmatmul.mubr.f32.gmra.mrb[0].mxu0 %v210
    %v387 = vpop.f32.mrb[0].mxu0
    %v388 = vadd.f32 0.0, %v387
    %v389 = vpop.f32.mrb[0].mxu0
    %390 = vmatprep.mubr.f32.mxu0 0.0
    %391 = vmatmul.mubr.f32.gmra.mrb[0].mxu0 %v212
    %v392 = vpop.f32.mrb[0].mxu0
    %v393 = vadd.f32 0.0, %v392
    %v394 = vpop.f32.mrb[0].mxu0
    %395 = vmatprep.mubr.f32.mxu0 0.0
    %396 = vmatmul.mubr.f32.gmra.mrb[0].mxu0 %v214
    %v397 = vpop.f32.mrb[0].mxu0
    %v398 = vadd.f32 0.0, %v397
    %v399 = vpop.f32.mrb[0].mxu0
    %400 = vmatprep.mubr.f32.mxu0 0.0
    %401 = vmatmul.mubr.f32.gmra.mrb[0].mxu0 %v216
    %v402 = vpop.f32.mrb[0].mxu0
    %v403 = vadd.f32 0.0, %v402
    %v404 = vpop.f32.mrb[0].mxu0
    %405 = vmatprep.mubr.f32.mxu0 0.0
    %406 = vmatmul.mubr.f32.gmra.mrb[0].mxu0 %v218
    %v407 = vpop.f32.mrb[0].mxu0
    %v408 = vadd.f32 0.0, %v407
    %v409 = vpop.f32.mrb[0].mxu0
    %410 = vmatprep.mubr.f32.mxu0 0.0
    %411 = vmatmul.mubr.f32.gmra.mrb[0].mxu0 %v220
    %v412 = vpop.f32.mrb[0].mxu0
    %v413 = vadd.f32 0.0, %v412
    %v414 = vpop.f32.mrb[0].mxu0
    %415 = vdwg.mxu0
    %v440 = vcombine.high %v293, %v293
    %v441 = vcombine.high %v298, %v298
    %v442 = vcombine.high %v303, %v303
    %v443 = vcombine.high %v308, %v308
    %v444 = vcombine.high %v313, %v313
    %v445 = vcombine.high %v318, %v318
    %v446 = vcombine.high %v323, %v323
    %v447 = vcombine.high %v328, %v328
    %v448 = vcombine.high %v333, %v333
    %v449 = vcombine.high %v338, %v338
    %v450 = vcombine.high %v343, %v343
    %v451 = vcombine.high %v348, %v348
    %v452 = vcombine.high %v353, %v353
    %v453 = vcombine.high %v358, %v358
    %v454 = vcombine.high %v363, %v363
    %v455 = vcombine.high %v368, %v368
    %v456 = vcombine.high %v373, %v373
    %v457 = vcombine.high %v378, %v378
    %v458 = vcombine.high %v383, %v383
    %v459 = vcombine.high %v388, %v388
    %v460 = vcombine.high %v393, %v393
    %v461 = vcombine.high %v398, %v398
    %v462 = vcombine.high %v403, %v403
    %v463 = vcombine.high %v408, %v408
    %v488 = vadd.f32 %v96, %v293
    %v489 = vadd.f32 %v96, %v440
    %v490 = vadd.f32 %v96, %v298
    %v491 = vadd.f32 %v96, %v441
    %v492 = vadd.f32 %v96, %v303
    %v493 = vadd.f32 %v96, %v442
    %v494 = vadd.f32 %v96, %v308
    %v495 = vadd.f32 %v96, %v443
    %v496 = vadd.f32 %v96, %v313
    %v497 = vadd.f32 %v96, %v444
    %v498 = vadd.f32 %v96, %v318
    %v499 = vadd.f32 %v96, %v445
    %v500 = vadd.f32 %v96, %v323
    %v501 = vadd.f32 %v96, %v446
    %v502 = vadd.f32 %v96, %v328
    %v503 = vadd.f32 %v96, %v447
    %v504 = vadd.f32 %v96, %v333
    %v505 = vadd.f32 %v96, %v448
    %v506 = vadd.f32 %v96, %v338
    %v507 = vadd.f32 %v96, %v449
    %v508 = vadd.f32 %v96, %v343
    %v509 = vadd.f32 %v96, %v450
    %v510 = vadd.f32 %v96, %v348
    %v511 = vadd.f32 %v96, %v451
    %v512 = vadd.f32 %v96, %v353
    %v513 = vadd.f32 %v96, %v452
    %v514 = vadd.f32 %v96, %v358
    %v515 = vadd.f32 %v96, %v453
    %v516 = vadd.f32 %v96, %v363
    %v517 = vadd.f32 %v96, %v454
    %v518 = vadd.f32 %v96, %v368
    %v519 = vadd.f32 %v96, %v455
    %v520 = vadd.f32 %v96, %v373
    %v521 = vadd.f32 %v96, %v456
    %v522 = vadd.f32 %v96, %v378
    %v523 = vadd.f32 %v96, %v457
    %v524 = vadd.f32 %v96, %v383
    %v525 = vadd.f32 %v96, %v458
    %v526 = vadd.f32 %v96, %v388
    %v527 = vadd.f32 %v96, %v459
    %v528 = vadd.f32 %v96, %v393
    %v529 = vadd.f32 %v96, %v460
    %v530 = vadd.f32 %v96, %v398
    %v531 = vadd.f32 %v96, %v461
    %v532 = vadd.f32 %v96, %v403
    %v533 = vadd.f32 %v96, %v462
    %v534 = vadd.f32 %v96, %v408
    %v535 = vadd.f32 %v96, %v463
    %v536 = vadd.f32 %v96, %v413
    %v538 = vcombine.low %v39, %v40
    %v539 = vcombine.low %v41, %v42
    %v540 = vcombine.low %v43, %v44
    %v541 = vcombine.low %v45, %v46
    %v542 = vcombine.low %v47, %v48
    %v543 = vcombine.low %v49, %v50
    %v544 = vcombine.low %v51, %v52
    %v545 = vcombine.low %v53, %v54
    %v546 = vcombine.low %v55, %v56
    %v547 = vcombine.low %v57, %v58
    %v548 = vcombine.low %v59, %v60
    %v549 = vcombine.low %v61, %v62
    %v550 = vcombine.low %v63, %v64
    %v551 = vcombine.low %v65, %v66
    %v552 = vcombine.low %v67, %v68
    %v553 = vcombine.low %v69, %v70
    %v554 = vcombine.low %v71, %v72
    %v555 = vcombine.low %v73, %v74
    %v556 = vcombine.low %v75, %v76
    %v557 = vcombine.low %v77, %v78
    %v558 = vcombine.low %v79, %v80
    %v559 = vcombine.low %v81, %v82
    %v560 = vcombine.low %v83, %v84
    %v561 = vcombine.low %v85, %v86
    %v562 = vsel %vm171, %v538, 0
    %v564 = vsel %vm171, %v539, 0
    %v566 = vsel %vm171, %v540, 0
    %v568 = vsel %vm171, %v541, 0
    %v570 = vsel %vm171, %v542, 0
    %v572 = vsel %vm171, %v543, 0
    %v574 = vsel %vm171, %v544, 0
    %v576 = vsel %vm171, %v545, 0
    %v578 = vsel %vm171, %v546, 0
    %v580 = vsel %vm171, %v547, 0
    %v582 = vsel %vm171, %v548, 0
    %v584 = vsel %vm171, %v549, 0
    %v586 = vsel %vm171, %v550, 0
    %v588 = vsel %vm171, %v551, 0
    %v590 = vsel %vm171, %v552, 0
    %v592 = vsel %vm171, %v553, 0
    %v594 = vsel %vm171, %v554, 0
    %v596 = vsel %vm171, %v555, 0
    %v598 = vsel %vm171, %v556, 0
    %v600 = vsel %vm171, %v557, 0
    %v602 = vsel %vm171, %v558, 0
    %v604 = vsel %vm171, %v559, 0
    %v606 = vsel %vm171, %v560, 0
    %v608 = vsel %vm171, %v561, 0
    %v610 = vsel %vm171, %v87, 0
    %v613 = vsel %vm222, %v89, 0
    %615 = vmatprep.subr.mxu0 0.0
    %616 = vmatpush1.msra.mxu0 %v613
    %617 = vmatprep.subr.mxu0 0.0
    %618 = vmatpush1.msra.mxu0 0.0
    %619 = vmatprep.subr.mxu0 0.0
    %620 = vmatpush1.msra.mxu0 0.0
    %621 = vmatprep.subr.mxu0 0.0
    %622 = vmatpush1.msra.mxu0 0.0
    %623 = vmatprep.subr.mxu0 0.0
    %624 = vmatpush1.msra.mxu0 0.0
    %625 = vmatprep.subr.mxu0 0.0
    %626 = vmatpush1.msra.mxu0 0.0
    %627 = vmatprep.subr.mxu0 0.0
    %628 = vmatpush1.msra.mxu0 0.0
    %629 = vmatprep.subr.mxu0 0.0
    %630 = vmatpush1.msra.mxu0 0.0
    %631 = vmatprep.subr.mxu0 0.0
    %632 = vmatpush1.msra.mxu0 0.0
    %633 = vmatprep.subr.mxu0 0.0
    %634 = vmatpush1.msra.mxu0 0.0
    %635 = vmatprep.subr.mxu0 0.0
    %636 = vmatpush1.msra.mxu0 0.0
    %637 = vmatprep.subr.mxu0 0.0
    %638 = vmatpush1.msra.mxu0 0.0
    %639 = vmatprep.subr.mxu0 0.0
    %640 = vmatpush1.msra.mxu0 0.0
    %641 = vmatprep.subr.mxu0 0.0
    %642 = vmatpush1.msra.mxu0 0.0
    %643 = vmatprep.subr.mxu0 0.0
    %644 = vmatpush1.msra.mxu0 0.0
    %645 = vmatprep.subr.mxu0 0.0
    %646 = vmatpush1.msra.mxu0 0.0
    %647 = vmatprep.subr.mxu0 0.0
    %648 = vmatpush1.msra.mxu0 0.0
    %649 = vmatprep.subr.mxu0 0.0
    %650 = vmatpush1.msra.mxu0 0.0
    %651 = vmatprep.subr.mxu0 0.0
    %652 = vmatpush1.msra.mxu0 0.0
    %653 = vmatprep.subr.mxu0 0.0
    %654 = vmatpush1.msra.mxu0 0.0
    %655 = vmatprep.subr.mxu0 0.0
    %656 = vmatpush1.msra.mxu0 0.0
    %657 = vmatprep.subr.mxu0 0.0
    %658 = vmatpush1.msra.mxu0 0.0
    %659 = vmatprep.subr.mxu0 0.0
    %660 = vmatpush1.msra.mxu0 0.0
    %661 = vmatprep.subr.mxu0 0.0
    %662 = vmatpush1.msra.mxu0 0.0
    %663 = vmatprep.subr.mxu0 0.0
    %664 = vmatpush1.msra.mxu0 0.0
    %665 = vmatprep.subr.mxu0 0.0
    %666 = vmatpush1.msra.mxu0 0.0
    %667 = vmatprep.subr.mxu0 0.0
    %668 = vmatpush1.msra.mxu0 0.0
    %669 = vmatprep.subr.mxu0 0.0
    %670 = vmatpush1.msra.mxu0 0.0
    %671 = vmatprep.subr.mxu0 0.0
    %672 = vmatpush1.msra.mxu0 0.0
    %673 = vmatprep.subr.mxu0 0.0
    %674 = vmatpush1.msra.mxu0 0.0
    %675 = vmatprep.subr.mxu0 0.0
    %676 = vmatpush1.msra.mxu0 0.0
    %677 = vmatprep.subr.mxu0 0.0
    %678 = vmatpush1.msra.mxu0 0.0
    %679 = vmatprep.mubr.f32.mxu0 0.0
    %680 = vmatmul.mubr.f32.gmra.mrb[0].mxu0 %v562
    %v681 = vpop.f32.mrb[0].mxu0
    %v682 = vadd.f32 0.0, %v681
    %v683 = vpop.f32.mrb[0].mxu0
    %684 = vmatprep.mubr.f32.mxu0 0.0
    %685 = vmatmul.mubr.f32.gmra.mrb[0].mxu0 %v564
    %v686 = vpop.f32.mrb[0].mxu0
    %v687 = vadd.f32 0.0, %v686
    %v688 = vpop.f32.mrb[0].mxu0
    %689 = vmatprep.mubr.f32.mxu0 0.0
    %690 = vmatmul.mubr.f32.gmra.mrb[0].mxu0 %v566
    %v691 = vpop.f32.mrb[0].mxu0
    %v692 = vadd.f32 0.0, %v691
    %v693 = vpop.f32.mrb[0].mxu0
    %694 = vmatprep.mubr.f32.mxu0 0.0
    %695 = vmatmul.mubr.f32.gmra.mrb[0].mxu0 %v568
    %v696 = vpop.f32.mrb[0].mxu0
    %v697 = vadd.f32 0.0, %v696
    %v698 = vpop.f32.mrb[0].mxu0
    %699 = vmatprep.mubr.f32.mxu0 0.0
    %700 = vmatmul.mubr.f32.gmra.mrb[0].mxu0 %v570
    %v701 = vpop.f32.mrb[0].mxu0
    %v702 = vadd.f32 0.0, %v701
    %v703 = vpop.f32.mrb[0].mxu0
    %704 = vmatprep.mubr.f32.mxu0 0.0
    %705 = vmatmul.mubr.f32.gmra.mrb[0].mxu0 %v572
    %v706 = vpop.f32.mrb[0].mxu0
    %v707 = vadd.f32 0.0, %v706
    %v708 = vpop.f32.mrb[0].mxu0
    %709 = vmatprep.mubr.f32.mxu0 0.0
    %710 = vmatmul.mubr.f32.gmra.mrb[0].mxu0 %v574
    %v711 = vpop.f32.mrb[0].mxu0
    %v712 = vadd.f32 0.0, %v711
    %v713 = vpop.f32.mrb[0].mxu0
    %714 = vmatprep.mubr.f32.mxu0 0.0
    %715 = vmatmul.mubr.f32.gmra.mrb[0].mxu0 %v576
    %v716 = vpop.f32.mrb[0].mxu0
    %v717 = vadd.f32 0.0, %v716
    %v718 = vpop.f32.mrb[0].mxu0
    %719 = vmatprep.mubr.f32.mxu0 0.0
    %720 = vmatmul.mubr.f32.gmra.mrb[0].mxu0 %v578
    %v721 = vpop.f32.mrb[0].mxu0
    %v722 = vadd.f32 0.0, %v721
    %v723 = vpop.f32.mrb[0].mxu0
    %724 = vmatprep.mubr.f32.mxu0 0.0
    %725 = vmatmul.mubr.f32.gmra.mrb[0].mxu0 %v580
    %v726 = vpop.f32.mrb[0].mxu0
    %v727 = vadd.f32 0.0, %v726
    %v728 = vpop.f32.mrb[0].mxu0
    %729 = vmatprep.mubr.f32.mxu0 0.0
    %730 = vmatmul.mubr.f32.gmra.mrb[0].mxu0 %v582
    %v731 = vpop.f32.mrb[0].mxu0
    %v732 = vadd.f32 0.0, %v731
    %v733 = vpop.f32.mrb[0].mxu0
    %734 = vmatprep.mubr.f32.mxu0 0.0
    %735 = vmatmul.mubr.f32.gmra.mrb[0].mxu0 %v584
    %v736 = vpop.f32.mrb[0].mxu0
    %v737 = vadd.f32 0.0, %v736
    %v738 = vpop.f32.mrb[0].mxu0
    %739 = vmatprep.mubr.f32.mxu0 0.0
    %740 = vmatmul.mubr.f32.gmra.mrb[0].mxu0 %v586
    %v741 = vpop.f32.mrb[0].mxu0
    %v742 = vadd.f32 0.0, %v741
    %v743 = vpop.f32.mrb[0].mxu0
    %744 = vmatprep.mubr.f32.mxu0 0.0
    %745 = vmatmul.mubr.f32.gmra.mrb[0].mxu0 %v588
    %v746 = vpop.f32.mrb[0].mxu0
    %v747 = vadd.f32 0.0, %v746
    %v748 = vpop.f32.mrb[0].mxu0
    %749 = vmatprep.mubr.f32.mxu0 0.0
    %750 = vmatmul.mubr.f32.gmra.mrb[0].mxu0 %v590
    %v751 = vpop.f32.mrb[0].mxu0
    %v752 = vadd.f32 0.0, %v751
    %v753 = vpop.f32.mrb[0].mxu0
    %754 = vmatprep.mubr.f32.mxu0 0.0
    %755 = vmatmul.mubr.f32.gmra.mrb[0].mxu0 %v592
    %v756 = vpop.f32.mrb[0].mxu0
    %v757 = vadd.f32 0.0, %v756
    %v758 = vpop.f32.mrb[0].mxu0
    %759 = vmatprep.mubr.f32.mxu0 0.0
    %760 = vmatmul.mubr.f32.gmra.mrb[0].mxu0 %v594
    %v761 = vpop.f32.mrb[0].mxu0
    %v762 = vadd.f32 0.0, %v761
    %v763 = vpop.f32.mrb[0].mxu0
    %764 = vmatprep.mubr.f32.mxu0 0.0
    %765 = vmatmul.mubr.f32.gmra.mrb[0].mxu0 %v596
    %v766 = vpop.f32.mrb[0].mxu0
    %v767 = vadd.f32 0.0, %v766
    %v768 = vpop.f32.mrb[0].mxu0
    %769 = vmatprep.mubr.f32.mxu0 0.0
    %770 = vmatmul.mubr.f32.gmra.mrb[0].mxu0 %v598
    %v771 = vpop.f32.mrb[0].mxu0
    %v772 = vadd.f32 0.0, %v771
    %v773 = vpop.f32.mrb[0].mxu0
    %774 = vmatprep.mubr.f32.mxu0 0.0
    %775 = vmatmul.mubr.f32.gmra.mrb[0].mxu0 %v600
    %v776 = vpop.f32.mrb[0].mxu0
    %v777 = vadd.f32 0.0, %v776
    %v778 = vpop.f32.mrb[0].mxu0
    %779 = vmatprep.mubr.f32.mxu0 0.0
    %780 = vmatmul.mubr.f32.gmra.mrb[0].mxu0 %v602
    %v781 = vpop.f32.mrb[0].mxu0
    %v782 = vadd.f32 0.0, %v781
    %v783 = vpop.f32.mrb[0].mxu0
    %784 = vmatprep.mubr.f32.mxu0 0.0
    %785 = vmatmul.mubr.f32.gmra.mrb[0].mxu0 %v604
    %v786 = vpop.f32.mrb[0].mxu0
    %v787 = vadd.f32 0.0, %v786
    %v788 = vpop.f32.mrb[0].mxu0
    %789 = vmatprep.mubr.f32.mxu0 0.0
    %790 = vmatmul.mubr.f32.gmra.mrb[0].mxu0 %v606
    %v791 = vpop.f32.mrb[0].mxu0
    %v792 = vadd.f32 0.0, %v791
    %v793 = vpop.f32.mrb[0].mxu0
    %794 = vmatprep.mubr.f32.mxu0 0.0
    %795 = vmatmul.mubr.f32.gmra.mrb[0].mxu0 %v608
    %v796 = vpop.f32.mrb[0].mxu0
    %v797 = vadd.f32 0.0, %v796
    %v798 = vpop.f32.mrb[0].mxu0
    %799 = vmatprep.mubr.f32.mxu0 0.0
    %800 = vmatmul.mubr.f32.gmra.mrb[0].mxu0 %v610
    %v801 = vpop.f32.mrb[0].mxu0
    %v802 = vadd.f32 0.0, %v801
    %v803 = vpop.f32.mrb[0].mxu0
    %804 = vdwg.mxu0
    %v829 = vcombine.high %v682, %v682
    %v830 = vcombine.high %v687, %v687
    %v831 = vcombine.high %v692, %v692
    %v832 = vcombine.high %v697, %v697
    %v833 = vcombine.high %v702, %v702
    %v834 = vcombine.high %v707, %v707
    %v835 = vcombine.high %v712, %v712
    %v836 = vcombine.high %v717, %v717
    %v837 = vcombine.high %v722, %v722
    %v838 = vcombine.high %v727, %v727
    %v839 = vcombine.high %v732, %v732
    %v840 = vcombine.high %v737, %v737
    %v841 = vcombine.high %v742, %v742
    %v842 = vcombine.high %v747, %v747
    %v843 = vcombine.high %v752, %v752
    %v844 = vcombine.high %v757, %v757
    %v845 = vcombine.high %v762, %v762
    %v846 = vcombine.high %v767, %v767
    %v847 = vcombine.high %v772, %v772
    %v848 = vcombine.high %v777, %v777
    %v849 = vcombine.high %v782, %v782
    %v850 = vcombine.high %v787, %v787
    %v851 = vcombine.high %v792, %v792
    %v852 = vcombine.high %v797, %v797
    %v877 = vadd.f32 %v488, %v682
    %v878 = vadd.f32 %v489, %v829
    %v879 = vadd.f32 %v490, %v687
    %v880 = vadd.f32 %v491, %v830
    %v881 = vadd.f32 %v492, %v692
    %v882 = vadd.f32 %v493, %v831
    %v883 = vadd.f32 %v494, %v697
    %v884 = vadd.f32 %v495, %v832
    %v885 = vadd.f32 %v496, %v702
    %v886 = vadd.f32 %v497, %v833
    %v887 = vadd.f32 %v498, %v707
    %v888 = vadd.f32 %v499, %v834
    %v889 = vadd.f32 %v500, %v712
    %v890 = vadd.f32 %v501, %v835
    %v891 = vadd.f32 %v502, %v717
    %v892 = vadd.f32 %v503, %v836
    %v893 = vadd.f32 %v504, %v722
    %v894 = vadd.f32 %v505, %v837
    %v895 = vadd.f32 %v506, %v727
    %v896 = vadd.f32 %v507, %v838
    %v897 = vadd.f32 %v508, %v732
    %v898 = vadd.f32 %v509, %v839
    %v899 = vadd.f32 %v510, %v737
    %v900 = vadd.f32 %v511, %v840
    %v901 = vadd.f32 %v512, %v742
    %v902 = vadd.f32 %v513, %v841
    %v903 = vadd.f32 %v514, %v747
    %v904 = vadd.f32 %v515, %v842
    %v905 = vadd.f32 %v516, %v752
    %v906 = vadd.f32 %v517, %v843
    %v907 = vadd.f32 %v518, %v757
    %v908 = vadd.f32 %v519, %v844
    %v909 = vadd.f32 %v520, %v762
    %v910 = vadd.f32 %v521, %v845
    %v911 = vadd.f32 %v522, %v767
    %v912 = vadd.f32 %v523, %v846
    %v913 = vadd.f32 %v524, %v772
    %v914 = vadd.f32 %v525, %v847
    %v915 = vadd.f32 %v526, %v777
    %v916 = vadd.f32 %v527, %v848
    %v917 = vadd.f32 %v528, %v782
    %v918 = vadd.f32 %v529, %v849
    %v919 = vadd.f32 %v530, %v787
    %v920 = vadd.f32 %v531, %v850
    %v921 = vadd.f32 %v532, %v792
    %v922 = vadd.f32 %v533, %v851
    %v923 = vadd.f32 %v534, %v797
    %v924 = vadd.f32 %v535, %v852
    %v925 = vadd.f32 %v536, %v802
    %v926 = vcombine.low %v86, %v87
    %v927 = vsel %vm171, %v926, 0
    %v929 = vsel %vm171, 0.0, 0
    %v932 = vsel %vm222, %v90, 0
    %934 = vmatprep.subr.mxu0 0.0
    %935 = vmatpush1.msra.mxu0 %v932
    %936 = vmatprep.subr.mxu0 0.0
    %937 = vmatpush1.msra.mxu0 0.0
    %938 = vmatprep.subr.mxu0 0.0
    %939 = vmatpush1.msra.mxu0 0.0
    %940 = vmatprep.subr.mxu0 0.0
    %941 = vmatpush1.msra.mxu0 0.0
    %942 = vmatprep.subr.mxu0 0.0
    %943 = vmatpush1.msra.mxu0 0.0
    %944 = vmatprep.subr.mxu0 0.0
    %945 = vmatpush1.msra.mxu0 0.0
    %946 = vmatprep.subr.mxu0 0.0
    %947 = vmatpush1.msra.mxu0 0.0
    %948 = vmatprep.subr.mxu0 0.0
    %949 = vmatpush1.msra.mxu0 0.0
    %950 = vmatprep.subr.mxu0 0.0
    %951 = vmatpush1.msra.mxu0 0.0
    %952 = vmatprep.subr.mxu0 0.0
    %953 = vmatpush1.msra.mxu0 0.0
    %954 = vmatprep.subr.mxu0 0.0
    %955 = vmatpush1.msra.mxu0 0.0
    %956 = vmatprep.subr.mxu0 0.0
    %957 = vmatpush1.msra.mxu0 0.0
    %958 = vmatprep.subr.mxu0 0.0
    %959 = vmatpush1.msra.mxu0 0.0
    %960 = vmatprep.subr.mxu0 0.0
    %961 = vmatpush1.msra.mxu0 0.0
    %962 = vmatprep.subr.mxu0 0.0
    %963 = vmatpush1.msra.mxu0 0.0
    %964 = vmatprep.subr.mxu0 0.0
    %965 = vmatpush1.msra.mxu0 0.0
    %966 = vmatprep.subr.mxu0 0.0
    %967 = vmatpush1.msra.mxu0 0.0
    %968 = vmatprep.subr.mxu0 0.0
    %969 = vmatpush1.msra.mxu0 0.0
    %970 = vmatprep.subr.mxu0 0.0
    %971 = vmatpush1.msra.mxu0 0.0
    %972 = vmatprep.subr.mxu0 0.0
    %973 = vmatpush1.msra.mxu0 0.0
    %974 = vmatprep.subr.mxu0 0.0
    %975 = vmatpush1.msra.mxu0 0.0
    %976 = vmatprep.subr.mxu0 0.0
    %977 = vmatpush1.msra.mxu0 0.0
    %978 = vmatprep.subr.mxu0 0.0
    %979 = vmatpush1.msra.mxu0 0.0
    %980 = vmatprep.subr.mxu0 0.0
    %981 = vmatpush1.msra.mxu0 0.0
    %982 = vmatprep.subr.mxu0 0.0
    %983 = vmatpush1.msra.mxu0 0.0
    %984 = vmatprep.subr.mxu0 0.0
    %985 = vmatpush1.msra.mxu0 0.0
    %986 = vmatprep.subr.mxu0 0.0
    %987 = vmatpush1.msra.mxu0 0.0
    %988 = vmatprep.subr.mxu0 0.0
    %989 = vmatpush1.msra.mxu0 0.0
    %990 = vmatprep.subr.mxu0 0.0
    %991 = vmatpush1.msra.mxu0 0.0
    %992 = vmatprep.subr.mxu0 0.0
    %993 = vmatpush1.msra.mxu0 0.0
    %994 = vmatprep.subr.mxu0 0.0
    %995 = vmatpush1.msra.mxu0 0.0
    %996 = vmatprep.subr.mxu0 0.0
    %997 = vmatpush1.msra.mxu0 0.0
    %998 = vmatprep.mubr.f32.mxu0 0.0
    %999 = vmatmul.mubr.f32.gmra.mrb[0].mxu0 %v174
    %v1000 = vpop.f32.mrb[0].mxu0
    %v1001 = vadd.f32 0.0, %v1000
    %v1002 = vpop.f32.mrb[0].mxu0
    %1003 = vmatprep.mubr.f32.mxu0 0.0
    %1004 = vmatmul.mubr.f32.gmra.mrb[0].mxu0 %v176
    %v1005 = vpop.f32.mrb[0].mxu0
    %v1006 = vadd.f32 0.0, %v1005
    %v1007 = vpop.f32.mrb[0].mxu0
    %1008 = vmatprep.mubr.f32.mxu0 0.0
    %1009 = vmatmul.mubr.f32.gmra.mrb[0].mxu0 %v178
    %v1010 = vpop.f32.mrb[0].mxu0
    %v1011 = vadd.f32 0.0, %v1010
    %v1012 = vpop.f32.mrb[0].mxu0
    %1013 = vmatprep.mubr.f32.mxu0 0.0
    %1014 = vmatmul.mubr.f32.gmra.mrb[0].mxu0 %v180
    %v1015 = vpop.f32.mrb[0].mxu0
    %v1016 = vadd.f32 0.0, %v1015
    %v1017 = vpop.f32.mrb[0].mxu0
    %1018 = vmatprep.mubr.f32.mxu0 0.0
    %1019 = vmatmul.mubr.f32.gmra.mrb[0].mxu0 %v182
    %v1020 = vpop.f32.mrb[0].mxu0
    %v1021 = vadd.f32 0.0, %v1020
    %v1022 = vpop.f32.mrb[0].mxu0
    %1023 = vmatprep.mubr.f32.mxu0 0.0
    %1024 = vmatmul.mubr.f32.gmra.mrb[0].mxu0 %v184
    %v1025 = vpop.f32.mrb[0].mxu0
    %v1026 = vadd.f32 0.0, %v1025
    %v1027 = vpop.f32.mrb[0].mxu0
    %1028 = vmatprep.mubr.f32.mxu0 0.0
    %1029 = vmatmul.mubr.f32.gmra.mrb[0].mxu0 %v186
    %v1030 = vpop.f32.mrb[0].mxu0
    %v1031 = vadd.f32 0.0, %v1030
    %v1032 = vpop.f32.mrb[0].mxu0
    %1033 = vmatprep.mubr.f32.mxu0 0.0
    %1034 = vmatmul.mubr.f32.gmra.mrb[0].mxu0 %v188
    %v1035 = vpop.f32.mrb[0].mxu0
    %v1036 = vadd.f32 0.0, %v1035
    %v1037 = vpop.f32.mrb[0].mxu0
    %1038 = vmatprep.mubr.f32.mxu0 0.0
    %1039 = vmatmul.mubr.f32.gmra.mrb[0].mxu0 %v190
    %v1040 = vpop.f32.mrb[0].mxu0
    %v1041 = vadd.f32 0.0, %v1040
    %v1042 = vpop.f32.mrb[0].mxu0
    %1043 = vmatprep.mubr.f32.mxu0 0.0
    %1044 = vmatmul.mubr.f32.gmra.mrb[0].mxu0 %v192
    %v1045 = vpop.f32.mrb[0].mxu0
    %v1046 = vadd.f32 0.0, %v1045
    %v1047 = vpop.f32.mrb[0].mxu0
    %1048 = vmatprep.mubr.f32.mxu0 0.0
    %1049 = vmatmul.mubr.f32.gmra.mrb[0].mxu0 %v194
    %v1050 = vpop.f32.mrb[0].mxu0
    %v1051 = vadd.f32 0.0, %v1050
    %v1052 = vpop.f32.mrb[0].mxu0
    %1053 = vmatprep.mubr.f32.mxu0 0.0
    %1054 = vmatmul.mubr.f32.gmra.mrb[0].mxu0 %v196
    %v1055 = vpop.f32.mrb[0].mxu0
    %v1056 = vadd.f32 0.0, %v1055
    %v1057 = vpop.f32.mrb[0].mxu0
    %1058 = vmatprep.mubr.f32.mxu0 0.0
    %1059 = vmatmul.mubr.f32.gmra.mrb[0].mxu0 %v198
    %v1060 = vpop.f32.mrb[0].mxu0
    %v1061 = vadd.f32 0.0, %v1060
    %v1062 = vpop.f32.mrb[0].mxu0
    %1063 = vmatprep.mubr.f32.mxu0 0.0
    %1064 = vmatmul.mubr.f32.gmra.mrb[0].mxu0 %v200
    %v1065 = vpop.f32.mrb[0].mxu0
    %v1066 = vadd.f32 0.0, %v1065
    %v1067 = vpop.f32.mrb[0].mxu0
    %1068 = vmatprep.mubr.f32.mxu0 0.0
    %1069 = vmatmul.mubr.f32.gmra.mrb[0].mxu0 %v202
    %v1070 = vpop.f32.mrb[0].mxu0
    %v1071 = vadd.f32 0.0, %v1070
    %v1072 = vpop.f32.mrb[0].mxu0
    %1073 = vmatprep.mubr.f32.mxu0 0.0
    %1074 = vmatmul.mubr.f32.gmra.mrb[0].mxu0 %v204
    %v1075 = vpop.f32.mrb[0].mxu0
    %v1076 = vadd.f32 0.0, %v1075
    %v1077 = vpop.f32.mrb[0].mxu0
    %1078 = vmatprep.mubr.f32.mxu0 0.0
    %1079 = vmatmul.mubr.f32.gmra.mrb[0].mxu0 %v206
    %v1080 = vpop.f32.mrb[0].mxu0
    %v1081 = vadd.f32 0.0, %v1080
    %v1082 = vpop.f32.mrb[0].mxu0
    %1083 = vmatprep.mubr.f32.mxu0 0.0
    %1084 = vmatmul.mubr.f32.gmra.mrb[0].mxu0 %v208
    %v1085 = vpop.f32.mrb[0].mxu0
    %v1086 = vadd.f32 0.0, %v1085
    %v1087 = vpop.f32.mrb[0].mxu0
    %1088 = vmatprep.mubr.f32.mxu0 0.0
    %1089 = vmatmul.mubr.f32.gmra.mrb[0].mxu0 %v210
    %v1090 = vpop.f32.mrb[0].mxu0
    %v1091 = vadd.f32 0.0, %v1090
    %v1092 = vpop.f32.mrb[0].mxu0
    %1093 = vmatprep.mubr.f32.mxu0 0.0
    %1094 = vmatmul.mubr.f32.gmra.mrb[0].mxu0 %v212
    %v1095 = vpop.f32.mrb[0].mxu0
    %v1096 = vadd.f32 0.0, %v1095
    %v1097 = vpop.f32.mrb[0].mxu0
    %1098 = vmatprep.mubr.f32.mxu0 0.0
    %1099 = vmatmul.mubr.f32.gmra.mrb[0].mxu0 %v214
    %v1100 = vpop.f32.mrb[0].mxu0
    %v1101 = vadd.f32 0.0, %v1100
    %v1102 = vpop.f32.mrb[0].mxu0
    %1103 = vmatprep.mubr.f32.mxu0 0.0
    %1104 = vmatmul.mubr.f32.gmra.mrb[0].mxu0 %v216
    %v1105 = vpop.f32.mrb[0].mxu0
    %v1106 = vadd.f32 0.0, %v1105
    %v1107 = vpop.f32.mrb[0].mxu0
    %1108 = vmatprep.mubr.f32.mxu0 0.0
    %1109 = vmatmul.mubr.f32.gmra.mrb[0].mxu0 %v218
    %v1110 = vpop.f32.mrb[0].mxu0
    %v1111 = vadd.f32 0.0, %v1110
    %v1112 = vpop.f32.mrb[0].mxu0
    %1113 = vmatprep.mubr.f32.mxu0 0.0
    %1114 = vmatmul.mubr.f32.gmra.mrb[0].mxu0 %v927
    %v1115 = vpop.f32.mrb[0].mxu0
    %v1116 = vadd.f32 0.0, %v1115
    %v1117 = vpop.f32.mrb[0].mxu0
    %1118 = vmatprep.mubr.f32.mxu0 0.0
    %1119 = vmatmul.mubr.f32.gmra.mrb[0].mxu0 %v929
    %v1120 = vpop.f32.mrb[0].mxu0
    %v1121 = vadd.f32 0.0, %v1120
    %v1122 = vpop.f32.mrb[0].mxu0
    %1123 = vdwg.mxu0
    %v1148 = vcombine.high %v1001, %v1001
    %v1149 = vcombine.high %v1006, %v1006
    %v1150 = vcombine.high %v1011, %v1011
    %v1151 = vcombine.high %v1016, %v1016
    %v1152 = vcombine.high %v1021, %v1021
    %v1153 = vcombine.high %v1026, %v1026
    %v1154 = vcombine.high %v1031, %v1031
    %v1155 = vcombine.high %v1036, %v1036
    %v1156 = vcombine.high %v1041, %v1041
    %v1157 = vcombine.high %v1046, %v1046
    %v1158 = vcombine.high %v1051, %v1051
    %v1159 = vcombine.high %v1056, %v1056
    %v1160 = vcombine.high %v1061, %v1061
    %v1161 = vcombine.high %v1066, %v1066
    %v1162 = vcombine.high %v1071, %v1071
    %v1163 = vcombine.high %v1076, %v1076
    %v1164 = vcombine.high %v1081, %v1081
    %v1165 = vcombine.high %v1086, %v1086
    %v1166 = vcombine.high %v1091, %v1091
    %v1167 = vcombine.high %v1096, %v1096
    %v1168 = vcombine.high %v1101, %v1101
    %v1169 = vcombine.high %v1106, %v1106
    %v1170 = vcombine.high %v1111, %v1111
    %v1171 = vcombine.high %v1116, %v1116
    %v1196 = vadd.f32 %v877, %v1001
    %v1197 = vadd.f32 %v878, %v1148
    %v1198 = vadd.f32 %v879, %v1006
    %v1199 = vadd.f32 %v880, %v1149
    %v1200 = vadd.f32 %v881, %v1011
    %v1201 = vadd.f32 %v882, %v1150
    %v1202 = vadd.f32 %v883, %v1016
    %v1203 = vadd.f32 %v884, %v1151
    %v1204 = vadd.f32 %v885, %v1021
    %v1205 = vadd.f32 %v886, %v1152
    %v1206 = vadd.f32 %v887, %v1026
    %v1207 = vadd.f32 %v888, %v1153
    %v1208 = vadd.f32 %v889, %v1031
    %v1209 = vadd.f32 %v890, %v1154
    %v1210 = vadd.f32 %v891, %v1036
    %v1211 = vadd.f32 %v892, %v1155
    %v1212 = vadd.f32 %v893, %v1041
    %v1213 = vadd.f32 %v894, %v1156
    %v1214 = vadd.f32 %v895, %v1046
    %v1215 = vadd.f32 %v896, %v1157
    %v1216 = vadd.f32 %v897, %v1051
    %v1217 = vadd.f32 %v898, %v1158
    %v1218 = vadd.f32 %v899, %v1056
    %v1219 = vadd.f32 %v900, %v1159
    %v1220 = vadd.f32 %v901, %v1061
    %v1221 = vadd.f32 %v902, %v1160
    %v1222 = vadd.f32 %v903, %v1066
    %v1223 = vadd.f32 %v904, %v1161
    %v1224 = vadd.f32 %v905, %v1071
    %v1225 = vadd.f32 %v906, %v1162
    %v1226 = vadd.f32 %v907, %v1076
    %v1227 = vadd.f32 %v908, %v1163
    %v1228 = vadd.f32 %v909, %v1081
    %v1229 = vadd.f32 %v910, %v1164
    %v1230 = vadd.f32 %v911, %v1086
    %v1231 = vadd.f32 %v912, %v1165
    %v1232 = vadd.f32 %v913, %v1091
    %v1233 = vadd.f32 %v914, %v1166
    %v1234 = vadd.f32 %v915, %v1096
    %v1235 = vadd.f32 %v916, %v1167
    %v1236 = vadd.f32 %v917, %v1101
    %v1237 = vadd.f32 %v918, %v1168
    %v1238 = vadd.f32 %v919, %v1106
    %v1239 = vadd.f32 %v920, %v1169
    %v1240 = vadd.f32 %v921, %v1111
    %v1241 = vadd.f32 %v922, %v1170
    %v1242 = vadd.f32 %v923, %v1116
    %v1243 = vadd.f32 %v924, %v1171
    %v1244 = vadd.f32 %v925, %v1121
    %v1245 = vmax.f32 %v1196, 0.0
    %v1246 = vmax.f32 %v1197, 0.0
    %v1247 = vmax.f32 %v1198, 0.0
    %v1248 = vmax.f32 %v1199, 0.0
    %v1249 = vmax.f32 %v1200, 0.0
    %v1250 = vmax.f32 %v1201, 0.0
    %v1251 = vmax.f32 %v1202, 0.0
    %v1252 = vmax.f32 %v1203, 0.0
    %v1253 = vmax.f32 %v1204, 0.0
    %v1254 = vmax.f32 %v1205, 0.0
    %v1255 = vmax.f32 %v1206, 0.0
    %v1256 = vmax.f32 %v1207, 0.0
    %v1257 = vmax.f32 %v1208, 0.0
    %v1258 = vmax.f32 %v1209, 0.0
    %v1259 = vmax.f32 %v1210, 0.0
    %v1260 = vmax.f32 %v1211, 0.0
    %v1261 = vmax.f32 %v1212, 0.0
    %v1262 = vmax.f32 %v1213, 0.0
    %v1263 = vmax.f32 %v1214, 0.0
    %v1264 = vmax.f32 %v1215, 0.0
    %v1265 = vmax.f32 %v1216, 0.0
    %v1266 = vmax.f32 %v1217, 0.0
    %v1267 = vmax.f32 %v1218, 0.0
    %v1268 = vmax.f32 %v1219, 0.0
    %v1269 = vmax.f32 %v1220, 0.0
    %v1270 = vmax.f32 %v1221, 0.0
    %v1271 = vmax.f32 %v1222, 0.0
    %v1272 = vmax.f32 %v1223, 0.0
    %v1273 = vmax.f32 %v1224, 0.0
    %v1274 = vmax.f32 %v1225, 0.0
    %v1275 = vmax.f32 %v1226, 0.0
    %v1276 = vmax.f32 %v1227, 0.0
    %v1277 = vmax.f32 %v1228, 0.0
    %v1278 = vmax.f32 %v1229, 0.0
    %v1279 = vmax.f32 %v1230, 0.0
    %v1280 = vmax.f32 %v1231, 0.0
    %v1281 = vmax.f32 %v1232, 0.0
    %v1282 = vmax.f32 %v1233, 0.0
    %v1283 = vmax.f32 %v1234, 0.0
    %v1284 = vmax.f32 %v1235, 0.0
    %v1285 = vmax.f32 %v1236, 0.0
    %v1286 = vmax.f32 %v1237, 0.0
    %v1287 = vmax.f32 %v1238, 0.0
    %v1288 = vmax.f32 %v1239, 0.0
    %v1289 = vmax.f32 %v1240, 0.0
    %v1290 = vmax.f32 %v1241, 0.0
    %v1291 = vmax.f32 %v1242, 0.0
    %v1292 = vmax.f32 %v1243, 0.0
    %v1293 = vmax.f32 %v1244, 0.0
    %v1294 = vld [vmem:[%s4] sm:$0xff]
    %v1295 = vld [vmem:[%s4 + $0x8] sm:$0xff]
    %v1296 = vld [vmem:[%s4 + $0x10] sm:$0xff]
    %v1297 = vld [vmem:[%s4 + $0x18] sm:$0xff]
    %v1298 = vld [vmem:[%s4 + $0x20] sm:$0xff]
    %v1299 = vld [vmem:[%s4 + $0x28] sm:$0xff]
    %v1300 = vld [vmem:[%s4 + $0x30] sm:$0xff]
    %v1301 = vld [vmem:[%s4 + $0x38] sm:$0xff]
    %v1302 = vld [vmem:[%s4 + $0x40] sm:$0xff]
    %v1303 = vld [vmem:[%s4 + $0x48] sm:$0xff]
    %v1304 = vld [vmem:[%s5] sm:$0x1]
    %v1306 = vlaneseq
    %v1307 = vshrl.u32 %v1306, 7
    %v1308 = vsub.s32 0, %v1307
    %v1309 = vrot.slane %v1304, %v1308
    %v1358 = vcombine.low 0.0, 0.0
    %v1359 = vcombine.low %v1245, %v1246
    %v1360 = vcombine.low %v1247, %v1248
    %v1361 = vcombine.low %v1249, %v1250
    %v1362 = vcombine.low %v1251, %v1252
    %v1363 = vcombine.low %v1253, %v1254
    %v1364 = vcombine.low %v1255, %v1256
    %v1365 = vcombine.low %v1257, %v1258
    %v1366 = vcombine.low %v1259, %v1260
    %v1367 = vcombine.low %v1261, %v1262
    %v1368 = vcombine.low %v1263, %v1264
    %v1369 = vcombine.low %v1265, %v1266
    %v1370 = vcombine.low %v1267, %v1268
    %v1371 = vcombine.low %v1269, %v1270
    %v1372 = vcombine.low %v1271, %v1272
    %v1373 = vcombine.low %v1273, %v1274
    %v1374 = vcombine.low %v1275, %v1276
    %v1375 = vcombine.low %v1277, %v1278
    %v1376 = vcombine.low %v1279, %v1280
    %v1377 = vcombine.low %v1281, %v1282
    %v1378 = vcombine.low %v1283, %v1284
    %v1379 = vcombine.low %v1285, %v1286
    %v1380 = vcombine.low %v1287, %v1288
    %v1381 = vcombine.low %v1289, %v1290
    %vm1382 = vcmask 130048
    %v1383 = vsel %vm1382, %v1358, 0
    %v1385 = vsel %vm1382, %v1359, 0
    %v1387 = vsel %vm1382, %v1360, 0
    %v1389 = vsel %vm1382, %v1361, 0
    %v1391 = vsel %vm1382, %v1362, 0
    %v1393 = vsel %vm1382, %v1363, 0
    %v1395 = vsel %vm1382, %v1364, 0
    %v1397 = vsel %vm1382, %v1365, 0
    %v1399 = vsel %vm1382, %v1366, 0
    %v1401 = vsel %vm1382, %v1367, 0
    %v1403 = vsel %vm1382, %v1368, 0
    %v1405 = vsel %vm1382, %v1369, 0
    %v1407 = vsel %vm1382, %v1370, 0
    %v1409 = vsel %vm1382, %v1371, 0
    %v1411 = vsel %vm1382, %v1372, 0
    %v1413 = vsel %vm1382, %v1373, 0
    %v1415 = vsel %vm1382, %v1374, 0
    %v1417 = vsel %vm1382, %v1375, 0
    %v1419 = vsel %vm1382, %v1376, 0
    %v1421 = vsel %vm1382, %v1377, 0
    %v1423 = vsel %vm1382, %v1378, 0
    %v1425 = vsel %vm1382, %v1379, 0
    %v1427 = vsel %vm1382, %v1380, 0
    %v1429 = vsel %vm1382, %v1381, 0
    %v1431 = vsel %vm1382, %v1291, 0
    %1433 = vmatprep.subr.mxu0 0.0
    %1434 = vmatpush1.msra.mxu0 %v1294
    %1435 = vmatprep.subr.mxu0 0.0
    %1436 = vmatpush1.msra.mxu0 %v1295
    %1437 = vmatprep.subr.mxu0 0.0
    %1438 = vmatpush1.msra.mxu0 0.0
    %1439 = vmatprep.subr.mxu0 0.0
    %1440 = vmatpush1.msra.mxu0 0.0
    %1441 = vmatprep.subr.mxu0 0.0
    %1442 = vmatpush1.msra.mxu0 0.0
    %1443 = vmatprep.subr.mxu0 0.0
    %1444 = vmatpush1.msra.mxu0 0.0
    %1445 = vmatprep.subr.mxu0 0.0
    %1446 = vmatpush1.msra.mxu0 0.0
    %1447 = vmatprep.subr.mxu0 0.0
    %1448 = vmatpush1.msra.mxu0 0.0
    %1449 = vmatprep.subr.mxu0 0.0
    %1450 = vmatpush1.msra.mxu0 0.0
    %1451 = vmatprep.subr.mxu0 0.0
    %1452 = vmatpush1.msra.mxu0 0.0
    %1453 = vmatprep.subr.mxu0 0.0
    %1454 = vmatpush1.msra.mxu0 0.0
    %1455 = vmatprep.subr.mxu0 0.0
    %1456 = vmatpush1.msra.mxu0 0.0
    %1457 = vmatprep.subr.mxu0 0.0
    %1458 = vmatpush1.msra.mxu0 0.0
    %1459 = vmatprep.subr.mxu0 0.0
    %1460 = vmatpush1.msra.mxu0 0.0
    %1461 = vmatprep.subr.mxu0 0.0
    %1462 = vmatpush1.msra.mxu0 0.0
    %1463 = vmatprep.subr.mxu0 0.0
    %1464 = vmatpush1.msra.mxu0 0.0
    %1465 = vmatprep.subr.mxu0 0.0
    %1466 = vmatpush1.msra.mxu0 0.0
    %1467 = vmatprep.subr.mxu0 0.0
    %1468 = vmatpush1.msra.mxu0 0.0
    %1469 = vmatprep.subr.mxu0 0.0
    %1470 = vmatpush1.msra.mxu0 0.0
    %1471 = vmatprep.subr.mxu0 0.0
    %1472 = vmatpush1.msra.mxu0 0.0
    %1473 = vmatprep.subr.mxu0 0.0
    %1474 = vmatpush1.msra.mxu0 0.0
    %1475 = vmatprep.subr.mxu0 0.0
    %1476 = vmatpush1.msra.mxu0 0.0
    %1477 = vmatprep.subr.mxu0 0.0
    %1478 = vmatpush1.msra.mxu0 0.0
    %1479 = vmatprep.subr.mxu0 0.0
    %1480 = vmatpush1.msra.mxu0 0.0
    %1481 = vmatprep.subr.mxu0 0.0
    %1482 = vmatpush1.msra.mxu0 0.0
    %1483 = vmatprep.subr.mxu0 0.0
    %1484 = vmatpush1.msra.mxu0 0.0
    %1485 = vmatprep.subr.mxu0 0.0
    %1486 = vmatpush1.msra.mxu0 0.0
    %1487 = vmatprep.subr.mxu0 0.0
    %1488 = vmatpush1.msra.mxu0 0.0
    %1489 = vmatprep.subr.mxu0 0.0
    %1490 = vmatpush1.msra.mxu0 0.0
    %1491 = vmatprep.subr.mxu0 0.0
    %1492 = vmatpush1.msra.mxu0 0.0
    %1493 = vmatprep.subr.mxu0 0.0
    %1494 = vmatpush1.msra.mxu0 0.0
    %1495 = vmatprep.subr.mxu0 0.0
    %1496 = vmatpush1.msra.mxu0 0.0
    %1497 = vmatprep.mubr.f32.mxu0 0.0
    %1498 = vmatmul.mubr.f32.gmra.mrb[0].mxu0 %v1383
    %v1499 = vpop.f32.mrb[0].mxu0
    %v1500 = vadd.f32 0.0, %v1499
    %v1501 = vpop.f32.mrb[0].mxu0
    %1502 = vmatprep.mubr.f32.mxu0 0.0
    %1503 = vmatmul.mubr.f32.gmra.mrb[0].mxu0 %v1385
    %v1504 = vpop.f32.mrb[0].mxu0
    %v1505 = vadd.f32 0.0, %v1504
    %v1506 = vpop.f32.mrb[0].mxu0
    %1507 = vmatprep.mubr.f32.mxu0 0.0
    %1508 = vmatmul.mubr.f32.gmra.mrb[0].mxu0 %v1387
    %v1509 = vpop.f32.mrb[0].mxu0
    %v1510 = vadd.f32 0.0, %v1509
    %v1511 = vpop.f32.mrb[0].mxu0
    %1512 = vmatprep.mubr.f32.mxu0 0.0
    %1513 = vmatmul.mubr.f32.gmra.mrb[0].mxu0 %v1389
    %v1514 = vpop.f32.mrb[0].mxu0
    %v1515 = vadd.f32 0.0, %v1514
    %v1516 = vpop.f32.mrb[0].mxu0
    %1517 = vmatprep.mubr.f32.mxu0 0.0
    %1518 = vmatmul.mubr.f32.gmra.mrb[0].mxu0 %v1391
    %v1519 = vpop.f32.mrb[0].mxu0
    %v1520 = vadd.f32 0.0, %v1519
    %v1521 = vpop.f32.mrb[0].mxu0
    %1522 = vmatprep.mubr.f32.mxu0 0.0
    %1523 = vmatmul.mubr.f32.gmra.mrb[0].mxu0 %v1393
    %v1524 = vpop.f32.mrb[0].mxu0
    %v1525 = vadd.f32 0.0, %v1524
    %v1526 = vpop.f32.mrb[0].mxu0
    %1527 = vmatprep.mubr.f32.mxu0 0.0
    %1528 = vmatmul.mubr.f32.gmra.mrb[0].mxu0 %v1395
    %v1529 = vpop.f32.mrb[0].mxu0
    %v1530 = vadd.f32 0.0, %v1529
    %v1531 = vpop.f32.mrb[0].mxu0
    %1532 = vmatprep.mubr.f32.mxu0 0.0
    %1533 = vmatmul.mubr.f32.gmra.mrb[0].mxu0 %v1397
    %v1534 = vpop.f32.mrb[0].mxu0
    %v1535 = vadd.f32 0.0, %v1534
    %v1536 = vpop.f32.mrb[0].mxu0
    %1537 = vmatprep.mubr.f32.mxu0 0.0
    %1538 = vmatmul.mubr.f32.gmra.mrb[0].mxu0 %v1399
    %v1539 = vpop.f32.mrb[0].mxu0
    %v1540 = vadd.f32 0.0, %v1539
    %v1541 = vpop.f32.mrb[0].mxu0
    %1542 = vmatprep.mubr.f32.mxu0 0.0
    %1543 = vmatmul.mubr.f32.gmra.mrb[0].mxu0 %v1401
    %v1544 = vpop.f32.mrb[0].mxu0
    %v1545 = vadd.f32 0.0, %v1544
    %v1546 = vpop.f32.mrb[0].mxu0
    %1547 = vmatprep.mubr.f32.mxu0 0.0
    %1548 = vmatmul.mubr.f32.gmra.mrb[0].mxu0 %v1403
    %v1549 = vpop.f32.mrb[0].mxu0
    %v1550 = vadd.f32 0.0, %v1549
    %v1551 = vpop.f32.mrb[0].mxu0
    %1552 = vmatprep.mubr.f32.mxu0 0.0
    %1553 = vmatmul.mubr.f32.gmra.mrb[0].mxu0 %v1405
    %v1554 = vpop.f32.mrb[0].mxu0
    %v1555 = vadd.f32 0.0, %v1554
    %v1556 = vpop.f32.mrb[0].mxu0
    %1557 = vmatprep.mubr.f32.mxu0 0.0
    %1558 = vmatmul.mubr.f32.gmra.mrb[0].mxu0 %v1407
    %v1559 = vpop.f32.mrb[0].mxu0
    %v1560 = vadd.f32 0.0, %v1559
    %v1561 = vpop.f32.mrb[0].mxu0
    %1562 = vmatprep.mubr.f32.mxu0 0.0
    %1563 = vmatmul.mubr.f32.gmra.mrb[0].mxu0 %v1409
    %v1564 = vpop.f32.mrb[0].mxu0
    %v1565 = vadd.f32 0.0, %v1564
    %v1566 = vpop.f32.mrb[0].mxu0
    %1567 = vmatprep.mubr.f32.mxu0 0.0
    %1568 = vmatmul.mubr.f32.gmra.mrb[0].mxu0 %v1411
    %v1569 = vpop.f32.mrb[0].mxu0
    %v1570 = vadd.f32 0.0, %v1569
    %v1571 = vpop.f32.mrb[0].mxu0
    %1572 = vmatprep.mubr.f32.mxu0 0.0
    %1573 = vmatmul.mubr.f32.gmra.mrb[0].mxu0 %v1413
    %v1574 = vpop.f32.mrb[0].mxu0
    %v1575 = vadd.f32 0.0, %v1574
    %v1576 = vpop.f32.mrb[0].mxu0
    %1577 = vmatprep.mubr.f32.mxu0 0.0
    %1578 = vmatmul.mubr.f32.gmra.mrb[0].mxu0 %v1415
    %v1579 = vpop.f32.mrb[0].mxu0
    %v1580 = vadd.f32 0.0, %v1579
    %v1581 = vpop.f32.mrb[0].mxu0
    %1582 = vmatprep.mubr.f32.mxu0 0.0
    %1583 = vmatmul.mubr.f32.gmra.mrb[0].mxu0 %v1417
    %v1584 = vpop.f32.mrb[0].mxu0
    %v1585 = vadd.f32 0.0, %v1584
    %v1586 = vpop.f32.mrb[0].mxu0
    %1587 = vmatprep.mubr.f32.mxu0 0.0
    %1588 = vmatmul.mubr.f32.gmra.mrb[0].mxu0 %v1419
    %v1589 = vpop.f32.mrb[0].mxu0
    %v1590 = vadd.f32 0.0, %v1589
    %v1591 = vpop.f32.mrb[0].mxu0
    %1592 = vmatprep.mubr.f32.mxu0 0.0
    %1593 = vmatmul.mubr.f32.gmra.mrb[0].mxu0 %v1421
    %v1594 = vpop.f32.mrb[0].mxu0
    %v1595 = vadd.f32 0.0, %v1594
    %v1596 = vpop.f32.mrb[0].mxu0
    %1597 = vmatprep.mubr.f32.mxu0 0.0
    %1598 = vmatmul.mubr.f32.gmra.mrb[0].mxu0 %v1423
    %v1599 = vpop.f32.mrb[0].mxu0
    %v1600 = vadd.f32 0.0, %v1599
    %v1601 = vpop.f32.mrb[0].mxu0
    %1602 = vmatprep.mubr.f32.mxu0 0.0
    %1603 = vmatmul.mubr.f32.gmra.mrb[0].mxu0 %v1425
    %v1604 = vpop.f32.mrb[0].mxu0
    %v1605 = vadd.f32 0.0, %v1604
    %v1606 = vpop.f32.mrb[0].mxu0
    %1607 = vmatprep.mubr.f32.mxu0 0.0
    %1608 = vmatmul.mubr.f32.gmra.mrb[0].mxu0 %v1427
    %v1609 = vpop.f32.mrb[0].mxu0
    %v1610 = vadd.f32 0.0, %v1609
    %v1611 = vpop.f32.mrb[0].mxu0
    %1612 = vmatprep.mubr.f32.mxu0 0.0
    %1613 = vmatmul.mubr.f32.gmra.mrb[0].mxu0 %v1429
    %v1614 = vpop.f32.mrb[0].mxu0
    %v1615 = vadd.f32 0.0, %v1614
    %v1616 = vpop.f32.mrb[0].mxu0
    %1617 = vmatprep.mubr.f32.mxu0 0.0
    %1618 = vmatmul.mubr.f32.gmra.mrb[0].mxu0 %v1431
    %v1619 = vpop.f32.mrb[0].mxu0
    %v1620 = vadd.f32 0.0, %v1619
    %v1621 = vpop.f32.mrb[0].mxu0
    %1622 = vdwg.mxu0
    %v1647 = vcombine.high %v1500, %v1500
    %v1648 = vcombine.high %v1505, %v1505
    %v1649 = vcombine.high %v1510, %v1510
    %v1650 = vcombine.high %v1515, %v1515
    %v1651 = vcombine.high %v1520, %v1520
    %v1652 = vcombine.high %v1525, %v1525
    %v1653 = vcombine.high %v1530, %v1530
    %v1654 = vcombine.high %v1535, %v1535
    %v1655 = vcombine.high %v1540, %v1540
    %v1656 = vcombine.high %v1545, %v1545
    %v1657 = vcombine.high %v1550, %v1550
    %v1658 = vcombine.high %v1555, %v1555
    %v1659 = vcombine.high %v1560, %v1560
    %v1660 = vcombine.high %v1565, %v1565
    %v1661 = vcombine.high %v1570, %v1570
    %v1662 = vcombine.high %v1575, %v1575
    %v1663 = vcombine.high %v1580, %v1580
    %v1664 = vcombine.high %v1585, %v1585
    %v1665 = vcombine.high %v1590, %v1590
    %v1666 = vcombine.high %v1595, %v1595
    %v1667 = vcombine.high %v1600, %v1600
    %v1668 = vcombine.high %v1605, %v1605
    %v1669 = vcombine.high %v1610, %v1610
    %v1670 = vcombine.high %v1615, %v1615
    %v1695 = vadd.f32 %v1309, %v1500
    %v1696 = vadd.f32 %v1309, %v1647
    %v1697 = vadd.f32 %v1309, %v1505
    %v1698 = vadd.f32 %v1309, %v1648
    %v1699 = vadd.f32 %v1309, %v1510
    %v1700 = vadd.f32 %v1309, %v1649
    %v1701 = vadd.f32 %v1309, %v1515
    %v1702 = vadd.f32 %v1309, %v1650
    %v1703 = vadd.f32 %v1309, %v1520
    %v1704 = vadd.f32 %v1309, %v1651
    %v1705 = vadd.f32 %v1309, %v1525
    %v1706 = vadd.f32 %v1309, %v1652
    %v1707 = vadd.f32 %v1309, %v1530
    %v1708 = vadd.f32 %v1309, %v1653
    %v1709 = vadd.f32 %v1309, %v1535
    %v1710 = vadd.f32 %v1309, %v1654
    %v1711 = vadd.f32 %v1309, %v1540
    %v1712 = vadd.f32 %v1309, %v1655
    %v1713 = vadd.f32 %v1309, %v1545
    %v1714 = vadd.f32 %v1309, %v1656
    %v1715 = vadd.f32 %v1309, %v1550
    %v1716 = vadd.f32 %v1309, %v1657
    %v1717 = vadd.f32 %v1309, %v1555
    %v1718 = vadd.f32 %v1309, %v1658
    %v1719 = vadd.f32 %v1309, %v1560
    %v1720 = vadd.f32 %v1309, %v1659
    %v1721 = vadd.f32 %v1309, %v1565
    %v1722 = vadd.f32 %v1309, %v1660
    %v1723 = vadd.f32 %v1309, %v1570
    %v1724 = vadd.f32 %v1309, %v1661
    %v1725 = vadd.f32 %v1309, %v1575
    %v1726 = vadd.f32 %v1309, %v1662
    %v1727 = vadd.f32 %v1309, %v1580
    %v1728 = vadd.f32 %v1309, %v1663
    %v1729 = vadd.f32 %v1309, %v1585
    %v1730 = vadd.f32 %v1309, %v1664
    %v1731 = vadd.f32 %v1309, %v1590
    %v1732 = vadd.f32 %v1309, %v1665
    %v1733 = vadd.f32 %v1309, %v1595
    %v1734 = vadd.f32 %v1309, %v1666
    %v1735 = vadd.f32 %v1309, %v1600
    %v1736 = vadd.f32 %v1309, %v1667
    %v1737 = vadd.f32 %v1309, %v1605
    %v1738 = vadd.f32 %v1309, %v1668
    %v1739 = vadd.f32 %v1309, %v1610
    %v1740 = vadd.f32 %v1309, %v1669
    %v1741 = vadd.f32 %v1309, %v1615
    %v1742 = vadd.f32 %v1309, %v1670
    %v1743 = vadd.f32 %v1309, %v1620
    %v1745 = vcombine.low 0.0, %v1245
    %v1746 = vcombine.low %v1246, %v1247
    %v1747 = vcombine.low %v1248, %v1249
    %v1748 = vcombine.low %v1250, %v1251
    %v1749 = vcombine.low %v1252, %v1253
    %v1750 = vcombine.low %v1254, %v1255
    %v1751 = vcombine.low %v1256, %v1257
    %v1752 = vcombine.low %v1258, %v1259
    %v1753 = vcombine.low %v1260, %v1261
    %v1754 = vcombine.low %v1262, %v1263
    %v1755 = vcombine.low %v1264, %v1265
    %v1756 = vcombine.low %v1266, %v1267
    %v1757 = vcombine.low %v1268, %v1269
    %v1758 = vcombine.low %v1270, %v1271
    %v1759 = vcombine.low %v1272, %v1273
    %v1760 = vcombine.low %v1274, %v1275
    %v1761 = vcombine.low %v1276, %v1277
    %v1762 = vcombine.low %v1278, %v1279
    %v1763 = vcombine.low %v1280, %v1281
    %v1764 = vcombine.low %v1282, %v1283
    %v1765 = vcombine.low %v1284, %v1285
    %v1766 = vcombine.low %v1286, %v1287
    %v1767 = vcombine.low %v1288, %v1289
    %v1768 = vcombine.low %v1290, %v1291
    %v1769 = vsel %vm1382, %v1745, 0
    %v1771 = vsel %vm1382, %v1746, 0
    %v1773 = vsel %vm1382, %v1747, 0
    %v1775 = vsel %vm1382, %v1748, 0
    %v1777 = vsel %vm1382, %v1749, 0
    %v1779 = vsel %vm1382, %v1750, 0
    %v1781 = vsel %vm1382, %v1751, 0
    %v1783 = vsel %vm1382, %v1752, 0
    %v1785 = vsel %vm1382, %v1753, 0
    %v1787 = vsel %vm1382, %v1754, 0
    %v1789 = vsel %vm1382, %v1755, 0
    %v1791 = vsel %vm1382, %v1756, 0
    %v1793 = vsel %vm1382, %v1757, 0
    %v1795 = vsel %vm1382, %v1758, 0
    %v1797 = vsel %vm1382, %v1759, 0
    %v1799 = vsel %vm1382, %v1760, 0
    %v1801 = vsel %vm1382, %v1761, 0
    %v1803 = vsel %vm1382, %v1762, 0
    %v1805 = vsel %vm1382, %v1763, 0
    %v1807 = vsel %vm1382, %v1764, 0
    %v1809 = vsel %vm1382, %v1765, 0
    %v1811 = vsel %vm1382, %v1766, 0
    %v1813 = vsel %vm1382, %v1767, 0
    %v1815 = vsel %vm1382, %v1768, 0
    %v1817 = vsel %vm1382, %v1292, 0
    %1819 = vmatprep.subr.mxu0 0.0
    %1820 = vmatpush1.msra.mxu0 %v1296
    %1821 = vmatprep.subr.mxu0 0.0
    %1822 = vmatpush1.msra.mxu0 %v1297
    %1823 = vmatprep.subr.mxu0 0.0
    %1824 = vmatpush1.msra.mxu0 0.0
    %1825 = vmatprep.subr.mxu0 0.0
    %1826 = vmatpush1.msra.mxu0 0.0
    %1827 = vmatprep.subr.mxu0 0.0
    %1828 = vmatpush1.msra.mxu0 0.0
    %1829 = vmatprep.subr.mxu0 0.0
    %1830 = vmatpush1.msra.mxu0 0.0
    %1831 = vmatprep.subr.mxu0 0.0
    %1832 = vmatpush1.msra.mxu0 0.0
    %1833 = vmatprep.subr.mxu0 0.0
    %1834 = vmatpush1.msra.mxu0 0.0
    %1835 = vmatprep.subr.mxu0 0.0
    %1836 = vmatpush1.msra.mxu0 0.0
    %1837 = vmatprep.subr.mxu0 0.0
    %1838 = vmatpush1.msra.mxu0 0.0
    %1839 = vmatprep.subr.mxu0 0.0
    %1840 = vmatpush1.msra.mxu0 0.0
    %1841 = vmatprep.subr.mxu0 0.0
    %1842 = vmatpush1.msra.mxu0 0.0
    %1843 = vmatprep.subr.mxu0 0.0
    %1844 = vmatpush1.msra.mxu0 0.0
    %1845 = vmatprep.subr.mxu0 0.0
    %1846 = vmatpush1.msra.mxu0 0.0
    %1847 = vmatprep.subr.mxu0 0.0
    %1848 = vmatpush1.msra.mxu0 0.0
    %1849 = vmatprep.subr.mxu0 0.0
    %1850 = vmatpush1.msra.mxu0 0.0
    %1851 = vmatprep.subr.mxu0 0.0
    %1852 = vmatpush1.msra.mxu0 0.0
    %1853 = vmatprep.subr.mxu0 0.0
    %1854 = vmatpush1.msra.mxu0 0.0
    %1855 = vmatprep.subr.mxu0 0.0
    %1856 = vmatpush1.msra.mxu0 0.0
    %1857 = vmatprep.subr.mxu0 0.0
    %1858 = vmatpush1.msra.mxu0 0.0
    %1859 = vmatprep.subr.mxu0 0.0
    %1860 = vmatpush1.msra.mxu0 0.0
    %1861 = vmatprep.subr.mxu0 0.0
    %1862 = vmatpush1.msra.mxu0 0.0
    %1863 = vmatprep.subr.mxu0 0.0
    %1864 = vmatpush1.msra.mxu0 0.0
    %1865 = vmatprep.subr.mxu0 0.0
    %1866 = vmatpush1.msra.mxu0 0.0
    %1867 = vmatprep.subr.mxu0 0.0
    %1868 = vmatpush1.msra.mxu0 0.0
    %1869 = vmatprep.subr.mxu0 0.0
    %1870 = vmatpush1.msra.mxu0 0.0
    %1871 = vmatprep.subr.mxu0 0.0
    %1872 = vmatpush1.msra.mxu0 0.0
    %1873 = vmatprep.subr.mxu0 0.0
    %1874 = vmatpush1.msra.mxu0 0.0
    %1875 = vmatprep.subr.mxu0 0.0
    %1876 = vmatpush1.msra.mxu0 0.0
    %1877 = vmatprep.subr.mxu0 0.0
    %1878 = vmatpush1.msra.mxu0 0.0
    %1879 = vmatprep.subr.mxu0 0.0
    %1880 = vmatpush1.msra.mxu0 0.0
    %1881 = vmatprep.subr.mxu0 0.0
    %1882 = vmatpush1.msra.mxu0 0.0
    %1883 = vmatprep.mubr.f32.mxu0 0.0
    %1884 = vmatmul.mubr.f32.gmra.mrb[0].mxu0 %v1769
    %v1885 = vpop.f32.mrb[0].mxu0
    %v1886 = vadd.f32 0.0, %v1885
    %v1887 = vpop.f32.mrb[0].mxu0
    %1888 = vmatprep.mubr.f32.mxu0 0.0
    %1889 = vmatmul.mubr.f32.gmra.mrb[0].mxu0 %v1771
    %v1890 = vpop.f32.mrb[0].mxu0
    %v1891 = vadd.f32 0.0, %v1890
    %v1892 = vpop.f32.mrb[0].mxu0
    %1893 = vmatprep.mubr.f32.mxu0 0.0
    %1894 = vmatmul.mubr.f32.gmra.mrb[0].mxu0 %v1773
    %v1895 = vpop.f32.mrb[0].mxu0
    %v1896 = vadd.f32 0.0, %v1895
    %v1897 = vpop.f32.mrb[0].mxu0
    %1898 = vmatprep.mubr.f32.mxu0 0.0
    %1899 = vmatmul.mubr.f32.gmra.mrb[0].mxu0 %v1775
    %v1900 = vpop.f32.mrb[0].mxu0
    %v1901 = vadd.f32 0.0, %v1900
    %v1902 = vpop.f32.mrb[0].mxu0
    %1903 = vmatprep.mubr.f32.mxu0 0.0
    %1904 = vmatmul.mubr.f32.gmra.mrb[0].mxu0 %v1777
    %v1905 = vpop.f32.mrb[0].mxu0
    %v1906 = vadd.f32 0.0, %v1905
    %v1907 = vpop.f32.mrb[0].mxu0
    %1908 = vmatprep.mubr.f32.mxu0 0.0
    %1909 = vmatmul.mubr.f32.gmra.mrb[0].mxu0 %v1779
    %v1910 = vpop.f32.mrb[0].mxu0
    %v1911 = vadd.f32 0.0, %v1910
    %v1912 = vpop.f32.mrb[0].mxu0
    %1913 = vmatprep.mubr.f32.mxu0 0.0
    %1914 = vmatmul.mubr.f32.gmra.mrb[0].mxu0 %v1781
    %v1915 = vpop.f32.mrb[0].mxu0
    %v1916 = vadd.f32 0.0, %v1915
    %v1917 = vpop.f32.mrb[0].mxu0
    %1918 = vmatprep.mubr.f32.mxu0 0.0
    %1919 = vmatmul.mubr.f32.gmra.mrb[0].mxu0 %v1783
    %v1920 = vpop.f32.mrb[0].mxu0
    %v1921 = vadd.f32 0.0, %v1920
    %v1922 = vpop.f32.mrb[0].mxu0
    %1923 = vmatprep.mubr.f32.mxu0 0.0
    %1924 = vmatmul.mubr.f32.gmra.mrb[0].mxu0 %v1785
    %v1925 = vpop.f32.mrb[0].mxu0
    %v1926 = vadd.f32 0.0, %v1925
    %v1927 = vpop.f32.mrb[0].mxu0
    %1928 = vmatprep.mubr.f32.mxu0 0.0
    %1929 = vmatmul.mubr.f32.gmra.mrb[0].mxu0 %v1787
    %v1930 = vpop.f32.mrb[0].mxu0
    %v1931 = vadd.f32 0.0, %v1930
    %v1932 = vpop.f32.mrb[0].mxu0
    %1933 = vmatprep.mubr.f32.mxu0 0.0
    %1934 = vmatmul.mubr.f32.gmra.mrb[0].mxu0 %v1789
    %v1935 = vpop.f32.mrb[0].mxu0
    %v1936 = vadd.f32 0.0, %v1935
    %v1937 = vpop.f32.mrb[0].mxu0
    %1938 = vmatprep.mubr.f32.mxu0 0.0
    %1939 = vmatmul.mubr.f32.gmra.mrb[0].mxu0 %v1791
    %v1940 = vpop.f32.mrb[0].mxu0
    %v1941 = vadd.f32 0.0, %v1940
    %v1942 = vpop.f32.mrb[0].mxu0
    %1943 = vmatprep.mubr.f32.mxu0 0.0
    %1944 = vmatmul.mubr.f32.gmra.mrb[0].mxu0 %v1793
    %v1945 = vpop.f32.mrb[0].mxu0
    %v1946 = vadd.f32 0.0, %v1945
    %v1947 = vpop.f32.mrb[0].mxu0
    %1948 = vmatprep.mubr.f32.mxu0 0.0
    %1949 = vmatmul.mubr.f32.gmra.mrb[0].mxu0 %v1795
    %v1950 = vpop.f32.mrb[0].mxu0
    %v1951 = vadd.f32 0.0, %v1950
    %v1952 = vpop.f32.mrb[0].mxu0
    %1953 = vmatprep.mubr.f32.mxu0 0.0
    %1954 = vmatmul.mubr.f32.gmra.mrb[0].mxu0 %v1797
    %v1955 = vpop.f32.mrb[0].mxu0
    %v1956 = vadd.f32 0.0, %v1955
    %v1957 = vpop.f32.mrb[0].mxu0
    %1958 = vmatprep.mubr.f32.mxu0 0.0
    %1959 = vmatmul.mubr.f32.gmra.mrb[0].mxu0 %v1799
    %v1960 = vpop.f32.mrb[0].mxu0
    %v1961 = vadd.f32 0.0, %v1960
    %v1962 = vpop.f32.mrb[0].mxu0
    %1963 = vmatprep.mubr.f32.mxu0 0.0
    %1964 = vmatmul.mubr.f32.gmra.mrb[0].mxu0 %v1801
    %v1965 = vpop.f32.mrb[0].mxu0
    %v1966 = vadd.f32 0.0, %v1965
    %v1967 = vpop.f32.mrb[0].mxu0
    %1968 = vmatprep.mubr.f32.mxu0 0.0
    %1969 = vmatmul.mubr.f32.gmra.mrb[0].mxu0 %v1803
    %v1970 = vpop.f32.mrb[0].mxu0
    %v1971 = vadd.f32 0.0, %v1970
    %v1972 = vpop.f32.mrb[0].mxu0
    %1973 = vmatprep.mubr.f32.mxu0 0.0
    %1974 = vmatmul.mubr.f32.gmra.mrb[0].mxu0 %v1805
    %v1975 = vpop.f32.mrb[0].mxu0
    %v1976 = vadd.f32 0.0, %v1975
    %v1977 = vpop.f32.mrb[0].mxu0
    %1978 = vmatprep.mubr.f32.mxu0 0.0
    %1979 = vmatmul.mubr.f32.gmra.mrb[0].mxu0 %v1807
    %v1980 = vpop.f32.mrb[0].mxu0
    %v1981 = vadd.f32 0.0, %v1980
    %v1982 = vpop.f32.mrb[0].mxu0
    %1983 = vmatprep.mubr.f32.mxu0 0.0
    %1984 = vmatmul.mubr.f32.gmra.mrb[0].mxu0 %v1809
    %v1985 = vpop.f32.mrb[0].mxu0
    %v1986 = vadd.f32 0.0, %v1985
    %v1987 = vpop.f32.mrb[0].mxu0
    %1988 = vmatprep.mubr.f32.mxu0 0.0
    %1989 = vmatmul.mubr.f32.gmra.mrb[0].mxu0 %v1811
    %v1990 = vpop.f32.mrb[0].mxu0
    %v1991 = vadd.f32 0.0, %v1990
    %v1992 = vpop.f32.mrb[0].mxu0
    %1993 = vmatprep.mubr.f32.mxu0 0.0
    %1994 = vmatmul.mubr.f32.gmra.mrb[0].mxu0 %v1813
    %v1995 = vpop.f32.mrb[0].mxu0
    %v1996 = vadd.f32 0.0, %v1995
    %v1997 = vpop.f32.mrb[0].mxu0
    %1998 = vmatprep.mubr.f32.mxu0 0.0
    %1999 = vmatmul.mubr.f32.gmra.mrb[0].mxu0 %v1815
    %v2000 = vpop.f32.mrb[0].mxu0
    %v2001 = vadd.f32 0.0, %v2000
    %v2002 = vpop.f32.mrb[0].mxu0
    %2003 = vmatprep.mubr.f32.mxu0 0.0
    %2004 = vmatmul.mubr.f32.gmra.mrb[0].mxu0 %v1817
    %v2005 = vpop.f32.mrb[0].mxu0
    %v2006 = vadd.f32 0.0, %v2005
    %v2007 = vpop.f32.mrb[0].mxu0
    %2008 = vdwg.mxu0
    %v2033 = vcombine.high %v1886, %v1886
    %v2034 = vcombine.high %v1891, %v1891
    %v2035 = vcombine.high %v1896, %v1896
    %v2036 = vcombine.high %v1901, %v1901
    %v2037 = vcombine.high %v1906, %v1906
    %v2038 = vcombine.high %v1911, %v1911
    %v2039 = vcombine.high %v1916, %v1916
    %v2040 = vcombine.high %v1921, %v1921
    %v2041 = vcombine.high %v1926, %v1926
    %v2042 = vcombine.high %v1931, %v1931
    %v2043 = vcombine.high %v1936, %v1936
    %v2044 = vcombine.high %v1941, %v1941
    %v2045 = vcombine.high %v1946, %v1946
    %v2046 = vcombine.high %v1951, %v1951
    %v2047 = vcombine.high %v1956, %v1956
    %v2048 = vcombine.high %v1961, %v1961
    %v2049 = vcombine.high %v1966, %v1966
    %v2050 = vcombine.high %v1971, %v1971
    %v2051 = vcombine.high %v1976, %v1976
    %v2052 = vcombine.high %v1981, %v1981
    %v2053 = vcombine.high %v1986, %v1986
    %v2054 = vcombine.high %v1991, %v1991
    %v2055 = vcombine.high %v1996, %v1996
    %v2056 = vcombine.high %v2001, %v2001
    %v2081 = vadd.f32 %v1695, %v1886
    %v2082 = vadd.f32 %v1696, %v2033
    %v2083 = vadd.f32 %v1697, %v1891
    %v2084 = vadd.f32 %v1698, %v2034
    %v2085 = vadd.f32 %v1699, %v1896
    %v2086 = vadd.f32 %v1700, %v2035
    %v2087 = vadd.f32 %v1701, %v1901
    %v2088 = vadd.f32 %v1702, %v2036
    %v2089 = vadd.f32 %v1703, %v1906
    %v2090 = vadd.f32 %v1704, %v2037
    %v2091 = vadd.f32 %v1705, %v1911
    %v2092 = vadd.f32 %v1706, %v2038
    %v2093 = vadd.f32 %v1707, %v1916
    %v2094 = vadd.f32 %v1708, %v2039
    %v2095 = vadd.f32 %v1709, %v1921
    %v2096 = vadd.f32 %v1710, %v2040
    %v2097 = vadd.f32 %v1711, %v1926
    %v2098 = vadd.f32 %v1712, %v2041
    %v2099 = vadd.f32 %v1713, %v1931
    %v2100 = vadd.f32 %v1714, %v2042
    %v2101 = vadd.f32 %v1715, %v1936
    %v2102 = vadd.f32 %v1716, %v2043
    %v2103 = vadd.f32 %v1717, %v1941
    %v2104 = vadd.f32 %v1718, %v2044
    %v2105 = vadd.f32 %v1719, %v1946
    %v2106 = vadd.f32 %v1720, %v2045
    %v2107 = vadd.f32 %v1721, %v1951
    %v2108 = vadd.f32 %v1722, %v2046
    %v2109 = vadd.f32 %v1723, %v1956
    %v2110 = vadd.f32 %v1724, %v2047
    %v2111 = vadd.f32 %v1725, %v1961
    %v2112 = vadd.f32 %v1726, %v2048
    %v2113 = vadd.f32 %v1727, %v1966
    %v2114 = vadd.f32 %v1728, %v2049
    %v2115 = vadd.f32 %v1729, %v1971
    %v2116 = vadd.f32 %v1730, %v2050
    %v2117 = vadd.f32 %v1731, %v1976
    %v2118 = vadd.f32 %v1732, %v2051
    %v2119 = vadd.f32 %v1733, %v1981
    %v2120 = vadd.f32 %v1734, %v2052
    %v2121 = vadd.f32 %v1735, %v1986
    %v2122 = vadd.f32 %v1736, %v2053
    %v2123 = vadd.f32 %v1737, %v1991
    %v2124 = vadd.f32 %v1738, %v2054
    %v2125 = vadd.f32 %v1739, %v1996
    %v2126 = vadd.f32 %v1740, %v2055
    %v2127 = vadd.f32 %v1741, %v2001
    %v2128 = vadd.f32 %v1742, %v2056
    %v2129 = vadd.f32 %v1743, %v2006
    %v2131 = vcombine.low %v1291, %v1292
    %v2132 = vsel %vm1382, %v2131, 0
    %v2134 = vsel %vm1382, %v1293, 0
    %2136 = vmatprep.subr.mxu0 0.0
    %2137 = vmatpush1.msra.mxu0 %v1298
    %2138 = vmatprep.subr.mxu0 0.0
    %2139 = vmatpush1.msra.mxu0 %v1299
    %2140 = vmatprep.subr.mxu0 0.0
    %2141 = vmatpush1.msra.mxu0 0.0
    %2142 = vmatprep.subr.mxu0 0.0
    %2143 = vmatpush1.msra.mxu0 0.0
    %2144 = vmatprep.subr.mxu0 0.0
    %2145 = vmatpush1.msra.mxu0 0.0
    %2146 = vmatprep.subr.mxu0 0.0
    %2147 = vmatpush1.msra.mxu0 0.0
    %2148 = vmatprep.subr.mxu0 0.0
    %2149 = vmatpush1.msra.mxu0 0.0
    %2150 = vmatprep.subr.mxu0 0.0
    %2151 = vmatpush1.msra.mxu0 0.0
    %2152 = vmatprep.subr.mxu0 0.0
    %2153 = vmatpush1.msra.mxu0 0.0
    %2154 = vmatprep.subr.mxu0 0.0
    %2155 = vmatpush1.msra.mxu0 0.0
    %2156 = vmatprep.subr.mxu0 0.0
    %2157 = vmatpush1.msra.mxu0 0.0
    %2158 = vmatprep.subr.mxu0 0.0
    %2159 = vmatpush1.msra.mxu0 0.0
    %2160 = vmatprep.subr.mxu0 0.0
    %2161 = vmatpush1.msra.mxu0 0.0
    %2162 = vmatprep.subr.mxu0 0.0
    %2163 = vmatpush1.msra.mxu0 0.0
    %2164 = vmatprep.subr.mxu0 0.0
    %2165 = vmatpush1.msra.mxu0 0.0
    %2166 = vmatprep.subr.mxu0 0.0
    %2167 = vmatpush1.msra.mxu0 0.0
    %2168 = vmatprep.subr.mxu0 0.0
    %2169 = vmatpush1.msra.mxu0 0.0
    %2170 = vmatprep.subr.mxu0 0.0
    %2171 = vmatpush1.msra.mxu0 0.0
    %2172 = vmatprep.subr.mxu0 0.0
    %2173 = vmatpush1.msra.mxu0 0.0
    %2174 = vmatprep.subr.mxu0 0.0
    %2175 = vmatpush1.msra.mxu0 0.0
    %2176 = vmatprep.subr.mxu0 0.0
    %2177 = vmatpush1.msra.mxu0 0.0
    %2178 = vmatprep.subr.mxu0 0.0
    %2179 = vmatpush1.msra.mxu0 0.0
    %2180 = vmatprep.subr.mxu0 0.0
    %2181 = vmatpush1.msra.mxu0 0.0
    %2182 = vmatprep.subr.mxu0 0.0
    %2183 = vmatpush1.msra.mxu0 0.0
    %2184 = vmatprep.subr.mxu0 0.0
    %2185 = vmatpush1.msra.mxu0 0.0
    %2186 = vmatprep.subr.mxu0 0.0
    %2187 = vmatpush1.msra.mxu0 0.0
    %2188 = vmatprep.subr.mxu0 0.0
    %2189 = vmatpush1.msra.mxu0 0.0
    %2190 = vmatprep.subr.mxu0 0.0
    %2191 = vmatpush1.msra.mxu0 0.0
    %2192 = vmatprep.subr.mxu0 0.0
    %2193 = vmatpush1.msra.mxu0 0.0
    %2194 = vmatprep.subr.mxu0 0.0
    %2195 = vmatpush1.msra.mxu0 0.0
    %2196 = vmatprep.subr.mxu0 0.0
    %2197 = vmatpush1.msra.mxu0 0.0
    %2198 = vmatprep.subr.mxu0 0.0
    %2199 = vmatpush1.msra.mxu0 0.0
    %2200 = vmatprep.mubr.f32.mxu0 0.0
    %2201 = vmatmul.mubr.f32.gmra.mrb[0].mxu0 %v1385
    %v2202 = vpop.f32.mrb[0].mxu0
    %v2203 = vadd.f32 0.0, %v2202
    %v2204 = vpop.f32.mrb[0].mxu0
    %2205 = vmatprep.mubr.f32.mxu0 0.0
    %2206 = vmatmul.mubr.f32.gmra.mrb[0].mxu0 %v1387
    %v2207 = vpop.f32.mrb[0].mxu0
    %v2208 = vadd.f32 0.0, %v2207
    %v2209 = vpop.f32.mrb[0].mxu0
    %2210 = vmatprep.mubr.f32.mxu0 0.0
    %2211 = vmatmul.mubr.f32.gmra.mrb[0].mxu0 %v1389
    %v2212 = vpop.f32.mrb[0].mxu0
    %v2213 = vadd.f32 0.0, %v2212
    %v2214 = vpop.f32.mrb[0].mxu0
    %2215 = vmatprep.mubr.f32.mxu0 0.0
    %2216 = vmatmul.mubr.f32.gmra.mrb[0].mxu0 %v1391
    %v2217 = vpop.f32.mrb[0].mxu0
    %v2218 = vadd.f32 0.0, %v2217
    %v2219 = vpop.f32.mrb[0].mxu0
    %2220 = vmatprep.mubr.f32.mxu0 0.0
    %2221 = vmatmul.mubr.f32.gmra.mrb[0].mxu0 %v1393
    %v2222 = vpop.f32.mrb[0].mxu0
    %v2223 = vadd.f32 0.0, %v2222
    %v2224 = vpop.f32.mrb[0].mxu0
    %2225 = vmatprep.mubr.f32.mxu0 0.0
    %2226 = vmatmul.mubr.f32.gmra.mrb[0].mxu0 %v1395
    %v2227 = vpop.f32.mrb[0].mxu0
    %v2228 = vadd.f32 0.0, %v2227
    %v2229 = vpop.f32.mrb[0].mxu0
    %2230 = vmatprep.mubr.f32.mxu0 0.0
    %2231 = vmatmul.mubr.f32.gmra.mrb[0].mxu0 %v1397
    %v2232 = vpop.f32.mrb[0].mxu0
    %v2233 = vadd.f32 0.0, %v2232
    %v2234 = vpop.f32.mrb[0].mxu0
    %2235 = vmatprep.mubr.f32.mxu0 0.0
    %2236 = vmatmul.mubr.f32.gmra.mrb[0].mxu0 %v1399
    %v2237 = vpop.f32.mrb[0].mxu0
    %v2238 = vadd.f32 0.0, %v2237
    %v2239 = vpop.f32.mrb[0].mxu0
    %2240 = vmatprep.mubr.f32.mxu0 0.0
    %2241 = vmatmul.mubr.f32.gmra.mrb[0].mxu0 %v1401
    %v2242 = vpop.f32.mrb[0].mxu0
    %v2243 = vadd.f32 0.0, %v2242
    %v2244 = vpop.f32.mrb[0].mxu0
    %2245 = vmatprep.mubr.f32.mxu0 0.0
    %2246 = vmatmul.mubr.f32.gmra.mrb[0].mxu0 %v1403
    %v2247 = vpop.f32.mrb[0].mxu0
    %v2248 = vadd.f32 0.0, %v2247
    %v2249 = vpop.f32.mrb[0].mxu0
    %2250 = vmatprep.mubr.f32.mxu0 0.0
    %2251 = vmatmul.mubr.f32.gmra.mrb[0].mxu0 %v1405
    %v2252 = vpop.f32.mrb[0].mxu0
    %v2253 = vadd.f32 0.0, %v2252
    %v2254 = vpop.f32.mrb[0].mxu0
    %2255 = vmatprep.mubr.f32.mxu0 0.0
    %2256 = vmatmul.mubr.f32.gmra.mrb[0].mxu0 %v1407
    %v2257 = vpop.f32.mrb[0].mxu0
    %v2258 = vadd.f32 0.0, %v2257
    %v2259 = vpop.f32.mrb[0].mxu0
    %2260 = vmatprep.mubr.f32.mxu0 0.0
    %2261 = vmatmul.mubr.f32.gmra.mrb[0].mxu0 %v1409
    %v2262 = vpop.f32.mrb[0].mxu0
    %v2263 = vadd.f32 0.0, %v2262
    %v2264 = vpop.f32.mrb[0].mxu0
    %2265 = vmatprep.mubr.f32.mxu0 0.0
    %2266 = vmatmul.mubr.f32.gmra.mrb[0].mxu0 %v1411
    %v2267 = vpop.f32.mrb[0].mxu0
    %v2268 = vadd.f32 0.0, %v2267
    %v2269 = vpop.f32.mrb[0].mxu0
    %2270 = vmatprep.mubr.f32.mxu0 0.0
    %2271 = vmatmul.mubr.f32.gmra.mrb[0].mxu0 %v1413
    %v2272 = vpop.f32.mrb[0].mxu0
    %v2273 = vadd.f32 0.0, %v2272
    %v2274 = vpop.f32.mrb[0].mxu0
    %2275 = vmatprep.mubr.f32.mxu0 0.0
    %2276 = vmatmul.mubr.f32.gmra.mrb[0].mxu0 %v1415
    %v2277 = vpop.f32.mrb[0].mxu0
    %v2278 = vadd.f32 0.0, %v2277
    %v2279 = vpop.f32.mrb[0].mxu0
    %2280 = vmatprep.mubr.f32.mxu0 0.0
    %2281 = vmatmul.mubr.f32.gmra.mrb[0].mxu0 %v1417
    %v2282 = vpop.f32.mrb[0].mxu0
    %v2283 = vadd.f32 0.0, %v2282
    %v2284 = vpop.f32.mrb[0].mxu0
    %2285 = vmatprep.mubr.f32.mxu0 0.0
    %2286 = vmatmul.mubr.f32.gmra.mrb[0].mxu0 %v1419
    %v2287 = vpop.f32.mrb[0].mxu0
    %v2288 = vadd.f32 0.0, %v2287
    %v2289 = vpop.f32.mrb[0].mxu0
    %2290 = vmatprep.mubr.f32.mxu0 0.0
    %2291 = vmatmul.mubr.f32.gmra.mrb[0].mxu0 %v1421
    %v2292 = vpop.f32.mrb[0].mxu0
    %v2293 = vadd.f32 0.0, %v2292
    %v2294 = vpop.f32.mrb[0].mxu0
    %2295 = vmatprep.mubr.f32.mxu0 0.0
    %2296 = vmatmul.mubr.f32.gmra.mrb[0].mxu0 %v1423
    %v2297 = vpop.f32.mrb[0].mxu0
    %v2298 = vadd.f32 0.0, %v2297
    %v2299 = vpop.f32.mrb[0].mxu0
    %2300 = vmatprep.mubr.f32.mxu0 0.0
    %2301 = vmatmul.mubr.f32.gmra.mrb[0].mxu0 %v1425
    %v2302 = vpop.f32.mrb[0].mxu0
    %v2303 = vadd.f32 0.0, %v2302
    %v2304 = vpop.f32.mrb[0].mxu0
    %2305 = vmatprep.mubr.f32.mxu0 0.0
    %2306 = vmatmul.mubr.f32.gmra.mrb[0].mxu0 %v1427
    %v2307 = vpop.f32.mrb[0].mxu0
    %v2308 = vadd.f32 0.0, %v2307
    %v2309 = vpop.f32.mrb[0].mxu0
    %2310 = vmatprep.mubr.f32.mxu0 0.0
    %2311 = vmatmul.mubr.f32.gmra.mrb[0].mxu0 %v1429
    %v2312 = vpop.f32.mrb[0].mxu0
    %v2313 = vadd.f32 0.0, %v2312
    %v2314 = vpop.f32.mrb[0].mxu0
    %2315 = vmatprep.mubr.f32.mxu0 0.0
    %2316 = vmatmul.mubr.f32.gmra.mrb[0].mxu0 %v2132
    %v2317 = vpop.f32.mrb[0].mxu0
    %v2318 = vadd.f32 0.0, %v2317
    %v2319 = vpop.f32.mrb[0].mxu0
    %2320 = vmatprep.mubr.f32.mxu0 0.0
    %2321 = vmatmul.mubr.f32.gmra.mrb[0].mxu0 %v2134
    %v2322 = vpop.f32.mrb[0].mxu0
    %v2323 = vadd.f32 0.0, %v2322
    %v2324 = vpop.f32.mrb[0].mxu0
    %2325 = vdwg.mxu0
    %v2350 = vcombine.high %v2203, %v2203
    %v2351 = vcombine.high %v2208, %v2208
    %v2352 = vcombine.high %v2213, %v2213
    %v2353 = vcombine.high %v2218, %v2218
    %v2354 = vcombine.high %v2223, %v2223
    %v2355 = vcombine.high %v2228, %v2228
    %v2356 = vcombine.high %v2233, %v2233
    %v2357 = vcombine.high %v2238, %v2238
    %v2358 = vcombine.high %v2243, %v2243
    %v2359 = vcombine.high %v2248, %v2248
    %v2360 = vcombine.high %v2253, %v2253
    %v2361 = vcombine.high %v2258, %v2258
    %v2362 = vcombine.high %v2263, %v2263
    %v2363 = vcombine.high %v2268, %v2268
    %v2364 = vcombine.high %v2273, %v2273
    %v2365 = vcombine.high %v2278, %v2278
    %v2366 = vcombine.high %v2283, %v2283
    %v2367 = vcombine.high %v2288, %v2288
    %v2368 = vcombine.high %v2293, %v2293
    %v2369 = vcombine.high %v2298, %v2298
    %v2370 = vcombine.high %v2303, %v2303
    %v2371 = vcombine.high %v2308, %v2308
    %v2372 = vcombine.high %v2313, %v2313
    %v2373 = vcombine.high %v2318, %v2318
    %v2398 = vadd.f32 %v2081, %v2203
    %v2399 = vadd.f32 %v2082, %v2350
    %v2400 = vadd.f32 %v2083, %v2208
    %v2401 = vadd.f32 %v2084, %v2351
    %v2402 = vadd.f32 %v2085, %v2213
    %v2403 = vadd.f32 %v2086, %v2352
    %v2404 = vadd.f32 %v2087, %v2218
    %v2405 = vadd.f32 %v2088, %v2353
    %v2406 = vadd.f32 %v2089, %v2223
    %v2407 = vadd.f32 %v2090, %v2354
    %v2408 = vadd.f32 %v2091, %v2228
    %v2409 = vadd.f32 %v2092, %v2355
    %v2410 = vadd.f32 %v2093, %v2233
    %v2411 = vadd.f32 %v2094, %v2356
    %v2412 = vadd.f32 %v2095, %v2238
    %v2413 = vadd.f32 %v2096, %v2357
    %v2414 = vadd.f32 %v2097, %v2243
    %v2415 = vadd.f32 %v2098, %v2358
    %v2416 = vadd.f32 %v2099, %v2248
    %v2417 = vadd.f32 %v2100, %v2359
    %v2418 = vadd.f32 %v2101, %v2253
    %v2419 = vadd.f32 %v2102, %v2360
    %v2420 = vadd.f32 %v2103, %v2258
    %v2421 = vadd.f32 %v2104, %v2361
    %v2422 = vadd.f32 %v2105, %v2263
    %v2423 = vadd.f32 %v2106, %v2362
    %v2424 = vadd.f32 %v2107, %v2268
    %v2425 = vadd.f32 %v2108, %v2363
    %v2426 = vadd.f32 %v2109, %v2273
    %v2427 = vadd.f32 %v2110, %v2364
    %v2428 = vadd.f32 %v2111, %v2278
    %v2429 = vadd.f32 %v2112, %v2365
    %v2430 = vadd.f32 %v2113, %v2283
    %v2431 = vadd.f32 %v2114, %v2366
    %v2432 = vadd.f32 %v2115, %v2288
    %v2433 = vadd.f32 %v2116, %v2367
    %v2434 = vadd.f32 %v2117, %v2293
    %v2435 = vadd.f32 %v2118, %v2368
    %v2436 = vadd.f32 %v2119, %v2298
    %v2437 = vadd.f32 %v2120, %v2369
    %v2438 = vadd.f32 %v2121, %v2303
    %v2439 = vadd.f32 %v2122, %v2370
    %v2440 = vadd.f32 %v2123, %v2308
    %v2441 = vadd.f32 %v2124, %v2371
    %v2442 = vadd.f32 %v2125, %v2313
    %v2443 = vadd.f32 %v2126, %v2372
    %v2444 = vadd.f32 %v2127, %v2318
    %v2445 = vadd.f32 %v2128, %v2373
    %v2446 = vadd.f32 %v2129, %v2323
    %v2447 = vcombine.low %v1292, %v1293
    %v2448 = vsel %vm1382, %v2447, 0
    %v2450 = vsel %vm1382, 0.0, 0
    %2452 = vmatprep.subr.mxu0 0.0
    %2453 = vmatpush1.msra.mxu0 %v1300
    %2454 = vmatprep.subr.mxu0 0.0
    %2455 = vmatpush1.msra.mxu0 %v1301
    %2456 = vmatprep.subr.mxu0 0.0
    %2457 = vmatpush1.msra.mxu0 0.0
    %2458 = vmatprep.subr.mxu0 0.0
    %2459 = vmatpush1.msra.mxu0 0.0
    %2460 = vmatprep.subr.mxu0 0.0
    %2461 = vmatpush1.msra.mxu0 0.0
    %2462 = vmatprep.subr.mxu0 0.0
    %2463 = vmatpush1.msra.mxu0 0.0
    %2464 = vmatprep.subr.mxu0 0.0
    %2465 = vmatpush1.msra.mxu0 0.0
    %2466 = vmatprep.subr.mxu0 0.0
    %2467 = vmatpush1.msra.mxu0 0.0
    %2468 = vmatprep.subr.mxu0 0.0
    %2469 = vmatpush1.msra.mxu0 0.0
    %2470 = vmatprep.subr.mxu0 0.0
    %2471 = vmatpush1.msra.mxu0 0.0
    %2472 = vmatprep.subr.mxu0 0.0
    %2473 = vmatpush1.msra.mxu0 0.0
    %2474 = vmatprep.subr.mxu0 0.0
    %2475 = vmatpush1.msra.mxu0 0.0
    %2476 = vmatprep.subr.mxu0 0.0
    %2477 = vmatpush1.msra.mxu0 0.0
    %2478 = vmatprep.subr.mxu0 0.0
    %2479 = vmatpush1.msra.mxu0 0.0
    %2480 = vmatprep.subr.mxu0 0.0
    %2481 = vmatpush1.msra.mxu0 0.0
    %2482 = vmatprep.subr.mxu0 0.0
    %2483 = vmatpush1.msra.mxu0 0.0
    %2484 = vmatprep.subr.mxu0 0.0
    %2485 = vmatpush1.msra.mxu0 0.0
    %2486 = vmatprep.subr.mxu0 0.0
    %2487 = vmatpush1.msra.mxu0 0.0
    %2488 = vmatprep.subr.mxu0 0.0
    %2489 = vmatpush1.msra.mxu0 0.0
    %2490 = vmatprep.subr.mxu0 0.0
    %2491 = vmatpush1.msra.mxu0 0.0
    %2492 = vmatprep.subr.mxu0 0.0
    %2493 = vmatpush1.msra.mxu0 0.0
    %2494 = vmatprep.subr.mxu0 0.0
    %2495 = vmatpush1.msra.mxu0 0.0
    %2496 = vmatprep.subr.mxu0 0.0
    %2497 = vmatpush1.msra.mxu0 0.0
    %2498 = vmatprep.subr.mxu0 0.0
    %2499 = vmatpush1.msra.mxu0 0.0
    %2500 = vmatprep.subr.mxu0 0.0
    %2501 = vmatpush1.msra.mxu0 0.0
    %2502 = vmatprep.subr.mxu0 0.0
    %2503 = vmatpush1.msra.mxu0 0.0
    %2504 = vmatprep.subr.mxu0 0.0
    %2505 = vmatpush1.msra.mxu0 0.0
    %2506 = vmatprep.subr.mxu0 0.0
    %2507 = vmatpush1.msra.mxu0 0.0
    %2508 = vmatprep.subr.mxu0 0.0
    %2509 = vmatpush1.msra.mxu0 0.0
    %2510 = vmatprep.subr.mxu0 0.0
    %2511 = vmatpush1.msra.mxu0 0.0
    %2512 = vmatprep.subr.mxu0 0.0
    %2513 = vmatpush1.msra.mxu0 0.0
    %2514 = vmatprep.subr.mxu0 0.0
    %2515 = vmatpush1.msra.mxu0 0.0
    %2516 = vmatprep.mubr.f32.mxu0 0.0
    %2517 = vmatmul.mubr.f32.gmra.mrb[0].mxu0 %v1771
    %v2518 = vpop.f32.mrb[0].mxu0
    %v2519 = vadd.f32 0.0, %v2518
    %v2520 = vpop.f32.mrb[0].mxu0
    %2521 = vmatprep.mubr.f32.mxu0 0.0
    %2522 = vmatmul.mubr.f32.gmra.mrb[0].mxu0 %v1773
    %v2523 = vpop.f32.mrb[0].mxu0
    %v2524 = vadd.f32 0.0, %v2523
    %v2525 = vpop.f32.mrb[0].mxu0
    %2526 = vmatprep.mubr.f32.mxu0 0.0
    %2527 = vmatmul.mubr.f32.gmra.mrb[0].mxu0 %v1775
    %v2528 = vpop.f32.mrb[0].mxu0
    %v2529 = vadd.f32 0.0, %v2528
    %v2530 = vpop.f32.mrb[0].mxu0
    %2531 = vmatprep.mubr.f32.mxu0 0.0
    %2532 = vmatmul.mubr.f32.gmra.mrb[0].mxu0 %v1777
    %v2533 = vpop.f32.mrb[0].mxu0
    %v2534 = vadd.f32 0.0, %v2533
    %v2535 = vpop.f32.mrb[0].mxu0
    %2536 = vmatprep.mubr.f32.mxu0 0.0
    %2537 = vmatmul.mubr.f32.gmra.mrb[0].mxu0 %v1779
    %v2538 = vpop.f32.mrb[0].mxu0
    %v2539 = vadd.f32 0.0, %v2538
    %v2540 = vpop.f32.mrb[0].mxu0
    %2541 = vmatprep.mubr.f32.mxu0 0.0
    %2542 = vmatmul.mubr.f32.gmra.mrb[0].mxu0 %v1781
    %v2543 = vpop.f32.mrb[0].mxu0
    %v2544 = vadd.f32 0.0, %v2543
    %v2545 = vpop.f32.mrb[0].mxu0
    %2546 = vmatprep.mubr.f32.mxu0 0.0
    %2547 = vmatmul.mubr.f32.gmra.mrb[0].mxu0 %v1783
    %v2548 = vpop.f32.mrb[0].mxu0
    %v2549 = vadd.f32 0.0, %v2548
    %v2550 = vpop.f32.mrb[0].mxu0
    %2551 = vmatprep.mubr.f32.mxu0 0.0
    %2552 = vmatmul.mubr.f32.gmra.mrb[0].mxu0 %v1785
    %v2553 = vpop.f32.mrb[0].mxu0
    %v2554 = vadd.f32 0.0, %v2553
    %v2555 = vpop.f32.mrb[0].mxu0
    %2556 = vmatprep.mubr.f32.mxu0 0.0
    %2557 = vmatmul.mubr.f32.gmra.mrb[0].mxu0 %v1787
    %v2558 = vpop.f32.mrb[0].mxu0
    %v2559 = vadd.f32 0.0, %v2558
    %v2560 = vpop.f32.mrb[0].mxu0
    %2561 = vmatprep.mubr.f32.mxu0 0.0
    %2562 = vmatmul.mubr.f32.gmra.mrb[0].mxu0 %v1789
    %v2563 = vpop.f32.mrb[0].mxu0
    %v2564 = vadd.f32 0.0, %v2563
    %v2565 = vpop.f32.mrb[0].mxu0
    %2566 = vmatprep.mubr.f32.mxu0 0.0
    %2567 = vmatmul.mubr.f32.gmra.mrb[0].mxu0 %v1791
    %v2568 = vpop.f32.mrb[0].mxu0
    %v2569 = vadd.f32 0.0, %v2568
    %v2570 = vpop.f32.mrb[0].mxu0
    %2571 = vmatprep.mubr.f32.mxu0 0.0
    %2572 = vmatmul.mubr.f32.gmra.mrb[0].mxu0 %v1793
    %v2573 = vpop.f32.mrb[0].mxu0
    %v2574 = vadd.f32 0.0, %v2573
    %v2575 = vpop.f32.mrb[0].mxu0
    %2576 = vmatprep.mubr.f32.mxu0 0.0
    %2577 = vmatmul.mubr.f32.gmra.mrb[0].mxu0 %v1795
    %v2578 = vpop.f32.mrb[0].mxu0
    %v2579 = vadd.f32 0.0, %v2578
    %v2580 = vpop.f32.mrb[0].mxu0
    %2581 = vmatprep.mubr.f32.mxu0 0.0
    %2582 = vmatmul.mubr.f32.gmra.mrb[0].mxu0 %v1797
    %v2583 = vpop.f32.mrb[0].mxu0
    %v2584 = vadd.f32 0.0, %v2583
    %v2585 = vpop.f32.mrb[0].mxu0
    %2586 = vmatprep.mubr.f32.mxu0 0.0
    %2587 = vmatmul.mubr.f32.gmra.mrb[0].mxu0 %v1799
    %v2588 = vpop.f32.mrb[0].mxu0
    %v2589 = vadd.f32 0.0, %v2588
    %v2590 = vpop.f32.mrb[0].mxu0
    %2591 = vmatprep.mubr.f32.mxu0 0.0
    %2592 = vmatmul.mubr.f32.gmra.mrb[0].mxu0 %v1801
    %v2593 = vpop.f32.mrb[0].mxu0
    %v2594 = vadd.f32 0.0, %v2593
    %v2595 = vpop.f32.mrb[0].mxu0
    %2596 = vmatprep.mubr.f32.mxu0 0.0
    %2597 = vmatmul.mubr.f32.gmra.mrb[0].mxu0 %v1803
    %v2598 = vpop.f32.mrb[0].mxu0
    %v2599 = vadd.f32 0.0, %v2598
    %v2600 = vpop.f32.mrb[0].mxu0
    %2601 = vmatprep.mubr.f32.mxu0 0.0
    %2602 = vmatmul.mubr.f32.gmra.mrb[0].mxu0 %v1805
    %v2603 = vpop.f32.mrb[0].mxu0
    %v2604 = vadd.f32 0.0, %v2603
    %v2605 = vpop.f32.mrb[0].mxu0
    %2606 = vmatprep.mubr.f32.mxu0 0.0
    %2607 = vmatmul.mubr.f32.gmra.mrb[0].mxu0 %v1807
    %v2608 = vpop.f32.mrb[0].mxu0
    %v2609 = vadd.f32 0.0, %v2608
    %v2610 = vpop.f32.mrb[0].mxu0
    %2611 = vmatprep.mubr.f32.mxu0 0.0
    %2612 = vmatmul.mubr.f32.gmra.mrb[0].mxu0 %v1809
    %v2613 = vpop.f32.mrb[0].mxu0
    %v2614 = vadd.f32 0.0, %v2613
    %v2615 = vpop.f32.mrb[0].mxu0
    %2616 = vmatprep.mubr.f32.mxu0 0.0
    %2617 = vmatmul.mubr.f32.gmra.mrb[0].mxu0 %v1811
    %v2618 = vpop.f32.mrb[0].mxu0
    %v2619 = vadd.f32 0.0, %v2618
    %v2620 = vpop.f32.mrb[0].mxu0
    %2621 = vmatprep.mubr.f32.mxu0 0.0
    %2622 = vmatmul.mubr.f32.gmra.mrb[0].mxu0 %v1813
    %v2623 = vpop.f32.mrb[0].mxu0
    %v2624 = vadd.f32 0.0, %v2623
    %v2625 = vpop.f32.mrb[0].mxu0
    %2626 = vmatprep.mubr.f32.mxu0 0.0
    %2627 = vmatmul.mubr.f32.gmra.mrb[0].mxu0 %v1815
    %v2628 = vpop.f32.mrb[0].mxu0
    %v2629 = vadd.f32 0.0, %v2628
    %v2630 = vpop.f32.mrb[0].mxu0
    %2631 = vmatprep.mubr.f32.mxu0 0.0
    %2632 = vmatmul.mubr.f32.gmra.mrb[0].mxu0 %v2448
    %v2633 = vpop.f32.mrb[0].mxu0
    %v2634 = vadd.f32 0.0, %v2633
    %v2635 = vpop.f32.mrb[0].mxu0
    %2636 = vmatprep.mubr.f32.mxu0 0.0
    %2637 = vmatmul.mubr.f32.gmra.mrb[0].mxu0 %v2450
    %v2638 = vpop.f32.mrb[0].mxu0
    %v2639 = vadd.f32 0.0, %v2638
    %v2640 = vpop.f32.mrb[0].mxu0
    %2641 = vdwg.mxu0
    %v2666 = vcombine.high %v2519, %v2519
    %v2667 = vcombine.high %v2524, %v2524
    %v2668 = vcombine.high %v2529, %v2529
    %v2669 = vcombine.high %v2534, %v2534
    %v2670 = vcombine.high %v2539, %v2539
    %v2671 = vcombine.high %v2544, %v2544
    %v2672 = vcombine.high %v2549, %v2549
    %v2673 = vcombine.high %v2554, %v2554
    %v2674 = vcombine.high %v2559, %v2559
    %v2675 = vcombine.high %v2564, %v2564
    %v2676 = vcombine.high %v2569, %v2569
    %v2677 = vcombine.high %v2574, %v2574
    %v2678 = vcombine.high %v2579, %v2579
    %v2679 = vcombine.high %v2584, %v2584
    %v2680 = vcombine.high %v2589, %v2589
    %v2681 = vcombine.high %v2594, %v2594
    %v2682 = vcombine.high %v2599, %v2599
    %v2683 = vcombine.high %v2604, %v2604
    %v2684 = vcombine.high %v2609, %v2609
    %v2685 = vcombine.high %v2614, %v2614
    %v2686 = vcombine.high %v2619, %v2619
    %v2687 = vcombine.high %v2624, %v2624
    %v2688 = vcombine.high %v2629, %v2629
    %v2689 = vcombine.high %v2634, %v2634
    %v2714 = vadd.f32 %v2398, %v2519
    %v2715 = vadd.f32 %v2399, %v2666
    %v2716 = vadd.f32 %v2400, %v2524
    %v2717 = vadd.f32 %v2401, %v2667
    %v2718 = vadd.f32 %v2402, %v2529
    %v2719 = vadd.f32 %v2403, %v2668
    %v2720 = vadd.f32 %v2404, %v2534
    %v2721 = vadd.f32 %v2405, %v2669
    %v2722 = vadd.f32 %v2406, %v2539
    %v2723 = vadd.f32 %v2407, %v2670
    %v2724 = vadd.f32 %v2408, %v2544
    %v2725 = vadd.f32 %v2409, %v2671
    %v2726 = vadd.f32 %v2410, %v2549
    %v2727 = vadd.f32 %v2411, %v2672
    %v2728 = vadd.f32 %v2412, %v2554
    %v2729 = vadd.f32 %v2413, %v2673
    %v2730 = vadd.f32 %v2414, %v2559
    %v2731 = vadd.f32 %v2415, %v2674
    %v2732 = vadd.f32 %v2416, %v2564
    %v2733 = vadd.f32 %v2417, %v2675
    %v2734 = vadd.f32 %v2418, %v2569
    %v2735 = vadd.f32 %v2419, %v2676
    %v2736 = vadd.f32 %v2420, %v2574
    %v2737 = vadd.f32 %v2421, %v2677
    %v2738 = vadd.f32 %v2422, %v2579
    %v2739 = vadd.f32 %v2423, %v2678
    %v2740 = vadd.f32 %v2424, %v2584
    %v2741 = vadd.f32 %v2425, %v2679
    %v2742 = vadd.f32 %v2426, %v2589
    %v2743 = vadd.f32 %v2427, %v2680
    %v2744 = vadd.f32 %v2428, %v2594
    %v2745 = vadd.f32 %v2429, %v2681
    %v2746 = vadd.f32 %v2430, %v2599
    %v2747 = vadd.f32 %v2431, %v2682
    %v2748 = vadd.f32 %v2432, %v2604
    %v2749 = vadd.f32 %v2433, %v2683
    %v2750 = vadd.f32 %v2434, %v2609
    %v2751 = vadd.f32 %v2435, %v2684
    %v2752 = vadd.f32 %v2436, %v2614
    %v2753 = vadd.f32 %v2437, %v2685
    %v2754 = vadd.f32 %v2438, %v2619
    %v2755 = vadd.f32 %v2439, %v2686
    %v2756 = vadd.f32 %v2440, %v2624
    %v2757 = vadd.f32 %v2441, %v2687
    %v2758 = vadd.f32 %v2442, %v2629
    %v2759 = vadd.f32 %v2443, %v2688
    %v2760 = vadd.f32 %v2444, %v2634
    %v2761 = vadd.f32 %v2445, %v2689
    %v2762 = vadd.f32 %v2446, %v2639
    %v2763 = vcombine.low %v1293, 0.0
    %v2764 = vsel %vm1382, %v2763, 0
    %2766 = vmatprep.subr.mxu0 0.0
    %2767 = vmatpush1.msra.mxu0 %v1302
    %2768 = vmatprep.subr.mxu0 0.0
    %2769 = vmatpush1.msra.mxu0 %v1303
    %2770 = vmatprep.subr.mxu0 0.0
    %2771 = vmatpush1.msra.mxu0 0.0
    %2772 = vmatprep.subr.mxu0 0.0
    %2773 = vmatpush1.msra.mxu0 0.0
    %2774 = vmatprep.subr.mxu0 0.0
    %2775 = vmatpush1.msra.mxu0 0.0
    %2776 = vmatprep.subr.mxu0 0.0
    %2777 = vmatpush1.msra.mxu0 0.0
    %2778 = vmatprep.subr.mxu0 0.0
    %2779 = vmatpush1.msra.mxu0 0.0
    %2780 = vmatprep.subr.mxu0 0.0
    %2781 = vmatpush1.msra.mxu0 0.0
    %2782 = vmatprep.subr.mxu0 0.0
    %2783 = vmatpush1.msra.mxu0 0.0
    %2784 = vmatprep.subr.mxu0 0.0
    %2785 = vmatpush1.msra.mxu0 0.0
    %2786 = vmatprep.subr.mxu0 0.0
    %2787 = vmatpush1.msra.mxu0 0.0
    %2788 = vmatprep.subr.mxu0 0.0
    %2789 = vmatpush1.msra.mxu0 0.0
    %2790 = vmatprep.subr.mxu0 0.0
    %2791 = vmatpush1.msra.mxu0 0.0
    %2792 = vmatprep.subr.mxu0 0.0
    %2793 = vmatpush1.msra.mxu0 0.0
    %2794 = vmatprep.subr.mxu0 0.0
    %2795 = vmatpush1.msra.mxu0 0.0
    %2796 = vmatprep.subr.mxu0 0.0
    %2797 = vmatpush1.msra.mxu0 0.0
    %2798 = vmatprep.subr.mxu0 0.0
    %2799 = vmatpush1.msra.mxu0 0.0
    %2800 = vmatprep.subr.mxu0 0.0
    %2801 = vmatpush1.msra.mxu0 0.0
    %2802 = vmatprep.subr.mxu0 0.0
    %2803 = vmatpush1.msra.mxu0 0.0
    %2804 = vmatprep.subr.mxu0 0.0
    %2805 = vmatpush1.msra.mxu0 0.0
    %2806 = vmatprep.subr.mxu0 0.0
    %2807 = vmatpush1.msra.mxu0 0.0
    %2808 = vmatprep.subr.mxu0 0.0
    %2809 = vmatpush1.msra.mxu0 0.0
    %2810 = vmatprep.subr.mxu0 0.0
    %2811 = vmatpush1.msra.mxu0 0.0
    %2812 = vmatprep.subr.mxu0 0.0
    %2813 = vmatpush1.msra.mxu0 0.0
    %2814 = vmatprep.subr.mxu0 0.0
    %2815 = vmatpush1.msra.mxu0 0.0
    %2816 = vmatprep.subr.mxu0 0.0
    %2817 = vmatpush1.msra.mxu0 0.0
    %2818 = vmatprep.subr.mxu0 0.0
    %2819 = vmatpush1.msra.mxu0 0.0
    %2820 = vmatprep.subr.mxu0 0.0
    %2821 = vmatpush1.msra.mxu0 0.0
    %2822 = vmatprep.subr.mxu0 0.0
    %2823 = vmatpush1.msra.mxu0 0.0
    %2824 = vmatprep.subr.mxu0 0.0
    %2825 = vmatpush1.msra.mxu0 0.0
    %2826 = vmatprep.subr.mxu0 0.0
    %2827 = vmatpush1.msra.mxu0 0.0
    %2828 = vmatprep.subr.mxu0 0.0
    %2829 = vmatpush1.msra.mxu0 0.0
    %2830 = vmatprep.mubr.f32.mxu0 0.0
    %2831 = vmatmul.mubr.f32.gmra.mrb[0].mxu0 %v1387
    %v2832 = vpop.f32.mrb[0].mxu0
    %v2833 = vadd.f32 0.0, %v2832
    %v2834 = vpop.f32.mrb[0].mxu0
    %2835 = vmatprep.mubr.f32.mxu0 0.0
    %2836 = vmatmul.mubr.f32.gmra.mrb[0].mxu0 %v1389
    %v2837 = vpop.f32.mrb[0].mxu0
    %v2838 = vadd.f32 0.0, %v2837
    %v2839 = vpop.f32.mrb[0].mxu0
    %2840 = vmatprep.mubr.f32.mxu0 0.0
    %2841 = vmatmul.mubr.f32.gmra.mrb[0].mxu0 %v1391
    %v2842 = vpop.f32.mrb[0].mxu0
    %v2843 = vadd.f32 0.0, %v2842
    %v2844 = vpop.f32.mrb[0].mxu0
    %2845 = vmatprep.mubr.f32.mxu0 0.0
    %2846 = vmatmul.mubr.f32.gmra.mrb[0].mxu0 %v1393
    %v2847 = vpop.f32.mrb[0].mxu0
    %v2848 = vadd.f32 0.0, %v2847
    %v2849 = vpop.f32.mrb[0].mxu0
    %2850 = vmatprep.mubr.f32.mxu0 0.0
    %2851 = vmatmul.mubr.f32.gmra.mrb[0].mxu0 %v1395
    %v2852 = vpop.f32.mrb[0].mxu0
    %v2853 = vadd.f32 0.0, %v2852
    %v2854 = vpop.f32.mrb[0].mxu0
    %2855 = vmatprep.mubr.f32.mxu0 0.0
    %2856 = vmatmul.mubr.f32.gmra.mrb[0].mxu0 %v1397
    %v2857 = vpop.f32.mrb[0].mxu0
    %v2858 = vadd.f32 0.0, %v2857
    %v2859 = vpop.f32.mrb[0].mxu0
    %2860 = vmatprep.mubr.f32.mxu0 0.0
    %2861 = vmatmul.mubr.f32.gmra.mrb[0].mxu0 %v1399
    %v2862 = vpop.f32.mrb[0].mxu0
    %v2863 = vadd.f32 0.0, %v2862
    %v2864 = vpop.f32.mrb[0].mxu0
    %2865 = vmatprep.mubr.f32.mxu0 0.0
    %2866 = vmatmul.mubr.f32.gmra.mrb[0].mxu0 %v1401
    %v2867 = vpop.f32.mrb[0].mxu0
    %v2868 = vadd.f32 0.0, %v2867
    %v2869 = vpop.f32.mrb[0].mxu0
    %2870 = vmatprep.mubr.f32.mxu0 0.0
    %2871 = vmatmul.mubr.f32.gmra.mrb[0].mxu0 %v1403
    %v2872 = vpop.f32.mrb[0].mxu0
    %v2873 = vadd.f32 0.0, %v2872
    %v2874 = vpop.f32.mrb[0].mxu0
    %2875 = vmatprep.mubr.f32.mxu0 0.0
    %2876 = vmatmul.mubr.f32.gmra.mrb[0].mxu0 %v1405
    %v2877 = vpop.f32.mrb[0].mxu0
    %v2878 = vadd.f32 0.0, %v2877
    %v2879 = vpop.f32.mrb[0].mxu0
    %2880 = vmatprep.mubr.f32.mxu0 0.0
    %2881 = vmatmul.mubr.f32.gmra.mrb[0].mxu0 %v1407
    %v2882 = vpop.f32.mrb[0].mxu0
    %v2883 = vadd.f32 0.0, %v2882
    %v2884 = vpop.f32.mrb[0].mxu0
    %2885 = vmatprep.mubr.f32.mxu0 0.0
    %2886 = vmatmul.mubr.f32.gmra.mrb[0].mxu0 %v1409
    %v2887 = vpop.f32.mrb[0].mxu0
    %v2888 = vadd.f32 0.0, %v2887
    %v2889 = vpop.f32.mrb[0].mxu0
    %2890 = vmatprep.mubr.f32.mxu0 0.0
    %2891 = vmatmul.mubr.f32.gmra.mrb[0].mxu0 %v1411
    %v2892 = vpop.f32.mrb[0].mxu0
    %v2893 = vadd.f32 0.0, %v2892
    %v2894 = vpop.f32.mrb[0].mxu0
    %2895 = vmatprep.mubr.f32.mxu0 0.0
    %2896 = vmatmul.mubr.f32.gmra.mrb[0].mxu0 %v1413
    %v2897 = vpop.f32.mrb[0].mxu0
    %v2898 = vadd.f32 0.0, %v2897
    %v2899 = vpop.f32.mrb[0].mxu0
    %2900 = vmatprep.mubr.f32.mxu0 0.0
    %2901 = vmatmul.mubr.f32.gmra.mrb[0].mxu0 %v1415
    %v2902 = vpop.f32.mrb[0].mxu0
    %v2903 = vadd.f32 0.0, %v2902
    %v2904 = vpop.f32.mrb[0].mxu0
    %2905 = vmatprep.mubr.f32.mxu0 0.0
    %2906 = vmatmul.mubr.f32.gmra.mrb[0].mxu0 %v1417
    %v2907 = vpop.f32.mrb[0].mxu0
    %v2908 = vadd.f32 0.0, %v2907
    %v2909 = vpop.f32.mrb[0].mxu0
    %2910 = vmatprep.mubr.f32.mxu0 0.0
    %2911 = vmatmul.mubr.f32.gmra.mrb[0].mxu0 %v1419
    %v2912 = vpop.f32.mrb[0].mxu0
    %v2913 = vadd.f32 0.0, %v2912
    %v2914 = vpop.f32.mrb[0].mxu0
    %2915 = vmatprep.mubr.f32.mxu0 0.0
    %2916 = vmatmul.mubr.f32.gmra.mrb[0].mxu0 %v1421
    %v2917 = vpop.f32.mrb[0].mxu0
    %v2918 = vadd.f32 0.0, %v2917
    %v2919 = vpop.f32.mrb[0].mxu0
    %2920 = vmatprep.mubr.f32.mxu0 0.0
    %2921 = vmatmul.mubr.f32.gmra.mrb[0].mxu0 %v1423
    %v2922 = vpop.f32.mrb[0].mxu0
    %v2923 = vadd.f32 0.0, %v2922
    %v2924 = vpop.f32.mrb[0].mxu0
    %2925 = vmatprep.mubr.f32.mxu0 0.0
    %2926 = vmatmul.mubr.f32.gmra.mrb[0].mxu0 %v1425
    %v2927 = vpop.f32.mrb[0].mxu0
    %v2928 = vadd.f32 0.0, %v2927
    %v2929 = vpop.f32.mrb[0].mxu0
    %2930 = vmatprep.mubr.f32.mxu0 0.0
    %2931 = vmatmul.mubr.f32.gmra.mrb[0].mxu0 %v1427
    %v2932 = vpop.f32.mrb[0].mxu0
    %v2933 = vadd.f32 0.0, %v2932
    %v2934 = vpop.f32.mrb[0].mxu0
    %2935 = vmatprep.mubr.f32.mxu0 0.0
    %2936 = vmatmul.mubr.f32.gmra.mrb[0].mxu0 %v1429
    %v2937 = vpop.f32.mrb[0].mxu0
    %v2938 = vadd.f32 0.0, %v2937
    %v2939 = vpop.f32.mrb[0].mxu0
    %2940 = vmatprep.mubr.f32.mxu0 0.0
    %2941 = vmatmul.mubr.f32.gmra.mrb[0].mxu0 %v2132
    %v2942 = vpop.f32.mrb[0].mxu0
    %v2943 = vadd.f32 0.0, %v2942
    %v2944 = vpop.f32.mrb[0].mxu0
    %2945 = vmatprep.mubr.f32.mxu0 0.0
    %2946 = vmatmul.mubr.f32.gmra.mrb[0].mxu0 %v2764
    %v2947 = vpop.f32.mrb[0].mxu0
    %v2948 = vadd.f32 0.0, %v2947
    %v2949 = vpop.f32.mrb[0].mxu0
    %2950 = vmatprep.mubr.f32.mxu0 0.0
    %2951 = vmatmul.mubr.f32.gmra.mrb[0].mxu0 %v2450
    %v2952 = vpop.f32.mrb[0].mxu0
    %v2953 = vadd.f32 0.0, %v2952
    %v2954 = vpop.f32.mrb[0].mxu0
    %2955 = vdwg.mxu0
    %v2980 = vcombine.high %v2833, %v2833
    %v2981 = vcombine.high %v2838, %v2838
    %v2982 = vcombine.high %v2843, %v2843
    %v2983 = vcombine.high %v2848, %v2848
    %v2984 = vcombine.high %v2853, %v2853
    %v2985 = vcombine.high %v2858, %v2858
    %v2986 = vcombine.high %v2863, %v2863
    %v2987 = vcombine.high %v2868, %v2868
    %v2988 = vcombine.high %v2873, %v2873
    %v2989 = vcombine.high %v2878, %v2878
    %v2990 = vcombine.high %v2883, %v2883
    %v2991 = vcombine.high %v2888, %v2888
    %v2992 = vcombine.high %v2893, %v2893
    %v2993 = vcombine.high %v2898, %v2898
    %v2994 = vcombine.high %v2903, %v2903
    %v2995 = vcombine.high %v2908, %v2908
    %v2996 = vcombine.high %v2913, %v2913
    %v2997 = vcombine.high %v2918, %v2918
    %v2998 = vcombine.high %v2923, %v2923
    %v2999 = vcombine.high %v2928, %v2928
    %v3000 = vcombine.high %v2933, %v2933
    %v3001 = vcombine.high %v2938, %v2938
    %v3002 = vcombine.high %v2943, %v2943
    %v3003 = vcombine.high %v2948, %v2948
    %v3028 = vadd.f32 %v2714, %v2833
    %v3029 = vadd.f32 %v2715, %v2980
    %v3030 = vadd.f32 %v2716, %v2838
    %v3031 = vadd.f32 %v2717, %v2981
    %v3032 = vadd.f32 %v2718, %v2843
    %v3033 = vadd.f32 %v2719, %v2982
    %v3034 = vadd.f32 %v2720, %v2848
    %v3035 = vadd.f32 %v2721, %v2983
    %v3036 = vadd.f32 %v2722, %v2853
    %v3037 = vadd.f32 %v2723, %v2984
    %v3038 = vadd.f32 %v2724, %v2858
    %v3039 = vadd.f32 %v2725, %v2985
    %v3040 = vadd.f32 %v2726, %v2863
    %v3041 = vadd.f32 %v2727, %v2986
    %v3042 = vadd.f32 %v2728, %v2868
    %v3043 = vadd.f32 %v2729, %v2987
    %v3044 = vadd.f32 %v2730, %v2873
    %v3045 = vadd.f32 %v2731, %v2988
    %v3046 = vadd.f32 %v2732, %v2878
    %v3047 = vadd.f32 %v2733, %v2989
    %v3048 = vadd.f32 %v2734, %v2883
    %v3049 = vadd.f32 %v2735, %v2990
    %v3050 = vadd.f32 %v2736, %v2888
    %v3051 = vadd.f32 %v2737, %v2991
    %v3052 = vadd.f32 %v2738, %v2893
    %v3053 = vadd.f32 %v2739, %v2992
    %v3054 = vadd.f32 %v2740, %v2898
    %v3055 = vadd.f32 %v2741, %v2993
    %v3056 = vadd.f32 %v2742, %v2903
    %v3057 = vadd.f32 %v2743, %v2994
    %v3058 = vadd.f32 %v2744, %v2908
    %v3059 = vadd.f32 %v2745, %v2995
    %v3060 = vadd.f32 %v2746, %v2913
    %v3061 = vadd.f32 %v2747, %v2996
    %v3062 = vadd.f32 %v2748, %v2918
    %v3063 = vadd.f32 %v2749, %v2997
    %v3064 = vadd.f32 %v2750, %v2923
    %v3065 = vadd.f32 %v2751, %v2998
    %v3066 = vadd.f32 %v2752, %v2928
    %v3067 = vadd.f32 %v2753, %v2999
    %v3068 = vadd.f32 %v2754, %v2933
    %v3069 = vadd.f32 %v2755, %v3000
    %v3070 = vadd.f32 %v2756, %v2938
    %v3071 = vadd.f32 %v2757, %v3001
    %v3072 = vadd.f32 %v2758, %v2943
    %v3073 = vadd.f32 %v2759, %v3002
    %v3074 = vadd.f32 %v2760, %v2948
    %v3075 = vadd.f32 %v2761, %v3003
    %v3076 = vadd.f32 %v2762, %v2953
    %v3077 = vmax.f32 %v3028, 0.0
    %v3078 = vmax.f32 %v3029, 0.0
    %v3079 = vmax.f32 %v3030, 0.0
    %v3080 = vmax.f32 %v3031, 0.0
    %v3081 = vmax.f32 %v3032, 0.0
    %v3082 = vmax.f32 %v3033, 0.0
    %v3083 = vmax.f32 %v3034, 0.0
    %v3084 = vmax.f32 %v3035, 0.0
    %v3085 = vmax.f32 %v3036, 0.0
    %v3086 = vmax.f32 %v3037, 0.0
    %v3087 = vmax.f32 %v3038, 0.0
    %v3088 = vmax.f32 %v3039, 0.0
    %v3089 = vmax.f32 %v3040, 0.0
    %v3090 = vmax.f32 %v3041, 0.0
    %v3091 = vmax.f32 %v3042, 0.0
    %v3092 = vmax.f32 %v3043, 0.0
    %v3093 = vmax.f32 %v3044, 0.0
    %v3094 = vmax.f32 %v3045, 0.0
    %v3095 = vmax.f32 %v3046, 0.0
    %v3096 = vmax.f32 %v3047, 0.0
    %v3097 = vmax.f32 %v3048, 0.0
    %v3098 = vmax.f32 %v3049, 0.0
    %v3099 = vmax.f32 %v3050, 0.0
    %v3100 = vmax.f32 %v3051, 0.0
    %v3101 = vmax.f32 %v3052, 0.0
    %v3102 = vmax.f32 %v3053, 0.0
    %v3103 = vmax.f32 %v3054, 0.0
    %v3104 = vmax.f32 %v3055, 0.0
    %v3105 = vmax.f32 %v3056, 0.0
    %v3106 = vmax.f32 %v3057, 0.0
    %v3107 = vmax.f32 %v3058, 0.0
    %v3108 = vmax.f32 %v3059, 0.0
    %v3109 = vmax.f32 %v3060, 0.0
    %v3110 = vmax.f32 %v3061, 0.0
    %v3111 = vmax.f32 %v3062, 0.0
    %v3112 = vmax.f32 %v3063, 0.0
    %v3113 = vmax.f32 %v3064, 0.0
    %v3114 = vmax.f32 %v3065, 0.0
    %v3115 = vmax.f32 %v3066, 0.0
    %v3116 = vmax.f32 %v3067, 0.0
    %v3117 = vmax.f32 %v3068, 0.0
    %v3118 = vmax.f32 %v3069, 0.0
    %v3119 = vmax.f32 %v3070, 0.0
    %v3120 = vmax.f32 %v3071, 0.0
    %v3121 = vmax.f32 %v3072, 0.0
    %v3122 = vmax.f32 %v3073, 0.0
    %v3123 = vmax.f32 %v3074, 0.0
    %v3124 = vmax.f32 %v3075, 0.0
    %v3125 = vmax.f32 %v3076, 0.0
    %v3126 = vld [vmem:[%s6] sm:$0xff]
    %v3127 = vld [vmem:[%s6 + $0x8] sm:$0xff]
    %v3128 = vld [vmem:[%s6 + $0x10] sm:$0xff]
    %v3129 = vld [vmem:[%s6 + $0x18] sm:$0xff]
    %v3130 = vld [vmem:[%s6 + $0x20] sm:$0xff]
    %v3131 = vld [vmem:[%s6 + $0x28] sm:$0xff]
    %v3132 = vld [vmem:[%s6 + $0x30] sm:$0xff]
    %v3133 = vld [vmem:[%s6 + $0x38] sm:$0xff]
    %v3134 = vld [vmem:[%s6 + $0x40] sm:$0xff]
    %v3135 = vld [vmem:[%s6 + $0x48] sm:$0xff]
    %v3136 = vld [vmem:[%s6 + $0x50] sm:$0xff]
    %v3137 = vld [vmem:[%s6 + $0x58] sm:$0xff]
    %v3138 = vld [vmem:[%s6 + $0x60] sm:$0xff]
    %v3139 = vld [vmem:[%s6 + $0x68] sm:$0xff]
    %v3140 = vld [vmem:[%s6 + $0x70] sm:$0xff]
    %v3141 = vld [vmem:[%s6 + $0x78] sm:$0xff]
    %v3142 = vld [vmem:[%s6 + $0x80] sm:$0xff]
    %v3143 = vld [vmem:[%s6 + $0x88] sm:$0xff]
    %v3144 = vld [vmem:[%s6 + $0x90] sm:$0xff]
    %v3145 = vld [vmem:[%s6 + $0x98] sm:$0xff]
    %v3146 = vld [vmem:[%s6 + $0xa0] sm:$0xff]
    %v3147 = vld [vmem:[%s6 + $0xa8] sm:$0xff]
    %v3148 = vld [vmem:[%s6 + $0xb0] sm:$0xff]
    %v3149 = vld [vmem:[%s6 + $0xb8] sm:$0xff]
    %v3150 = vld [vmem:[%s6 + $0xc0] sm:$0xff]
    %v3151 = vld [vmem:[%s6 + $0xc8] sm:$0xff]
    %v3152 = vld [vmem:[%s6 + $0xd0] sm:$0xff]
    %v3153 = vld [vmem:[%s6 + $0xd8] sm:$0xff]
    %v3154 = vld [vmem:[%s6 + $0xe0] sm:$0xff]
    %v3155 = vld [vmem:[%s6 + $0xe8] sm:$0xff]
    %v3156 = vld [vmem:[%s6 + $0xf0] sm:$0xff]
    %v3157 = vld [vmem:[%s6 + $0xf8] sm:$0xff]
    %v3158 = vld [vmem:[%s6 + $0x100] sm:$0xff]
    %v3159 = vld [vmem:[%s6 + $0x108] sm:$0xff]
    %v3160 = vld [vmem:[%s6 + $0x110] sm:$0xff]
    %v3161 = vld [vmem:[%s6 + $0x118] sm:$0xff]
    %v3162 = vld [vmem:[%s6 + $0x120] sm:$0xff]
    %v3163 = vld [vmem:[%s6 + $0x128] sm:$0xff]
    %v3164 = vld [vmem:[%s6 + $0x130] sm:$0xff]
    %v3165 = vld [vmem:[%s6 + $0x138] sm:$0xff]
    %v3166 = vld [vmem:[%s6 + $0x140] sm:$0xff]
    %v3167 = vld [vmem:[%s6 + $0x148] sm:$0xff]
    %v3168 = vld [vmem:[%s6 + $0x150] sm:$0xff]
    %v3169 = vld [vmem:[%s6 + $0x158] sm:$0xff]
    %v3170 = vld [vmem:[%s6 + $0x160] sm:$0xff]
    %v3171 = vld [vmem:[%s6 + $0x168] sm:$0xff]
    %v3172 = vld [vmem:[%s6 + $0x170] sm:$0xff]
    %v3173 = vld [vmem:[%s6 + $0x178] sm:$0xff]
    %v3174 = vld [vmem:[%s6 + $0x180] sm:$0xff]
    %vm3175 = vcmask 64512
    %v3177 = vsel %vm3175, %v3077, 0
    %3179 = vmatprep.subr.mxu0 0.0
    %3180 = vmatpush1.msra.mxu0 %v3126
    %3181 = vmatprep.subr.mxu0 0.0
    %3182 = vmatpush1.msra.mxu0 0.0
    %3183 = vmatprep.subr.mxu0 0.0
    %3184 = vmatpush1.msra.mxu0 0.0
    %3185 = vmatprep.subr.mxu0 0.0
    %3186 = vmatpush1.msra.mxu0 0.0
    %3187 = vmatprep.subr.mxu0 0.0
    %3188 = vmatpush1.msra.mxu0 0.0
    %3189 = vmatprep.subr.mxu0 0.0
    %3190 = vmatpush1.msra.mxu0 0.0
    %3191 = vmatprep.subr.mxu0 0.0
    %3192 = vmatpush1.msra.mxu0 0.0
    %3193 = vmatprep.subr.mxu0 0.0
    %3194 = vmatpush1.msra.mxu0 0.0
    %3195 = vmatprep.subr.mxu0 0.0
    %3196 = vmatpush1.msra.mxu0 0.0
    %3197 = vmatprep.subr.mxu0 0.0
    %3198 = vmatpush1.msra.mxu0 0.0
    %3199 = vmatprep.subr.mxu0 0.0
    %3200 = vmatpush1.msra.mxu0 0.0
    %3201 = vmatprep.subr.mxu0 0.0
    %3202 = vmatpush1.msra.mxu0 0.0
    %3203 = vmatprep.subr.mxu0 0.0
    %3204 = vmatpush1.msra.mxu0 0.0
    %3205 = vmatprep.subr.mxu0 0.0
    %3206 = vmatpush1.msra.mxu0 0.0
    %3207 = vmatprep.subr.mxu0 0.0
    %3208 = vmatpush1.msra.mxu0 0.0
    %3209 = vmatprep.subr.mxu0 0.0
    %3210 = vmatpush1.msra.mxu0 0.0
    %3211 = vmatprep.subr.mxu0 0.0
    %3212 = vmatpush1.msra.mxu0 0.0
    %3213 = vmatprep.subr.mxu0 0.0
    %3214 = vmatpush1.msra.mxu0 0.0
    %3215 = vmatprep.subr.mxu0 0.0
    %3216 = vmatpush1.msra.mxu0 0.0
    %3217 = vmatprep.subr.mxu0 0.0
    %3218 = vmatpush1.msra.mxu0 0.0
    %3219 = vmatprep.subr.mxu0 0.0
    %3220 = vmatpush1.msra.mxu0 0.0
    %3221 = vmatprep.subr.mxu0 0.0
    %3222 = vmatpush1.msra.mxu0 0.0
    %3223 = vmatprep.subr.mxu0 0.0
    %3224 = vmatpush1.msra.mxu0 0.0
    %3225 = vmatprep.subr.mxu0 0.0
    %3226 = vmatpush1.msra.mxu0 0.0
    %3227 = vmatprep.subr.mxu0 0.0
    %3228 = vmatpush1.msra.mxu0 0.0
    %3229 = vmatprep.subr.mxu0 0.0
    %3230 = vmatpush1.msra.mxu0 0.0
    %3231 = vmatprep.subr.mxu0 0.0
    %3232 = vmatpush1.msra.mxu0 0.0
    %3233 = vmatprep.subr.mxu0 0.0
    %3234 = vmatpush1.msra.mxu0 0.0
    %3235 = vmatprep.subr.mxu0 0.0
    %3236 = vmatpush1.msra.mxu0 0.0
    %3237 = vmatprep.subr.mxu0 0.0
    %3238 = vmatpush1.msra.mxu0 0.0
    %3239 = vmatprep.subr.mxu0 0.0
    %3240 = vmatpush1.msra.mxu0 0.0
    %3241 = vmatprep.subr.mxu0 0.0
    %3242 = vmatpush1.msra.mxu0 0.0
    %3243 = vmatprep.mubr.f32.mxu0 0.0
    %3244 = vmatmul.mubr.f32.gmra.mrb[0].mxu0 %v3177
    %v3245 = vpop.f32.mrb[0].mxu0
    %v3246 = vadd.f32 0.0, %v3245
    %v3247 = vpop.f32.mrb[0].mxu0
    %3248 = vdwg.mxu0
    %v3250 = vsel %vm3175, %v3078, 0
    %3252 = vmatprep.subr.mxu0 0.0
    %3253 = vmatpush1.msra.mxu0 %v3127
    %3254 = vmatprep.subr.mxu0 0.0
    %3255 = vmatpush1.msra.mxu0 0.0
    %3256 = vmatprep.subr.mxu0 0.0
    %3257 = vmatpush1.msra.mxu0 0.0
    %3258 = vmatprep.subr.mxu0 0.0
    %3259 = vmatpush1.msra.mxu0 0.0
    %3260 = vmatprep.subr.mxu0 0.0
    %3261 = vmatpush1.msra.mxu0 0.0
    %3262 = vmatprep.subr.mxu0 0.0
    %3263 = vmatpush1.msra.mxu0 0.0
    %3264 = vmatprep.subr.mxu0 0.0
    %3265 = vmatpush1.msra.mxu0 0.0
    %3266 = vmatprep.subr.mxu0 0.0
    %3267 = vmatpush1.msra.mxu0 0.0
    %3268 = vmatprep.subr.mxu0 0.0
    %3269 = vmatpush1.msra.mxu0 0.0
    %3270 = vmatprep.subr.mxu0 0.0
    %3271 = vmatpush1.msra.mxu0 0.0
    %3272 = vmatprep.subr.mxu0 0.0
    %3273 = vmatpush1.msra.mxu0 0.0
    %3274 = vmatprep.subr.mxu0 0.0
    %3275 = vmatpush1.msra.mxu0 0.0
    %3276 = vmatprep.subr.mxu0 0.0
    %3277 = vmatpush1.msra.mxu0 0.0
    %3278 = vmatprep.subr.mxu0 0.0
    %3279 = vmatpush1.msra.mxu0 0.0
    %3280 = vmatprep.subr.mxu0 0.0
    %3281 = vmatpush1.msra.mxu0 0.0
    %3282 = vmatprep.subr.mxu0 0.0
    %3283 = vmatpush1.msra.mxu0 0.0
    %3284 = vmatprep.subr.mxu0 0.0
    %3285 = vmatpush1.msra.mxu0 0.0
    %3286 = vmatprep.subr.mxu0 0.0
    %3287 = vmatpush1.msra.mxu0 0.0
    %3288 = vmatprep.subr.mxu0 0.0
    %3289 = vmatpush1.msra.mxu0 0.0
    %3290 = vmatprep.subr.mxu0 0.0
    %3291 = vmatpush1.msra.mxu0 0.0
    %3292 = vmatprep.subr.mxu0 0.0
    %3293 = vmatpush1.msra.mxu0 0.0
    %3294 = vmatprep.subr.mxu0 0.0
    %3295 = vmatpush1.msra.mxu0 0.0
    %3296 = vmatprep.subr.mxu0 0.0
    %3297 = vmatpush1.msra.mxu0 0.0
    %3298 = vmatprep.subr.mxu0 0.0
    %3299 = vmatpush1.msra.mxu0 0.0
    %3300 = vmatprep.subr.mxu0 0.0
    %3301 = vmatpush1.msra.mxu0 0.0
    %3302 = vmatprep.subr.mxu0 0.0
    %3303 = vmatpush1.msra.mxu0 0.0
    %3304 = vmatprep.subr.mxu0 0.0
    %3305 = vmatpush1.msra.mxu0 0.0
    %3306 = vmatprep.subr.mxu0 0.0
    %3307 = vmatpush1.msra.mxu0 0.0
    %3308 = vmatprep.subr.mxu0 0.0
    %3309 = vmatpush1.msra.mxu0 0.0
    %3310 = vmatprep.subr.mxu0 0.0
    %3311 = vmatpush1.msra.mxu0 0.0
    %3312 = vmatprep.subr.mxu0 0.0
    %3313 = vmatpush1.msra.mxu0 0.0
    %3314 = vmatprep.subr.mxu0 0.0
    %3315 = vmatpush1.msra.mxu0 0.0
    %3316 = vmatprep.mubr.f32.mxu0 0.0
    %3317 = vmatmul.mubr.f32.gmra.mrb[0].mxu0 %v3250
    %v3318 = vpop.f32.mrb[0].mxu0
    %v3319 = vadd.f32 0.0, %v3318
    %v3320 = vpop.f32.mrb[0].mxu0
    %3321 = vdwg.mxu0
    %v3323 = vsel %vm3175, %v3079, 0
    %3325 = vmatprep.subr.mxu0 0.0
    %3326 = vmatpush1.msra.mxu0 %v3128
    %3327 = vmatprep.subr.mxu0 0.0
    %3328 = vmatpush1.msra.mxu0 0.0
    %3329 = vmatprep.subr.mxu0 0.0
    %3330 = vmatpush1.msra.mxu0 0.0
    %3331 = vmatprep.subr.mxu0 0.0
    %3332 = vmatpush1.msra.mxu0 0.0
    %3333 = vmatprep.subr.mxu0 0.0
    %3334 = vmatpush1.msra.mxu0 0.0
    %3335 = vmatprep.subr.mxu0 0.0
    %3336 = vmatpush1.msra.mxu0 0.0
    %3337 = vmatprep.subr.mxu0 0.0
    %3338 = vmatpush1.msra.mxu0 0.0
    %3339 = vmatprep.subr.mxu0 0.0
    %3340 = vmatpush1.msra.mxu0 0.0
    %3341 = vmatprep.subr.mxu0 0.0
    %3342 = vmatpush1.msra.mxu0 0.0
    %3343 = vmatprep.subr.mxu0 0.0
    %3344 = vmatpush1.msra.mxu0 0.0
    %3345 = vmatprep.subr.mxu0 0.0
    %3346 = vmatpush1.msra.mxu0 0.0
    %3347 = vmatprep.subr.mxu0 0.0
    %3348 = vmatpush1.msra.mxu0 0.0
    %3349 = vmatprep.subr.mxu0 0.0
    %3350 = vmatpush1.msra.mxu0 0.0
    %3351 = vmatprep.subr.mxu0 0.0
    %3352 = vmatpush1.msra.mxu0 0.0
    %3353 = vmatprep.subr.mxu0 0.0
    %3354 = vmatpush1.msra.mxu0 0.0
    %3355 = vmatprep.subr.mxu0 0.0
    %3356 = vmatpush1.msra.mxu0 0.0
    %3357 = vmatprep.subr.mxu0 0.0
    %3358 = vmatpush1.msra.mxu0 0.0
    %3359 = vmatprep.subr.mxu0 0.0
    %3360 = vmatpush1.msra.mxu0 0.0
    %3361 = vmatprep.subr.mxu0 0.0
    %3362 = vmatpush1.msra.mxu0 0.0
    %3363 = vmatprep.subr.mxu0 0.0
    %3364 = vmatpush1.msra.mxu0 0.0
    %3365 = vmatprep.subr.mxu0 0.0
    %3366 = vmatpush1.msra.mxu0 0.0
    %3367 = vmatprep.subr.mxu0 0.0
    %3368 = vmatpush1.msra.mxu0 0.0
    %3369 = vmatprep.subr.mxu0 0.0
    %3370 = vmatpush1.msra.mxu0 0.0
    %3371 = vmatprep.subr.mxu0 0.0
    %3372 = vmatpush1.msra.mxu0 0.0
    %3373 = vmatprep.subr.mxu0 0.0
    %3374 = vmatpush1.msra.mxu0 0.0
    %3375 = vmatprep.subr.mxu0 0.0
    %3376 = vmatpush1.msra.mxu0 0.0
    %3377 = vmatprep.subr.mxu0 0.0
    %3378 = vmatpush1.msra.mxu0 0.0
    %3379 = vmatprep.subr.mxu0 0.0
    %3380 = vmatpush1.msra.mxu0 0.0
    %3381 = vmatprep.subr.mxu0 0.0
    %3382 = vmatpush1.msra.mxu0 0.0
    %3383 = vmatprep.subr.mxu0 0.0
    %3384 = vmatpush1.msra.mxu0 0.0
    %3385 = vmatprep.subr.mxu0 0.0
    %3386 = vmatpush1.msra.mxu0 0.0
    %3387 = vmatprep.subr.mxu0 0.0
    %3388 = vmatpush1.msra.mxu0 0.0
    %3389 = vmatprep.mubr.f32.mxu0 0.0
    %3390 = vmatmul.mubr.f32.gmra.mrb[0].mxu0 %v3323
    %v3391 = vpop.f32.mrb[0].mxu0
    %v3392 = vadd.f32 0.0, %v3391
    %v3393 = vpop.f32.mrb[0].mxu0
    %3394 = vdwg.mxu0
    %v3396 = vsel %vm3175, %v3080, 0
    %3398 = vmatprep.subr.mxu0 0.0
    %3399 = vmatpush1.msra.mxu0 %v3129
    %3400 = vmatprep.subr.mxu0 0.0
    %3401 = vmatpush1.msra.mxu0 0.0
    %3402 = vmatprep.subr.mxu0 0.0
    %3403 = vmatpush1.msra.mxu0 0.0
    %3404 = vmatprep.subr.mxu0 0.0
    %3405 = vmatpush1.msra.mxu0 0.0
    %3406 = vmatprep.subr.mxu0 0.0
    %3407 = vmatpush1.msra.mxu0 0.0
    %3408 = vmatprep.subr.mxu0 0.0
    %3409 = vmatpush1.msra.mxu0 0.0
    %3410 = vmatprep.subr.mxu0 0.0
    %3411 = vmatpush1.msra.mxu0 0.0
    %3412 = vmatprep.subr.mxu0 0.0
    %3413 = vmatpush1.msra.mxu0 0.0
    %3414 = vmatprep.subr.mxu0 0.0
    %3415 = vmatpush1.msra.mxu0 0.0
    %3416 = vmatprep.subr.mxu0 0.0
    %3417 = vmatpush1.msra.mxu0 0.0
    %3418 = vmatprep.subr.mxu0 0.0
    %3419 = vmatpush1.msra.mxu0 0.0
    %3420 = vmatprep.subr.mxu0 0.0
    %3421 = vmatpush1.msra.mxu0 0.0
    %3422 = vmatprep.subr.mxu0 0.0
    %3423 = vmatpush1.msra.mxu0 0.0
    %3424 = vmatprep.subr.mxu0 0.0
    %3425 = vmatpush1.msra.mxu0 0.0
    %3426 = vmatprep.subr.mxu0 0.0
    %3427 = vmatpush1.msra.mxu0 0.0
    %3428 = vmatprep.subr.mxu0 0.0
    %3429 = vmatpush1.msra.mxu0 0.0
    %3430 = vmatprep.subr.mxu0 0.0
    %3431 = vmatpush1.msra.mxu0 0.0
    %3432 = vmatprep.subr.mxu0 0.0
    %3433 = vmatpush1.msra.mxu0 0.0
    %3434 = vmatprep.subr.mxu0 0.0
    %3435 = vmatpush1.msra.mxu0 0.0
    %3436 = vmatprep.subr.mxu0 0.0
    %3437 = vmatpush1.msra.mxu0 0.0
    %3438 = vmatprep.subr.mxu0 0.0
    %3439 = vmatpush1.msra.mxu0 0.0
    %3440 = vmatprep.subr.mxu0 0.0
    %3441 = vmatpush1.msra.mxu0 0.0
    %3442 = vmatprep.subr.mxu0 0.0
    %3443 = vmatpush1.msra.mxu0 0.0
    %3444 = vmatprep.subr.mxu0 0.0
    %3445 = vmatpush1.msra.mxu0 0.0
    %3446 = vmatprep.subr.mxu0 0.0
    %3447 = vmatpush1.msra.mxu0 0.0
    %3448 = vmatprep.subr.mxu0 0.0
    %3449 = vmatpush1.msra.mxu0 0.0
    %3450 = vmatprep.subr.mxu0 0.0
    %3451 = vmatpush1.msra.mxu0 0.0
    %3452 = vmatprep.subr.mxu0 0.0
    %3453 = vmatpush1.msra.mxu0 0.0
    %3454 = vmatprep.subr.mxu0 0.0
    %3455 = vmatpush1.msra.mxu0 0.0
    %3456 = vmatprep.subr.mxu0 0.0
    %3457 = vmatpush1.msra.mxu0 0.0
    %3458 = vmatprep.subr.mxu0 0.0
    %3459 = vmatpush1.msra.mxu0 0.0
    %3460 = vmatprep.subr.mxu0 0.0
    %3461 = vmatpush1.msra.mxu0 0.0
    %3462 = vmatprep.mubr.f32.mxu0 0.0
    %3463 = vmatmul.mubr.f32.gmra.mrb[0].mxu0 %v3396
    %v3464 = vpop.f32.mrb[0].mxu0
    %v3465 = vadd.f32 0.0, %v3464
    %v3466 = vpop.f32.mrb[0].mxu0
    %3467 = vdwg.mxu0
    %v3469 = vsel %vm3175, %v3081, 0
    %3471 = vmatprep.subr.mxu0 0.0
    %3472 = vmatpush1.msra.mxu0 %v3130
    %3473 = vmatprep.subr.mxu0 0.0
    %3474 = vmatpush1.msra.mxu0 0.0
    %3475 = vmatprep.subr.mxu0 0.0
    %3476 = vmatpush1.msra.mxu0 0.0
    %3477 = vmatprep.subr.mxu0 0.0
    %3478 = vmatpush1.msra.mxu0 0.0
    %3479 = vmatprep.subr.mxu0 0.0
    %3480 = vmatpush1.msra.mxu0 0.0
    %3481 = vmatprep.subr.mxu0 0.0
    %3482 = vmatpush1.msra.mxu0 0.0
    %3483 = vmatprep.subr.mxu0 0.0
    %3484 = vmatpush1.msra.mxu0 0.0
    %3485 = vmatprep.subr.mxu0 0.0
    %3486 = vmatpush1.msra.mxu0 0.0
    %3487 = vmatprep.subr.mxu0 0.0
    %3488 = vmatpush1.msra.mxu0 0.0
    %3489 = vmatprep.subr.mxu0 0.0
    %3490 = vmatpush1.msra.mxu0 0.0
    %3491 = vmatprep.subr.mxu0 0.0
    %3492 = vmatpush1.msra.mxu0 0.0
    %3493 = vmatprep.subr.mxu0 0.0
    %3494 = vmatpush1.msra.mxu0 0.0
    %3495 = vmatprep.subr.mxu0 0.0
    %3496 = vmatpush1.msra.mxu0 0.0
    %3497 = vmatprep.subr.mxu0 0.0
    %3498 = vmatpush1.msra.mxu0 0.0
    %3499 = vmatprep.subr.mxu0 0.0
    %3500 = vmatpush1.msra.mxu0 0.0
    %3501 = vmatprep.subr.mxu0 0.0
    %3502 = vmatpush1.msra.mxu0 0.0
    %3503 = vmatprep.subr.mxu0 0.0
    %3504 = vmatpush1.msra.mxu0 0.0
    %3505 = vmatprep.subr.mxu0 0.0
    %3506 = vmatpush1.msra.mxu0 0.0
    %3507 = vmatprep.subr.mxu0 0.0
    %3508 = vmatpush1.msra.mxu0 0.0
    %3509 = vmatprep.subr.mxu0 0.0
    %3510 = vmatpush1.msra.mxu0 0.0
    %3511 = vmatprep.subr.mxu0 0.0
    %3512 = vmatpush1.msra.mxu0 0.0
    %3513 = vmatprep.subr.mxu0 0.0
    %3514 = vmatpush1.msra.mxu0 0.0
    %3515 = vmatprep.subr.mxu0 0.0
    %3516 = vmatpush1.msra.mxu0 0.0
    %3517 = vmatprep.subr.mxu0 0.0
    %3518 = vmatpush1.msra.mxu0 0.0
    %3519 = vmatprep.subr.mxu0 0.0
    %3520 = vmatpush1.msra.mxu0 0.0
    %3521 = vmatprep.subr.mxu0 0.0
    %3522 = vmatpush1.msra.mxu0 0.0
    %3523 = vmatprep.subr.mxu0 0.0
    %3524 = vmatpush1.msra.mxu0 0.0
    %3525 = vmatprep.subr.mxu0 0.0
    %3526 = vmatpush1.msra.mxu0 0.0
    %3527 = vmatprep.subr.mxu0 0.0
    %3528 = vmatpush1.msra.mxu0 0.0
    %3529 = vmatprep.subr.mxu0 0.0
    %3530 = vmatpush1.msra.mxu0 0.0
    %3531 = vmatprep.subr.mxu0 0.0
    %3532 = vmatpush1.msra.mxu0 0.0
    %3533 = vmatprep.subr.mxu0 0.0
    %3534 = vmatpush1.msra.mxu0 0.0
    %3535 = vmatprep.mubr.f32.mxu0 0.0
    %3536 = vmatmul.mubr.f32.gmra.mrb[0].mxu0 %v3469
    %v3537 = vpop.f32.mrb[0].mxu0
    %v3538 = vadd.f32 0.0, %v3537
    %v3539 = vpop.f32.mrb[0].mxu0
    %3540 = vdwg.mxu0
    %v3542 = vsel %vm3175, %v3082, 0
    %3544 = vmatprep.subr.mxu0 0.0
    %3545 = vmatpush1.msra.mxu0 %v3131
    %3546 = vmatprep.subr.mxu0 0.0
    %3547 = vmatpush1.msra.mxu0 0.0
    %3548 = vmatprep.subr.mxu0 0.0
    %3549 = vmatpush1.msra.mxu0 0.0
    %3550 = vmatprep.subr.mxu0 0.0
    %3551 = vmatpush1.msra.mxu0 0.0
    %3552 = vmatprep.subr.mxu0 0.0
    %3553 = vmatpush1.msra.mxu0 0.0
    %3554 = vmatprep.subr.mxu0 0.0
    %3555 = vmatpush1.msra.mxu0 0.0
    %3556 = vmatprep.subr.mxu0 0.0
    %3557 = vmatpush1.msra.mxu0 0.0
    %3558 = vmatprep.subr.mxu0 0.0
    %3559 = vmatpush1.msra.mxu0 0.0
    %3560 = vmatprep.subr.mxu0 0.0
    %3561 = vmatpush1.msra.mxu0 0.0
    %3562 = vmatprep.subr.mxu0 0.0
    %3563 = vmatpush1.msra.mxu0 0.0
    %3564 = vmatprep.subr.mxu0 0.0
    %3565 = vmatpush1.msra.mxu0 0.0
    %3566 = vmatprep.subr.mxu0 0.0
    %3567 = vmatpush1.msra.mxu0 0.0
    %3568 = vmatprep.subr.mxu0 0.0
    %3569 = vmatpush1.msra.mxu0 0.0
    %3570 = vmatprep.subr.mxu0 0.0
    %3571 = vmatpush1.msra.mxu0 0.0
    %3572 = vmatprep.subr.mxu0 0.0
    %3573 = vmatpush1.msra.mxu0 0.0
    %3574 = vmatprep.subr.mxu0 0.0
    %3575 = vmatpush1.msra.mxu0 0.0
    %3576 = vmatprep.subr.mxu0 0.0
    %3577 = vmatpush1.msra.mxu0 0.0
    %3578 = vmatprep.subr.mxu0 0.0
    %3579 = vmatpush1.msra.mxu0 0.0
    %3580 = vmatprep.subr.mxu0 0.0
    %3581 = vmatpush1.msra.mxu0 0.0
    %3582 = vmatprep.subr.mxu0 0.0
    %3583 = vmatpush1.msra.mxu0 0.0
    %3584 = vmatprep.subr.mxu0 0.0
    %3585 = vmatpush1.msra.mxu0 0.0
    %3586 = vmatprep.subr.mxu0 0.0
    %3587 = vmatpush1.msra.mxu0 0.0
    %3588 = vmatprep.subr.mxu0 0.0
    %3589 = vmatpush1.msra.mxu0 0.0
    %3590 = vmatprep.subr.mxu0 0.0
    %3591 = vmatpush1.msra.mxu0 0.0
    %3592 = vmatprep.subr.mxu0 0.0
    %3593 = vmatpush1.msra.mxu0 0.0
    %3594 = vmatprep.subr.mxu0 0.0
    %3595 = vmatpush1.msra.mxu0 0.0
    %3596 = vmatprep.subr.mxu0 0.0
    %3597 = vmatpush1.msra.mxu0 0.0
    %3598 = vmatprep.subr.mxu0 0.0
    %3599 = vmatpush1.msra.mxu0 0.0
    %3600 = vmatprep.subr.mxu0 0.0
    %3601 = vmatpush1.msra.mxu0 0.0
    %3602 = vmatprep.subr.mxu0 0.0
    %3603 = vmatpush1.msra.mxu0 0.0
    %3604 = vmatprep.subr.mxu0 0.0
    %3605 = vmatpush1.msra.mxu0 0.0
    %3606 = vmatprep.subr.mxu0 0.0
    %3607 = vmatpush1.msra.mxu0 0.0
    %3608 = vmatprep.mubr.f32.mxu0 0.0
    %3609 = vmatmul.mubr.f32.gmra.mrb[0].mxu0 %v3542
    %v3610 = vpop.f32.mrb[0].mxu0
    %v3611 = vadd.f32 0.0, %v3610
    %v3612 = vpop.f32.mrb[0].mxu0
    %3613 = vdwg.mxu0
    %v3615 = vsel %vm3175, %v3083, 0
    %3617 = vmatprep.subr.mxu0 0.0
    %3618 = vmatpush1.msra.mxu0 %v3132
    %3619 = vmatprep.subr.mxu0 0.0
    %3620 = vmatpush1.msra.mxu0 0.0
    %3621 = vmatprep.subr.mxu0 0.0
    %3622 = vmatpush1.msra.mxu0 0.0
    %3623 = vmatprep.subr.mxu0 0.0
    %3624 = vmatpush1.msra.mxu0 0.0
    %3625 = vmatprep.subr.mxu0 0.0
    %3626 = vmatpush1.msra.mxu0 0.0
    %3627 = vmatprep.subr.mxu0 0.0
    %3628 = vmatpush1.msra.mxu0 0.0
    %3629 = vmatprep.subr.mxu0 0.0
    %3630 = vmatpush1.msra.mxu0 0.0
    %3631 = vmatprep.subr.mxu0 0.0
    %3632 = vmatpush1.msra.mxu0 0.0
    %3633 = vmatprep.subr.mxu0 0.0
    %3634 = vmatpush1.msra.mxu0 0.0
    %3635 = vmatprep.subr.mxu0 0.0
    %3636 = vmatpush1.msra.mxu0 0.0
    %3637 = vmatprep.subr.mxu0 0.0
    %3638 = vmatpush1.msra.mxu0 0.0
    %3639 = vmatprep.subr.mxu0 0.0
    %3640 = vmatpush1.msra.mxu0 0.0
    %3641 = vmatprep.subr.mxu0 0.0
    %3642 = vmatpush1.msra.mxu0 0.0
    %3643 = vmatprep.subr.mxu0 0.0
    %3644 = vmatpush1.msra.mxu0 0.0
    %3645 = vmatprep.subr.mxu0 0.0
    %3646 = vmatpush1.msra.mxu0 0.0
    %3647 = vmatprep.subr.mxu0 0.0
    %3648 = vmatpush1.msra.mxu0 0.0
    %3649 = vmatprep.subr.mxu0 0.0
    %3650 = vmatpush1.msra.mxu0 0.0
    %3651 = vmatprep.subr.mxu0 0.0
    %3652 = vmatpush1.msra.mxu0 0.0
    %3653 = vmatprep.subr.mxu0 0.0
    %3654 = vmatpush1.msra.mxu0 0.0
    %3655 = vmatprep.subr.mxu0 0.0
    %3656 = vmatpush1.msra.mxu0 0.0
    %3657 = vmatprep.subr.mxu0 0.0
    %3658 = vmatpush1.msra.mxu0 0.0
    %3659 = vmatprep.subr.mxu0 0.0
    %3660 = vmatpush1.msra.mxu0 0.0
    %3661 = vmatprep.subr.mxu0 0.0
    %3662 = vmatpush1.msra.mxu0 0.0
    %3663 = vmatprep.subr.mxu0 0.0
    %3664 = vmatpush1.msra.mxu0 0.0
    %3665 = vmatprep.subr.mxu0 0.0
    %3666 = vmatpush1.msra.mxu0 0.0
    %3667 = vmatprep.subr.mxu0 0.0
    %3668 = vmatpush1.msra.mxu0 0.0
    %3669 = vmatprep.subr.mxu0 0.0
    %3670 = vmatpush1.msra.mxu0 0.0
    %3671 = vmatprep.subr.mxu0 0.0
    %3672 = vmatpush1.msra.mxu0 0.0
    %3673 = vmatprep.subr.mxu0 0.0
    %3674 = vmatpush1.msra.mxu0 0.0
    %3675 = vmatprep.subr.mxu0 0.0
    %3676 = vmatpush1.msra.mxu0 0.0
    %3677 = vmatprep.subr.mxu0 0.0
    %3678 = vmatpush1.msra.mxu0 0.0
    %3679 = vmatprep.subr.mxu0 0.0
    %3680 = vmatpush1.msra.mxu0 0.0
    %3681 = vmatprep.mubr.f32.mxu0 0.0
    %3682 = vmatmul.mubr.f32.gmra.mrb[0].mxu0 %v3615
    %v3683 = vpop.f32.mrb[0].mxu0
    %v3684 = vadd.f32 0.0, %v3683
    %v3685 = vpop.f32.mrb[0].mxu0
    %3686 = vdwg.mxu0
    %v3688 = vsel %vm3175, %v3084, 0
    %3690 = vmatprep.subr.mxu0 0.0
    %3691 = vmatpush1.msra.mxu0 %v3133
    %3692 = vmatprep.subr.mxu0 0.0
    %3693 = vmatpush1.msra.mxu0 0.0
    %3694 = vmatprep.subr.mxu0 0.0
    %3695 = vmatpush1.msra.mxu0 0.0
    %3696 = vmatprep.subr.mxu0 0.0
    %3697 = vmatpush1.msra.mxu0 0.0
    %3698 = vmatprep.subr.mxu0 0.0
    %3699 = vmatpush1.msra.mxu0 0.0
    %3700 = vmatprep.subr.mxu0 0.0
    %3701 = vmatpush1.msra.mxu0 0.0
    %3702 = vmatprep.subr.mxu0 0.0
    %3703 = vmatpush1.msra.mxu0 0.0
    %3704 = vmatprep.subr.mxu0 0.0
    %3705 = vmatpush1.msra.mxu0 0.0
    %3706 = vmatprep.subr.mxu0 0.0
    %3707 = vmatpush1.msra.mxu0 0.0
    %3708 = vmatprep.subr.mxu0 0.0
    %3709 = vmatpush1.msra.mxu0 0.0
    %3710 = vmatprep.subr.mxu0 0.0
    %3711 = vmatpush1.msra.mxu0 0.0
    %3712 = vmatprep.subr.mxu0 0.0
    %3713 = vmatpush1.msra.mxu0 0.0
    %3714 = vmatprep.subr.mxu0 0.0
    %3715 = vmatpush1.msra.mxu0 0.0
    %3716 = vmatprep.subr.mxu0 0.0
    %3717 = vmatpush1.msra.mxu0 0.0
    %3718 = vmatprep.subr.mxu0 0.0
    %3719 = vmatpush1.msra.mxu0 0.0
    %3720 = vmatprep.subr.mxu0 0.0
    %3721 = vmatpush1.msra.mxu0 0.0
    %3722 = vmatprep.subr.mxu0 0.0
    %3723 = vmatpush1.msra.mxu0 0.0
    %3724 = vmatprep.subr.mxu0 0.0
    %3725 = vmatpush1.msra.mxu0 0.0
    %3726 = vmatprep.subr.mxu0 0.0
    %3727 = vmatpush1.msra.mxu0 0.0
    %3728 = vmatprep.subr.mxu0 0.0
    %3729 = vmatpush1.msra.mxu0 0.0
    %3730 = vmatprep.subr.mxu0 0.0
    %3731 = vmatpush1.msra.mxu0 0.0
    %3732 = vmatprep.subr.mxu0 0.0
    %3733 = vmatpush1.msra.mxu0 0.0
    %3734 = vmatprep.subr.mxu0 0.0
    %3735 = vmatpush1.msra.mxu0 0.0
    %3736 = vmatprep.subr.mxu0 0.0
    %3737 = vmatpush1.msra.mxu0 0.0
    %3738 = vmatprep.subr.mxu0 0.0
    %3739 = vmatpush1.msra.mxu0 0.0
    %3740 = vmatprep.subr.mxu0 0.0
    %3741 = vmatpush1.msra.mxu0 0.0
    %3742 = vmatprep.subr.mxu0 0.0
    %3743 = vmatpush1.msra.mxu0 0.0
    %3744 = vmatprep.subr.mxu0 0.0
    %3745 = vmatpush1.msra.mxu0 0.0
    %3746 = vmatprep.subr.mxu0 0.0
    %3747 = vmatpush1.msra.mxu0 0.0
    %3748 = vmatprep.subr.mxu0 0.0
    %3749 = vmatpush1.msra.mxu0 0.0
    %3750 = vmatprep.subr.mxu0 0.0
    %3751 = vmatpush1.msra.mxu0 0.0
    %3752 = vmatprep.subr.mxu0 0.0
    %3753 = vmatpush1.msra.mxu0 0.0
    %3754 = vmatprep.mubr.f32.mxu0 0.0
    %3755 = vmatmul.mubr.f32.gmra.mrb[0].mxu0 %v3688
    %v3756 = vpop.f32.mrb[0].mxu0
    %v3757 = vadd.f32 0.0, %v3756
    %v3758 = vpop.f32.mrb[0].mxu0
    %3759 = vdwg.mxu0
    %v3761 = vsel %vm3175, %v3085, 0
    %3763 = vmatprep.subr.mxu0 0.0
    %3764 = vmatpush1.msra.mxu0 %v3134
    %3765 = vmatprep.subr.mxu0 0.0
    %3766 = vmatpush1.msra.mxu0 0.0
    %3767 = vmatprep.subr.mxu0 0.0
    %3768 = vmatpush1.msra.mxu0 0.0
    %3769 = vmatprep.subr.mxu0 0.0
    %3770 = vmatpush1.msra.mxu0 0.0
    %3771 = vmatprep.subr.mxu0 0.0
    %3772 = vmatpush1.msra.mxu0 0.0
    %3773 = vmatprep.subr.mxu0 0.0
    %3774 = vmatpush1.msra.mxu0 0.0
    %3775 = vmatprep.subr.mxu0 0.0
    %3776 = vmatpush1.msra.mxu0 0.0
    %3777 = vmatprep.subr.mxu0 0.0
    %3778 = vmatpush1.msra.mxu0 0.0
    %3779 = vmatprep.subr.mxu0 0.0
    %3780 = vmatpush1.msra.mxu0 0.0
    %3781 = vmatprep.subr.mxu0 0.0
    %3782 = vmatpush1.msra.mxu0 0.0
    %3783 = vmatprep.subr.mxu0 0.0
    %3784 = vmatpush1.msra.mxu0 0.0
    %3785 = vmatprep.subr.mxu0 0.0
    %3786 = vmatpush1.msra.mxu0 0.0
    %3787 = vmatprep.subr.mxu0 0.0
    %3788 = vmatpush1.msra.mxu0 0.0
    %3789 = vmatprep.subr.mxu0 0.0
    %3790 = vmatpush1.msra.mxu0 0.0
    %3791 = vmatprep.subr.mxu0 0.0
    %3792 = vmatpush1.msra.mxu0 0.0
    %3793 = vmatprep.subr.mxu0 0.0
    %3794 = vmatpush1.msra.mxu0 0.0
    %3795 = vmatprep.subr.mxu0 0.0
    %3796 = vmatpush1.msra.mxu0 0.0
    %3797 = vmatprep.subr.mxu0 0.0
    %3798 = vmatpush1.msra.mxu0 0.0
    %3799 = vmatprep.subr.mxu0 0.0
    %3800 = vmatpush1.msra.mxu0 0.0
    %3801 = vmatprep.subr.mxu0 0.0
    %3802 = vmatpush1.msra.mxu0 0.0
    %3803 = vmatprep.subr.mxu0 0.0
    %3804 = vmatpush1.msra.mxu0 0.0
    %3805 = vmatprep.subr.mxu0 0.0
    %3806 = vmatpush1.msra.mxu0 0.0
    %3807 = vmatprep.subr.mxu0 0.0
    %3808 = vmatpush1.msra.mxu0 0.0
    %3809 = vmatprep.subr.mxu0 0.0
    %3810 = vmatpush1.msra.mxu0 0.0
    %3811 = vmatprep.subr.mxu0 0.0
    %3812 = vmatpush1.msra.mxu0 0.0
    %3813 = vmatprep.subr.mxu0 0.0
    %3814 = vmatpush1.msra.mxu0 0.0
    %3815 = vmatprep.subr.mxu0 0.0
    %3816 = vmatpush1.msra.mxu0 0.0
    %3817 = vmatprep.subr.mxu0 0.0
    %3818 = vmatpush1.msra.mxu0 0.0
    %3819 = vmatprep.subr.mxu0 0.0
    %3820 = vmatpush1.msra.mxu0 0.0
    %3821 = vmatprep.subr.mxu0 0.0
    %3822 = vmatpush1.msra.mxu0 0.0
    %3823 = vmatprep.subr.mxu0 0.0
    %3824 = vmatpush1.msra.mxu0 0.0
    %3825 = vmatprep.subr.mxu0 0.0
    %3826 = vmatpush1.msra.mxu0 0.0
    %3827 = vmatprep.mubr.f32.mxu0 0.0
    %3828 = vmatmul.mubr.f32.gmra.mrb[0].mxu0 %v3761
    %v3829 = vpop.f32.mrb[0].mxu0
    %v3830 = vadd.f32 0.0, %v3829
    %v3831 = vpop.f32.mrb[0].mxu0
    %3832 = vdwg.mxu0
    %v3834 = vsel %vm3175, %v3086, 0
    %3836 = vmatprep.subr.mxu0 0.0
    %3837 = vmatpush1.msra.mxu0 %v3135
    %3838 = vmatprep.subr.mxu0 0.0
    %3839 = vmatpush1.msra.mxu0 0.0
    %3840 = vmatprep.subr.mxu0 0.0
    %3841 = vmatpush1.msra.mxu0 0.0
    %3842 = vmatprep.subr.mxu0 0.0
    %3843 = vmatpush1.msra.mxu0 0.0
    %3844 = vmatprep.subr.mxu0 0.0
    %3845 = vmatpush1.msra.mxu0 0.0
    %3846 = vmatprep.subr.mxu0 0.0
    %3847 = vmatpush1.msra.mxu0 0.0
    %3848 = vmatprep.subr.mxu0 0.0
    %3849 = vmatpush1.msra.mxu0 0.0
    %3850 = vmatprep.subr.mxu0 0.0
    %3851 = vmatpush1.msra.mxu0 0.0
    %3852 = vmatprep.subr.mxu0 0.0
    %3853 = vmatpush1.msra.mxu0 0.0
    %3854 = vmatprep.subr.mxu0 0.0
    %3855 = vmatpush1.msra.mxu0 0.0
    %3856 = vmatprep.subr.mxu0 0.0
    %3857 = vmatpush1.msra.mxu0 0.0
    %3858 = vmatprep.subr.mxu0 0.0
    %3859 = vmatpush1.msra.mxu0 0.0
    %3860 = vmatprep.subr.mxu0 0.0
    %3861 = vmatpush1.msra.mxu0 0.0
    %3862 = vmatprep.subr.mxu0 0.0
    %3863 = vmatpush1.msra.mxu0 0.0
    %3864 = vmatprep.subr.mxu0 0.0
    %3865 = vmatpush1.msra.mxu0 0.0
    %3866 = vmatprep.subr.mxu0 0.0
    %3867 = vmatpush1.msra.mxu0 0.0
    %3868 = vmatprep.subr.mxu0 0.0
    %3869 = vmatpush1.msra.mxu0 0.0
    %3870 = vmatprep.subr.mxu0 0.0
    %3871 = vmatpush1.msra.mxu0 0.0
    %3872 = vmatprep.subr.mxu0 0.0
    %3873 = vmatpush1.msra.mxu0 0.0
    %3874 = vmatprep.subr.mxu0 0.0
    %3875 = vmatpush1.msra.mxu0 0.0
    %3876 = vmatprep.subr.mxu0 0.0
    %3877 = vmatpush1.msra.mxu0 0.0
    %3878 = vmatprep.subr.mxu0 0.0
    %3879 = vmatpush1.msra.mxu0 0.0
    %3880 = vmatprep.subr.mxu0 0.0
    %3881 = vmatpush1.msra.mxu0 0.0
    %3882 = vmatprep.subr.mxu0 0.0
    %3883 = vmatpush1.msra.mxu0 0.0
    %3884 = vmatprep.subr.mxu0 0.0
    %3885 = vmatpush1.msra.mxu0 0.0
    %3886 = vmatprep.subr.mxu0 0.0
    %3887 = vmatpush1.msra.mxu0 0.0
    %3888 = vmatprep.subr.mxu0 0.0
    %3889 = vmatpush1.msra.mxu0 0.0
    %3890 = vmatprep.subr.mxu0 0.0
    %3891 = vmatpush1.msra.mxu0 0.0
    %3892 = vmatprep.subr.mxu0 0.0
    %3893 = vmatpush1.msra.mxu0 0.0
    %3894 = vmatprep.subr.mxu0 0.0
    %3895 = vmatpush1.msra.mxu0 0.0
    %3896 = vmatprep.subr.mxu0 0.0
    %3897 = vmatpush1.msra.mxu0 0.0
    %3898 = vmatprep.subr.mxu0 0.0
    %3899 = vmatpush1.msra.mxu0 0.0
    %3900 = vmatprep.mubr.f32.mxu0 0.0
    %3901 = vmatmul.mubr.f32.gmra.mrb[0].mxu0 %v3834
    %v3902 = vpop.f32.mrb[0].mxu0
    %v3903 = vadd.f32 0.0, %v3902
    %v3904 = vpop.f32.mrb[0].mxu0
    %3905 = vdwg.mxu0
    %v3907 = vsel %vm3175, %v3087, 0
    %3909 = vmatprep.subr.mxu0 0.0
    %3910 = vmatpush1.msra.mxu0 %v3136
    %3911 = vmatprep.subr.mxu0 0.0
    %3912 = vmatpush1.msra.mxu0 0.0
    %3913 = vmatprep.subr.mxu0 0.0
    %3914 = vmatpush1.msra.mxu0 0.0
    %3915 = vmatprep.subr.mxu0 0.0
    %3916 = vmatpush1.msra.mxu0 0.0
    %3917 = vmatprep.subr.mxu0 0.0
    %3918 = vmatpush1.msra.mxu0 0.0
    %3919 = vmatprep.subr.mxu0 0.0
    %3920 = vmatpush1.msra.mxu0 0.0
    %3921 = vmatprep.subr.mxu0 0.0
    %3922 = vmatpush1.msra.mxu0 0.0
    %3923 = vmatprep.subr.mxu0 0.0
    %3924 = vmatpush1.msra.mxu0 0.0
    %3925 = vmatprep.subr.mxu0 0.0
    %3926 = vmatpush1.msra.mxu0 0.0
    %3927 = vmatprep.subr.mxu0 0.0
    %3928 = vmatpush1.msra.mxu0 0.0
    %3929 = vmatprep.subr.mxu0 0.0
    %3930 = vmatpush1.msra.mxu0 0.0
    %3931 = vmatprep.subr.mxu0 0.0
    %3932 = vmatpush1.msra.mxu0 0.0
    %3933 = vmatprep.subr.mxu0 0.0
    %3934 = vmatpush1.msra.mxu0 0.0
    %3935 = vmatprep.subr.mxu0 0.0
    %3936 = vmatpush1.msra.mxu0 0.0
    %3937 = vmatprep.subr.mxu0 0.0
    %3938 = vmatpush1.msra.mxu0 0.0
    %3939 = vmatprep.subr.mxu0 0.0
    %3940 = vmatpush1.msra.mxu0 0.0
    %3941 = vmatprep.subr.mxu0 0.0
    %3942 = vmatpush1.msra.mxu0 0.0
    %3943 = vmatprep.subr.mxu0 0.0
    %3944 = vmatpush1.msra.mxu0 0.0
    %3945 = vmatprep.subr.mxu0 0.0
    %3946 = vmatpush1.msra.mxu0 0.0
    %3947 = vmatprep.subr.mxu0 0.0
    %3948 = vmatpush1.msra.mxu0 0.0
    %3949 = vmatprep.subr.mxu0 0.0
    %3950 = vmatpush1.msra.mxu0 0.0
    %3951 = vmatprep.subr.mxu0 0.0
    %3952 = vmatpush1.msra.mxu0 0.0
    %3953 = vmatprep.subr.mxu0 0.0
    %3954 = vmatpush1.msra.mxu0 0.0
    %3955 = vmatprep.subr.mxu0 0.0
    %3956 = vmatpush1.msra.mxu0 0.0
    %3957 = vmatprep.subr.mxu0 0.0
    %3958 = vmatpush1.msra.mxu0 0.0
    %3959 = vmatprep.subr.mxu0 0.0
    %3960 = vmatpush1.msra.mxu0 0.0
    %3961 = vmatprep.subr.mxu0 0.0
    %3962 = vmatpush1.msra.mxu0 0.0
    %3963 = vmatprep.subr.mxu0 0.0
    %3964 = vmatpush1.msra.mxu0 0.0
    %3965 = vmatprep.subr.mxu0 0.0
    %3966 = vmatpush1.msra.mxu0 0.0
    %3967 = vmatprep.subr.mxu0 0.0
    %3968 = vmatpush1.msra.mxu0 0.0
    %3969 = vmatprep.subr.mxu0 0.0
    %3970 = vmatpush1.msra.mxu0 0.0
    %3971 = vmatprep.subr.mxu0 0.0
    %3972 = vmatpush1.msra.mxu0 0.0
    %3973 = vmatprep.mubr.f32.mxu0 0.0
    %3974 = vmatmul.mubr.f32.gmra.mrb[0].mxu0 %v3907
    %v3975 = vpop.f32.mrb[0].mxu0
    %v3976 = vadd.f32 0.0, %v3975
    %v3977 = vpop.f32.mrb[0].mxu0
    %3978 = vdwg.mxu0
    %v3980 = vsel %vm3175, %v3088, 0
    %3982 = vmatprep.subr.mxu0 0.0
    %3983 = vmatpush1.msra.mxu0 %v3137
    %3984 = vmatprep.subr.mxu0 0.0
    %3985 = vmatpush1.msra.mxu0 0.0
    %3986 = vmatprep.subr.mxu0 0.0
    %3987 = vmatpush1.msra.mxu0 0.0
    %3988 = vmatprep.subr.mxu0 0.0
    %3989 = vmatpush1.msra.mxu0 0.0
    %3990 = vmatprep.subr.mxu0 0.0
    %3991 = vmatpush1.msra.mxu0 0.0
    %3992 = vmatprep.subr.mxu0 0.0
    %3993 = vmatpush1.msra.mxu0 0.0
    %3994 = vmatprep.subr.mxu0 0.0
    %3995 = vmatpush1.msra.mxu0 0.0
    %3996 = vmatprep.subr.mxu0 0.0
    %3997 = vmatpush1.msra.mxu0 0.0
    %3998 = vmatprep.subr.mxu0 0.0
    %3999 = vmatpush1.msra.mxu0 0.0
    %4000 = vmatprep.subr.mxu0 0.0
    %4001 = vmatpush1.msra.mxu0 0.0
    %4002 = vmatprep.subr.mxu0 0.0
    %4003 = vmatpush1.msra.mxu0 0.0
    %4004 = vmatprep.subr.mxu0 0.0
    %4005 = vmatpush1.msra.mxu0 0.0
    %4006 = vmatprep.subr.mxu0 0.0
    %4007 = vmatpush1.msra.mxu0 0.0
    %4008 = vmatprep.subr.mxu0 0.0
    %4009 = vmatpush1.msra.mxu0 0.0
    %4010 = vmatprep.subr.mxu0 0.0
    %4011 = vmatpush1.msra.mxu0 0.0
    %4012 = vmatprep.subr.mxu0 0.0
    %4013 = vmatpush1.msra.mxu0 0.0
    %4014 = vmatprep.subr.mxu0 0.0
    %4015 = vmatpush1.msra.mxu0 0.0
    %4016 = vmatprep.subr.mxu0 0.0
    %4017 = vmatpush1.msra.mxu0 0.0
    %4018 = vmatprep.subr.mxu0 0.0
    %4019 = vmatpush1.msra.mxu0 0.0
    %4020 = vmatprep.subr.mxu0 0.0
    %4021 = vmatpush1.msra.mxu0 0.0
    %4022 = vmatprep.subr.mxu0 0.0
    %4023 = vmatpush1.msra.mxu0 0.0
    %4024 = vmatprep.subr.mxu0 0.0
    %4025 = vmatpush1.msra.mxu0 0.0
    %4026 = vmatprep.subr.mxu0 0.0
    %4027 = vmatpush1.msra.mxu0 0.0
    %4028 = vmatprep.subr.mxu0 0.0
    %4029 = vmatpush1.msra.mxu0 0.0
    %4030 = vmatprep.subr.mxu0 0.0
    %4031 = vmatpush1.msra.mxu0 0.0
    %4032 = vmatprep.subr.mxu0 0.0
    %4033 = vmatpush1.msra.mxu0 0.0
    %4034 = vmatprep.subr.mxu0 0.0
    %4035 = vmatpush1.msra.mxu0 0.0
    %4036 = vmatprep.subr.mxu0 0.0
    %4037 = vmatpush1.msra.mxu0 0.0
    %4038 = vmatprep.subr.mxu0 0.0
    %4039 = vmatpush1.msra.mxu0 0.0
    %4040 = vmatprep.subr.mxu0 0.0
    %4041 = vmatpush1.msra.mxu0 0.0
    %4042 = vmatprep.subr.mxu0 0.0
    %4043 = vmatpush1.msra.mxu0 0.0
    %4044 = vmatprep.subr.mxu0 0.0
    %4045 = vmatpush1.msra.mxu0 0.0
    %4046 = vmatprep.mubr.f32.mxu0 0.0
    %4047 = vmatmul.mubr.f32.gmra.mrb[0].mxu0 %v3980
    %v4048 = vpop.f32.mrb[0].mxu0
    %v4049 = vadd.f32 0.0, %v4048
    %v4050 = vpop.f32.mrb[0].mxu0
    %4051 = vdwg.mxu0
    %v4053 = vsel %vm3175, %v3089, 0
    %4055 = vmatprep.subr.mxu0 0.0
    %4056 = vmatpush1.msra.mxu0 %v3138
    %4057 = vmatprep.subr.mxu0 0.0
    %4058 = vmatpush1.msra.mxu0 0.0
    %4059 = vmatprep.subr.mxu0 0.0
    %4060 = vmatpush1.msra.mxu0 0.0
    %4061 = vmatprep.subr.mxu0 0.0
    %4062 = vmatpush1.msra.mxu0 0.0
    %4063 = vmatprep.subr.mxu0 0.0
    %4064 = vmatpush1.msra.mxu0 0.0
    %4065 = vmatprep.subr.mxu0 0.0
    %4066 = vmatpush1.msra.mxu0 0.0
    %4067 = vmatprep.subr.mxu0 0.0
    %4068 = vmatpush1.msra.mxu0 0.0
    %4069 = vmatprep.subr.mxu0 0.0
    %4070 = vmatpush1.msra.mxu0 0.0
    %4071 = vmatprep.subr.mxu0 0.0
    %4072 = vmatpush1.msra.mxu0 0.0
    %4073 = vmatprep.subr.mxu0 0.0
    %4074 = vmatpush1.msra.mxu0 0.0
    %4075 = vmatprep.subr.mxu0 0.0
    %4076 = vmatpush1.msra.mxu0 0.0
    %4077 = vmatprep.subr.mxu0 0.0
    %4078 = vmatpush1.msra.mxu0 0.0
    %4079 = vmatprep.subr.mxu0 0.0
    %4080 = vmatpush1.msra.mxu0 0.0
    %4081 = vmatprep.subr.mxu0 0.0
    %4082 = vmatpush1.msra.mxu0 0.0
    %4083 = vmatprep.subr.mxu0 0.0
    %4084 = vmatpush1.msra.mxu0 0.0
    %4085 = vmatprep.subr.mxu0 0.0
    %4086 = vmatpush1.msra.mxu0 0.0
    %4087 = vmatprep.subr.mxu0 0.0
    %4088 = vmatpush1.msra.mxu0 0.0
    %4089 = vmatprep.subr.mxu0 0.0
    %4090 = vmatpush1.msra.mxu0 0.0
    %4091 = vmatprep.subr.mxu0 0.0
    %4092 = vmatpush1.msra.mxu0 0.0
    %4093 = vmatprep.subr.mxu0 0.0
    %4094 = vmatpush1.msra.mxu0 0.0
    %4095 = vmatprep.subr.mxu0 0.0
    %4096 = vmatpush1.msra.mxu0 0.0
    %4097 = vmatprep.subr.mxu0 0.0
    %4098 = vmatpush1.msra.mxu0 0.0
    %4099 = vmatprep.subr.mxu0 0.0
    %4100 = vmatpush1.msra.mxu0 0.0
    %4101 = vmatprep.subr.mxu0 0.0
    %4102 = vmatpush1.msra.mxu0 0.0
    %4103 = vmatprep.subr.mxu0 0.0
    %4104 = vmatpush1.msra.mxu0 0.0
    %4105 = vmatprep.subr.mxu0 0.0
    %4106 = vmatpush1.msra.mxu0 0.0
    %4107 = vmatprep.subr.mxu0 0.0
    %4108 = vmatpush1.msra.mxu0 0.0
    %4109 = vmatprep.subr.mxu0 0.0
    %4110 = vmatpush1.msra.mxu0 0.0
    %4111 = vmatprep.subr.mxu0 0.0
    %4112 = vmatpush1.msra.mxu0 0.0
    %4113 = vmatprep.subr.mxu0 0.0
    %4114 = vmatpush1.msra.mxu0 0.0
    %4115 = vmatprep.subr.mxu0 0.0
    %4116 = vmatpush1.msra.mxu0 0.0
    %4117 = vmatprep.subr.mxu0 0.0
    %4118 = vmatpush1.msra.mxu0 0.0
    %4119 = vmatprep.mubr.f32.mxu0 0.0
    %4120 = vmatmul.mubr.f32.gmra.mrb[0].mxu0 %v4053
    %v4121 = vpop.f32.mrb[0].mxu0
    %v4122 = vadd.f32 0.0, %v4121
    %v4123 = vpop.f32.mrb[0].mxu0
    %4124 = vdwg.mxu0
    %v4126 = vsel %vm3175, %v3090, 0
    %4128 = vmatprep.subr.mxu0 0.0
    %4129 = vmatpush1.msra.mxu0 %v3139
    %4130 = vmatprep.subr.mxu0 0.0
    %4131 = vmatpush1.msra.mxu0 0.0
    %4132 = vmatprep.subr.mxu0 0.0
    %4133 = vmatpush1.msra.mxu0 0.0
    %4134 = vmatprep.subr.mxu0 0.0
    %4135 = vmatpush1.msra.mxu0 0.0
    %4136 = vmatprep.subr.mxu0 0.0
    %4137 = vmatpush1.msra.mxu0 0.0
    %4138 = vmatprep.subr.mxu0 0.0
    %4139 = vmatpush1.msra.mxu0 0.0
    %4140 = vmatprep.subr.mxu0 0.0
    %4141 = vmatpush1.msra.mxu0 0.0
    %4142 = vmatprep.subr.mxu0 0.0
    %4143 = vmatpush1.msra.mxu0 0.0
    %4144 = vmatprep.subr.mxu0 0.0
    %4145 = vmatpush1.msra.mxu0 0.0
    %4146 = vmatprep.subr.mxu0 0.0
    %4147 = vmatpush1.msra.mxu0 0.0
    %4148 = vmatprep.subr.mxu0 0.0
    %4149 = vmatpush1.msra.mxu0 0.0
    %4150 = vmatprep.subr.mxu0 0.0
    %4151 = vmatpush1.msra.mxu0 0.0
    %4152 = vmatprep.subr.mxu0 0.0
    %4153 = vmatpush1.msra.mxu0 0.0
    %4154 = vmatprep.subr.mxu0 0.0
    %4155 = vmatpush1.msra.mxu0 0.0
    %4156 = vmatprep.subr.mxu0 0.0
    %4157 = vmatpush1.msra.mxu0 0.0
    %4158 = vmatprep.subr.mxu0 0.0
    %4159 = vmatpush1.msra.mxu0 0.0
    %4160 = vmatprep.subr.mxu0 0.0
    %4161 = vmatpush1.msra.mxu0 0.0
    %4162 = vmatprep.subr.mxu0 0.0
    %4163 = vmatpush1.msra.mxu0 0.0
    %4164 = vmatprep.subr.mxu0 0.0
    %4165 = vmatpush1.msra.mxu0 0.0
    %4166 = vmatprep.subr.mxu0 0.0
    %4167 = vmatpush1.msra.mxu0 0.0
    %4168 = vmatprep.subr.mxu0 0.0
    %4169 = vmatpush1.msra.mxu0 0.0
    %4170 = vmatprep.subr.mxu0 0.0
    %4171 = vmatpush1.msra.mxu0 0.0
    %4172 = vmatprep.subr.mxu0 0.0
    %4173 = vmatpush1.msra.mxu0 0.0
    %4174 = vmatprep.subr.mxu0 0.0
    %4175 = vmatpush1.msra.mxu0 0.0
    %4176 = vmatprep.subr.mxu0 0.0
    %4177 = vmatpush1.msra.mxu0 0.0
    %4178 = vmatprep.subr.mxu0 0.0
    %4179 = vmatpush1.msra.mxu0 0.0
    %4180 = vmatprep.subr.mxu0 0.0
    %4181 = vmatpush1.msra.mxu0 0.0
    %4182 = vmatprep.subr.mxu0 0.0
    %4183 = vmatpush1.msra.mxu0 0.0
    %4184 = vmatprep.subr.mxu0 0.0
    %4185 = vmatpush1.msra.mxu0 0.0
    %4186 = vmatprep.subr.mxu0 0.0
    %4187 = vmatpush1.msra.mxu0 0.0
    %4188 = vmatprep.subr.mxu0 0.0
    %4189 = vmatpush1.msra.mxu0 0.0
    %4190 = vmatprep.subr.mxu0 0.0
    %4191 = vmatpush1.msra.mxu0 0.0
    %4192 = vmatprep.mubr.f32.mxu0 0.0
    %4193 = vmatmul.mubr.f32.gmra.mrb[0].mxu0 %v4126
    %v4194 = vpop.f32.mrb[0].mxu0
    %v4195 = vadd.f32 0.0, %v4194
    %v4196 = vpop.f32.mrb[0].mxu0
    %4197 = vdwg.mxu0
    %v4199 = vsel %vm3175, %v3091, 0
    %4201 = vmatprep.subr.mxu0 0.0
    %4202 = vmatpush1.msra.mxu0 %v3140
    %4203 = vmatprep.subr.mxu0 0.0
    %4204 = vmatpush1.msra.mxu0 0.0
    %4205 = vmatprep.subr.mxu0 0.0
    %4206 = vmatpush1.msra.mxu0 0.0
    %4207 = vmatprep.subr.mxu0 0.0
    %4208 = vmatpush1.msra.mxu0 0.0
    %4209 = vmatprep.subr.mxu0 0.0
    %4210 = vmatpush1.msra.mxu0 0.0
    %4211 = vmatprep.subr.mxu0 0.0
    %4212 = vmatpush1.msra.mxu0 0.0
    %4213 = vmatprep.subr.mxu0 0.0
    %4214 = vmatpush1.msra.mxu0 0.0
    %4215 = vmatprep.subr.mxu0 0.0
    %4216 = vmatpush1.msra.mxu0 0.0
    %4217 = vmatprep.subr.mxu0 0.0
    %4218 = vmatpush1.msra.mxu0 0.0
    %4219 = vmatprep.subr.mxu0 0.0
    %4220 = vmatpush1.msra.mxu0 0.0
    %4221 = vmatprep.subr.mxu0 0.0
    %4222 = vmatpush1.msra.mxu0 0.0
    %4223 = vmatprep.subr.mxu0 0.0
    %4224 = vmatpush1.msra.mxu0 0.0
    %4225 = vmatprep.subr.mxu0 0.0
    %4226 = vmatpush1.msra.mxu0 0.0
    %4227 = vmatprep.subr.mxu0 0.0
    %4228 = vmatpush1.msra.mxu0 0.0
    %4229 = vmatprep.subr.mxu0 0.0
    %4230 = vmatpush1.msra.mxu0 0.0
    %4231 = vmatprep.subr.mxu0 0.0
    %4232 = vmatpush1.msra.mxu0 0.0
    %4233 = vmatprep.subr.mxu0 0.0
    %4234 = vmatpush1.msra.mxu0 0.0
    %4235 = vmatprep.subr.mxu0 0.0
    %4236 = vmatpush1.msra.mxu0 0.0
    %4237 = vmatprep.subr.mxu0 0.0
    %4238 = vmatpush1.msra.mxu0 0.0
    %4239 = vmatprep.subr.mxu0 0.0
    %4240 = vmatpush1.msra.mxu0 0.0
    %4241 = vmatprep.subr.mxu0 0.0
    %4242 = vmatpush1.msra.mxu0 0.0
    %4243 = vmatprep.subr.mxu0 0.0
    %4244 = vmatpush1.msra.mxu0 0.0
    %4245 = vmatprep.subr.mxu0 0.0
    %4246 = vmatpush1.msra.mxu0 0.0
    %4247 = vmatprep.subr.mxu0 0.0
    %4248 = vmatpush1.msra.mxu0 0.0
    %4249 = vmatprep.subr.mxu0 0.0
    %4250 = vmatpush1.msra.mxu0 0.0
    %4251 = vmatprep.subr.mxu0 0.0
    %4252 = vmatpush1.msra.mxu0 0.0
    %4253 = vmatprep.subr.mxu0 0.0
    %4254 = vmatpush1.msra.mxu0 0.0
    %4255 = vmatprep.subr.mxu0 0.0
    %4256 = vmatpush1.msra.mxu0 0.0
    %4257 = vmatprep.subr.mxu0 0.0
    %4258 = vmatpush1.msra.mxu0 0.0
    %4259 = vmatprep.subr.mxu0 0.0
    %4260 = vmatpush1.msra.mxu0 0.0
    %4261 = vmatprep.subr.mxu0 0.0
    %4262 = vmatpush1.msra.mxu0 0.0
    %4263 = vmatprep.subr.mxu0 0.0
    %4264 = vmatpush1.msra.mxu0 0.0
    %4265 = vmatprep.mubr.f32.mxu0 0.0
    %4266 = vmatmul.mubr.f32.gmra.mrb[0].mxu0 %v4199
    %v4267 = vpop.f32.mrb[0].mxu0
    %v4268 = vadd.f32 0.0, %v4267
    %v4269 = vpop.f32.mrb[0].mxu0
    %4270 = vdwg.mxu0
    %v4272 = vsel %vm3175, %v3092, 0
    %4274 = vmatprep.subr.mxu0 0.0
    %4275 = vmatpush1.msra.mxu0 %v3141
    %4276 = vmatprep.subr.mxu0 0.0
    %4277 = vmatpush1.msra.mxu0 0.0
    %4278 = vmatprep.subr.mxu0 0.0
    %4279 = vmatpush1.msra.mxu0 0.0
    %4280 = vmatprep.subr.mxu0 0.0
    %4281 = vmatpush1.msra.mxu0 0.0
    %4282 = vmatprep.subr.mxu0 0.0
    %4283 = vmatpush1.msra.mxu0 0.0
    %4284 = vmatprep.subr.mxu0 0.0
    %4285 = vmatpush1.msra.mxu0 0.0
    %4286 = vmatprep.subr.mxu0 0.0
    %4287 = vmatpush1.msra.mxu0 0.0
    %4288 = vmatprep.subr.mxu0 0.0
    %4289 = vmatpush1.msra.mxu0 0.0
    %4290 = vmatprep.subr.mxu0 0.0
    %4291 = vmatpush1.msra.mxu0 0.0
    %4292 = vmatprep.subr.mxu0 0.0
    %4293 = vmatpush1.msra.mxu0 0.0
    %4294 = vmatprep.subr.mxu0 0.0
    %4295 = vmatpush1.msra.mxu0 0.0
    %4296 = vmatprep.subr.mxu0 0.0
    %4297 = vmatpush1.msra.mxu0 0.0
    %4298 = vmatprep.subr.mxu0 0.0
    %4299 = vmatpush1.msra.mxu0 0.0
    %4300 = vmatprep.subr.mxu0 0.0
    %4301 = vmatpush1.msra.mxu0 0.0
    %4302 = vmatprep.subr.mxu0 0.0
    %4303 = vmatpush1.msra.mxu0 0.0
    %4304 = vmatprep.subr.mxu0 0.0
    %4305 = vmatpush1.msra.mxu0 0.0
    %4306 = vmatprep.subr.mxu0 0.0
    %4307 = vmatpush1.msra.mxu0 0.0
    %4308 = vmatprep.subr.mxu0 0.0
    %4309 = vmatpush1.msra.mxu0 0.0
    %4310 = vmatprep.subr.mxu0 0.0
    %4311 = vmatpush1.msra.mxu0 0.0
    %4312 = vmatprep.subr.mxu0 0.0
    %4313 = vmatpush1.msra.mxu0 0.0
    %4314 = vmatprep.subr.mxu0 0.0
    %4315 = vmatpush1.msra.mxu0 0.0
    %4316 = vmatprep.subr.mxu0 0.0
    %4317 = vmatpush1.msra.mxu0 0.0
    %4318 = vmatprep.subr.mxu0 0.0
    %4319 = vmatpush1.msra.mxu0 0.0
    %4320 = vmatprep.subr.mxu0 0.0
    %4321 = vmatpush1.msra.mxu0 0.0
    %4322 = vmatprep.subr.mxu0 0.0
    %4323 = vmatpush1.msra.mxu0 0.0
    %4324 = vmatprep.subr.mxu0 0.0
    %4325 = vmatpush1.msra.mxu0 0.0
    %4326 = vmatprep.subr.mxu0 0.0
    %4327 = vmatpush1.msra.mxu0 0.0
    %4328 = vmatprep.subr.mxu0 0.0
    %4329 = vmatpush1.msra.mxu0 0.0
    %4330 = vmatprep.subr.mxu0 0.0
    %4331 = vmatpush1.msra.mxu0 0.0
    %4332 = vmatprep.subr.mxu0 0.0
    %4333 = vmatpush1.msra.mxu0 0.0
    %4334 = vmatprep.subr.mxu0 0.0
    %4335 = vmatpush1.msra.mxu0 0.0
    %4336 = vmatprep.subr.mxu0 0.0
    %4337 = vmatpush1.msra.mxu0 0.0
    %4338 = vmatprep.mubr.f32.mxu0 0.0
    %4339 = vmatmul.mubr.f32.gmra.mrb[0].mxu0 %v4272
    %v4340 = vpop.f32.mrb[0].mxu0
    %v4341 = vadd.f32 0.0, %v4340
    %v4342 = vpop.f32.mrb[0].mxu0
    %4343 = vdwg.mxu0
    %v4345 = vsel %vm3175, %v3093, 0
    %4347 = vmatprep.subr.mxu0 0.0
    %4348 = vmatpush1.msra.mxu0 %v3142
    %4349 = vmatprep.subr.mxu0 0.0
    %4350 = vmatpush1.msra.mxu0 0.0
    %4351 = vmatprep.subr.mxu0 0.0
    %4352 = vmatpush1.msra.mxu0 0.0
    %4353 = vmatprep.subr.mxu0 0.0
    %4354 = vmatpush1.msra.mxu0 0.0
    %4355 = vmatprep.subr.mxu0 0.0
    %4356 = vmatpush1.msra.mxu0 0.0
    %4357 = vmatprep.subr.mxu0 0.0
    %4358 = vmatpush1.msra.mxu0 0.0
    %4359 = vmatprep.subr.mxu0 0.0
    %4360 = vmatpush1.msra.mxu0 0.0
    %4361 = vmatprep.subr.mxu0 0.0
    %4362 = vmatpush1.msra.mxu0 0.0
    %4363 = vmatprep.subr.mxu0 0.0
    %4364 = vmatpush1.msra.mxu0 0.0
    %4365 = vmatprep.subr.mxu0 0.0
    %4366 = vmatpush1.msra.mxu0 0.0
    %4367 = vmatprep.subr.mxu0 0.0
    %4368 = vmatpush1.msra.mxu0 0.0
    %4369 = vmatprep.subr.mxu0 0.0
    %4370 = vmatpush1.msra.mxu0 0.0
    %4371 = vmatprep.subr.mxu0 0.0
    %4372 = vmatpush1.msra.mxu0 0.0
    %4373 = vmatprep.subr.mxu0 0.0
    %4374 = vmatpush1.msra.mxu0 0.0
    %4375 = vmatprep.subr.mxu0 0.0
    %4376 = vmatpush1.msra.mxu0 0.0
    %4377 = vmatprep.subr.mxu0 0.0
    %4378 = vmatpush1.msra.mxu0 0.0
    %4379 = vmatprep.subr.mxu0 0.0
    %4380 = vmatpush1.msra.mxu0 0.0
    %4381 = vmatprep.subr.mxu0 0.0
    %4382 = vmatpush1.msra.mxu0 0.0
    %4383 = vmatprep.subr.mxu0 0.0
    %4384 = vmatpush1.msra.mxu0 0.0
    %4385 = vmatprep.subr.mxu0 0.0
    %4386 = vmatpush1.msra.mxu0 0.0
    %4387 = vmatprep.subr.mxu0 0.0
    %4388 = vmatpush1.msra.mxu0 0.0
    %4389 = vmatprep.subr.mxu0 0.0
    %4390 = vmatpush1.msra.mxu0 0.0
    %4391 = vmatprep.subr.mxu0 0.0
    %4392 = vmatpush1.msra.mxu0 0.0
    %4393 = vmatprep.subr.mxu0 0.0
    %4394 = vmatpush1.msra.mxu0 0.0
    %4395 = vmatprep.subr.mxu0 0.0
    %4396 = vmatpush1.msra.mxu0 0.0
    %4397 = vmatprep.subr.mxu0 0.0
    %4398 = vmatpush1.msra.mxu0 0.0
    %4399 = vmatprep.subr.mxu0 0.0
    %4400 = vmatpush1.msra.mxu0 0.0
    %4401 = vmatprep.subr.mxu0 0.0
    %4402 = vmatpush1.msra.mxu0 0.0
    %4403 = vmatprep.subr.mxu0 0.0
    %4404 = vmatpush1.msra.mxu0 0.0
    %4405 = vmatprep.subr.mxu0 0.0
    %4406 = vmatpush1.msra.mxu0 0.0
    %4407 = vmatprep.subr.mxu0 0.0
    %4408 = vmatpush1.msra.mxu0 0.0
    %4409 = vmatprep.subr.mxu0 0.0
    %4410 = vmatpush1.msra.mxu0 0.0
    %4411 = vmatprep.mubr.f32.mxu0 0.0
    %4412 = vmatmul.mubr.f32.gmra.mrb[0].mxu0 %v4345
    %v4413 = vpop.f32.mrb[0].mxu0
    %v4414 = vadd.f32 0.0, %v4413
    %v4415 = vpop.f32.mrb[0].mxu0
    %4416 = vdwg.mxu0
    %v4418 = vsel %vm3175, %v3094, 0
    %4420 = vmatprep.subr.mxu0 0.0
    %4421 = vmatpush1.msra.mxu0 %v3143
    %4422 = vmatprep.subr.mxu0 0.0
    %4423 = vmatpush1.msra.mxu0 0.0
    %4424 = vmatprep.subr.mxu0 0.0
    %4425 = vmatpush1.msra.mxu0 0.0
    %4426 = vmatprep.subr.mxu0 0.0
    %4427 = vmatpush1.msra.mxu0 0.0
    %4428 = vmatprep.subr.mxu0 0.0
    %4429 = vmatpush1.msra.mxu0 0.0
    %4430 = vmatprep.subr.mxu0 0.0
    %4431 = vmatpush1.msra.mxu0 0.0
    %4432 = vmatprep.subr.mxu0 0.0
    %4433 = vmatpush1.msra.mxu0 0.0
    %4434 = vmatprep.subr.mxu0 0.0
    %4435 = vmatpush1.msra.mxu0 0.0
    %4436 = vmatprep.subr.mxu0 0.0
    %4437 = vmatpush1.msra.mxu0 0.0
    %4438 = vmatprep.subr.mxu0 0.0
    %4439 = vmatpush1.msra.mxu0 0.0
    %4440 = vmatprep.subr.mxu0 0.0
    %4441 = vmatpush1.msra.mxu0 0.0
    %4442 = vmatprep.subr.mxu0 0.0
    %4443 = vmatpush1.msra.mxu0 0.0
    %4444 = vmatprep.subr.mxu0 0.0
    %4445 = vmatpush1.msra.mxu0 0.0
    %4446 = vmatprep.subr.mxu0 0.0
    %4447 = vmatpush1.msra.mxu0 0.0
    %4448 = vmatprep.subr.mxu0 0.0
    %4449 = vmatpush1.msra.mxu0 0.0
    %4450 = vmatprep.subr.mxu0 0.0
    %4451 = vmatpush1.msra.mxu0 0.0
    %4452 = vmatprep.subr.mxu0 0.0
    %4453 = vmatpush1.msra.mxu0 0.0
    %4454 = vmatprep.subr.mxu0 0.0
    %4455 = vmatpush1.msra.mxu0 0.0
    %4456 = vmatprep.subr.mxu0 0.0
    %4457 = vmatpush1.msra.mxu0 0.0
    %4458 = vmatprep.subr.mxu0 0.0
    %4459 = vmatpush1.msra.mxu0 0.0
    %4460 = vmatprep.subr.mxu0 0.0
    %4461 = vmatpush1.msra.mxu0 0.0
    %4462 = vmatprep.subr.mxu0 0.0
    %4463 = vmatpush1.msra.mxu0 0.0
    %4464 = vmatprep.subr.mxu0 0.0
    %4465 = vmatpush1.msra.mxu0 0.0
    %4466 = vmatprep.subr.mxu0 0.0
    %4467 = vmatpush1.msra.mxu0 0.0
    %4468 = vmatprep.subr.mxu0 0.0
    %4469 = vmatpush1.msra.mxu0 0.0
    %4470 = vmatprep.subr.mxu0 0.0
    %4471 = vmatpush1.msra.mxu0 0.0
    %4472 = vmatprep.subr.mxu0 0.0
    %4473 = vmatpush1.msra.mxu0 0.0
    %4474 = vmatprep.subr.mxu0 0.0
    %4475 = vmatpush1.msra.mxu0 0.0
    %4476 = vmatprep.subr.mxu0 0.0
    %4477 = vmatpush1.msra.mxu0 0.0
    %4478 = vmatprep.subr.mxu0 0.0
    %4479 = vmatpush1.msra.mxu0 0.0
    %4480 = vmatprep.subr.mxu0 0.0
    %4481 = vmatpush1.msra.mxu0 0.0
    %4482 = vmatprep.subr.mxu0 0.0
    %4483 = vmatpush1.msra.mxu0 0.0
    %4484 = vmatprep.mubr.f32.mxu0 0.0
    %4485 = vmatmul.mubr.f32.gmra.mrb[0].mxu0 %v4418
    %v4486 = vpop.f32.mrb[0].mxu0
    %v4487 = vadd.f32 0.0, %v4486
    %v4488 = vpop.f32.mrb[0].mxu0
    %4489 = vdwg.mxu0
    %v4491 = vsel %vm3175, %v3095, 0
    %4493 = vmatprep.subr.mxu0 0.0
    %4494 = vmatpush1.msra.mxu0 %v3144
    %4495 = vmatprep.subr.mxu0 0.0
    %4496 = vmatpush1.msra.mxu0 0.0
    %4497 = vmatprep.subr.mxu0 0.0
    %4498 = vmatpush1.msra.mxu0 0.0
    %4499 = vmatprep.subr.mxu0 0.0
    %4500 = vmatpush1.msra.mxu0 0.0
    %4501 = vmatprep.subr.mxu0 0.0
    %4502 = vmatpush1.msra.mxu0 0.0
    %4503 = vmatprep.subr.mxu0 0.0
    %4504 = vmatpush1.msra.mxu0 0.0
    %4505 = vmatprep.subr.mxu0 0.0
    %4506 = vmatpush1.msra.mxu0 0.0
    %4507 = vmatprep.subr.mxu0 0.0
    %4508 = vmatpush1.msra.mxu0 0.0
    %4509 = vmatprep.subr.mxu0 0.0
    %4510 = vmatpush1.msra.mxu0 0.0
    %4511 = vmatprep.subr.mxu0 0.0
    %4512 = vmatpush1.msra.mxu0 0.0
    %4513 = vmatprep.subr.mxu0 0.0
    %4514 = vmatpush1.msra.mxu0 0.0
    %4515 = vmatprep.subr.mxu0 0.0
    %4516 = vmatpush1.msra.mxu0 0.0
    %4517 = vmatprep.subr.mxu0 0.0
    %4518 = vmatpush1.msra.mxu0 0.0
    %4519 = vmatprep.subr.mxu0 0.0
    %4520 = vmatpush1.msra.mxu0 0.0
    %4521 = vmatprep.subr.mxu0 0.0
    %4522 = vmatpush1.msra.mxu0 0.0
    %4523 = vmatprep.subr.mxu0 0.0
    %4524 = vmatpush1.msra.mxu0 0.0
    %4525 = vmatprep.subr.mxu0 0.0
    %4526 = vmatpush1.msra.mxu0 0.0
    %4527 = vmatprep.subr.mxu0 0.0
    %4528 = vmatpush1.msra.mxu0 0.0
    %4529 = vmatprep.subr.mxu0 0.0
    %4530 = vmatpush1.msra.mxu0 0.0
    %4531 = vmatprep.subr.mxu0 0.0
    %4532 = vmatpush1.msra.mxu0 0.0
    %4533 = vmatprep.subr.mxu0 0.0
    %4534 = vmatpush1.msra.mxu0 0.0
    %4535 = vmatprep.subr.mxu0 0.0
    %4536 = vmatpush1.msra.mxu0 0.0
    %4537 = vmatprep.subr.mxu0 0.0
    %4538 = vmatpush1.msra.mxu0 0.0
    %4539 = vmatprep.subr.mxu0 0.0
    %4540 = vmatpush1.msra.mxu0 0.0
    %4541 = vmatprep.subr.mxu0 0.0
    %4542 = vmatpush1.msra.mxu0 0.0
    %4543 = vmatprep.subr.mxu0 0.0
    %4544 = vmatpush1.msra.mxu0 0.0
    %4545 = vmatprep.subr.mxu0 0.0
    %4546 = vmatpush1.msra.mxu0 0.0
    %4547 = vmatprep.subr.mxu0 0.0
    %4548 = vmatpush1.msra.mxu0 0.0
    %4549 = vmatprep.subr.mxu0 0.0
    %4550 = vmatpush1.msra.mxu0 0.0
    %4551 = vmatprep.subr.mxu0 0.0
    %4552 = vmatpush1.msra.mxu0 0.0
    %4553 = vmatprep.subr.mxu0 0.0
    %4554 = vmatpush1.msra.mxu0 0.0
    %4555 = vmatprep.subr.mxu0 0.0
    %4556 = vmatpush1.msra.mxu0 0.0
    %4557 = vmatprep.mubr.f32.mxu0 0.0
    %4558 = vmatmul.mubr.f32.gmra.mrb[0].mxu0 %v4491
    %v4559 = vpop.f32.mrb[0].mxu0
    %v4560 = vadd.f32 0.0, %v4559
    %v4561 = vpop.f32.mrb[0].mxu0
    %4562 = vdwg.mxu0
    %v4564 = vsel %vm3175, %v3096, 0
    %4566 = vmatprep.subr.mxu0 0.0
    %4567 = vmatpush1.msra.mxu0 %v3145
    %4568 = vmatprep.subr.mxu0 0.0
    %4569 = vmatpush1.msra.mxu0 0.0
    %4570 = vmatprep.subr.mxu0 0.0
    %4571 = vmatpush1.msra.mxu0 0.0
    %4572 = vmatprep.subr.mxu0 0.0
    %4573 = vmatpush1.msra.mxu0 0.0
    %4574 = vmatprep.subr.mxu0 0.0
    %4575 = vmatpush1.msra.mxu0 0.0
    %4576 = vmatprep.subr.mxu0 0.0
    %4577 = vmatpush1.msra.mxu0 0.0
    %4578 = vmatprep.subr.mxu0 0.0
    %4579 = vmatpush1.msra.mxu0 0.0
    %4580 = vmatprep.subr.mxu0 0.0
    %4581 = vmatpush1.msra.mxu0 0.0
    %4582 = vmatprep.subr.mxu0 0.0
    %4583 = vmatpush1.msra.mxu0 0.0
    %4584 = vmatprep.subr.mxu0 0.0
    %4585 = vmatpush1.msra.mxu0 0.0
    %4586 = vmatprep.subr.mxu0 0.0
    %4587 = vmatpush1.msra.mxu0 0.0
    %4588 = vmatprep.subr.mxu0 0.0
    %4589 = vmatpush1.msra.mxu0 0.0
    %4590 = vmatprep.subr.mxu0 0.0
    %4591 = vmatpush1.msra.mxu0 0.0
    %4592 = vmatprep.subr.mxu0 0.0
    %4593 = vmatpush1.msra.mxu0 0.0
    %4594 = vmatprep.subr.mxu0 0.0
    %4595 = vmatpush1.msra.mxu0 0.0
    %4596 = vmatprep.subr.mxu0 0.0
    %4597 = vmatpush1.msra.mxu0 0.0
    %4598 = vmatprep.subr.mxu0 0.0
    %4599 = vmatpush1.msra.mxu0 0.0
    %4600 = vmatprep.subr.mxu0 0.0
    %4601 = vmatpush1.msra.mxu0 0.0
    %4602 = vmatprep.subr.mxu0 0.0
    %4603 = vmatpush1.msra.mxu0 0.0
    %4604 = vmatprep.subr.mxu0 0.0
    %4605 = vmatpush1.msra.mxu0 0.0
    %4606 = vmatprep.subr.mxu0 0.0
    %4607 = vmatpush1.msra.mxu0 0.0
    %4608 = vmatprep.subr.mxu0 0.0
    %4609 = vmatpush1.msra.mxu0 0.0
    %4610 = vmatprep.subr.mxu0 0.0
    %4611 = vmatpush1.msra.mxu0 0.0
    %4612 = vmatprep.subr.mxu0 0.0
    %4613 = vmatpush1.msra.mxu0 0.0
    %4614 = vmatprep.subr.mxu0 0.0
    %4615 = vmatpush1.msra.mxu0 0.0
    %4616 = vmatprep.subr.mxu0 0.0
    %4617 = vmatpush1.msra.mxu0 0.0
    %4618 = vmatprep.subr.mxu0 0.0
    %4619 = vmatpush1.msra.mxu0 0.0
    %4620 = vmatprep.subr.mxu0 0.0
    %4621 = vmatpush1.msra.mxu0 0.0
    %4622 = vmatprep.subr.mxu0 0.0
    %4623 = vmatpush1.msra.mxu0 0.0
    %4624 = vmatprep.subr.mxu0 0.0
    %4625 = vmatpush1.msra.mxu0 0.0
    %4626 = vmatprep.subr.mxu0 0.0
    %4627 = vmatpush1.msra.mxu0 0.0
    %4628 = vmatprep.subr.mxu0 0.0
    %4629 = vmatpush1.msra.mxu0 0.0
    %4630 = vmatprep.mubr.f32.mxu0 0.0
    %4631 = vmatmul.mubr.f32.gmra.mrb[0].mxu0 %v4564
    %v4632 = vpop.f32.mrb[0].mxu0
    %v4633 = vadd.f32 0.0, %v4632
    %v4634 = vpop.f32.mrb[0].mxu0
    %4635 = vdwg.mxu0
    %v4637 = vsel %vm3175, %v3097, 0
    %4639 = vmatprep.subr.mxu0 0.0
    %4640 = vmatpush1.msra.mxu0 %v3146
    %4641 = vmatprep.subr.mxu0 0.0
    %4642 = vmatpush1.msra.mxu0 0.0
    %4643 = vmatprep.subr.mxu0 0.0
    %4644 = vmatpush1.msra.mxu0 0.0
    %4645 = vmatprep.subr.mxu0 0.0
    %4646 = vmatpush1.msra.mxu0 0.0
    %4647 = vmatprep.subr.mxu0 0.0
    %4648 = vmatpush1.msra.mxu0 0.0
    %4649 = vmatprep.subr.mxu0 0.0
    %4650 = vmatpush1.msra.mxu0 0.0
    %4651 = vmatprep.subr.mxu0 0.0
    %4652 = vmatpush1.msra.mxu0 0.0
    %4653 = vmatprep.subr.mxu0 0.0
    %4654 = vmatpush1.msra.mxu0 0.0
    %4655 = vmatprep.subr.mxu0 0.0
    %4656 = vmatpush1.msra.mxu0 0.0
    %4657 = vmatprep.subr.mxu0 0.0
    %4658 = vmatpush1.msra.mxu0 0.0
    %4659 = vmatprep.subr.mxu0 0.0
    %4660 = vmatpush1.msra.mxu0 0.0
    %4661 = vmatprep.subr.mxu0 0.0
    %4662 = vmatpush1.msra.mxu0 0.0
    %4663 = vmatprep.subr.mxu0 0.0
    %4664 = vmatpush1.msra.mxu0 0.0
    %4665 = vmatprep.subr.mxu0 0.0
    %4666 = vmatpush1.msra.mxu0 0.0
    %4667 = vmatprep.subr.mxu0 0.0
    %4668 = vmatpush1.msra.mxu0 0.0
    %4669 = vmatprep.subr.mxu0 0.0
    %4670 = vmatpush1.msra.mxu0 0.0
    %4671 = vmatprep.subr.mxu0 0.0
    %4672 = vmatpush1.msra.mxu0 0.0
    %4673 = vmatprep.subr.mxu0 0.0
    %4674 = vmatpush1.msra.mxu0 0.0
    %4675 = vmatprep.subr.mxu0 0.0
    %4676 = vmatpush1.msra.mxu0 0.0
    %4677 = vmatprep.subr.mxu0 0.0
    %4678 = vmatpush1.msra.mxu0 0.0
    %4679 = vmatprep.subr.mxu0 0.0
    %4680 = vmatpush1.msra.mxu0 0.0
    %4681 = vmatprep.subr.mxu0 0.0
    %4682 = vmatpush1.msra.mxu0 0.0
    %4683 = vmatprep.subr.mxu0 0.0
    %4684 = vmatpush1.msra.mxu0 0.0
    %4685 = vmatprep.subr.mxu0 0.0
    %4686 = vmatpush1.msra.mxu0 0.0
    %4687 = vmatprep.subr.mxu0 0.0
    %4688 = vmatpush1.msra.mxu0 0.0
    %4689 = vmatprep.subr.mxu0 0.0
    %4690 = vmatpush1.msra.mxu0 0.0
    %4691 = vmatprep.subr.mxu0 0.0
    %4692 = vmatpush1.msra.mxu0 0.0
    %4693 = vmatprep.subr.mxu0 0.0
    %4694 = vmatpush1.msra.mxu0 0.0
    %4695 = vmatprep.subr.mxu0 0.0
    %4696 = vmatpush1.msra.mxu0 0.0
    %4697 = vmatprep.subr.mxu0 0.0
    %4698 = vmatpush1.msra.mxu0 0.0
    %4699 = vmatprep.subr.mxu0 0.0
    %4700 = vmatpush1.msra.mxu0 0.0
    %4701 = vmatprep.subr.mxu0 0.0
    %4702 = vmatpush1.msra.mxu0 0.0
    %4703 = vmatprep.mubr.f32.mxu0 0.0
    %4704 = vmatmul.mubr.f32.gmra.mrb[0].mxu0 %v4637
    %v4705 = vpop.f32.mrb[0].mxu0
    %v4706 = vadd.f32 0.0, %v4705
    %v4707 = vpop.f32.mrb[0].mxu0
    %4708 = vdwg.mxu0
    %v4710 = vsel %vm3175, %v3098, 0
    %4712 = vmatprep.subr.mxu0 0.0
    %4713 = vmatpush1.msra.mxu0 %v3147
    %4714 = vmatprep.subr.mxu0 0.0
    %4715 = vmatpush1.msra.mxu0 0.0
    %4716 = vmatprep.subr.mxu0 0.0
    %4717 = vmatpush1.msra.mxu0 0.0
    %4718 = vmatprep.subr.mxu0 0.0
    %4719 = vmatpush1.msra.mxu0 0.0
    %4720 = vmatprep.subr.mxu0 0.0
    %4721 = vmatpush1.msra.mxu0 0.0
    %4722 = vmatprep.subr.mxu0 0.0
    %4723 = vmatpush1.msra.mxu0 0.0
    %4724 = vmatprep.subr.mxu0 0.0
    %4725 = vmatpush1.msra.mxu0 0.0
    %4726 = vmatprep.subr.mxu0 0.0
    %4727 = vmatpush1.msra.mxu0 0.0
    %4728 = vmatprep.subr.mxu0 0.0
    %4729 = vmatpush1.msra.mxu0 0.0
    %4730 = vmatprep.subr.mxu0 0.0
    %4731 = vmatpush1.msra.mxu0 0.0
    %4732 = vmatprep.subr.mxu0 0.0
    %4733 = vmatpush1.msra.mxu0 0.0
    %4734 = vmatprep.subr.mxu0 0.0
    %4735 = vmatpush1.msra.mxu0 0.0
    %4736 = vmatprep.subr.mxu0 0.0
    %4737 = vmatpush1.msra.mxu0 0.0
    %4738 = vmatprep.subr.mxu0 0.0
    %4739 = vmatpush1.msra.mxu0 0.0
    %4740 = vmatprep.subr.mxu0 0.0
    %4741 = vmatpush1.msra.mxu0 0.0
    %4742 = vmatprep.subr.mxu0 0.0
    %4743 = vmatpush1.msra.mxu0 0.0
    %4744 = vmatprep.subr.mxu0 0.0
    %4745 = vmatpush1.msra.mxu0 0.0
    %4746 = vmatprep.subr.mxu0 0.0
    %4747 = vmatpush1.msra.mxu0 0.0
    %4748 = vmatprep.subr.mxu0 0.0
    %4749 = vmatpush1.msra.mxu0 0.0
    %4750 = vmatprep.subr.mxu0 0.0
    %4751 = vmatpush1.msra.mxu0 0.0
    %4752 = vmatprep.subr.mxu0 0.0
    %4753 = vmatpush1.msra.mxu0 0.0
    %4754 = vmatprep.subr.mxu0 0.0
    %4755 = vmatpush1.msra.mxu0 0.0
    %4756 = vmatprep.subr.mxu0 0.0
    %4757 = vmatpush1.msra.mxu0 0.0
    %4758 = vmatprep.subr.mxu0 0.0
    %4759 = vmatpush1.msra.mxu0 0.0
    %4760 = vmatprep.subr.mxu0 0.0
    %4761 = vmatpush1.msra.mxu0 0.0
    %4762 = vmatprep.subr.mxu0 0.0
    %4763 = vmatpush1.msra.mxu0 0.0
    %4764 = vmatprep.subr.mxu0 0.0
    %4765 = vmatpush1.msra.mxu0 0.0
    %4766 = vmatprep.subr.mxu0 0.0
    %4767 = vmatpush1.msra.mxu0 0.0
    %4768 = vmatprep.subr.mxu0 0.0
    %4769 = vmatpush1.msra.mxu0 0.0
    %4770 = vmatprep.subr.mxu0 0.0
    %4771 = vmatpush1.msra.mxu0 0.0
    %4772 = vmatprep.subr.mxu0 0.0
    %4773 = vmatpush1.msra.mxu0 0.0
    %4774 = vmatprep.subr.mxu0 0.0
    %4775 = vmatpush1.msra.mxu0 0.0
    %4776 = vmatprep.mubr.f32.mxu0 0.0
    %4777 = vmatmul.mubr.f32.gmra.mrb[0].mxu0 %v4710
    %v4778 = vpop.f32.mrb[0].mxu0
    %v4779 = vadd.f32 0.0, %v4778
    %v4780 = vpop.f32.mrb[0].mxu0
    %4781 = vdwg.mxu0
    %v4783 = vsel %vm3175, %v3099, 0
    %4785 = vmatprep.subr.mxu0 0.0
    %4786 = vmatpush1.msra.mxu0 %v3148
    %4787 = vmatprep.subr.mxu0 0.0
    %4788 = vmatpush1.msra.mxu0 0.0
    %4789 = vmatprep.subr.mxu0 0.0
    %4790 = vmatpush1.msra.mxu0 0.0
    %4791 = vmatprep.subr.mxu0 0.0
    %4792 = vmatpush1.msra.mxu0 0.0
    %4793 = vmatprep.subr.mxu0 0.0
    %4794 = vmatpush1.msra.mxu0 0.0
    %4795 = vmatprep.subr.mxu0 0.0
    %4796 = vmatpush1.msra.mxu0 0.0
    %4797 = vmatprep.subr.mxu0 0.0
    %4798 = vmatpush1.msra.mxu0 0.0
    %4799 = vmatprep.subr.mxu0 0.0
    %4800 = vmatpush1.msra.mxu0 0.0
    %4801 = vmatprep.subr.mxu0 0.0
    %4802 = vmatpush1.msra.mxu0 0.0
    %4803 = vmatprep.subr.mxu0 0.0
    %4804 = vmatpush1.msra.mxu0 0.0
    %4805 = vmatprep.subr.mxu0 0.0
    %4806 = vmatpush1.msra.mxu0 0.0
    %4807 = vmatprep.subr.mxu0 0.0
    %4808 = vmatpush1.msra.mxu0 0.0
    %4809 = vmatprep.subr.mxu0 0.0
    %4810 = vmatpush1.msra.mxu0 0.0
    %4811 = vmatprep.subr.mxu0 0.0
    %4812 = vmatpush1.msra.mxu0 0.0
    %4813 = vmatprep.subr.mxu0 0.0
    %4814 = vmatpush1.msra.mxu0 0.0
    %4815 = vmatprep.subr.mxu0 0.0
    %4816 = vmatpush1.msra.mxu0 0.0
    %4817 = vmatprep.subr.mxu0 0.0
    %4818 = vmatpush1.msra.mxu0 0.0
    %4819 = vmatprep.subr.mxu0 0.0
    %4820 = vmatpush1.msra.mxu0 0.0
    %4821 = vmatprep.subr.mxu0 0.0
    %4822 = vmatpush1.msra.mxu0 0.0
    %4823 = vmatprep.subr.mxu0 0.0
    %4824 = vmatpush1.msra.mxu0 0.0
    %4825 = vmatprep.subr.mxu0 0.0
    %4826 = vmatpush1.msra.mxu0 0.0
    %4827 = vmatprep.subr.mxu0 0.0
    %4828 = vmatpush1.msra.mxu0 0.0
    %4829 = vmatprep.subr.mxu0 0.0
    %4830 = vmatpush1.msra.mxu0 0.0
    %4831 = vmatprep.subr.mxu0 0.0
    %4832 = vmatpush1.msra.mxu0 0.0
    %4833 = vmatprep.subr.mxu0 0.0
    %4834 = vmatpush1.msra.mxu0 0.0
    %4835 = vmatprep.subr.mxu0 0.0
    %4836 = vmatpush1.msra.mxu0 0.0
    %4837 = vmatprep.subr.mxu0 0.0
    %4838 = vmatpush1.msra.mxu0 0.0
    %4839 = vmatprep.subr.mxu0 0.0
    %4840 = vmatpush1.msra.mxu0 0.0
    %4841 = vmatprep.subr.mxu0 0.0
    %4842 = vmatpush1.msra.mxu0 0.0
    %4843 = vmatprep.subr.mxu0 0.0
    %4844 = vmatpush1.msra.mxu0 0.0
    %4845 = vmatprep.subr.mxu0 0.0
    %4846 = vmatpush1.msra.mxu0 0.0
    %4847 = vmatprep.subr.mxu0 0.0
    %4848 = vmatpush1.msra.mxu0 0.0
    %4849 = vmatprep.mubr.f32.mxu0 0.0
    %4850 = vmatmul.mubr.f32.gmra.mrb[0].mxu0 %v4783
    %v4851 = vpop.f32.mrb[0].mxu0
    %v4852 = vadd.f32 0.0, %v4851
    %v4853 = vpop.f32.mrb[0].mxu0
    %4854 = vdwg.mxu0
    %v4856 = vsel %vm3175, %v3100, 0
    %4858 = vmatprep.subr.mxu0 0.0
    %4859 = vmatpush1.msra.mxu0 %v3149
    %4860 = vmatprep.subr.mxu0 0.0
    %4861 = vmatpush1.msra.mxu0 0.0
    %4862 = vmatprep.subr.mxu0 0.0
    %4863 = vmatpush1.msra.mxu0 0.0
    %4864 = vmatprep.subr.mxu0 0.0
    %4865 = vmatpush1.msra.mxu0 0.0
    %4866 = vmatprep.subr.mxu0 0.0
    %4867 = vmatpush1.msra.mxu0 0.0
    %4868 = vmatprep.subr.mxu0 0.0
    %4869 = vmatpush1.msra.mxu0 0.0
    %4870 = vmatprep.subr.mxu0 0.0
    %4871 = vmatpush1.msra.mxu0 0.0
    %4872 = vmatprep.subr.mxu0 0.0
    %4873 = vmatpush1.msra.mxu0 0.0
    %4874 = vmatprep.subr.mxu0 0.0
    %4875 = vmatpush1.msra.mxu0 0.0
    %4876 = vmatprep.subr.mxu0 0.0
    %4877 = vmatpush1.msra.mxu0 0.0
    %4878 = vmatprep.subr.mxu0 0.0
    %4879 = vmatpush1.msra.mxu0 0.0
    %4880 = vmatprep.subr.mxu0 0.0
    %4881 = vmatpush1.msra.mxu0 0.0
    %4882 = vmatprep.subr.mxu0 0.0
    %4883 = vmatpush1.msra.mxu0 0.0
    %4884 = vmatprep.subr.mxu0 0.0
    %4885 = vmatpush1.msra.mxu0 0.0
    %4886 = vmatprep.subr.mxu0 0.0
    %4887 = vmatpush1.msra.mxu0 0.0
    %4888 = vmatprep.subr.mxu0 0.0
    %4889 = vmatpush1.msra.mxu0 0.0
    %4890 = vmatprep.subr.mxu0 0.0
    %4891 = vmatpush1.msra.mxu0 0.0
    %4892 = vmatprep.subr.mxu0 0.0
    %4893 = vmatpush1.msra.mxu0 0.0
    %4894 = vmatprep.subr.mxu0 0.0
    %4895 = vmatpush1.msra.mxu0 0.0
    %4896 = vmatprep.subr.mxu0 0.0
    %4897 = vmatpush1.msra.mxu0 0.0
    %4898 = vmatprep.subr.mxu0 0.0
    %4899 = vmatpush1.msra.mxu0 0.0
    %4900 = vmatprep.subr.mxu0 0.0
    %4901 = vmatpush1.msra.mxu0 0.0
    %4902 = vmatprep.subr.mxu0 0.0
    %4903 = vmatpush1.msra.mxu0 0.0
    %4904 = vmatprep.subr.mxu0 0.0
    %4905 = vmatpush1.msra.mxu0 0.0
    %4906 = vmatprep.subr.mxu0 0.0
    %4907 = vmatpush1.msra.mxu0 0.0
    %4908 = vmatprep.subr.mxu0 0.0
    %4909 = vmatpush1.msra.mxu0 0.0
    %4910 = vmatprep.subr.mxu0 0.0
    %4911 = vmatpush1.msra.mxu0 0.0
    %4912 = vmatprep.subr.mxu0 0.0
    %4913 = vmatpush1.msra.mxu0 0.0
    %4914 = vmatprep.subr.mxu0 0.0
    %4915 = vmatpush1.msra.mxu0 0.0
    %4916 = vmatprep.subr.mxu0 0.0
    %4917 = vmatpush1.msra.mxu0 0.0
    %4918 = vmatprep.subr.mxu0 0.0
    %4919 = vmatpush1.msra.mxu0 0.0
    %4920 = vmatprep.subr.mxu0 0.0
    %4921 = vmatpush1.msra.mxu0 0.0
    %4922 = vmatprep.mubr.f32.mxu0 0.0
    %4923 = vmatmul.mubr.f32.gmra.mrb[0].mxu0 %v4856
    %v4924 = vpop.f32.mrb[0].mxu0
    %v4925 = vadd.f32 0.0, %v4924
    %v4926 = vpop.f32.mrb[0].mxu0
    %4927 = vdwg.mxu0
    %v4929 = vsel %vm3175, %v3101, 0
    %4931 = vmatprep.subr.mxu0 0.0
    %4932 = vmatpush1.msra.mxu0 %v3150
    %4933 = vmatprep.subr.mxu0 0.0
    %4934 = vmatpush1.msra.mxu0 0.0
    %4935 = vmatprep.subr.mxu0 0.0
    %4936 = vmatpush1.msra.mxu0 0.0
    %4937 = vmatprep.subr.mxu0 0.0
    %4938 = vmatpush1.msra.mxu0 0.0
    %4939 = vmatprep.subr.mxu0 0.0
    %4940 = vmatpush1.msra.mxu0 0.0
    %4941 = vmatprep.subr.mxu0 0.0
    %4942 = vmatpush1.msra.mxu0 0.0
    %4943 = vmatprep.subr.mxu0 0.0
    %4944 = vmatpush1.msra.mxu0 0.0
    %4945 = vmatprep.subr.mxu0 0.0
    %4946 = vmatpush1.msra.mxu0 0.0
    %4947 = vmatprep.subr.mxu0 0.0
    %4948 = vmatpush1.msra.mxu0 0.0
    %4949 = vmatprep.subr.mxu0 0.0
    %4950 = vmatpush1.msra.mxu0 0.0
    %4951 = vmatprep.subr.mxu0 0.0
    %4952 = vmatpush1.msra.mxu0 0.0
    %4953 = vmatprep.subr.mxu0 0.0
    %4954 = vmatpush1.msra.mxu0 0.0
    %4955 = vmatprep.subr.mxu0 0.0
    %4956 = vmatpush1.msra.mxu0 0.0
    %4957 = vmatprep.subr.mxu0 0.0
    %4958 = vmatpush1.msra.mxu0 0.0
    %4959 = vmatprep.subr.mxu0 0.0
    %4960 = vmatpush1.msra.mxu0 0.0
    %4961 = vmatprep.subr.mxu0 0.0
    %4962 = vmatpush1.msra.mxu0 0.0
    %4963 = vmatprep.subr.mxu0 0.0
    %4964 = vmatpush1.msra.mxu0 0.0
    %4965 = vmatprep.subr.mxu0 0.0
    %4966 = vmatpush1.msra.mxu0 0.0
    %4967 = vmatprep.subr.mxu0 0.0
    %4968 = vmatpush1.msra.mxu0 0.0
    %4969 = vmatprep.subr.mxu0 0.0
    %4970 = vmatpush1.msra.mxu0 0.0
    %4971 = vmatprep.subr.mxu0 0.0
    %4972 = vmatpush1.msra.mxu0 0.0
    %4973 = vmatprep.subr.mxu0 0.0
    %4974 = vmatpush1.msra.mxu0 0.0
    %4975 = vmatprep.subr.mxu0 0.0
    %4976 = vmatpush1.msra.mxu0 0.0
    %4977 = vmatprep.subr.mxu0 0.0
    %4978 = vmatpush1.msra.mxu0 0.0
    %4979 = vmatprep.subr.mxu0 0.0
    %4980 = vmatpush1.msra.mxu0 0.0
    %4981 = vmatprep.subr.mxu0 0.0
    %4982 = vmatpush1.msra.mxu0 0.0
    %4983 = vmatprep.subr.mxu0 0.0
    %4984 = vmatpush1.msra.mxu0 0.0
    %4985 = vmatprep.subr.mxu0 0.0
    %4986 = vmatpush1.msra.mxu0 0.0
    %4987 = vmatprep.subr.mxu0 0.0
    %4988 = vmatpush1.msra.mxu0 0.0
    %4989 = vmatprep.subr.mxu0 0.0
    %4990 = vmatpush1.msra.mxu0 0.0
    %4991 = vmatprep.subr.mxu0 0.0
    %4992 = vmatpush1.msra.mxu0 0.0
    %4993 = vmatprep.subr.mxu0 0.0
    %4994 = vmatpush1.msra.mxu0 0.0
    %4995 = vmatprep.mubr.f32.mxu0 0.0
    %4996 = vmatmul.mubr.f32.gmra.mrb[0].mxu0 %v4929
    %v4997 = vpop.f32.mrb[0].mxu0
    %v4998 = vadd.f32 0.0, %v4997
    %v4999 = vpop.f32.mrb[0].mxu0
    %5000 = vdwg.mxu0
    %v5002 = vsel %vm3175, %v3102, 0
    %5004 = vmatprep.subr.mxu0 0.0
    %5005 = vmatpush1.msra.mxu0 %v3151
    %5006 = vmatprep.subr.mxu0 0.0
    %5007 = vmatpush1.msra.mxu0 0.0
    %5008 = vmatprep.subr.mxu0 0.0
    %5009 = vmatpush1.msra.mxu0 0.0
    %5010 = vmatprep.subr.mxu0 0.0
    %5011 = vmatpush1.msra.mxu0 0.0
    %5012 = vmatprep.subr.mxu0 0.0
    %5013 = vmatpush1.msra.mxu0 0.0
    %5014 = vmatprep.subr.mxu0 0.0
    %5015 = vmatpush1.msra.mxu0 0.0
    %5016 = vmatprep.subr.mxu0 0.0
    %5017 = vmatpush1.msra.mxu0 0.0
    %5018 = vmatprep.subr.mxu0 0.0
    %5019 = vmatpush1.msra.mxu0 0.0
    %5020 = vmatprep.subr.mxu0 0.0
    %5021 = vmatpush1.msra.mxu0 0.0
    %5022 = vmatprep.subr.mxu0 0.0
    %5023 = vmatpush1.msra.mxu0 0.0
    %5024 = vmatprep.subr.mxu0 0.0
    %5025 = vmatpush1.msra.mxu0 0.0
    %5026 = vmatprep.subr.mxu0 0.0
    %5027 = vmatpush1.msra.mxu0 0.0
    %5028 = vmatprep.subr.mxu0 0.0
    %5029 = vmatpush1.msra.mxu0 0.0
    %5030 = vmatprep.subr.mxu0 0.0
    %5031 = vmatpush1.msra.mxu0 0.0
    %5032 = vmatprep.subr.mxu0 0.0
    %5033 = vmatpush1.msra.mxu0 0.0
    %5034 = vmatprep.subr.mxu0 0.0
    %5035 = vmatpush1.msra.mxu0 0.0
    %5036 = vmatprep.subr.mxu0 0.0
    %5037 = vmatpush1.msra.mxu0 0.0
    %5038 = vmatprep.subr.mxu0 0.0
    %5039 = vmatpush1.msra.mxu0 0.0
    %5040 = vmatprep.subr.mxu0 0.0
    %5041 = vmatpush1.msra.mxu0 0.0
    %5042 = vmatprep.subr.mxu0 0.0
    %5043 = vmatpush1.msra.mxu0 0.0
    %5044 = vmatprep.subr.mxu0 0.0
    %5045 = vmatpush1.msra.mxu0 0.0
    %5046 = vmatprep.subr.mxu0 0.0
    %5047 = vmatpush1.msra.mxu0 0.0
    %5048 = vmatprep.subr.mxu0 0.0
    %5049 = vmatpush1.msra.mxu0 0.0
    %5050 = vmatprep.subr.mxu0 0.0
    %5051 = vmatpush1.msra.mxu0 0.0
    %5052 = vmatprep.subr.mxu0 0.0
    %5053 = vmatpush1.msra.mxu0 0.0
    %5054 = vmatprep.subr.mxu0 0.0
    %5055 = vmatpush1.msra.mxu0 0.0
    %5056 = vmatprep.subr.mxu0 0.0
    %5057 = vmatpush1.msra.mxu0 0.0
    %5058 = vmatprep.subr.mxu0 0.0
    %5059 = vmatpush1.msra.mxu0 0.0
    %5060 = vmatprep.subr.mxu0 0.0
    %5061 = vmatpush1.msra.mxu0 0.0
    %5062 = vmatprep.subr.mxu0 0.0
    %5063 = vmatpush1.msra.mxu0 0.0
    %5064 = vmatprep.subr.mxu0 0.0
    %5065 = vmatpush1.msra.mxu0 0.0
    %5066 = vmatprep.subr.mxu0 0.0
    %5067 = vmatpush1.msra.mxu0 0.0
    %5068 = vmatprep.mubr.f32.mxu0 0.0
    %5069 = vmatmul.mubr.f32.gmra.mrb[0].mxu0 %v5002
    %v5070 = vpop.f32.mrb[0].mxu0
    %v5071 = vadd.f32 0.0, %v5070
    %v5072 = vpop.f32.mrb[0].mxu0
    %5073 = vdwg.mxu0
    %v5075 = vsel %vm3175, %v3103, 0
    %5077 = vmatprep.subr.mxu0 0.0
    %5078 = vmatpush1.msra.mxu0 %v3152
    %5079 = vmatprep.subr.mxu0 0.0
    %5080 = vmatpush1.msra.mxu0 0.0
    %5081 = vmatprep.subr.mxu0 0.0
    %5082 = vmatpush1.msra.mxu0 0.0
    %5083 = vmatprep.subr.mxu0 0.0
    %5084 = vmatpush1.msra.mxu0 0.0
    %5085 = vmatprep.subr.mxu0 0.0
    %5086 = vmatpush1.msra.mxu0 0.0
    %5087 = vmatprep.subr.mxu0 0.0
    %5088 = vmatpush1.msra.mxu0 0.0
    %5089 = vmatprep.subr.mxu0 0.0
    %5090 = vmatpush1.msra.mxu0 0.0
    %5091 = vmatprep.subr.mxu0 0.0
    %5092 = vmatpush1.msra.mxu0 0.0
    %5093 = vmatprep.subr.mxu0 0.0
    %5094 = vmatpush1.msra.mxu0 0.0
    %5095 = vmatprep.subr.mxu0 0.0
    %5096 = vmatpush1.msra.mxu0 0.0
    %5097 = vmatprep.subr.mxu0 0.0
    %5098 = vmatpush1.msra.mxu0 0.0
    %5099 = vmatprep.subr.mxu0 0.0
    %5100 = vmatpush1.msra.mxu0 0.0
    %5101 = vmatprep.subr.mxu0 0.0
    %5102 = vmatpush1.msra.mxu0 0.0
    %5103 = vmatprep.subr.mxu0 0.0
    %5104 = vmatpush1.msra.mxu0 0.0
    %5105 = vmatprep.subr.mxu0 0.0
    %5106 = vmatpush1.msra.mxu0 0.0
    %5107 = vmatprep.subr.mxu0 0.0
    %5108 = vmatpush1.msra.mxu0 0.0
    %5109 = vmatprep.subr.mxu0 0.0
    %5110 = vmatpush1.msra.mxu0 0.0
    %5111 = vmatprep.subr.mxu0 0.0
    %5112 = vmatpush1.msra.mxu0 0.0
    %5113 = vmatprep.subr.mxu0 0.0
    %5114 = vmatpush1.msra.mxu0 0.0
    %5115 = vmatprep.subr.mxu0 0.0
    %5116 = vmatpush1.msra.mxu0 0.0
    %5117 = vmatprep.subr.mxu0 0.0
    %5118 = vmatpush1.msra.mxu0 0.0
    %5119 = vmatprep.subr.mxu0 0.0
    %5120 = vmatpush1.msra.mxu0 0.0
    %5121 = vmatprep.subr.mxu0 0.0
    %5122 = vmatpush1.msra.mxu0 0.0
    %5123 = vmatprep.subr.mxu0 0.0
    %5124 = vmatpush1.msra.mxu0 0.0
    %5125 = vmatprep.subr.mxu0 0.0
    %5126 = vmatpush1.msra.mxu0 0.0
    %5127 = vmatprep.subr.mxu0 0.0
    %5128 = vmatpush1.msra.mxu0 0.0
    %5129 = vmatprep.subr.mxu0 0.0
    %5130 = vmatpush1.msra.mxu0 0.0
    %5131 = vmatprep.subr.mxu0 0.0
    %5132 = vmatpush1.msra.mxu0 0.0
    %5133 = vmatprep.subr.mxu0 0.0
    %5134 = vmatpush1.msra.mxu0 0.0
    %5135 = vmatprep.subr.mxu0 0.0
    %5136 = vmatpush1.msra.mxu0 0.0
    %5137 = vmatprep.subr.mxu0 0.0
    %5138 = vmatpush1.msra.mxu0 0.0
    %5139 = vmatprep.subr.mxu0 0.0
    %5140 = vmatpush1.msra.mxu0 0.0
    %5141 = vmatprep.mubr.f32.mxu0 0.0
    %5142 = vmatmul.mubr.f32.gmra.mrb[0].mxu0 %v5075
    %v5143 = vpop.f32.mrb[0].mxu0
    %v5144 = vadd.f32 0.0, %v5143
    %v5145 = vpop.f32.mrb[0].mxu0
    %5146 = vdwg.mxu0
    %v5148 = vsel %vm3175, %v3104, 0
    %5150 = vmatprep.subr.mxu0 0.0
    %5151 = vmatpush1.msra.mxu0 %v3153
    %5152 = vmatprep.subr.mxu0 0.0
    %5153 = vmatpush1.msra.mxu0 0.0
    %5154 = vmatprep.subr.mxu0 0.0
    %5155 = vmatpush1.msra.mxu0 0.0
    %5156 = vmatprep.subr.mxu0 0.0
    %5157 = vmatpush1.msra.mxu0 0.0
    %5158 = vmatprep.subr.mxu0 0.0
    %5159 = vmatpush1.msra.mxu0 0.0
    %5160 = vmatprep.subr.mxu0 0.0
    %5161 = vmatpush1.msra.mxu0 0.0
    %5162 = vmatprep.subr.mxu0 0.0
    %5163 = vmatpush1.msra.mxu0 0.0
    %5164 = vmatprep.subr.mxu0 0.0
    %5165 = vmatpush1.msra.mxu0 0.0
    %5166 = vmatprep.subr.mxu0 0.0
    %5167 = vmatpush1.msra.mxu0 0.0
    %5168 = vmatprep.subr.mxu0 0.0
    %5169 = vmatpush1.msra.mxu0 0.0
    %5170 = vmatprep.subr.mxu0 0.0
    %5171 = vmatpush1.msra.mxu0 0.0
    %5172 = vmatprep.subr.mxu0 0.0
    %5173 = vmatpush1.msra.mxu0 0.0
    %5174 = vmatprep.subr.mxu0 0.0
    %5175 = vmatpush1.msra.mxu0 0.0
    %5176 = vmatprep.subr.mxu0 0.0
    %5177 = vmatpush1.msra.mxu0 0.0
    %5178 = vmatprep.subr.mxu0 0.0
    %5179 = vmatpush1.msra.mxu0 0.0
    %5180 = vmatprep.subr.mxu0 0.0
    %5181 = vmatpush1.msra.mxu0 0.0
    %5182 = vmatprep.subr.mxu0 0.0
    %5183 = vmatpush1.msra.mxu0 0.0
    %5184 = vmatprep.subr.mxu0 0.0
    %5185 = vmatpush1.msra.mxu0 0.0
    %5186 = vmatprep.subr.mxu0 0.0
    %5187 = vmatpush1.msra.mxu0 0.0
    %5188 = vmatprep.subr.mxu0 0.0
    %5189 = vmatpush1.msra.mxu0 0.0
    %5190 = vmatprep.subr.mxu0 0.0
    %5191 = vmatpush1.msra.mxu0 0.0
    %5192 = vmatprep.subr.mxu0 0.0
    %5193 = vmatpush1.msra.mxu0 0.0
    %5194 = vmatprep.subr.mxu0 0.0
    %5195 = vmatpush1.msra.mxu0 0.0
    %5196 = vmatprep.subr.mxu0 0.0
    %5197 = vmatpush1.msra.mxu0 0.0
    %5198 = vmatprep.subr.mxu0 0.0
    %5199 = vmatpush1.msra.mxu0 0.0
    %5200 = vmatprep.subr.mxu0 0.0
    %5201 = vmatpush1.msra.mxu0 0.0
    %5202 = vmatprep.subr.mxu0 0.0
    %5203 = vmatpush1.msra.mxu0 0.0
    %5204 = vmatprep.subr.mxu0 0.0
    %5205 = vmatpush1.msra.mxu0 0.0
    %5206 = vmatprep.subr.mxu0 0.0
    %5207 = vmatpush1.msra.mxu0 0.0
    %5208 = vmatprep.subr.mxu0 0.0
    %5209 = vmatpush1.msra.mxu0 0.0
    %5210 = vmatprep.subr.mxu0 0.0
    %5211 = vmatpush1.msra.mxu0 0.0
    %5212 = vmatprep.subr.mxu0 0.0
    %5213 = vmatpush1.msra.mxu0 0.0
    %5214 = vmatprep.mubr.f32.mxu0 0.0
    %5215 = vmatmul.mubr.f32.gmra.mrb[0].mxu0 %v5148
    %v5216 = vpop.f32.mrb[0].mxu0
    %v5217 = vadd.f32 0.0, %v5216
    %v5218 = vpop.f32.mrb[0].mxu0
    %5219 = vdwg.mxu0
    %v5221 = vsel %vm3175, %v3105, 0
    %5223 = vmatprep.subr.mxu0 0.0
    %5224 = vmatpush1.msra.mxu0 %v3154
    %5225 = vmatprep.subr.mxu0 0.0
    %5226 = vmatpush1.msra.mxu0 0.0
    %5227 = vmatprep.subr.mxu0 0.0
    %5228 = vmatpush1.msra.mxu0 0.0
    %5229 = vmatprep.subr.mxu0 0.0
    %5230 = vmatpush1.msra.mxu0 0.0
    %5231 = vmatprep.subr.mxu0 0.0
    %5232 = vmatpush1.msra.mxu0 0.0
    %5233 = vmatprep.subr.mxu0 0.0
    %5234 = vmatpush1.msra.mxu0 0.0
    %5235 = vmatprep.subr.mxu0 0.0
    %5236 = vmatpush1.msra.mxu0 0.0
    %5237 = vmatprep.subr.mxu0 0.0
    %5238 = vmatpush1.msra.mxu0 0.0
    %5239 = vmatprep.subr.mxu0 0.0
    %5240 = vmatpush1.msra.mxu0 0.0
    %5241 = vmatprep.subr.mxu0 0.0
    %5242 = vmatpush1.msra.mxu0 0.0
    %5243 = vmatprep.subr.mxu0 0.0
    %5244 = vmatpush1.msra.mxu0 0.0
    %5245 = vmatprep.subr.mxu0 0.0
    %5246 = vmatpush1.msra.mxu0 0.0
    %5247 = vmatprep.subr.mxu0 0.0
    %5248 = vmatpush1.msra.mxu0 0.0
    %5249 = vmatprep.subr.mxu0 0.0
    %5250 = vmatpush1.msra.mxu0 0.0
    %5251 = vmatprep.subr.mxu0 0.0
    %5252 = vmatpush1.msra.mxu0 0.0
    %5253 = vmatprep.subr.mxu0 0.0
    %5254 = vmatpush1.msra.mxu0 0.0
    %5255 = vmatprep.subr.mxu0 0.0
    %5256 = vmatpush1.msra.mxu0 0.0
    %5257 = vmatprep.subr.mxu0 0.0
    %5258 = vmatpush1.msra.mxu0 0.0
    %5259 = vmatprep.subr.mxu0 0.0
    %5260 = vmatpush1.msra.mxu0 0.0
    %5261 = vmatprep.subr.mxu0 0.0
    %5262 = vmatpush1.msra.mxu0 0.0
    %5263 = vmatprep.subr.mxu0 0.0
    %5264 = vmatpush1.msra.mxu0 0.0
    %5265 = vmatprep.subr.mxu0 0.0
    %5266 = vmatpush1.msra.mxu0 0.0
    %5267 = vmatprep.subr.mxu0 0.0
    %5268 = vmatpush1.msra.mxu0 0.0
    %5269 = vmatprep.subr.mxu0 0.0
    %5270 = vmatpush1.msra.mxu0 0.0
    %5271 = vmatprep.subr.mxu0 0.0
    %5272 = vmatpush1.msra.mxu0 0.0
    %5273 = vmatprep.subr.mxu0 0.0
    %5274 = vmatpush1.msra.mxu0 0.0
    %5275 = vmatprep.subr.mxu0 0.0
    %5276 = vmatpush1.msra.mxu0 0.0
    %5277 = vmatprep.subr.mxu0 0.0
    %5278 = vmatpush1.msra.mxu0 0.0
    %5279 = vmatprep.subr.mxu0 0.0
    %5280 = vmatpush1.msra.mxu0 0.0
    %5281 = vmatprep.subr.mxu0 0.0
    %5282 = vmatpush1.msra.mxu0 0.0
    %5283 = vmatprep.subr.mxu0 0.0
    %5284 = vmatpush1.msra.mxu0 0.0
    %5285 = vmatprep.subr.mxu0 0.0
    %5286 = vmatpush1.msra.mxu0 0.0
    %5287 = vmatprep.mubr.f32.mxu0 0.0
    %5288 = vmatmul.mubr.f32.gmra.mrb[0].mxu0 %v5221
    %v5289 = vpop.f32.mrb[0].mxu0
    %v5290 = vadd.f32 0.0, %v5289
    %v5291 = vpop.f32.mrb[0].mxu0
    %5292 = vdwg.mxu0
    %v5294 = vsel %vm3175, %v3106, 0
    %5296 = vmatprep.subr.mxu0 0.0
    %5297 = vmatpush1.msra.mxu0 %v3155
    %5298 = vmatprep.subr.mxu0 0.0
    %5299 = vmatpush1.msra.mxu0 0.0
    %5300 = vmatprep.subr.mxu0 0.0
    %5301 = vmatpush1.msra.mxu0 0.0
    %5302 = vmatprep.subr.mxu0 0.0
    %5303 = vmatpush1.msra.mxu0 0.0
    %5304 = vmatprep.subr.mxu0 0.0
    %5305 = vmatpush1.msra.mxu0 0.0
    %5306 = vmatprep.subr.mxu0 0.0
    %5307 = vmatpush1.msra.mxu0 0.0
    %5308 = vmatprep.subr.mxu0 0.0
    %5309 = vmatpush1.msra.mxu0 0.0
    %5310 = vmatprep.subr.mxu0 0.0
    %5311 = vmatpush1.msra.mxu0 0.0
    %5312 = vmatprep.subr.mxu0 0.0
    %5313 = vmatpush1.msra.mxu0 0.0
    %5314 = vmatprep.subr.mxu0 0.0
    %5315 = vmatpush1.msra.mxu0 0.0
    %5316 = vmatprep.subr.mxu0 0.0
    %5317 = vmatpush1.msra.mxu0 0.0
    %5318 = vmatprep.subr.mxu0 0.0
    %5319 = vmatpush1.msra.mxu0 0.0
    %5320 = vmatprep.subr.mxu0 0.0
    %5321 = vmatpush1.msra.mxu0 0.0
    %5322 = vmatprep.subr.mxu0 0.0
    %5323 = vmatpush1.msra.mxu0 0.0
    %5324 = vmatprep.subr.mxu0 0.0
    %5325 = vmatpush1.msra.mxu0 0.0
    %5326 = vmatprep.subr.mxu0 0.0
    %5327 = vmatpush1.msra.mxu0 0.0
    %5328 = vmatprep.subr.mxu0 0.0
    %5329 = vmatpush1.msra.mxu0 0.0
    %5330 = vmatprep.subr.mxu0 0.0
    %5331 = vmatpush1.msra.mxu0 0.0
    %5332 = vmatprep.subr.mxu0 0.0
    %5333 = vmatpush1.msra.mxu0 0.0
    %5334 = vmatprep.subr.mxu0 0.0
    %5335 = vmatpush1.msra.mxu0 0.0
    %5336 = vmatprep.subr.mxu0 0.0
    %5337 = vmatpush1.msra.mxu0 0.0
    %5338 = vmatprep.subr.mxu0 0.0
    %5339 = vmatpush1.msra.mxu0 0.0
    %5340 = vmatprep.subr.mxu0 0.0
    %5341 = vmatpush1.msra.mxu0 0.0
    %5342 = vmatprep.subr.mxu0 0.0
    %5343 = vmatpush1.msra.mxu0 0.0
    %5344 = vmatprep.subr.mxu0 0.0
    %5345 = vmatpush1.msra.mxu0 0.0
    %5346 = vmatprep.subr.mxu0 0.0
    %5347 = vmatpush1.msra.mxu0 0.0
    %5348 = vmatprep.subr.mxu0 0.0
    %5349 = vmatpush1.msra.mxu0 0.0
    %5350 = vmatprep.subr.mxu0 0.0
    %5351 = vmatpush1.msra.mxu0 0.0
    %5352 = vmatprep.subr.mxu0 0.0
    %5353 = vmatpush1.msra.mxu0 0.0
    %5354 = vmatprep.subr.mxu0 0.0
    %5355 = vmatpush1.msra.mxu0 0.0
    %5356 = vmatprep.subr.mxu0 0.0
    %5357 = vmatpush1.msra.mxu0 0.0
    %5358 = vmatprep.subr.mxu0 0.0
    %5359 = vmatpush1.msra.mxu0 0.0
    %5360 = vmatprep.mubr.f32.mxu0 0.0
    %5361 = vmatmul.mubr.f32.gmra.mrb[0].mxu0 %v5294
    %v5362 = vpop.f32.mrb[0].mxu0
    %v5363 = vadd.f32 0.0, %v5362
    %v5364 = vpop.f32.mrb[0].mxu0
    %5365 = vdwg.mxu0
    %v5367 = vsel %vm3175, %v3107, 0
    %5369 = vmatprep.subr.mxu0 0.0
    %5370 = vmatpush1.msra.mxu0 %v3156
    %5371 = vmatprep.subr.mxu0 0.0
    %5372 = vmatpush1.msra.mxu0 0.0
    %5373 = vmatprep.subr.mxu0 0.0
    %5374 = vmatpush1.msra.mxu0 0.0
    %5375 = vmatprep.subr.mxu0 0.0
    %5376 = vmatpush1.msra.mxu0 0.0
    %5377 = vmatprep.subr.mxu0 0.0
    %5378 = vmatpush1.msra.mxu0 0.0
    %5379 = vmatprep.subr.mxu0 0.0
    %5380 = vmatpush1.msra.mxu0 0.0
    %5381 = vmatprep.subr.mxu0 0.0
    %5382 = vmatpush1.msra.mxu0 0.0
    %5383 = vmatprep.subr.mxu0 0.0
    %5384 = vmatpush1.msra.mxu0 0.0
    %5385 = vmatprep.subr.mxu0 0.0
    %5386 = vmatpush1.msra.mxu0 0.0
    %5387 = vmatprep.subr.mxu0 0.0
    %5388 = vmatpush1.msra.mxu0 0.0
    %5389 = vmatprep.subr.mxu0 0.0
    %5390 = vmatpush1.msra.mxu0 0.0
    %5391 = vmatprep.subr.mxu0 0.0
    %5392 = vmatpush1.msra.mxu0 0.0
    %5393 = vmatprep.subr.mxu0 0.0
    %5394 = vmatpush1.msra.mxu0 0.0
    %5395 = vmatprep.subr.mxu0 0.0
    %5396 = vmatpush1.msra.mxu0 0.0
    %5397 = vmatprep.subr.mxu0 0.0
    %5398 = vmatpush1.msra.mxu0 0.0
    %5399 = vmatprep.subr.mxu0 0.0
    %5400 = vmatpush1.msra.mxu0 0.0
    %5401 = vmatprep.subr.mxu0 0.0
    %5402 = vmatpush1.msra.mxu0 0.0
    %5403 = vmatprep.subr.mxu0 0.0
    %5404 = vmatpush1.msra.mxu0 0.0
    %5405 = vmatprep.subr.mxu0 0.0
    %5406 = vmatpush1.msra.mxu0 0.0
    %5407 = vmatprep.subr.mxu0 0.0
    %5408 = vmatpush1.msra.mxu0 0.0
    %5409 = vmatprep.subr.mxu0 0.0
    %5410 = vmatpush1.msra.mxu0 0.0
    %5411 = vmatprep.subr.mxu0 0.0
    %5412 = vmatpush1.msra.mxu0 0.0
    %5413 = vmatprep.subr.mxu0 0.0
    %5414 = vmatpush1.msra.mxu0 0.0
    %5415 = vmatprep.subr.mxu0 0.0
    %5416 = vmatpush1.msra.mxu0 0.0
    %5417 = vmatprep.subr.mxu0 0.0
    %5418 = vmatpush1.msra.mxu0 0.0
    %5419 = vmatprep.subr.mxu0 0.0
    %5420 = vmatpush1.msra.mxu0 0.0
    %5421 = vmatprep.subr.mxu0 0.0
    %5422 = vmatpush1.msra.mxu0 0.0
    %5423 = vmatprep.subr.mxu0 0.0
    %5424 = vmatpush1.msra.mxu0 0.0
    %5425 = vmatprep.subr.mxu0 0.0
    %5426 = vmatpush1.msra.mxu0 0.0
    %5427 = vmatprep.subr.mxu0 0.0
    %5428 = vmatpush1.msra.mxu0 0.0
    %5429 = vmatprep.subr.mxu0 0.0
    %5430 = vmatpush1.msra.mxu0 0.0
    %5431 = vmatprep.subr.mxu0 0.0
    %5432 = vmatpush1.msra.mxu0 0.0
    %5433 = vmatprep.mubr.f32.mxu0 0.0
    %5434 = vmatmul.mubr.f32.gmra.mrb[0].mxu0 %v5367
    %v5435 = vpop.f32.mrb[0].mxu0
    %v5436 = vadd.f32 0.0, %v5435
    %v5437 = vpop.f32.mrb[0].mxu0
    %5438 = vdwg.mxu0
    %v5440 = vsel %vm3175, %v3108, 0
    %5442 = vmatprep.subr.mxu0 0.0
    %5443 = vmatpush1.msra.mxu0 %v3157
    %5444 = vmatprep.subr.mxu0 0.0
    %5445 = vmatpush1.msra.mxu0 0.0
    %5446 = vmatprep.subr.mxu0 0.0
    %5447 = vmatpush1.msra.mxu0 0.0
    %5448 = vmatprep.subr.mxu0 0.0
    %5449 = vmatpush1.msra.mxu0 0.0
    %5450 = vmatprep.subr.mxu0 0.0
    %5451 = vmatpush1.msra.mxu0 0.0
    %5452 = vmatprep.subr.mxu0 0.0
    %5453 = vmatpush1.msra.mxu0 0.0
    %5454 = vmatprep.subr.mxu0 0.0
    %5455 = vmatpush1.msra.mxu0 0.0
    %5456 = vmatprep.subr.mxu0 0.0
    %5457 = vmatpush1.msra.mxu0 0.0
    %5458 = vmatprep.subr.mxu0 0.0
    %5459 = vmatpush1.msra.mxu0 0.0
    %5460 = vmatprep.subr.mxu0 0.0
    %5461 = vmatpush1.msra.mxu0 0.0
    %5462 = vmatprep.subr.mxu0 0.0
    %5463 = vmatpush1.msra.mxu0 0.0
    %5464 = vmatprep.subr.mxu0 0.0
    %5465 = vmatpush1.msra.mxu0 0.0
    %5466 = vmatprep.subr.mxu0 0.0
    %5467 = vmatpush1.msra.mxu0 0.0
    %5468 = vmatprep.subr.mxu0 0.0
    %5469 = vmatpush1.msra.mxu0 0.0
    %5470 = vmatprep.subr.mxu0 0.0
    %5471 = vmatpush1.msra.mxu0 0.0
    %5472 = vmatprep.subr.mxu0 0.0
    %5473 = vmatpush1.msra.mxu0 0.0
    %5474 = vmatprep.subr.mxu0 0.0
    %5475 = vmatpush1.msra.mxu0 0.0
    %5476 = vmatprep.subr.mxu0 0.0
    %5477 = vmatpush1.msra.mxu0 0.0
    %5478 = vmatprep.subr.mxu0 0.0
    %5479 = vmatpush1.msra.mxu0 0.0
    %5480 = vmatprep.subr.mxu0 0.0
    %5481 = vmatpush1.msra.mxu0 0.0
    %5482 = vmatprep.subr.mxu0 0.0
    %5483 = vmatpush1.msra.mxu0 0.0
    %5484 = vmatprep.subr.mxu0 0.0
    %5485 = vmatpush1.msra.mxu0 0.0
    %5486 = vmatprep.subr.mxu0 0.0
    %5487 = vmatpush1.msra.mxu0 0.0
    %5488 = vmatprep.subr.mxu0 0.0
    %5489 = vmatpush1.msra.mxu0 0.0
    %5490 = vmatprep.subr.mxu0 0.0
    %5491 = vmatpush1.msra.mxu0 0.0
    %5492 = vmatprep.subr.mxu0 0.0
    %5493 = vmatpush1.msra.mxu0 0.0
    %5494 = vmatprep.subr.mxu0 0.0
    %5495 = vmatpush1.msra.mxu0 0.0
    %5496 = vmatprep.subr.mxu0 0.0
    %5497 = vmatpush1.msra.mxu0 0.0
    %5498 = vmatprep.subr.mxu0 0.0
    %5499 = vmatpush1.msra.mxu0 0.0
    %5500 = vmatprep.subr.mxu0 0.0
    %5501 = vmatpush1.msra.mxu0 0.0
    %5502 = vmatprep.subr.mxu0 0.0
    %5503 = vmatpush1.msra.mxu0 0.0
    %5504 = vmatprep.subr.mxu0 0.0
    %5505 = vmatpush1.msra.mxu0 0.0
    %5506 = vmatprep.mubr.f32.mxu0 0.0
    %5507 = vmatmul.mubr.f32.gmra.mrb[0].mxu0 %v5440
    %v5508 = vpop.f32.mrb[0].mxu0
    %v5509 = vadd.f32 0.0, %v5508
    %v5510 = vpop.f32.mrb[0].mxu0
    %5511 = vdwg.mxu0
    %v5513 = vsel %vm3175, %v3109, 0
    %5515 = vmatprep.subr.mxu0 0.0
    %5516 = vmatpush1.msra.mxu0 %v3158
    %5517 = vmatprep.subr.mxu0 0.0
    %5518 = vmatpush1.msra.mxu0 0.0
    %5519 = vmatprep.subr.mxu0 0.0
    %5520 = vmatpush1.msra.mxu0 0.0
    %5521 = vmatprep.subr.mxu0 0.0
    %5522 = vmatpush1.msra.mxu0 0.0
    %5523 = vmatprep.subr.mxu0 0.0
    %5524 = vmatpush1.msra.mxu0 0.0
    %5525 = vmatprep.subr.mxu0 0.0
    %5526 = vmatpush1.msra.mxu0 0.0
    %5527 = vmatprep.subr.mxu0 0.0
    %5528 = vmatpush1.msra.mxu0 0.0
    %5529 = vmatprep.subr.mxu0 0.0
    %5530 = vmatpush1.msra.mxu0 0.0
    %5531 = vmatprep.subr.mxu0 0.0
    %5532 = vmatpush1.msra.mxu0 0.0
    %5533 = vmatprep.subr.mxu0 0.0
    %5534 = vmatpush1.msra.mxu0 0.0
    %5535 = vmatprep.subr.mxu0 0.0
    %5536 = vmatpush1.msra.mxu0 0.0
    %5537 = vmatprep.subr.mxu0 0.0
    %5538 = vmatpush1.msra.mxu0 0.0
    %5539 = vmatprep.subr.mxu0 0.0
    %5540 = vmatpush1.msra.mxu0 0.0
    %5541 = vmatprep.subr.mxu0 0.0
    %5542 = vmatpush1.msra.mxu0 0.0
    %5543 = vmatprep.subr.mxu0 0.0
    %5544 = vmatpush1.msra.mxu0 0.0
    %5545 = vmatprep.subr.mxu0 0.0
    %5546 = vmatpush1.msra.mxu0 0.0
    %5547 = vmatprep.subr.mxu0 0.0
    %5548 = vmatpush1.msra.mxu0 0.0
    %5549 = vmatprep.subr.mxu0 0.0
    %5550 = vmatpush1.msra.mxu0 0.0
    %5551 = vmatprep.subr.mxu0 0.0
    %5552 = vmatpush1.msra.mxu0 0.0
    %5553 = vmatprep.subr.mxu0 0.0
    %5554 = vmatpush1.msra.mxu0 0.0
    %5555 = vmatprep.subr.mxu0 0.0
    %5556 = vmatpush1.msra.mxu0 0.0
    %5557 = vmatprep.subr.mxu0 0.0
    %5558 = vmatpush1.msra.mxu0 0.0
    %5559 = vmatprep.subr.mxu0 0.0
    %5560 = vmatpush1.msra.mxu0 0.0
    %5561 = vmatprep.subr.mxu0 0.0
    %5562 = vmatpush1.msra.mxu0 0.0
    %5563 = vmatprep.subr.mxu0 0.0
    %5564 = vmatpush1.msra.mxu0 0.0
    %5565 = vmatprep.subr.mxu0 0.0
    %5566 = vmatpush1.msra.mxu0 0.0
    %5567 = vmatprep.subr.mxu0 0.0
    %5568 = vmatpush1.msra.mxu0 0.0
    %5569 = vmatprep.subr.mxu0 0.0
    %5570 = vmatpush1.msra.mxu0 0.0
    %5571 = vmatprep.subr.mxu0 0.0
    %5572 = vmatpush1.msra.mxu0 0.0
    %5573 = vmatprep.subr.mxu0 0.0
    %5574 = vmatpush1.msra.mxu0 0.0
    %5575 = vmatprep.subr.mxu0 0.0
    %5576 = vmatpush1.msra.mxu0 0.0
    %5577 = vmatprep.subr.mxu0 0.0
    %5578 = vmatpush1.msra.mxu0 0.0
    %5579 = vmatprep.mubr.f32.mxu0 0.0
    %5580 = vmatmul.mubr.f32.gmra.mrb[0].mxu0 %v5513
    %v5581 = vpop.f32.mrb[0].mxu0
    %v5582 = vadd.f32 0.0, %v5581
    %v5583 = vpop.f32.mrb[0].mxu0
    %5584 = vdwg.mxu0
    %v5586 = vsel %vm3175, %v3110, 0
    %5588 = vmatprep.subr.mxu0 0.0
    %5589 = vmatpush1.msra.mxu0 %v3159
    %5590 = vmatprep.subr.mxu0 0.0
    %5591 = vmatpush1.msra.mxu0 0.0
    %5592 = vmatprep.subr.mxu0 0.0
    %5593 = vmatpush1.msra.mxu0 0.0
    %5594 = vmatprep.subr.mxu0 0.0
    %5595 = vmatpush1.msra.mxu0 0.0
    %5596 = vmatprep.subr.mxu0 0.0
    %5597 = vmatpush1.msra.mxu0 0.0
    %5598 = vmatprep.subr.mxu0 0.0
    %5599 = vmatpush1.msra.mxu0 0.0
    %5600 = vmatprep.subr.mxu0 0.0
    %5601 = vmatpush1.msra.mxu0 0.0
    %5602 = vmatprep.subr.mxu0 0.0
    %5603 = vmatpush1.msra.mxu0 0.0
    %5604 = vmatprep.subr.mxu0 0.0
    %5605 = vmatpush1.msra.mxu0 0.0
    %5606 = vmatprep.subr.mxu0 0.0
    %5607 = vmatpush1.msra.mxu0 0.0
    %5608 = vmatprep.subr.mxu0 0.0
    %5609 = vmatpush1.msra.mxu0 0.0
    %5610 = vmatprep.subr.mxu0 0.0
    %5611 = vmatpush1.msra.mxu0 0.0
    %5612 = vmatprep.subr.mxu0 0.0
    %5613 = vmatpush1.msra.mxu0 0.0
    %5614 = vmatprep.subr.mxu0 0.0
    %5615 = vmatpush1.msra.mxu0 0.0
    %5616 = vmatprep.subr.mxu0 0.0
    %5617 = vmatpush1.msra.mxu0 0.0
    %5618 = vmatprep.subr.mxu0 0.0
    %5619 = vmatpush1.msra.mxu0 0.0
    %5620 = vmatprep.subr.mxu0 0.0
    %5621 = vmatpush1.msra.mxu0 0.0
    %5622 = vmatprep.subr.mxu0 0.0
    %5623 = vmatpush1.msra.mxu0 0.0
    %5624 = vmatprep.subr.mxu0 0.0
    %5625 = vmatpush1.msra.mxu0 0.0
    %5626 = vmatprep.subr.mxu0 0.0
    %5627 = vmatpush1.msra.mxu0 0.0
    %5628 = vmatprep.subr.mxu0 0.0
    %5629 = vmatpush1.msra.mxu0 0.0
    %5630 = vmatprep.subr.mxu0 0.0
    %5631 = vmatpush1.msra.mxu0 0.0
    %5632 = vmatprep.subr.mxu0 0.0
    %5633 = vmatpush1.msra.mxu0 0.0
    %5634 = vmatprep.subr.mxu0 0.0
    %5635 = vmatpush1.msra.mxu0 0.0
    %5636 = vmatprep.subr.mxu0 0.0
    %5637 = vmatpush1.msra.mxu0 0.0
    %5638 = vmatprep.subr.mxu0 0.0
    %5639 = vmatpush1.msra.mxu0 0.0
    %5640 = vmatprep.subr.mxu0 0.0
    %5641 = vmatpush1.msra.mxu0 0.0
    %5642 = vmatprep.subr.mxu0 0.0
    %5643 = vmatpush1.msra.mxu0 0.0
    %5644 = vmatprep.subr.mxu0 0.0
    %5645 = vmatpush1.msra.mxu0 0.0
    %5646 = vmatprep.subr.mxu0 0.0
    %5647 = vmatpush1.msra.mxu0 0.0
    %5648 = vmatprep.subr.mxu0 0.0
    %5649 = vmatpush1.msra.mxu0 0.0
    %5650 = vmatprep.subr.mxu0 0.0
    %5651 = vmatpush1.msra.mxu0 0.0
    %5652 = vmatprep.mubr.f32.mxu0 0.0
    %5653 = vmatmul.mubr.f32.gmra.mrb[0].mxu0 %v5586
    %v5654 = vpop.f32.mrb[0].mxu0
    %v5655 = vadd.f32 0.0, %v5654
    %v5656 = vpop.f32.mrb[0].mxu0
    %5657 = vdwg.mxu0
    %v5659 = vsel %vm3175, %v3111, 0
    %5661 = vmatprep.subr.mxu0 0.0
    %5662 = vmatpush1.msra.mxu0 %v3160
    %5663 = vmatprep.subr.mxu0 0.0
    %5664 = vmatpush1.msra.mxu0 0.0
    %5665 = vmatprep.subr.mxu0 0.0
    %5666 = vmatpush1.msra.mxu0 0.0
    %5667 = vmatprep.subr.mxu0 0.0
    %5668 = vmatpush1.msra.mxu0 0.0
    %5669 = vmatprep.subr.mxu0 0.0
    %5670 = vmatpush1.msra.mxu0 0.0
    %5671 = vmatprep.subr.mxu0 0.0
    %5672 = vmatpush1.msra.mxu0 0.0
    %5673 = vmatprep.subr.mxu0 0.0
    %5674 = vmatpush1.msra.mxu0 0.0
    %5675 = vmatprep.subr.mxu0 0.0
    %5676 = vmatpush1.msra.mxu0 0.0
    %5677 = vmatprep.subr.mxu0 0.0
    %5678 = vmatpush1.msra.mxu0 0.0
    %5679 = vmatprep.subr.mxu0 0.0
    %5680 = vmatpush1.msra.mxu0 0.0
    %5681 = vmatprep.subr.mxu0 0.0
    %5682 = vmatpush1.msra.mxu0 0.0
    %5683 = vmatprep.subr.mxu0 0.0
    %5684 = vmatpush1.msra.mxu0 0.0
    %5685 = vmatprep.subr.mxu0 0.0
    %5686 = vmatpush1.msra.mxu0 0.0
    %5687 = vmatprep.subr.mxu0 0.0
    %5688 = vmatpush1.msra.mxu0 0.0
    %5689 = vmatprep.subr.mxu0 0.0
    %5690 = vmatpush1.msra.mxu0 0.0
    %5691 = vmatprep.subr.mxu0 0.0
    %5692 = vmatpush1.msra.mxu0 0.0
    %5693 = vmatprep.subr.mxu0 0.0
    %5694 = vmatpush1.msra.mxu0 0.0
    %5695 = vmatprep.subr.mxu0 0.0
    %5696 = vmatpush1.msra.mxu0 0.0
    %5697 = vmatprep.subr.mxu0 0.0
    %5698 = vmatpush1.msra.mxu0 0.0
    %5699 = vmatprep.subr.mxu0 0.0
    %5700 = vmatpush1.msra.mxu0 0.0
    %5701 = vmatprep.subr.mxu0 0.0
    %5702 = vmatpush1.msra.mxu0 0.0
    %5703 = vmatprep.subr.mxu0 0.0
    %5704 = vmatpush1.msra.mxu0 0.0
    %5705 = vmatprep.subr.mxu0 0.0
    %5706 = vmatpush1.msra.mxu0 0.0
    %5707 = vmatprep.subr.mxu0 0.0
    %5708 = vmatpush1.msra.mxu0 0.0
    %5709 = vmatprep.subr.mxu0 0.0
    %5710 = vmatpush1.msra.mxu0 0.0
    %5711 = vmatprep.subr.mxu0 0.0
    %5712 = vmatpush1.msra.mxu0 0.0
    %5713 = vmatprep.subr.mxu0 0.0
    %5714 = vmatpush1.msra.mxu0 0.0
    %5715 = vmatprep.subr.mxu0 0.0
    %5716 = vmatpush1.msra.mxu0 0.0
    %5717 = vmatprep.subr.mxu0 0.0
    %5718 = vmatpush1.msra.mxu0 0.0
    %5719 = vmatprep.subr.mxu0 0.0
    %5720 = vmatpush1.msra.mxu0 0.0
    %5721 = vmatprep.subr.mxu0 0.0
    %5722 = vmatpush1.msra.mxu0 0.0
    %5723 = vmatprep.subr.mxu0 0.0
    %5724 = vmatpush1.msra.mxu0 0.0
    %5725 = vmatprep.mubr.f32.mxu0 0.0
    %5726 = vmatmul.mubr.f32.gmra.mrb[0].mxu0 %v5659
    %v5727 = vpop.f32.mrb[0].mxu0
    %v5728 = vadd.f32 0.0, %v5727
    %v5729 = vpop.f32.mrb[0].mxu0
    %5730 = vdwg.mxu0
    %v5732 = vsel %vm3175, %v3112, 0
    %5734 = vmatprep.subr.mxu0 0.0
    %5735 = vmatpush1.msra.mxu0 %v3161
    %5736 = vmatprep.subr.mxu0 0.0
    %5737 = vmatpush1.msra.mxu0 0.0
    %5738 = vmatprep.subr.mxu0 0.0
    %5739 = vmatpush1.msra.mxu0 0.0
    %5740 = vmatprep.subr.mxu0 0.0
    %5741 = vmatpush1.msra.mxu0 0.0
    %5742 = vmatprep.subr.mxu0 0.0
    %5743 = vmatpush1.msra.mxu0 0.0
    %5744 = vmatprep.subr.mxu0 0.0
    %5745 = vmatpush1.msra.mxu0 0.0
    %5746 = vmatprep.subr.mxu0 0.0
    %5747 = vmatpush1.msra.mxu0 0.0
    %5748 = vmatprep.subr.mxu0 0.0
    %5749 = vmatpush1.msra.mxu0 0.0
    %5750 = vmatprep.subr.mxu0 0.0
    %5751 = vmatpush1.msra.mxu0 0.0
    %5752 = vmatprep.subr.mxu0 0.0
    %5753 = vmatpush1.msra.mxu0 0.0
    %5754 = vmatprep.subr.mxu0 0.0
    %5755 = vmatpush1.msra.mxu0 0.0
    %5756 = vmatprep.subr.mxu0 0.0
    %5757 = vmatpush1.msra.mxu0 0.0
    %5758 = vmatprep.subr.mxu0 0.0
    %5759 = vmatpush1.msra.mxu0 0.0
    %5760 = vmatprep.subr.mxu0 0.0
    %5761 = vmatpush1.msra.mxu0 0.0
    %5762 = vmatprep.subr.mxu0 0.0
    %5763 = vmatpush1.msra.mxu0 0.0
    %5764 = vmatprep.subr.mxu0 0.0
    %5765 = vmatpush1.msra.mxu0 0.0
    %5766 = vmatprep.subr.mxu0 0.0
    %5767 = vmatpush1.msra.mxu0 0.0
    %5768 = vmatprep.subr.mxu0 0.0
    %5769 = vmatpush1.msra.mxu0 0.0
    %5770 = vmatprep.subr.mxu0 0.0
    %5771 = vmatpush1.msra.mxu0 0.0
    %5772 = vmatprep.subr.mxu0 0.0
    %5773 = vmatpush1.msra.mxu0 0.0
    %5774 = vmatprep.subr.mxu0 0.0
    %5775 = vmatpush1.msra.mxu0 0.0
    %5776 = vmatprep.subr.mxu0 0.0
    %5777 = vmatpush1.msra.mxu0 0.0
    %5778 = vmatprep.subr.mxu0 0.0
    %5779 = vmatpush1.msra.mxu0 0.0
    %5780 = vmatprep.subr.mxu0 0.0
    %5781 = vmatpush1.msra.mxu0 0.0
    %5782 = vmatprep.subr.mxu0 0.0
    %5783 = vmatpush1.msra.mxu0 0.0
    %5784 = vmatprep.subr.mxu0 0.0
    %5785 = vmatpush1.msra.mxu0 0.0
    %5786 = vmatprep.subr.mxu0 0.0
    %5787 = vmatpush1.msra.mxu0 0.0
    %5788 = vmatprep.subr.mxu0 0.0
    %5789 = vmatpush1.msra.mxu0 0.0
    %5790 = vmatprep.subr.mxu0 0.0
    %5791 = vmatpush1.msra.mxu0 0.0
    %5792 = vmatprep.subr.mxu0 0.0
    %5793 = vmatpush1.msra.mxu0 0.0
    %5794 = vmatprep.subr.mxu0 0.0
    %5795 = vmatpush1.msra.mxu0 0.0
    %5796 = vmatprep.subr.mxu0 0.0
    %5797 = vmatpush1.msra.mxu0 0.0
    %5798 = vmatprep.mubr.f32.mxu0 0.0
    %5799 = vmatmul.mubr.f32.gmra.mrb[0].mxu0 %v5732
    %v5800 = vpop.f32.mrb[0].mxu0
    %v5801 = vadd.f32 0.0, %v5800
    %v5802 = vpop.f32.mrb[0].mxu0
    %5803 = vdwg.mxu0
    %v5805 = vsel %vm3175, %v3113, 0
    %5807 = vmatprep.subr.mxu0 0.0
    %5808 = vmatpush1.msra.mxu0 %v3162
    %5809 = vmatprep.subr.mxu0 0.0
    %5810 = vmatpush1.msra.mxu0 0.0
    %5811 = vmatprep.subr.mxu0 0.0
    %5812 = vmatpush1.msra.mxu0 0.0
    %5813 = vmatprep.subr.mxu0 0.0
    %5814 = vmatpush1.msra.mxu0 0.0
    %5815 = vmatprep.subr.mxu0 0.0
    %5816 = vmatpush1.msra.mxu0 0.0
    %5817 = vmatprep.subr.mxu0 0.0
    %5818 = vmatpush1.msra.mxu0 0.0
    %5819 = vmatprep.subr.mxu0 0.0
    %5820 = vmatpush1.msra.mxu0 0.0
    %5821 = vmatprep.subr.mxu0 0.0
    %5822 = vmatpush1.msra.mxu0 0.0
    %5823 = vmatprep.subr.mxu0 0.0
    %5824 = vmatpush1.msra.mxu0 0.0
    %5825 = vmatprep.subr.mxu0 0.0
    %5826 = vmatpush1.msra.mxu0 0.0
    %5827 = vmatprep.subr.mxu0 0.0
    %5828 = vmatpush1.msra.mxu0 0.0
    %5829 = vmatprep.subr.mxu0 0.0
    %5830 = vmatpush1.msra.mxu0 0.0
    %5831 = vmatprep.subr.mxu0 0.0
    %5832 = vmatpush1.msra.mxu0 0.0
    %5833 = vmatprep.subr.mxu0 0.0
    %5834 = vmatpush1.msra.mxu0 0.0
    %5835 = vmatprep.subr.mxu0 0.0
    %5836 = vmatpush1.msra.mxu0 0.0
    %5837 = vmatprep.subr.mxu0 0.0
    %5838 = vmatpush1.msra.mxu0 0.0
    %5839 = vmatprep.subr.mxu0 0.0
    %5840 = vmatpush1.msra.mxu0 0.0
    %5841 = vmatprep.subr.mxu0 0.0
    %5842 = vmatpush1.msra.mxu0 0.0
    %5843 = vmatprep.subr.mxu0 0.0
    %5844 = vmatpush1.msra.mxu0 0.0
    %5845 = vmatprep.subr.mxu0 0.0
    %5846 = vmatpush1.msra.mxu0 0.0
    %5847 = vmatprep.subr.mxu0 0.0
    %5848 = vmatpush1.msra.mxu0 0.0
    %5849 = vmatprep.subr.mxu0 0.0
    %5850 = vmatpush1.msra.mxu0 0.0
    %5851 = vmatprep.subr.mxu0 0.0
    %5852 = vmatpush1.msra.mxu0 0.0
    %5853 = vmatprep.subr.mxu0 0.0
    %5854 = vmatpush1.msra.mxu0 0.0
    %5855 = vmatprep.subr.mxu0 0.0
    %5856 = vmatpush1.msra.mxu0 0.0
    %5857 = vmatprep.subr.mxu0 0.0
    %5858 = vmatpush1.msra.mxu0 0.0
    %5859 = vmatprep.subr.mxu0 0.0
    %5860 = vmatpush1.msra.mxu0 0.0
    %5861 = vmatprep.subr.mxu0 0.0
    %5862 = vmatpush1.msra.mxu0 0.0
    %5863 = vmatprep.subr.mxu0 0.0
    %5864 = vmatpush1.msra.mxu0 0.0
    %5865 = vmatprep.subr.mxu0 0.0
    %5866 = vmatpush1.msra.mxu0 0.0
    %5867 = vmatprep.subr.mxu0 0.0
    %5868 = vmatpush1.msra.mxu0 0.0
    %5869 = vmatprep.subr.mxu0 0.0
    %5870 = vmatpush1.msra.mxu0 0.0
    %5871 = vmatprep.mubr.f32.mxu0 0.0
    %5872 = vmatmul.mubr.f32.gmra.mrb[0].mxu0 %v5805
    %v5873 = vpop.f32.mrb[0].mxu0
    %v5874 = vadd.f32 0.0, %v5873
    %v5875 = vpop.f32.mrb[0].mxu0
    %5876 = vdwg.mxu0
    %v5878 = vsel %vm3175, %v3114, 0
    %5880 = vmatprep.subr.mxu0 0.0
    %5881 = vmatpush1.msra.mxu0 %v3163
    %5882 = vmatprep.subr.mxu0 0.0
    %5883 = vmatpush1.msra.mxu0 0.0
    %5884 = vmatprep.subr.mxu0 0.0
    %5885 = vmatpush1.msra.mxu0 0.0
    %5886 = vmatprep.subr.mxu0 0.0
    %5887 = vmatpush1.msra.mxu0 0.0
    %5888 = vmatprep.subr.mxu0 0.0
    %5889 = vmatpush1.msra.mxu0 0.0
    %5890 = vmatprep.subr.mxu0 0.0
    %5891 = vmatpush1.msra.mxu0 0.0
    %5892 = vmatprep.subr.mxu0 0.0
    %5893 = vmatpush1.msra.mxu0 0.0
    %5894 = vmatprep.subr.mxu0 0.0
    %5895 = vmatpush1.msra.mxu0 0.0
    %5896 = vmatprep.subr.mxu0 0.0
    %5897 = vmatpush1.msra.mxu0 0.0
    %5898 = vmatprep.subr.mxu0 0.0
    %5899 = vmatpush1.msra.mxu0 0.0
    %5900 = vmatprep.subr.mxu0 0.0
    %5901 = vmatpush1.msra.mxu0 0.0
    %5902 = vmatprep.subr.mxu0 0.0
    %5903 = vmatpush1.msra.mxu0 0.0
    %5904 = vmatprep.subr.mxu0 0.0
    %5905 = vmatpush1.msra.mxu0 0.0
    %5906 = vmatprep.subr.mxu0 0.0
    %5907 = vmatpush1.msra.mxu0 0.0
    %5908 = vmatprep.subr.mxu0 0.0
    %5909 = vmatpush1.msra.mxu0 0.0
    %5910 = vmatprep.subr.mxu0 0.0
    %5911 = vmatpush1.msra.mxu0 0.0
    %5912 = vmatprep.subr.mxu0 0.0
    %5913 = vmatpush1.msra.mxu0 0.0
    %5914 = vmatprep.subr.mxu0 0.0
    %5915 = vmatpush1.msra.mxu0 0.0
    %5916 = vmatprep.subr.mxu0 0.0
    %5917 = vmatpush1.msra.mxu0 0.0
    %5918 = vmatprep.subr.mxu0 0.0
    %5919 = vmatpush1.msra.mxu0 0.0
    %5920 = vmatprep.subr.mxu0 0.0
    %5921 = vmatpush1.msra.mxu0 0.0
    %5922 = vmatprep.subr.mxu0 0.0
    %5923 = vmatpush1.msra.mxu0 0.0
    %5924 = vmatprep.subr.mxu0 0.0
    %5925 = vmatpush1.msra.mxu0 0.0
    %5926 = vmatprep.subr.mxu0 0.0
    %5927 = vmatpush1.msra.mxu0 0.0
    %5928 = vmatprep.subr.mxu0 0.0
    %5929 = vmatpush1.msra.mxu0 0.0
    %5930 = vmatprep.subr.mxu0 0.0
    %5931 = vmatpush1.msra.mxu0 0.0
    %5932 = vmatprep.subr.mxu0 0.0
    %5933 = vmatpush1.msra.mxu0 0.0
    %5934 = vmatprep.subr.mxu0 0.0
    %5935 = vmatpush1.msra.mxu0 0.0
    %5936 = vmatprep.subr.mxu0 0.0
    %5937 = vmatpush1.msra.mxu0 0.0
    %5938 = vmatprep.subr.mxu0 0.0
    %5939 = vmatpush1.msra.mxu0 0.0
    %5940 = vmatprep.subr.mxu0 0.0
    %5941 = vmatpush1.msra.mxu0 0.0
    %5942 = vmatprep.subr.mxu0 0.0
    %5943 = vmatpush1.msra.mxu0 0.0
    %5944 = vmatprep.mubr.f32.mxu0 0.0
    %5945 = vmatmul.mubr.f32.gmra.mrb[0].mxu0 %v5878
    %v5946 = vpop.f32.mrb[0].mxu0
    %v5947 = vadd.f32 0.0, %v5946
    %v5948 = vpop.f32.mrb[0].mxu0
    %5949 = vdwg.mxu0
    %v5951 = vsel %vm3175, %v3115, 0
    %5953 = vmatprep.subr.mxu0 0.0
    %5954 = vmatpush1.msra.mxu0 %v3164
    %5955 = vmatprep.subr.mxu0 0.0
    %5956 = vmatpush1.msra.mxu0 0.0
    %5957 = vmatprep.subr.mxu0 0.0
    %5958 = vmatpush1.msra.mxu0 0.0
    %5959 = vmatprep.subr.mxu0 0.0
    %5960 = vmatpush1.msra.mxu0 0.0
    %5961 = vmatprep.subr.mxu0 0.0
    %5962 = vmatpush1.msra.mxu0 0.0
    %5963 = vmatprep.subr.mxu0 0.0
    %5964 = vmatpush1.msra.mxu0 0.0
    %5965 = vmatprep.subr.mxu0 0.0
    %5966 = vmatpush1.msra.mxu0 0.0
    %5967 = vmatprep.subr.mxu0 0.0
    %5968 = vmatpush1.msra.mxu0 0.0
    %5969 = vmatprep.subr.mxu0 0.0
    %5970 = vmatpush1.msra.mxu0 0.0
    %5971 = vmatprep.subr.mxu0 0.0
    %5972 = vmatpush1.msra.mxu0 0.0
    %5973 = vmatprep.subr.mxu0 0.0
    %5974 = vmatpush1.msra.mxu0 0.0
    %5975 = vmatprep.subr.mxu0 0.0
    %5976 = vmatpush1.msra.mxu0 0.0
    %5977 = vmatprep.subr.mxu0 0.0
    %5978 = vmatpush1.msra.mxu0 0.0
    %5979 = vmatprep.subr.mxu0 0.0
    %5980 = vmatpush1.msra.mxu0 0.0
    %5981 = vmatprep.subr.mxu0 0.0
    %5982 = vmatpush1.msra.mxu0 0.0
    %5983 = vmatprep.subr.mxu0 0.0
    %5984 = vmatpush1.msra.mxu0 0.0
    %5985 = vmatprep.subr.mxu0 0.0
    %5986 = vmatpush1.msra.mxu0 0.0
    %5987 = vmatprep.subr.mxu0 0.0
    %5988 = vmatpush1.msra.mxu0 0.0
    %5989 = vmatprep.subr.mxu0 0.0
    %5990 = vmatpush1.msra.mxu0 0.0
    %5991 = vmatprep.subr.mxu0 0.0
    %5992 = vmatpush1.msra.mxu0 0.0
    %5993 = vmatprep.subr.mxu0 0.0
    %5994 = vmatpush1.msra.mxu0 0.0
    %5995 = vmatprep.subr.mxu0 0.0
    %5996 = vmatpush1.msra.mxu0 0.0
    %5997 = vmatprep.subr.mxu0 0.0
    %5998 = vmatpush1.msra.mxu0 0.0
    %5999 = vmatprep.subr.mxu0 0.0
    %6000 = vmatpush1.msra.mxu0 0.0
    %6001 = vmatprep.subr.mxu0 0.0
    %6002 = vmatpush1.msra.mxu0 0.0
    %6003 = vmatprep.subr.mxu0 0.0
    %6004 = vmatpush1.msra.mxu0 0.0
    %6005 = vmatprep.subr.mxu0 0.0
    %6006 = vmatpush1.msra.mxu0 0.0
    %6007 = vmatprep.subr.mxu0 0.0
    %6008 = vmatpush1.msra.mxu0 0.0
    %6009 = vmatprep.subr.mxu0 0.0
    %6010 = vmatpush1.msra.mxu0 0.0
    %6011 = vmatprep.subr.mxu0 0.0
    %6012 = vmatpush1.msra.mxu0 0.0
    %6013 = vmatprep.subr.mxu0 0.0
    %6014 = vmatpush1.msra.mxu0 0.0
    %6015 = vmatprep.subr.mxu0 0.0
    %6016 = vmatpush1.msra.mxu0 0.0
    %6017 = vmatprep.mubr.f32.mxu0 0.0
    %6018 = vmatmul.mubr.f32.gmra.mrb[0].mxu0 %v5951
    %v6019 = vpop.f32.mrb[0].mxu0
    %v6020 = vadd.f32 0.0, %v6019
    %v6021 = vpop.f32.mrb[0].mxu0
    %6022 = vdwg.mxu0
    %v6024 = vsel %vm3175, %v3116, 0
    %6026 = vmatprep.subr.mxu0 0.0
    %6027 = vmatpush1.msra.mxu0 %v3165
    %6028 = vmatprep.subr.mxu0 0.0
    %6029 = vmatpush1.msra.mxu0 0.0
    %6030 = vmatprep.subr.mxu0 0.0
    %6031 = vmatpush1.msra.mxu0 0.0
    %6032 = vmatprep.subr.mxu0 0.0
    %6033 = vmatpush1.msra.mxu0 0.0
    %6034 = vmatprep.subr.mxu0 0.0
    %6035 = vmatpush1.msra.mxu0 0.0
    %6036 = vmatprep.subr.mxu0 0.0
    %6037 = vmatpush1.msra.mxu0 0.0
    %6038 = vmatprep.subr.mxu0 0.0
    %6039 = vmatpush1.msra.mxu0 0.0
    %6040 = vmatprep.subr.mxu0 0.0
    %6041 = vmatpush1.msra.mxu0 0.0
    %6042 = vmatprep.subr.mxu0 0.0
    %6043 = vmatpush1.msra.mxu0 0.0
    %6044 = vmatprep.subr.mxu0 0.0
    %6045 = vmatpush1.msra.mxu0 0.0
    %6046 = vmatprep.subr.mxu0 0.0
    %6047 = vmatpush1.msra.mxu0 0.0
    %6048 = vmatprep.subr.mxu0 0.0
    %6049 = vmatpush1.msra.mxu0 0.0
    %6050 = vmatprep.subr.mxu0 0.0
    %6051 = vmatpush1.msra.mxu0 0.0
    %6052 = vmatprep.subr.mxu0 0.0
    %6053 = vmatpush1.msra.mxu0 0.0
    %6054 = vmatprep.subr.mxu0 0.0
    %6055 = vmatpush1.msra.mxu0 0.0
    %6056 = vmatprep.subr.mxu0 0.0
    %6057 = vmatpush1.msra.mxu0 0.0
    %6058 = vmatprep.subr.mxu0 0.0
    %6059 = vmatpush1.msra.mxu0 0.0
    %6060 = vmatprep.subr.mxu0 0.0
    %6061 = vmatpush1.msra.mxu0 0.0
    %6062 = vmatprep.subr.mxu0 0.0
    %6063 = vmatpush1.msra.mxu0 0.0
    %6064 = vmatprep.subr.mxu0 0.0
    %6065 = vmatpush1.msra.mxu0 0.0
    %6066 = vmatprep.subr.mxu0 0.0
    %6067 = vmatpush1.msra.mxu0 0.0
    %6068 = vmatprep.subr.mxu0 0.0
    %6069 = vmatpush1.msra.mxu0 0.0
    %6070 = vmatprep.subr.mxu0 0.0
    %6071 = vmatpush1.msra.mxu0 0.0
    %6072 = vmatprep.subr.mxu0 0.0
    %6073 = vmatpush1.msra.mxu0 0.0
    %6074 = vmatprep.subr.mxu0 0.0
    %6075 = vmatpush1.msra.mxu0 0.0
    %6076 = vmatprep.subr.mxu0 0.0
    %6077 = vmatpush1.msra.mxu0 0.0
    %6078 = vmatprep.subr.mxu0 0.0
    %6079 = vmatpush1.msra.mxu0 0.0
    %6080 = vmatprep.subr.mxu0 0.0
    %6081 = vmatpush1.msra.mxu0 0.0
    %6082 = vmatprep.subr.mxu0 0.0
    %6083 = vmatpush1.msra.mxu0 0.0
    %6084 = vmatprep.subr.mxu0 0.0
    %6085 = vmatpush1.msra.mxu0 0.0
    %6086 = vmatprep.subr.mxu0 0.0
    %6087 = vmatpush1.msra.mxu0 0.0
    %6088 = vmatprep.subr.mxu0 0.0
    %6089 = vmatpush1.msra.mxu0 0.0
    %6090 = vmatprep.mubr.f32.mxu0 0.0
    %6091 = vmatmul.mubr.f32.gmra.mrb[0].mxu0 %v6024
    %v6092 = vpop.f32.mrb[0].mxu0
    %v6093 = vadd.f32 0.0, %v6092
    %v6094 = vpop.f32.mrb[0].mxu0
    %6095 = vdwg.mxu0
    %v6097 = vsel %vm3175, %v3117, 0
    %6099 = vmatprep.subr.mxu0 0.0
    %6100 = vmatpush1.msra.mxu0 %v3166
    %6101 = vmatprep.subr.mxu0 0.0
    %6102 = vmatpush1.msra.mxu0 0.0
    %6103 = vmatprep.subr.mxu0 0.0
    %6104 = vmatpush1.msra.mxu0 0.0
    %6105 = vmatprep.subr.mxu0 0.0
    %6106 = vmatpush1.msra.mxu0 0.0
    %6107 = vmatprep.subr.mxu0 0.0
    %6108 = vmatpush1.msra.mxu0 0.0
    %6109 = vmatprep.subr.mxu0 0.0
    %6110 = vmatpush1.msra.mxu0 0.0
    %6111 = vmatprep.subr.mxu0 0.0
    %6112 = vmatpush1.msra.mxu0 0.0
    %6113 = vmatprep.subr.mxu0 0.0
    %6114 = vmatpush1.msra.mxu0 0.0
    %6115 = vmatprep.subr.mxu0 0.0
    %6116 = vmatpush1.msra.mxu0 0.0
    %6117 = vmatprep.subr.mxu0 0.0
    %6118 = vmatpush1.msra.mxu0 0.0
    %6119 = vmatprep.subr.mxu0 0.0
    %6120 = vmatpush1.msra.mxu0 0.0
    %6121 = vmatprep.subr.mxu0 0.0
    %6122 = vmatpush1.msra.mxu0 0.0
    %6123 = vmatprep.subr.mxu0 0.0
    %6124 = vmatpush1.msra.mxu0 0.0
    %6125 = vmatprep.subr.mxu0 0.0
    %6126 = vmatpush1.msra.mxu0 0.0
    %6127 = vmatprep.subr.mxu0 0.0
    %6128 = vmatpush1.msra.mxu0 0.0
    %6129 = vmatprep.subr.mxu0 0.0
    %6130 = vmatpush1.msra.mxu0 0.0
    %6131 = vmatprep.subr.mxu0 0.0
    %6132 = vmatpush1.msra.mxu0 0.0
    %6133 = vmatprep.subr.mxu0 0.0
    %6134 = vmatpush1.msra.mxu0 0.0
    %6135 = vmatprep.subr.mxu0 0.0
    %6136 = vmatpush1.msra.mxu0 0.0
    %6137 = vmatprep.subr.mxu0 0.0
    %6138 = vmatpush1.msra.mxu0 0.0
    %6139 = vmatprep.subr.mxu0 0.0
    %6140 = vmatpush1.msra.mxu0 0.0
    %6141 = vmatprep.subr.mxu0 0.0
    %6142 = vmatpush1.msra.mxu0 0.0
    %6143 = vmatprep.subr.mxu0 0.0
    %6144 = vmatpush1.msra.mxu0 0.0
    %6145 = vmatprep.subr.mxu0 0.0
    %6146 = vmatpush1.msra.mxu0 0.0
    %6147 = vmatprep.subr.mxu0 0.0
    %6148 = vmatpush1.msra.mxu0 0.0
    %6149 = vmatprep.subr.mxu0 0.0
    %6150 = vmatpush1.msra.mxu0 0.0
    %6151 = vmatprep.subr.mxu0 0.0
    %6152 = vmatpush1.msra.mxu0 0.0
    %6153 = vmatprep.subr.mxu0 0.0
    %6154 = vmatpush1.msra.mxu0 0.0
    %6155 = vmatprep.subr.mxu0 0.0
    %6156 = vmatpush1.msra.mxu0 0.0
    %6157 = vmatprep.subr.mxu0 0.0
    %6158 = vmatpush1.msra.mxu0 0.0
    %6159 = vmatprep.subr.mxu0 0.0
    %6160 = vmatpush1.msra.mxu0 0.0
    %6161 = vmatprep.subr.mxu0 0.0
    %6162 = vmatpush1.msra.mxu0 0.0
    %6163 = vmatprep.mubr.f32.mxu0 0.0
    %6164 = vmatmul.mubr.f32.gmra.mrb[0].mxu0 %v6097
    %v6165 = vpop.f32.mrb[0].mxu0
    %v6166 = vadd.f32 0.0, %v6165
    %v6167 = vpop.f32.mrb[0].mxu0
    %6168 = vdwg.mxu0
    %v6170 = vsel %vm3175, %v3118, 0
    %6172 = vmatprep.subr.mxu0 0.0
    %6173 = vmatpush1.msra.mxu0 %v3167
    %6174 = vmatprep.subr.mxu0 0.0
    %6175 = vmatpush1.msra.mxu0 0.0
    %6176 = vmatprep.subr.mxu0 0.0
    %6177 = vmatpush1.msra.mxu0 0.0
    %6178 = vmatprep.subr.mxu0 0.0
    %6179 = vmatpush1.msra.mxu0 0.0
    %6180 = vmatprep.subr.mxu0 0.0
    %6181 = vmatpush1.msra.mxu0 0.0
    %6182 = vmatprep.subr.mxu0 0.0
    %6183 = vmatpush1.msra.mxu0 0.0
    %6184 = vmatprep.subr.mxu0 0.0
    %6185 = vmatpush1.msra.mxu0 0.0
    %6186 = vmatprep.subr.mxu0 0.0
    %6187 = vmatpush1.msra.mxu0 0.0
    %6188 = vmatprep.subr.mxu0 0.0
    %6189 = vmatpush1.msra.mxu0 0.0
    %6190 = vmatprep.subr.mxu0 0.0
    %6191 = vmatpush1.msra.mxu0 0.0
    %6192 = vmatprep.subr.mxu0 0.0
    %6193 = vmatpush1.msra.mxu0 0.0
    %6194 = vmatprep.subr.mxu0 0.0
    %6195 = vmatpush1.msra.mxu0 0.0
    %6196 = vmatprep.subr.mxu0 0.0
    %6197 = vmatpush1.msra.mxu0 0.0
    %6198 = vmatprep.subr.mxu0 0.0
    %6199 = vmatpush1.msra.mxu0 0.0
    %6200 = vmatprep.subr.mxu0 0.0
    %6201 = vmatpush1.msra.mxu0 0.0
    %6202 = vmatprep.subr.mxu0 0.0
    %6203 = vmatpush1.msra.mxu0 0.0
    %6204 = vmatprep.subr.mxu0 0.0
    %6205 = vmatpush1.msra.mxu0 0.0
    %6206 = vmatprep.subr.mxu0 0.0
    %6207 = vmatpush1.msra.mxu0 0.0
    %6208 = vmatprep.subr.mxu0 0.0
    %6209 = vmatpush1.msra.mxu0 0.0
    %6210 = vmatprep.subr.mxu0 0.0
    %6211 = vmatpush1.msra.mxu0 0.0
    %6212 = vmatprep.subr.mxu0 0.0
    %6213 = vmatpush1.msra.mxu0 0.0
    %6214 = vmatprep.subr.mxu0 0.0
    %6215 = vmatpush1.msra.mxu0 0.0
    %6216 = vmatprep.subr.mxu0 0.0
    %6217 = vmatpush1.msra.mxu0 0.0
    %6218 = vmatprep.subr.mxu0 0.0
    %6219 = vmatpush1.msra.mxu0 0.0
    %6220 = vmatprep.subr.mxu0 0.0
    %6221 = vmatpush1.msra.mxu0 0.0
    %6222 = vmatprep.subr.mxu0 0.0
    %6223 = vmatpush1.msra.mxu0 0.0
    %6224 = vmatprep.subr.mxu0 0.0
    %6225 = vmatpush1.msra.mxu0 0.0
    %6226 = vmatprep.subr.mxu0 0.0
    %6227 = vmatpush1.msra.mxu0 0.0
    %6228 = vmatprep.subr.mxu0 0.0
    %6229 = vmatpush1.msra.mxu0 0.0
    %6230 = vmatprep.subr.mxu0 0.0
    %6231 = vmatpush1.msra.mxu0 0.0
    %6232 = vmatprep.subr.mxu0 0.0
    %6233 = vmatpush1.msra.mxu0 0.0
    %6234 = vmatprep.subr.mxu0 0.0
    %6235 = vmatpush1.msra.mxu0 0.0
    %6236 = vmatprep.mubr.f32.mxu0 0.0
    %6237 = vmatmul.mubr.f32.gmra.mrb[0].mxu0 %v6170
    %v6238 = vpop.f32.mrb[0].mxu0
    %v6239 = vadd.f32 0.0, %v6238
    %v6240 = vpop.f32.mrb[0].mxu0
    %6241 = vdwg.mxu0
    %v6243 = vsel %vm3175, %v3119, 0
    %6245 = vmatprep.subr.mxu0 0.0
    %6246 = vmatpush1.msra.mxu0 %v3168
    %6247 = vmatprep.subr.mxu0 0.0
    %6248 = vmatpush1.msra.mxu0 0.0
    %6249 = vmatprep.subr.mxu0 0.0
    %6250 = vmatpush1.msra.mxu0 0.0
    %6251 = vmatprep.subr.mxu0 0.0
    %6252 = vmatpush1.msra.mxu0 0.0
    %6253 = vmatprep.subr.mxu0 0.0
    %6254 = vmatpush1.msra.mxu0 0.0
    %6255 = vmatprep.subr.mxu0 0.0
    %6256 = vmatpush1.msra.mxu0 0.0
    %6257 = vmatprep.subr.mxu0 0.0
    %6258 = vmatpush1.msra.mxu0 0.0
    %6259 = vmatprep.subr.mxu0 0.0
    %6260 = vmatpush1.msra.mxu0 0.0
    %6261 = vmatprep.subr.mxu0 0.0
    %6262 = vmatpush1.msra.mxu0 0.0
    %6263 = vmatprep.subr.mxu0 0.0
    %6264 = vmatpush1.msra.mxu0 0.0
    %6265 = vmatprep.subr.mxu0 0.0
    %6266 = vmatpush1.msra.mxu0 0.0
    %6267 = vmatprep.subr.mxu0 0.0
    %6268 = vmatpush1.msra.mxu0 0.0
    %6269 = vmatprep.subr.mxu0 0.0
    %6270 = vmatpush1.msra.mxu0 0.0
    %6271 = vmatprep.subr.mxu0 0.0
    %6272 = vmatpush1.msra.mxu0 0.0
    %6273 = vmatprep.subr.mxu0 0.0
    %6274 = vmatpush1.msra.mxu0 0.0
    %6275 = vmatprep.subr.mxu0 0.0
    %6276 = vmatpush1.msra.mxu0 0.0
    %6277 = vmatprep.subr.mxu0 0.0
    %6278 = vmatpush1.msra.mxu0 0.0
    %6279 = vmatprep.subr.mxu0 0.0
    %6280 = vmatpush1.msra.mxu0 0.0
    %6281 = vmatprep.subr.mxu0 0.0
    %6282 = vmatpush1.msra.mxu0 0.0
    %6283 = vmatprep.subr.mxu0 0.0
    %6284 = vmatpush1.msra.mxu0 0.0
    %6285 = vmatprep.subr.mxu0 0.0
    %6286 = vmatpush1.msra.mxu0 0.0
    %6287 = vmatprep.subr.mxu0 0.0
    %6288 = vmatpush1.msra.mxu0 0.0
    %6289 = vmatprep.subr.mxu0 0.0
    %6290 = vmatpush1.msra.mxu0 0.0
    %6291 = vmatprep.subr.mxu0 0.0
    %6292 = vmatpush1.msra.mxu0 0.0
    %6293 = vmatprep.subr.mxu0 0.0
    %6294 = vmatpush1.msra.mxu0 0.0
    %6295 = vmatprep.subr.mxu0 0.0
    %6296 = vmatpush1.msra.mxu0 0.0
    %6297 = vmatprep.subr.mxu0 0.0
    %6298 = vmatpush1.msra.mxu0 0.0
    %6299 = vmatprep.subr.mxu0 0.0
    %6300 = vmatpush1.msra.mxu0 0.0
    %6301 = vmatprep.subr.mxu0 0.0
    %6302 = vmatpush1.msra.mxu0 0.0
    %6303 = vmatprep.subr.mxu0 0.0
    %6304 = vmatpush1.msra.mxu0 0.0
    %6305 = vmatprep.subr.mxu0 0.0
    %6306 = vmatpush1.msra.mxu0 0.0
    %6307 = vmatprep.subr.mxu0 0.0
    %6308 = vmatpush1.msra.mxu0 0.0
    %6309 = vmatprep.mubr.f32.mxu0 0.0
    %6310 = vmatmul.mubr.f32.gmra.mrb[0].mxu0 %v6243
    %v6311 = vpop.f32.mrb[0].mxu0
    %v6312 = vadd.f32 0.0, %v6311
    %v6313 = vpop.f32.mrb[0].mxu0
    %6314 = vdwg.mxu0
    %v6316 = vsel %vm3175, %v3120, 0
    %6318 = vmatprep.subr.mxu0 0.0
    %6319 = vmatpush1.msra.mxu0 %v3169
    %6320 = vmatprep.subr.mxu0 0.0
    %6321 = vmatpush1.msra.mxu0 0.0
    %6322 = vmatprep.subr.mxu0 0.0
    %6323 = vmatpush1.msra.mxu0 0.0
    %6324 = vmatprep.subr.mxu0 0.0
    %6325 = vmatpush1.msra.mxu0 0.0
    %6326 = vmatprep.subr.mxu0 0.0
    %6327 = vmatpush1.msra.mxu0 0.0
    %6328 = vmatprep.subr.mxu0 0.0
    %6329 = vmatpush1.msra.mxu0 0.0
    %6330 = vmatprep.subr.mxu0 0.0
    %6331 = vmatpush1.msra.mxu0 0.0
    %6332 = vmatprep.subr.mxu0 0.0
    %6333 = vmatpush1.msra.mxu0 0.0
    %6334 = vmatprep.subr.mxu0 0.0
    %6335 = vmatpush1.msra.mxu0 0.0
    %6336 = vmatprep.subr.mxu0 0.0
    %6337 = vmatpush1.msra.mxu0 0.0
    %6338 = vmatprep.subr.mxu0 0.0
    %6339 = vmatpush1.msra.mxu0 0.0
    %6340 = vmatprep.subr.mxu0 0.0
    %6341 = vmatpush1.msra.mxu0 0.0
    %6342 = vmatprep.subr.mxu0 0.0
    %6343 = vmatpush1.msra.mxu0 0.0
    %6344 = vmatprep.subr.mxu0 0.0
    %6345 = vmatpush1.msra.mxu0 0.0
    %6346 = vmatprep.subr.mxu0 0.0
    %6347 = vmatpush1.msra.mxu0 0.0
    %6348 = vmatprep.subr.mxu0 0.0
    %6349 = vmatpush1.msra.mxu0 0.0
    %6350 = vmatprep.subr.mxu0 0.0
    %6351 = vmatpush1.msra.mxu0 0.0
    %6352 = vmatprep.subr.mxu0 0.0
    %6353 = vmatpush1.msra.mxu0 0.0
    %6354 = vmatprep.subr.mxu0 0.0
    %6355 = vmatpush1.msra.mxu0 0.0
    %6356 = vmatprep.subr.mxu0 0.0
    %6357 = vmatpush1.msra.mxu0 0.0
    %6358 = vmatprep.subr.mxu0 0.0
    %6359 = vmatpush1.msra.mxu0 0.0
    %6360 = vmatprep.subr.mxu0 0.0
    %6361 = vmatpush1.msra.mxu0 0.0
    %6362 = vmatprep.subr.mxu0 0.0
    %6363 = vmatpush1.msra.mxu0 0.0
    %6364 = vmatprep.subr.mxu0 0.0
    %6365 = vmatpush1.msra.mxu0 0.0
    %6366 = vmatprep.subr.mxu0 0.0
    %6367 = vmatpush1.msra.mxu0 0.0
    %6368 = vmatprep.subr.mxu0 0.0
    %6369 = vmatpush1.msra.mxu0 0.0
    %6370 = vmatprep.subr.mxu0 0.0
    %6371 = vmatpush1.msra.mxu0 0.0
    %6372 = vmatprep.subr.mxu0 0.0
    %6373 = vmatpush1.msra.mxu0 0.0
    %6374 = vmatprep.subr.mxu0 0.0
    %6375 = vmatpush1.msra.mxu0 0.0
    %6376 = vmatprep.subr.mxu0 0.0
    %6377 = vmatpush1.msra.mxu0 0.0
    %6378 = vmatprep.subr.mxu0 0.0
    %6379 = vmatpush1.msra.mxu0 0.0
    %6380 = vmatprep.subr.mxu0 0.0
    %6381 = vmatpush1.msra.mxu0 0.0
    %6382 = vmatprep.mubr.f32.mxu0 0.0
    %6383 = vmatmul.mubr.f32.gmra.mrb[0].mxu0 %v6316
    %v6384 = vpop.f32.mrb[0].mxu0
    %v6385 = vadd.f32 0.0, %v6384
    %v6386 = vpop.f32.mrb[0].mxu0
    %6387 = vdwg.mxu0
    %v6389 = vsel %vm3175, %v3121, 0
    %6391 = vmatprep.subr.mxu0 0.0
    %6392 = vmatpush1.msra.mxu0 %v3170
    %6393 = vmatprep.subr.mxu0 0.0
    %6394 = vmatpush1.msra.mxu0 0.0
    %6395 = vmatprep.subr.mxu0 0.0
    %6396 = vmatpush1.msra.mxu0 0.0
    %6397 = vmatprep.subr.mxu0 0.0
    %6398 = vmatpush1.msra.mxu0 0.0
    %6399 = vmatprep.subr.mxu0 0.0
    %6400 = vmatpush1.msra.mxu0 0.0
    %6401 = vmatprep.subr.mxu0 0.0
    %6402 = vmatpush1.msra.mxu0 0.0
    %6403 = vmatprep.subr.mxu0 0.0
    %6404 = vmatpush1.msra.mxu0 0.0
    %6405 = vmatprep.subr.mxu0 0.0
    %6406 = vmatpush1.msra.mxu0 0.0
    %6407 = vmatprep.subr.mxu0 0.0
    %6408 = vmatpush1.msra.mxu0 0.0
    %6409 = vmatprep.subr.mxu0 0.0
    %6410 = vmatpush1.msra.mxu0 0.0
    %6411 = vmatprep.subr.mxu0 0.0
    %6412 = vmatpush1.msra.mxu0 0.0
    %6413 = vmatprep.subr.mxu0 0.0
    %6414 = vmatpush1.msra.mxu0 0.0
    %6415 = vmatprep.subr.mxu0 0.0
    %6416 = vmatpush1.msra.mxu0 0.0
    %6417 = vmatprep.subr.mxu0 0.0
    %6418 = vmatpush1.msra.mxu0 0.0
    %6419 = vmatprep.subr.mxu0 0.0
    %6420 = vmatpush1.msra.mxu0 0.0
    %6421 = vmatprep.subr.mxu0 0.0
    %6422 = vmatpush1.msra.mxu0 0.0
    %6423 = vmatprep.subr.mxu0 0.0
    %6424 = vmatpush1.msra.mxu0 0.0
    %6425 = vmatprep.subr.mxu0 0.0
    %6426 = vmatpush1.msra.mxu0 0.0
    %6427 = vmatprep.subr.mxu0 0.0
    %6428 = vmatpush1.msra.mxu0 0.0
    %6429 = vmatprep.subr.mxu0 0.0
    %6430 = vmatpush1.msra.mxu0 0.0
    %6431 = vmatprep.subr.mxu0 0.0
    %6432 = vmatpush1.msra.mxu0 0.0
    %6433 = vmatprep.subr.mxu0 0.0
    %6434 = vmatpush1.msra.mxu0 0.0
    %6435 = vmatprep.subr.mxu0 0.0
    %6436 = vmatpush1.msra.mxu0 0.0
    %6437 = vmatprep.subr.mxu0 0.0
    %6438 = vmatpush1.msra.mxu0 0.0
    %6439 = vmatprep.subr.mxu0 0.0
    %6440 = vmatpush1.msra.mxu0 0.0
    %6441 = vmatprep.subr.mxu0 0.0
    %6442 = vmatpush1.msra.mxu0 0.0
    %6443 = vmatprep.subr.mxu0 0.0
    %6444 = vmatpush1.msra.mxu0 0.0
    %6445 = vmatprep.subr.mxu0 0.0
    %6446 = vmatpush1.msra.mxu0 0.0
    %6447 = vmatprep.subr.mxu0 0.0
    %6448 = vmatpush1.msra.mxu0 0.0
    %6449 = vmatprep.subr.mxu0 0.0
    %6450 = vmatpush1.msra.mxu0 0.0
    %6451 = vmatprep.subr.mxu0 0.0
    %6452 = vmatpush1.msra.mxu0 0.0
    %6453 = vmatprep.subr.mxu0 0.0
    %6454 = vmatpush1.msra.mxu0 0.0
    %6455 = vmatprep.mubr.f32.mxu0 0.0
    %6456 = vmatmul.mubr.f32.gmra.mrb[0].mxu0 %v6389
    %v6457 = vpop.f32.mrb[0].mxu0
    %v6458 = vadd.f32 0.0, %v6457
    %v6459 = vpop.f32.mrb[0].mxu0
    %6460 = vdwg.mxu0
    %v6462 = vsel %vm3175, %v3122, 0
    %6464 = vmatprep.subr.mxu0 0.0
    %6465 = vmatpush1.msra.mxu0 %v3171
    %6466 = vmatprep.subr.mxu0 0.0
    %6467 = vmatpush1.msra.mxu0 0.0
    %6468 = vmatprep.subr.mxu0 0.0
    %6469 = vmatpush1.msra.mxu0 0.0
    %6470 = vmatprep.subr.mxu0 0.0
    %6471 = vmatpush1.msra.mxu0 0.0
    %6472 = vmatprep.subr.mxu0 0.0
    %6473 = vmatpush1.msra.mxu0 0.0
    %6474 = vmatprep.subr.mxu0 0.0
    %6475 = vmatpush1.msra.mxu0 0.0
    %6476 = vmatprep.subr.mxu0 0.0
    %6477 = vmatpush1.msra.mxu0 0.0
    %6478 = vmatprep.subr.mxu0 0.0
    %6479 = vmatpush1.msra.mxu0 0.0
    %6480 = vmatprep.subr.mxu0 0.0
    %6481 = vmatpush1.msra.mxu0 0.0
    %6482 = vmatprep.subr.mxu0 0.0
    %6483 = vmatpush1.msra.mxu0 0.0
    %6484 = vmatprep.subr.mxu0 0.0
    %6485 = vmatpush1.msra.mxu0 0.0
    %6486 = vmatprep.subr.mxu0 0.0
    %6487 = vmatpush1.msra.mxu0 0.0
    %6488 = vmatprep.subr.mxu0 0.0
    %6489 = vmatpush1.msra.mxu0 0.0
    %6490 = vmatprep.subr.mxu0 0.0
    %6491 = vmatpush1.msra.mxu0 0.0
    %6492 = vmatprep.subr.mxu0 0.0
    %6493 = vmatpush1.msra.mxu0 0.0
    %6494 = vmatprep.subr.mxu0 0.0
    %6495 = vmatpush1.msra.mxu0 0.0
    %6496 = vmatprep.subr.mxu0 0.0
    %6497 = vmatpush1.msra.mxu0 0.0
    %6498 = vmatprep.subr.mxu0 0.0
    %6499 = vmatpush1.msra.mxu0 0.0
    %6500 = vmatprep.subr.mxu0 0.0
    %6501 = vmatpush1.msra.mxu0 0.0
    %6502 = vmatprep.subr.mxu0 0.0
    %6503 = vmatpush1.msra.mxu0 0.0
    %6504 = vmatprep.subr.mxu0 0.0
    %6505 = vmatpush1.msra.mxu0 0.0
    %6506 = vmatprep.subr.mxu0 0.0
    %6507 = vmatpush1.msra.mxu0 0.0
    %6508 = vmatprep.subr.mxu0 0.0
    %6509 = vmatpush1.msra.mxu0 0.0
    %6510 = vmatprep.subr.mxu0 0.0
    %6511 = vmatpush1.msra.mxu0 0.0
    %6512 = vmatprep.subr.mxu0 0.0
    %6513 = vmatpush1.msra.mxu0 0.0
    %6514 = vmatprep.subr.mxu0 0.0
    %6515 = vmatpush1.msra.mxu0 0.0
    %6516 = vmatprep.subr.mxu0 0.0
    %6517 = vmatpush1.msra.mxu0 0.0
    %6518 = vmatprep.subr.mxu0 0.0
    %6519 = vmatpush1.msra.mxu0 0.0
    %6520 = vmatprep.subr.mxu0 0.0
    %6521 = vmatpush1.msra.mxu0 0.0
    %6522 = vmatprep.subr.mxu0 0.0
    %6523 = vmatpush1.msra.mxu0 0.0
    %6524 = vmatprep.subr.mxu0 0.0
    %6525 = vmatpush1.msra.mxu0 0.0
    %6526 = vmatprep.subr.mxu0 0.0
    %6527 = vmatpush1.msra.mxu0 0.0
    %6528 = vmatprep.mubr.f32.mxu0 0.0
    %6529 = vmatmul.mubr.f32.gmra.mrb[0].mxu0 %v6462
    %v6530 = vpop.f32.mrb[0].mxu0
    %v6531 = vadd.f32 0.0, %v6530
    %v6532 = vpop.f32.mrb[0].mxu0
    %6533 = vdwg.mxu0
    %v6535 = vsel %vm3175, %v3123, 0
    %6537 = vmatprep.subr.mxu0 0.0
    %6538 = vmatpush1.msra.mxu0 %v3172
    %6539 = vmatprep.subr.mxu0 0.0
    %6540 = vmatpush1.msra.mxu0 0.0
    %6541 = vmatprep.subr.mxu0 0.0
    %6542 = vmatpush1.msra.mxu0 0.0
    %6543 = vmatprep.subr.mxu0 0.0
    %6544 = vmatpush1.msra.mxu0 0.0
    %6545 = vmatprep.subr.mxu0 0.0
    %6546 = vmatpush1.msra.mxu0 0.0
    %6547 = vmatprep.subr.mxu0 0.0
    %6548 = vmatpush1.msra.mxu0 0.0
    %6549 = vmatprep.subr.mxu0 0.0
    %6550 = vmatpush1.msra.mxu0 0.0
    %6551 = vmatprep.subr.mxu0 0.0
    %6552 = vmatpush1.msra.mxu0 0.0
    %6553 = vmatprep.subr.mxu0 0.0
    %6554 = vmatpush1.msra.mxu0 0.0
    %6555 = vmatprep.subr.mxu0 0.0
    %6556 = vmatpush1.msra.mxu0 0.0
    %6557 = vmatprep.subr.mxu0 0.0
    %6558 = vmatpush1.msra.mxu0 0.0
    %6559 = vmatprep.subr.mxu0 0.0
    %6560 = vmatpush1.msra.mxu0 0.0
    %6561 = vmatprep.subr.mxu0 0.0
    %6562 = vmatpush1.msra.mxu0 0.0
    %6563 = vmatprep.subr.mxu0 0.0
    %6564 = vmatpush1.msra.mxu0 0.0
    %6565 = vmatprep.subr.mxu0 0.0
    %6566 = vmatpush1.msra.mxu0 0.0
    %6567 = vmatprep.subr.mxu0 0.0
    %6568 = vmatpush1.msra.mxu0 0.0
    %6569 = vmatprep.subr.mxu0 0.0
    %6570 = vmatpush1.msra.mxu0 0.0
    %6571 = vmatprep.subr.mxu0 0.0
    %6572 = vmatpush1.msra.mxu0 0.0
    %6573 = vmatprep.subr.mxu0 0.0
    %6574 = vmatpush1.msra.mxu0 0.0
    %6575 = vmatprep.subr.mxu0 0.0
    %6576 = vmatpush1.msra.mxu0 0.0
    %6577 = vmatprep.subr.mxu0 0.0
    %6578 = vmatpush1.msra.mxu0 0.0
    %6579 = vmatprep.subr.mxu0 0.0
    %6580 = vmatpush1.msra.mxu0 0.0
    %6581 = vmatprep.subr.mxu0 0.0
    %6582 = vmatpush1.msra.mxu0 0.0
    %6583 = vmatprep.subr.mxu0 0.0
    %6584 = vmatpush1.msra.mxu0 0.0
    %6585 = vmatprep.subr.mxu0 0.0
    %6586 = vmatpush1.msra.mxu0 0.0
    %6587 = vmatprep.subr.mxu0 0.0
    %6588 = vmatpush1.msra.mxu0 0.0
    %6589 = vmatprep.subr.mxu0 0.0
    %6590 = vmatpush1.msra.mxu0 0.0
    %6591 = vmatprep.subr.mxu0 0.0
    %6592 = vmatpush1.msra.mxu0 0.0
    %6593 = vmatprep.subr.mxu0 0.0
    %6594 = vmatpush1.msra.mxu0 0.0
    %6595 = vmatprep.subr.mxu0 0.0
    %6596 = vmatpush1.msra.mxu0 0.0
    %6597 = vmatprep.subr.mxu0 0.0
    %6598 = vmatpush1.msra.mxu0 0.0
    %6599 = vmatprep.subr.mxu0 0.0
    %6600 = vmatpush1.msra.mxu0 0.0
    %6601 = vmatprep.mubr.f32.mxu0 0.0
    %6602 = vmatmul.mubr.f32.gmra.mrb[0].mxu0 %v6535
    %v6603 = vpop.f32.mrb[0].mxu0
    %v6604 = vadd.f32 0.0, %v6603
    %v6605 = vpop.f32.mrb[0].mxu0
    %6606 = vdwg.mxu0
    %v6608 = vsel %vm3175, %v3124, 0
    %6610 = vmatprep.subr.mxu0 0.0
    %6611 = vmatpush1.msra.mxu0 %v3173
    %6612 = vmatprep.subr.mxu0 0.0
    %6613 = vmatpush1.msra.mxu0 0.0
    %6614 = vmatprep.subr.mxu0 0.0
    %6615 = vmatpush1.msra.mxu0 0.0
    %6616 = vmatprep.subr.mxu0 0.0
    %6617 = vmatpush1.msra.mxu0 0.0
    %6618 = vmatprep.subr.mxu0 0.0
    %6619 = vmatpush1.msra.mxu0 0.0
    %6620 = vmatprep.subr.mxu0 0.0
    %6621 = vmatpush1.msra.mxu0 0.0
    %6622 = vmatprep.subr.mxu0 0.0
    %6623 = vmatpush1.msra.mxu0 0.0
    %6624 = vmatprep.subr.mxu0 0.0
    %6625 = vmatpush1.msra.mxu0 0.0
    %6626 = vmatprep.subr.mxu0 0.0
    %6627 = vmatpush1.msra.mxu0 0.0
    %6628 = vmatprep.subr.mxu0 0.0
    %6629 = vmatpush1.msra.mxu0 0.0
    %6630 = vmatprep.subr.mxu0 0.0
    %6631 = vmatpush1.msra.mxu0 0.0
    %6632 = vmatprep.subr.mxu0 0.0
    %6633 = vmatpush1.msra.mxu0 0.0
    %6634 = vmatprep.subr.mxu0 0.0
    %6635 = vmatpush1.msra.mxu0 0.0
    %6636 = vmatprep.subr.mxu0 0.0
    %6637 = vmatpush1.msra.mxu0 0.0
    %6638 = vmatprep.subr.mxu0 0.0
    %6639 = vmatpush1.msra.mxu0 0.0
    %6640 = vmatprep.subr.mxu0 0.0
    %6641 = vmatpush1.msra.mxu0 0.0
    %6642 = vmatprep.subr.mxu0 0.0
    %6643 = vmatpush1.msra.mxu0 0.0
    %6644 = vmatprep.subr.mxu0 0.0
    %6645 = vmatpush1.msra.mxu0 0.0
    %6646 = vmatprep.subr.mxu0 0.0
    %6647 = vmatpush1.msra.mxu0 0.0
    %6648 = vmatprep.subr.mxu0 0.0
    %6649 = vmatpush1.msra.mxu0 0.0
    %6650 = vmatprep.subr.mxu0 0.0
    %6651 = vmatpush1.msra.mxu0 0.0
    %6652 = vmatprep.subr.mxu0 0.0
    %6653 = vmatpush1.msra.mxu0 0.0
    %6654 = vmatprep.subr.mxu0 0.0
    %6655 = vmatpush1.msra.mxu0 0.0
    %6656 = vmatprep.subr.mxu0 0.0
    %6657 = vmatpush1.msra.mxu0 0.0
    %6658 = vmatprep.subr.mxu0 0.0
    %6659 = vmatpush1.msra.mxu0 0.0
    %6660 = vmatprep.subr.mxu0 0.0
    %6661 = vmatpush1.msra.mxu0 0.0
    %6662 = vmatprep.subr.mxu0 0.0
    %6663 = vmatpush1.msra.mxu0 0.0
    %6664 = vmatprep.subr.mxu0 0.0
    %6665 = vmatpush1.msra.mxu0 0.0
    %6666 = vmatprep.subr.mxu0 0.0
    %6667 = vmatpush1.msra.mxu0 0.0
    %6668 = vmatprep.subr.mxu0 0.0
    %6669 = vmatpush1.msra.mxu0 0.0
    %6670 = vmatprep.subr.mxu0 0.0
    %6671 = vmatpush1.msra.mxu0 0.0
    %6672 = vmatprep.subr.mxu0 0.0
    %6673 = vmatpush1.msra.mxu0 0.0
    %6674 = vmatprep.mubr.f32.mxu0 0.0
    %6675 = vmatmul.mubr.f32.gmra.mrb[0].mxu0 %v6608
    %v6676 = vpop.f32.mrb[0].mxu0
    %v6677 = vadd.f32 0.0, %v6676
    %v6678 = vpop.f32.mrb[0].mxu0
    %6679 = vdwg.mxu0
    %v6681 = vsel %vm3175, %v3125, 0
    %6683 = vmatprep.subr.mxu0 0.0
    %6684 = vmatpush1.msra.mxu0 %v3174
    %6685 = vmatprep.subr.mxu0 0.0
    %6686 = vmatpush1.msra.mxu0 0.0
    %6687 = vmatprep.subr.mxu0 0.0
    %6688 = vmatpush1.msra.mxu0 0.0
    %6689 = vmatprep.subr.mxu0 0.0
    %6690 = vmatpush1.msra.mxu0 0.0
    %6691 = vmatprep.subr.mxu0 0.0
    %6692 = vmatpush1.msra.mxu0 0.0
    %6693 = vmatprep.subr.mxu0 0.0
    %6694 = vmatpush1.msra.mxu0 0.0
    %6695 = vmatprep.subr.mxu0 0.0
    %6696 = vmatpush1.msra.mxu0 0.0
    %6697 = vmatprep.subr.mxu0 0.0
    %6698 = vmatpush1.msra.mxu0 0.0
    %6699 = vmatprep.subr.mxu0 0.0
    %6700 = vmatpush1.msra.mxu0 0.0
    %6701 = vmatprep.subr.mxu0 0.0
    %6702 = vmatpush1.msra.mxu0 0.0
    %6703 = vmatprep.subr.mxu0 0.0
    %6704 = vmatpush1.msra.mxu0 0.0
    %6705 = vmatprep.subr.mxu0 0.0
    %6706 = vmatpush1.msra.mxu0 0.0
    %6707 = vmatprep.subr.mxu0 0.0
    %6708 = vmatpush1.msra.mxu0 0.0
    %6709 = vmatprep.subr.mxu0 0.0
    %6710 = vmatpush1.msra.mxu0 0.0
    %6711 = vmatprep.subr.mxu0 0.0
    %6712 = vmatpush1.msra.mxu0 0.0
    %6713 = vmatprep.subr.mxu0 0.0
    %6714 = vmatpush1.msra.mxu0 0.0
    %6715 = vmatprep.subr.mxu0 0.0
    %6716 = vmatpush1.msra.mxu0 0.0
    %6717 = vmatprep.subr.mxu0 0.0
    %6718 = vmatpush1.msra.mxu0 0.0
    %6719 = vmatprep.subr.mxu0 0.0
    %6720 = vmatpush1.msra.mxu0 0.0
    %6721 = vmatprep.subr.mxu0 0.0
    %6722 = vmatpush1.msra.mxu0 0.0
    %6723 = vmatprep.subr.mxu0 0.0
    %6724 = vmatpush1.msra.mxu0 0.0
    %6725 = vmatprep.subr.mxu0 0.0
    %6726 = vmatpush1.msra.mxu0 0.0
    %6727 = vmatprep.subr.mxu0 0.0
    %6728 = vmatpush1.msra.mxu0 0.0
    %6729 = vmatprep.subr.mxu0 0.0
    %6730 = vmatpush1.msra.mxu0 0.0
    %6731 = vmatprep.subr.mxu0 0.0
    %6732 = vmatpush1.msra.mxu0 0.0
    %6733 = vmatprep.subr.mxu0 0.0
    %6734 = vmatpush1.msra.mxu0 0.0
    %6735 = vmatprep.subr.mxu0 0.0
    %6736 = vmatpush1.msra.mxu0 0.0
    %6737 = vmatprep.subr.mxu0 0.0
    %6738 = vmatpush1.msra.mxu0 0.0
    %6739 = vmatprep.subr.mxu0 0.0
    %6740 = vmatpush1.msra.mxu0 0.0
    %6741 = vmatprep.subr.mxu0 0.0
    %6742 = vmatpush1.msra.mxu0 0.0
    %6743 = vmatprep.subr.mxu0 0.0
    %6744 = vmatpush1.msra.mxu0 0.0
    %6745 = vmatprep.subr.mxu0 0.0
    %6746 = vmatpush1.msra.mxu0 0.0
    %6747 = vmatprep.mubr.f32.mxu0 0.0
    %6748 = vmatmul.mubr.f32.gmra.mrb[0].mxu0 %v6681
    %v6749 = vpop.f32.mrb[0].mxu0
    %v6750 = vadd.f32 0.0, %v6749
    %v6751 = vpop.f32.mrb[0].mxu0
    %6752 = vdwg.mxu0
    %vm6753 = vcmask 257024
    %v6754 = vsel %vm6753, %v3246, 0.0
    %v6755 = vsel %vm6753, %v3319, 0.0
    %v6756 = vadd.f32 %v6754, %v6755
    %v6757 = vsel %vm6753, %v3392, 0.0
    %v6758 = vadd.f32 %v6756, %v6757
    %v6759 = vsel %vm6753, %v3465, 0.0
    %v6760 = vadd.f32 %v6758, %v6759
    %v6761 = vsel %vm6753, %v3538, 0.0
    %v6762 = vadd.f32 %v6760, %v6761
    %v6763 = vsel %vm6753, %v3611, 0.0
    %v6764 = vadd.f32 %v6762, %v6763
    %v6765 = vsel %vm6753, %v3684, 0.0
    %v6766 = vadd.f32 %v6764, %v6765
    %v6767 = vsel %vm6753, %v3757, 0.0
    %v6768 = vadd.f32 %v6766, %v6767
    %v6769 = vsel %vm6753, %v3830, 0.0
    %v6770 = vadd.f32 %v6768, %v6769
    %v6771 = vsel %vm6753, %v3903, 0.0
    %v6772 = vadd.f32 %v6770, %v6771
    %v6773 = vsel %vm6753, %v3976, 0.0
    %v6774 = vadd.f32 %v6772, %v6773
    %v6775 = vsel %vm6753, %v4049, 0.0
    %v6776 = vadd.f32 %v6774, %v6775
    %v6777 = vsel %vm6753, %v4122, 0.0
    %v6778 = vadd.f32 %v6776, %v6777
    %v6779 = vsel %vm6753, %v4195, 0.0
    %v6780 = vadd.f32 %v6778, %v6779
    %v6781 = vsel %vm6753, %v4268, 0.0
    %v6782 = vadd.f32 %v6780, %v6781
    %v6783 = vsel %vm6753, %v4341, 0.0
    %v6784 = vadd.f32 %v6782, %v6783
    %v6785 = vsel %vm6753, %v4414, 0.0
    %v6786 = vadd.f32 %v6784, %v6785
    %v6787 = vsel %vm6753, %v4487, 0.0
    %v6788 = vadd.f32 %v6786, %v6787
    %v6789 = vsel %vm6753, %v4560, 0.0
    %v6790 = vadd.f32 %v6788, %v6789
    %v6791 = vsel %vm6753, %v4633, 0.0
    %v6792 = vadd.f32 %v6790, %v6791
    %v6793 = vsel %vm6753, %v4706, 0.0
    %v6794 = vadd.f32 %v6792, %v6793
    %v6795 = vsel %vm6753, %v4779, 0.0
    %v6796 = vadd.f32 %v6794, %v6795
    %v6797 = vsel %vm6753, %v4852, 0.0
    %v6798 = vadd.f32 %v6796, %v6797
    %v6799 = vsel %vm6753, %v4925, 0.0
    %v6800 = vadd.f32 %v6798, %v6799
    %v6801 = vsel %vm6753, %v4998, 0.0
    %v6802 = vadd.f32 %v6800, %v6801
    %v6803 = vsel %vm6753, %v5071, 0.0
    %v6804 = vadd.f32 %v6802, %v6803
    %v6805 = vsel %vm6753, %v5144, 0.0
    %v6806 = vadd.f32 %v6804, %v6805
    %v6807 = vsel %vm6753, %v5217, 0.0
    %v6808 = vadd.f32 %v6806, %v6807
    %v6809 = vsel %vm6753, %v5290, 0.0
    %v6810 = vadd.f32 %v6808, %v6809
    %v6811 = vsel %vm6753, %v5363, 0.0
    %v6812 = vadd.f32 %v6810, %v6811
    %v6813 = vsel %vm6753, %v5436, 0.0
    %v6814 = vadd.f32 %v6812, %v6813
    %v6815 = vsel %vm6753, %v5509, 0.0
    %v6816 = vadd.f32 %v6814, %v6815
    %v6817 = vsel %vm6753, %v5582, 0.0
    %v6818 = vadd.f32 %v6816, %v6817
    %v6819 = vsel %vm6753, %v5655, 0.0
    %v6820 = vadd.f32 %v6818, %v6819
    %v6821 = vsel %vm6753, %v5728, 0.0
    %v6822 = vadd.f32 %v6820, %v6821
    %v6823 = vsel %vm6753, %v5801, 0.0
    %v6824 = vadd.f32 %v6822, %v6823
    %v6825 = vsel %vm6753, %v5874, 0.0
    %v6826 = vadd.f32 %v6824, %v6825
    %v6827 = vsel %vm6753, %v5947, 0.0
    %v6828 = vadd.f32 %v6826, %v6827
    %v6829 = vsel %vm6753, %v6020, 0.0
    %v6830 = vadd.f32 %v6828, %v6829
    %v6831 = vsel %vm6753, %v6093, 0.0
    %v6832 = vadd.f32 %v6830, %v6831
    %v6833 = vsel %vm6753, %v6166, 0.0
    %v6834 = vadd.f32 %v6832, %v6833
    %v6835 = vsel %vm6753, %v6239, 0.0
    %v6836 = vadd.f32 %v6834, %v6835
    %v6837 = vsel %vm6753, %v6312, 0.0
    %v6838 = vadd.f32 %v6836, %v6837
    %v6839 = vsel %vm6753, %v6385, 0.0
    %v6840 = vadd.f32 %v6838, %v6839
    %v6841 = vsel %vm6753, %v6458, 0.0
    %v6842 = vadd.f32 %v6840, %v6841
    %v6843 = vsel %vm6753, %v6531, 0.0
    %v6844 = vadd.f32 %v6842, %v6843
    %v6845 = vsel %vm6753, %v6604, 0.0
    %v6846 = vadd.f32 %v6844, %v6845
    %v6847 = vsel %vm6753, %v6677, 0.0
    %v6848 = vadd.f32 %v6846, %v6847
    %v6849 = vsel %vm6753, %v6750, 0.0
    %v6850 = vadd.f32 %v6848, %v6849
    %v6851 = vld [vmem:[%s1] sm:$0xf]
    %v6852 = vld [vmem:[%s7] sm:$0x3]
    %v6854 = vsel %vm171, %v6851, 0
    %v6857 = vsel %vm222, %v6852, 0
    %6859 = vmatprep.subr.mxu0 0.0
    %6860 = vmatpush1.msra.mxu0 %v6857
    %6861 = vmatprep.subr.mxu0 0.0
    %6862 = vmatpush1.msra.mxu0 0.0
    %6863 = vmatprep.subr.mxu0 0.0
    %6864 = vmatpush1.msra.mxu0 0.0
    %6865 = vmatprep.subr.mxu0 0.0
    %6866 = vmatpush1.msra.mxu0 0.0
    %6867 = vmatprep.subr.mxu0 0.0
    %6868 = vmatpush1.msra.mxu0 0.0
    %6869 = vmatprep.subr.mxu0 0.0
    %6870 = vmatpush1.msra.mxu0 0.0
    %6871 = vmatprep.subr.mxu0 0.0
    %6872 = vmatpush1.msra.mxu0 0.0
    %6873 = vmatprep.subr.mxu0 0.0
    %6874 = vmatpush1.msra.mxu0 0.0
    %6875 = vmatprep.subr.mxu0 0.0
    %6876 = vmatpush1.msra.mxu0 0.0
    %6877 = vmatprep.subr.mxu0 0.0
    %6878 = vmatpush1.msra.mxu0 0.0
    %6879 = vmatprep.subr.mxu0 0.0
    %6880 = vmatpush1.msra.mxu0 0.0
    %6881 = vmatprep.subr.mxu0 0.0
    %6882 = vmatpush1.msra.mxu0 0.0
    %6883 = vmatprep.subr.mxu0 0.0
    %6884 = vmatpush1.msra.mxu0 0.0
    %6885 = vmatprep.subr.mxu0 0.0
    %6886 = vmatpush1.msra.mxu0 0.0
    %6887 = vmatprep.subr.mxu0 0.0
    %6888 = vmatpush1.msra.mxu0 0.0
    %6889 = vmatprep.subr.mxu0 0.0
    %6890 = vmatpush1.msra.mxu0 0.0
    %6891 = vmatprep.subr.mxu0 0.0
    %6892 = vmatpush1.msra.mxu0 0.0
    %6893 = vmatprep.subr.mxu0 0.0
    %6894 = vmatpush1.msra.mxu0 0.0
    %6895 = vmatprep.subr.mxu0 0.0
    %6896 = vmatpush1.msra.mxu0 0.0
    %6897 = vmatprep.subr.mxu0 0.0
    %6898 = vmatpush1.msra.mxu0 0.0
    %6899 = vmatprep.subr.mxu0 0.0
    %6900 = vmatpush1.msra.mxu0 0.0
    %6901 = vmatprep.subr.mxu0 0.0
    %6902 = vmatpush1.msra.mxu0 0.0
    %6903 = vmatprep.subr.mxu0 0.0
    %6904 = vmatpush1.msra.mxu0 0.0
    %6905 = vmatprep.subr.mxu0 0.0
    %6906 = vmatpush1.msra.mxu0 0.0
    %6907 = vmatprep.subr.mxu0 0.0
    %6908 = vmatpush1.msra.mxu0 0.0
    %6909 = vmatprep.subr.mxu0 0.0
    %6910 = vmatpush1.msra.mxu0 0.0
    %6911 = vmatprep.subr.mxu0 0.0
    %6912 = vmatpush1.msra.mxu0 0.0
    %6913 = vmatprep.subr.mxu0 0.0
    %6914 = vmatpush1.msra.mxu0 0.0
    %6915 = vmatprep.subr.mxu0 0.0
    %6916 = vmatpush1.msra.mxu0 0.0
    %6917 = vmatprep.subr.mxu0 0.0
    %6918 = vmatpush1.msra.mxu0 0.0
    %6919 = vmatprep.subr.mxu0 0.0
    %6920 = vmatpush1.msra.mxu0 0.0
    %6921 = vmatprep.subr.mxu0 0.0
    %6922 = vmatpush1.msra.mxu0 0.0
    %6923 = vmatprep.mubr.f32.mxu0 0.0
    %6924 = vmatmul.mubr.f32.gmra.mrb[0].mxu0 %v6854
    %v6925 = vpop.f32.mrb[0].mxu0
    %v6926 = vadd.f32 0.0, %v6925
    %v6927 = vpop.f32.mrb[0].mxu0
    %6928 = vdwg.mxu0
    %v6929 = vadd.f32 %v6850, %v6926
    %v6930 = vld [vmem:[%s8] sm:$0x1]
    %v6932 = vlaneseq
    %v6933 = vshrl.u32 %v6932, 7
    %v6934 = vsub.s32 0, %v6933
    %v6935 = vrot.slane %v6930, %v6934
    %v6937 = vadd.f32 %v6929, %v6935
    %v6938 = vmax.f32 %v6937, 0.0
    %v6939 = vld [vmem:[%s9] sm:$0xff]
    %v6940 = vld [vmem:[%s9 + $0x8] sm:$0xff]
    %v6941 = vld [vmem:[%s9 + $0x10] sm:$0xff]
    %v6942 = vld [vmem:[%s9 + $0x18] sm:$0xff]
    %v6943 = vld [vmem:[%s10] sm:$0x1]
    %v6945 = vlaneseq
    %v6946 = vshrl.u32 %v6945, 7
    %v6947 = vsub.s32 0, %v6946
    %v6948 = vrot.slane %v6943, %v6947
    %vm6950 = vcmask 261120
    %v6952 = vsel %vm6950, %v6938, 0
    %6954 = vmatprep.subr.mxu0 0.0
    %6955 = vmatpush1.msra.mxu0 %v6939
    %6956 = vmatprep.subr.mxu0 0.0
    %6957 = vmatpush1.msra.mxu0 %v6940
    %6958 = vmatprep.subr.mxu0 0.0
    %6959 = vmatpush1.msra.mxu0 %v6941
    %6960 = vmatprep.subr.mxu0 0.0
    %6961 = vmatpush1.msra.mxu0 %v6942
    %6962 = vmatprep.subr.mxu0 0.0
    %6963 = vmatpush1.msra.mxu0 0.0
    %6964 = vmatprep.subr.mxu0 0.0
    %6965 = vmatpush1.msra.mxu0 0.0
    %6966 = vmatprep.subr.mxu0 0.0
    %6967 = vmatpush1.msra.mxu0 0.0
    %6968 = vmatprep.subr.mxu0 0.0
    %6969 = vmatpush1.msra.mxu0 0.0
    %6970 = vmatprep.subr.mxu0 0.0
    %6971 = vmatpush1.msra.mxu0 0.0
    %6972 = vmatprep.subr.mxu0 0.0
    %6973 = vmatpush1.msra.mxu0 0.0
    %6974 = vmatprep.subr.mxu0 0.0
    %6975 = vmatpush1.msra.mxu0 0.0
    %6976 = vmatprep.subr.mxu0 0.0
    %6977 = vmatpush1.msra.mxu0 0.0
    %6978 = vmatprep.subr.mxu0 0.0
    %6979 = vmatpush1.msra.mxu0 0.0
    %6980 = vmatprep.subr.mxu0 0.0
    %6981 = vmatpush1.msra.mxu0 0.0
    %6982 = vmatprep.subr.mxu0 0.0
    %6983 = vmatpush1.msra.mxu0 0.0
    %6984 = vmatprep.subr.mxu0 0.0
    %6985 = vmatpush1.msra.mxu0 0.0
    %6986 = vmatprep.subr.mxu0 0.0
    %6987 = vmatpush1.msra.mxu0 0.0
    %6988 = vmatprep.subr.mxu0 0.0
    %6989 = vmatpush1.msra.mxu0 0.0
    %6990 = vmatprep.subr.mxu0 0.0
    %6991 = vmatpush1.msra.mxu0 0.0
    %6992 = vmatprep.subr.mxu0 0.0
    %6993 = vmatpush1.msra.mxu0 0.0
    %6994 = vmatprep.subr.mxu0 0.0
    %6995 = vmatpush1.msra.mxu0 0.0
    %6996 = vmatprep.subr.mxu0 0.0
    %6997 = vmatpush1.msra.mxu0 0.0
    %6998 = vmatprep.subr.mxu0 0.0
    %6999 = vmatpush1.msra.mxu0 0.0
    %7000 = vmatprep.subr.mxu0 0.0
    %7001 = vmatpush1.msra.mxu0 0.0
    %7002 = vmatprep.subr.mxu0 0.0
    %7003 = vmatpush1.msra.mxu0 0.0
    %7004 = vmatprep.subr.mxu0 0.0
    %7005 = vmatpush1.msra.mxu0 0.0
    %7006 = vmatprep.subr.mxu0 0.0
    %7007 = vmatpush1.msra.mxu0 0.0
    %7008 = vmatprep.subr.mxu0 0.0
    %7009 = vmatpush1.msra.mxu0 0.0
    %7010 = vmatprep.subr.mxu0 0.0
    %7011 = vmatpush1.msra.mxu0 0.0
    %7012 = vmatprep.subr.mxu0 0.0
    %7013 = vmatpush1.msra.mxu0 0.0
    %7014 = vmatprep.subr.mxu0 0.0
    %7015 = vmatpush1.msra.mxu0 0.0
    %7016 = vmatprep.subr.mxu0 0.0
    %7017 = vmatpush1.msra.mxu0 0.0
    %7018 = vmatprep.mubr.f32.mxu0 0.0
    %7019 = vmatmul.mubr.f32.gmra.mrb[0].mxu0 %v6952
    %v7020 = vpop.f32.mrb[0].mxu0
    %v7021 = vadd.f32 %v6948, %v7020
    %v7022 = vpop.f32.mrb[0].mxu0
    %7023 = vdwg.mxu0
    %vm7024 = vcmask 396288
    %7025 = vst.msk [vmem:[#allocation2] sm:$0xf] %vm7024, %v7021
    // Predicated region
    $region46: #{tpu_custom_call.1} parent=1 // pred_check
      _
    $region47: #{tpu_custom_call.1} parent=1 // pred_check_branch
      %7027 = sbr.rel (0) target = $region49
    $region48: #{tpu_custom_call.1} parent=1 // pred_region
      %s7029 = ssub.s32 64, 64
      %7030 = vsyncadd [#allocation3], %s7029
      %s7032 = sshll.u32 [#allocation2], 4
      %s7033 = int_to_ptr.vmem [resolvable:$true] %s7032
      %7035 = dma.vmem_to_hbm [thread:$0]  %s7033, 64, %s11, [#allocation3]
    $region49: #{tpu_custom_call.1} parent=1 // pred_fallthru
      _
    // Predicated region
    $region50: #{tpu_custom_call.1} parent=1 // pred_check
      _
    $region51: #{tpu_custom_call.1} parent=1 // pred_check_branch
      %7037 = sbr.rel (0) target = $region53
    $region52: #{tpu_custom_call.1} parent=1 // pred_region
      %7038 = dma.done [#allocation3], 64
    $region53: #{tpu_custom_call.1} parent=1 // pred_fallthru
      _
    %7039 = vsyncpa [#allocation3], 1

</llo_original>
